<compile_context>
chip_gen: v5e
topology: v5e:2x2
jax: 0.10.0
libtpu: 0.0.40
codegen_flags: <defaults>
</compile_context>

<pallas_src>
import functools
import math

import jax
import jax.numpy as jnp
from jax.experimental import pallas as pl
from jax.experimental.pallas import tpu as pltpu

SEQUENCE_LENGTH = 64 * 2   # max_len of the positional encoding
NEG_INF = -1e30            # stand-in for float('-inf') in the causal mask
LN_EPS = 1e-5              # PyTorch LayerNorm default
# NOTE: per the review, bf16 matmul operands would roughly double MXU throughput
# on v6e/v7x at scale; kept f32 here for exact parity with the f32 reference.


# ----------------------------------------------------------------------------
# In-kernel helpers (operate on traced arrays already resident in vregs/VMEM)
# ----------------------------------------------------------------------------
def _layernorm(x, g, b, eps):
    mu = jnp.mean(x, axis=-1, keepdims=True)
    xc = x - mu
    var = jnp.mean(xc * xc, axis=-1, keepdims=True)
    return xc * jax.lax.rsqrt(var + eps) * g + b


def _attention(q, k, v, allow, num_heads):
    """Head-batched scaled-dot-product attention with an additive-style mask."""
    Sq, D = q.shape
    Sk = k.shape[0]
    Dh = D // num_heads
    scale = 1.0 / math.sqrt(Dh)
    qh = jnp.swapaxes(q.reshape(Sq, num_heads, Dh), 0, 1)   # (H, Sq, Dh)
    kh = jnp.swapaxes(k.reshape(Sk, num_heads, Dh), 0, 1)   # (H, Sk, Dh)
    vh = jnp.swapaxes(v.reshape(Sk, num_heads, Dh), 0, 1)   # (H, Sk, Dh)
    s = jnp.einsum("hqd,hkd->hqk", qh, kh,
                   preferred_element_type=jnp.float32) * scale
    s = jnp.where(allow[None, :, :], s, NEG_INF)
    m = jnp.max(s, axis=-1, keepdims=True)
    p = jnp.exp(s - m)
    p = p / jnp.sum(p, axis=-1, keepdims=True)               # exact softmax
    o = jnp.einsum("hqk,hkd->hqd", p, vh,
                   preferred_element_type=jnp.float32)       # (H, Sq, Dh)
    return jnp.swapaxes(o, 0, 1).reshape(Sq, D)


# ----------------------------------------------------------------------------
# The single fused kernel: full decoder stack + final projection, per batch elem
# ----------------------------------------------------------------------------
def _textgen_kernel(x_ref,
                    sa_wqkv_ref, sa_bqkv_ref, sa_wo_ref, sa_bo_ref,
                    ca_wq_ref, ca_bq_ref, ca_wkv_ref, ca_bkv_ref,
                    ca_wo_ref, ca_bo_ref,
                    ln1g_ref, ln1b_ref, ln2g_ref, ln2b_ref, ln3g_ref, ln3b_ref,
                    ffw1_ref, ffb1_ref, ffw2_ref, ffb2_ref,
                    outw_ref, outb_ref,
                    o_ref, *,
                    num_layers, num_heads, ff_chunk, eps):
    x = x_ref[0].astype(jnp.float32)                          # (S, D)
    S, D = x.shape
    F = ffw1_ref.shape[-1]

    # Causal mask generated once in-kernel via iota (no mask DMA): keys j <= i.
    row = jax.lax.broadcasted_iota(jnp.int32, (S, S), 0)
    col = jax.lax.broadcasted_iota(jnp.int32, (S, S), 1)
    allow = col <= row

    mem = x                                                   # decoder(x, memory=x)
    h = x
    for l in range(num_layers):                               # static unroll, L=2
        # ---- self-attention: fused Wq|Wk|Wv, residual + post-LayerNorm ----
        qkv = jnp.dot(h, sa_wqkv_ref[l],
                      preferred_element_type=jnp.float32) + sa_bqkv_ref[l]
        attn = _attention(qkv[:, :D], qkv[:, D:2 * D], qkv[:, 2 * D:],
                          allow, num_heads)
        sa = jnp.dot(attn, sa_wo_ref[l],
                     preferred_element_type=jnp.float32) + sa_bo_ref[l]
        h = _layernorm(h + sa, ln1g_ref[l], ln1b_ref[l], eps)

        # ---- cross-attention over memory (memory_mask == causal mask) ----
        q = jnp.dot(h, ca_wq_ref[l],
                    preferred_element_type=jnp.float32) + ca_bq_ref[l]
        kv = jnp.dot(mem, ca_wkv_ref[l],
                     preferred_element_type=jnp.float32) + ca_bkv_ref[l]
        attn = _attention(q, kv[:, :D], kv[:, D:], allow, num_heads)
        ca = jnp.dot(attn, ca_wo_ref[l],
                     preferred_element_type=jnp.float32) + ca_bo_ref[l]
        h = _layernorm(h + ca, ln2g_ref[l], ln2b_ref[l], eps)

        # ---- feed-forward, chunked over dim_ff: (S, F) intermediate never
        #      materializes in full; only a (S, ff_chunk) slab is live ----
        y = jnp.zeros((S, D), jnp.float32)
        for f0 in range(0, F, ff_chunk):
            f1 = f0 + ff_chunk
            hc = jnp.maximum(
                jnp.dot(h, ffw1_ref[l, :, f0:f1],
                        preferred_element_type=jnp.float32) + ffb1_ref[l, :, f0:f1],
                0.0)
            y = y + jnp.dot(hc, ffw2_ref[l, f0:f1, :],
                            preferred_element_type=jnp.float32)
        y = y + ffb2_ref[l]
        h = _layernorm(h + y, ln3g_ref[l], ln3b_ref[l], eps)

    # final dropout = identity (eval); vocab projection, lane-dense (padded) N.
    logits = jnp.dot(h, outw_ref[...],
                     preferred_element_type=jnp.float32) + outb_ref[...]
    o_ref[0] = logits.astype(o_ref.dtype)


# ----------------------------------------------------------------------------
# Wrapper: one pallas_call for the whole network
# ----------------------------------------------------------------------------
_WEIGHT_NAMES = (
    "sa_wqkv", "sa_bqkv", "sa_wo", "sa_bo",
    "ca_wq", "ca_bq", "ca_wkv", "ca_bkv", "ca_wo", "ca_bo",
    "ln1_g", "ln1_b", "ln2_g", "ln2_b", "ln3_g", "ln3_b",
    "ff_w1", "ff_b1", "ff_w2", "ff_b2",
    "out_w_pad", "out_b_pad",
)


def _const_map(ndim):
    zeros = (0,) * ndim
    return lambda b: zeros


def textgen_forward(params, tokens, *, num_heads, vocab_size):
    B, S = tokens.shape
    D = params["emb"].shape[1]
    L = params["sa_wqkv"].shape[0]
    F = params["ff_w1"].shape[-1]
    Vpad = params["out_w_pad"].shape[1]

    # TODO(synk): embedding gather + positional-encoding add kept in plain JAX
    # (XLA gather); dropout layers are identity (eval-mode forward semantics).
    x = jnp.take(params["emb"], tokens, axis=0) + params["pe"][None, :S, :]

    ff_chunk = 512 if F % 512 == 0 else F
    weights = [params[n] for n in _WEIGHT_NAMES]

    flops_layer = (2 * S * D * 3 * D + 4 * S * S * D + 2 * S * D * D   # self-attn
                   + 2 * S * D * D + 2 * S * D * 2 * D                 # cross proj
                   + 4 * S * S * D + 2 * S * D * D                     # cross attn+out
                   + 4 * S * D * F)                                     # FFN
    flops = B * (L * flops_layer + 2 * S * D * Vpad)
    transcendentals = B * L * (2 * num_heads * S * S + 3 * S)
    bytes_accessed = 4 * (B * S * D + B * S * Vpad
                          + sum(int(w.size) for w in weights))

    kernel = functools.partial(_textgen_kernel, num_layers=L,
                               num_heads=num_heads, ff_chunk=ff_chunk,
                               eps=LN_EPS)
    out = pl.pallas_call(
        kernel,
        out_shape=jax.ShapeDtypeStruct((B, S, Vpad), jnp.float32),
        grid=(B,),
        in_specs=[pl.BlockSpec((1, S, D), lambda b: (b, 0, 0))] + [
            pl.BlockSpec(w.shape, _const_map(w.ndim)) for w in weights],
        out_specs=pl.BlockSpec((1, S, Vpad), lambda b: (b, 0, 0)),
        compiler_params=pltpu.CompilerParams(
            dimension_semantics=("parallel",)),
        cost_estimate=pl.CostEstimate(flops=flops,
                                      transcendentals=transcendentals,
                                      bytes_accessed=bytes_accessed),
    )(x, *weights)
    return out[:, :, :vocab_size]


# ----------------------------------------------------------------------------
# Deterministic parameter initialization (shapes per the module's __init__)
# ----------------------------------------------------------------------------
def _normal(key, shape, scale=0.02):
    return (scale * jax.random.normal(key, shape)).astype(jnp.float32)


def _init_layer(key, d, dim_ff):
    ks = jax.random.split(key, 8)
    return {
        # self-attention: fused Wq|Wk|Wv
        "sa_wqkv": jnp.concatenate(
            [_normal(ks[0], (d, d)), _normal(ks[1], (d, d)),
             _normal(ks[2], (d, d))], axis=1),
        "sa_bqkv": jnp.zeros((1, 3 * d), jnp.float32),
        "sa_wo": _normal(ks[3], (d, d)), "sa_bo": jnp.zeros((1, d), jnp.float32),
        # cross-attention: separate Q, fused K|V
        "ca_wq": _normal(ks[4], (d, d)), "ca_bq": jnp.zeros((1, d), jnp.float32),
        "ca_wkv": jnp.concatenate(
            [_normal(ks[5], (d, d)), _normal(ks[6], (d, d))], axis=1),
        "ca_bkv": jnp.zeros((1, 2 * d), jnp.float32),
        "ca_wo": _normal(ks[7], (d, d)), "ca_bo": jnp.zeros((1, d), jnp.float32),
        # feed-forward
        "ff_w1": _normal(jax.random.fold_in(key, 100), (d, dim_ff)),
        "ff_b1": jnp.zeros((1, dim_ff), jnp.float32),
        "ff_w2": _normal(jax.random.fold_in(key, 101), (dim_ff, d)),
        "ff_b2": jnp.zeros((1, d), jnp.float32),
        # LayerNorms
        "ln1_g": jnp.ones((1, d), jnp.float32), "ln1_b": jnp.zeros((1, d), jnp.float32),
        "ln2_g": jnp.ones((1, d), jnp.float32), "ln2_b": jnp.zeros((1, d), jnp.float32),
        "ln3_g": jnp.ones((1, d), jnp.float32), "ln3_b": jnp.zeros((1, d), jnp.float32),
    }


def _positional_encoding(max_len, d):
    pos = jnp.arange(max_len, dtype=jnp.float32)[:, None]
    div = jnp.exp(jnp.arange(0, d, 2, dtype=jnp.float32) * (-math.log(10000.0) / d))
    pe = jnp.zeros((max_len, d), jnp.float32)
    pe = pe.at[:, 0::2].set(jnp.sin(pos * div))
    pe = pe.at[:, 1::2].set(jnp.cos(pos * div))
    return pe


def init_params(key, vocab_size, embed_dim, num_layers, dim_ff=2048,
                max_len=SEQUENCE_LENGTH):
    ks = jax.random.split(key, 2 + num_layers)
    layers = [_init_layer(ks[2 + l], embed_dim, dim_ff) for l in range(num_layers)]
    # stack per-layer params along a leading layer axis -> one ref per weight kind
    params = {k: jnp.stack([lp[k] for lp in layers], axis=0) for k in layers[0]}
    params["emb"] = _normal(ks[0], (vocab_size, embed_dim))
    params["pe"] = _positional_encoding(max_len, embed_dim)
    # pad vocab projection to a multiple of 128 for lane-dense stores
    v_pad = 128 * pl.cdiv(vocab_size, 128)
    out_w = _normal(ks[1], (embed_dim, vocab_size))
    params["out_w_pad"] = jnp.pad(out_w, ((0, 0), (0, v_pad - vocab_size)))
    params["out_b_pad"] = jnp.zeros((1, v_pad), jnp.float32)
    return params


# ----------------------------------------------------------------------------
if __name__ == "__main__":
    vocab_size = 50
    embed_dim = 32
    num_layers = 2
    num_heads = 4
    batch, seq = 2, 16          # seq <= SEQUENCE_LENGTH (positional-encoding max_len)

    key = jax.random.PRNGKey(0)
    pkey, dkey = jax.random.split(key)
    params = init_params(pkey, vocab_size, embed_dim, num_layers)
    tokens = jax.random.randint(dkey, (batch, seq), 0, vocab_size, dtype=jnp.int32)

    fwd = jax.jit(functools.partial(textgen_forward,
                                    num_heads=num_heads, vocab_size=vocab_size))
    out = fwd(params, tokens)
    out = jax.block_until_ready(out)
    assert out.shape == (batch, seq, vocab_size)
    assert bool(jnp.all(jnp.isfinite(out)))
    print("KERNEL_OK")
</pallas_src>

<mosaic_0001>
module attributes {stable_mosaic.version = 11 : i64} {
  func.func @_textgen_kernel(%arg0: i32, %arg1: memref<1x16x32xf32, #tpu.memory_space<vmem>>, %arg2: memref<2x32x96xf32, #tpu.memory_space<vmem>>, %arg3: memref<2x1x96xf32, #tpu.memory_space<vmem>>, %arg4: memref<2x32x32xf32, #tpu.memory_space<vmem>>, %arg5: memref<2x1x32xf32, #tpu.memory_space<vmem>>, %arg6: memref<2x32x32xf32, #tpu.memory_space<vmem>>, %arg7: memref<2x1x32xf32, #tpu.memory_space<vmem>>, %arg8: memref<2x32x64xf32, #tpu.memory_space<vmem>>, %arg9: memref<2x1x64xf32, #tpu.memory_space<vmem>>, %arg10: memref<2x32x32xf32, #tpu.memory_space<vmem>>, %arg11: memref<2x1x32xf32, #tpu.memory_space<vmem>>, %arg12: memref<2x1x32xf32, #tpu.memory_space<vmem>>, %arg13: memref<2x1x32xf32, #tpu.memory_space<vmem>>, %arg14: memref<2x1x32xf32, #tpu.memory_space<vmem>>, %arg15: memref<2x1x32xf32, #tpu.memory_space<vmem>>, %arg16: memref<2x1x32xf32, #tpu.memory_space<vmem>>, %arg17: memref<2x1x32xf32, #tpu.memory_space<vmem>>, %arg18: memref<2x32x2048xf32, #tpu.memory_space<vmem>>, %arg19: memref<2x1x2048xf32, #tpu.memory_space<vmem>>, %arg20: memref<2x2048x32xf32, #tpu.memory_space<vmem>>, %arg21: memref<2x1x32xf32, #tpu.memory_space<vmem>>, %arg22: memref<32x128xf32, #tpu.memory_space<vmem>>, %arg23: memref<1x128xf32, #tpu.memory_space<vmem>>, %arg24: memref<1x16x128xf32, #tpu.memory_space<vmem>>) attributes {dimension_semantics = [#tpu.dimension_semantics<parallel>], iteration_bounds = array<i64: 2>, scalar_prefetch = 0 : i64, scratch_operands = 0 : i64, tpu.core_type = #tpu.core_type<tc>, window_params = [{transform_indices = @transform_0, window_bounds = array<i64: 1, 16, 32>}, {pipeline_mode = #tpu.pipeline_mode<synchronous>, transform_indices = @transform_1, window_bounds = array<i64: 2, 32, 96>}, {pipeline_mode = #tpu.pipeline_mode<synchronous>, transform_indices = @transform_2, window_bounds = array<i64: 2, 1, 96>}, {pipeline_mode = #tpu.pipeline_mode<synchronous>, transform_indices = @transform_3, window_bounds = array<i64: 2, 32, 32>}, {pipeline_mode = #tpu.pipeline_mode<synchronous>, transform_indices = @transform_4, window_bounds = array<i64: 2, 1, 32>}, {pipeline_mode = #tpu.pipeline_mode<synchronous>, transform_indices = @transform_5, window_bounds = array<i64: 2, 32, 32>}, {pipeline_mode = #tpu.pipeline_mode<synchronous>, transform_indices = @transform_6, window_bounds = array<i64: 2, 1, 32>}, {pipeline_mode = #tpu.pipeline_mode<synchronous>, transform_indices = @transform_7, window_bounds = array<i64: 2, 32, 64>}, {pipeline_mode = #tpu.pipeline_mode<synchronous>, transform_indices = @transform_8, window_bounds = array<i64: 2, 1, 64>}, {pipeline_mode = #tpu.pipeline_mode<synchronous>, transform_indices = @transform_9, window_bounds = array<i64: 2, 32, 32>}, {pipeline_mode = #tpu.pipeline_mode<synchronous>, transform_indices = @transform_10, window_bounds = array<i64: 2, 1, 32>}, {pipeline_mode = #tpu.pipeline_mode<synchronous>, transform_indices = @transform_11, window_bounds = array<i64: 2, 1, 32>}, {pipeline_mode = #tpu.pipeline_mode<synchronous>, transform_indices = @transform_12, window_bounds = array<i64: 2, 1, 32>}, {pipeline_mode = #tpu.pipeline_mode<synchronous>, transform_indices = @transform_13, window_bounds = array<i64: 2, 1, 32>}, {pipeline_mode = #tpu.pipeline_mode<synchronous>, transform_indices = @transform_14, window_bounds = array<i64: 2, 1, 32>}, {pipeline_mode = #tpu.pipeline_mode<synchronous>, transform_indices = @transform_15, window_bounds = array<i64: 2, 1, 32>}, {pipeline_mode = #tpu.pipeline_mode<synchronous>, transform_indices = @transform_16, window_bounds = array<i64: 2, 1, 32>}, {pipeline_mode = #tpu.pipeline_mode<synchronous>, transform_indices = @transform_17, window_bounds = array<i64: 2, 32, 2048>}, {pipeline_mode = #tpu.pipeline_mode<synchronous>, transform_indices = @transform_18, window_bounds = array<i64: 2, 1, 2048>}, {pipeline_mode = #tpu.pipeline_mode<synchronous>, transform_indices = @transform_19, window_bounds = array<i64: 2, 2048, 32>}, {pipeline_mode = #tpu.pipeline_mode<synchronous>, transform_indices = @transform_20, window_bounds = array<i64: 2, 1, 32>}, {pipeline_mode = #tpu.pipeline_mode<synchronous>, transform_indices = @transform_21, window_bounds = array<i64: 32, 128>}, {pipeline_mode = #tpu.pipeline_mode<synchronous>, transform_indices = @transform_22, window_bounds = array<i64: 1, 128>}, {transform_indices = @transform_23, window_bounds = array<i64: 1, 16, 128>}]} {
    %c0 = arith.constant 0 : index
    %c0_0 = arith.constant 0 : index
    %c0_1 = arith.constant 0 : index
    %0 = vector.load %arg1[%c0, %c0_0, %c0_1] : memref<1x16x32xf32, #tpu.memory_space<vmem>>, vector<1x16x32xf32>
    %1 = vector.shape_cast %0 : vector<1x16x32xf32> to vector<16x32xf32>
    %2 = tpu.iota {dimensions = array<i32: 0>} : vector<16x16xi32>
    %3 = tpu.iota {dimensions = array<i32: 1>} : vector<16x16xi32>
    %4 = arith.cmpi sle, %3, %2 : vector<16x16xi32>
    %c0_2 = arith.constant 0 : index
    %c0_3 = arith.constant 0 : index
    %c0_4 = arith.constant 0 : index
    %5 = vector.load %arg2[%c0_2, %c0_3, %c0_4] : memref<2x32x96xf32, #tpu.memory_space<vmem>>, vector<1x32x96xf32>
    %6 = vector.shape_cast %5 : vector<1x32x96xf32> to vector<32x96xf32>
    %cst = arith.constant dense<0.000000e+00> : vector<16x96xf32>
    %7 = tpu.matmul %1, %6, %cst {dimension_numbers = #tpu.dot_dimension_numbers<[1], [0], [0], [1], [0, 0, 1, 1], [], []>} : vector<16x32xf32>, vector<32x96xf32>, vector<16x96xf32> -> vector<16x96xf32>
    %c0_5 = arith.constant 0 : index
    %c0_6 = arith.constant 0 : index
    %c0_7 = arith.constant 0 : index
    %8 = vector.load %arg3[%c0_5, %c0_6, %c0_7] : memref<2x1x96xf32, #tpu.memory_space<vmem>>, vector<1x1x96xf32>
    %9 = vector.shape_cast %8 : vector<1x1x96xf32> to vector<1x96xf32>
    %10 = vector.broadcast %9 : vector<1x96xf32> to vector<16x96xf32>
    %11 = arith.addf %7, %10 : vector<16x96xf32>
    %12 = vector.extract_strided_slice %11 {offsets = [0, 0], sizes = [16, 32], strides = [1, 1]} : vector<16x96xf32> to vector<16x32xf32>
    %13 = vector.extract_strided_slice %11 {offsets = [0, 32], sizes = [16, 32], strides = [1, 1]} : vector<16x96xf32> to vector<16x32xf32>
    %14 = vector.extract_strided_slice %11 {offsets = [0, 64], sizes = [16, 32], strides = [1, 1]} : vector<16x96xf32> to vector<16x32xf32>
    %15 = vector.shape_cast %12 : vector<16x32xf32> to vector<16x4x8xf32>
    %16 = tpu.transpose %15, [1, 0, 2] : vector<16x4x8xf32> -> vector<4x16x8xf32>
    %17 = vector.shape_cast %13 : vector<16x32xf32> to vector<16x4x8xf32>
    %18 = tpu.transpose %17, [1, 0, 2] : vector<16x4x8xf32> -> vector<4x16x8xf32>
    %19 = vector.shape_cast %14 : vector<16x32xf32> to vector<16x4x8xf32>
    %20 = tpu.transpose %19, [1, 0, 2] : vector<16x4x8xf32> -> vector<4x16x8xf32>
    "tpu.trace_start"() <{level = 10 : i32, message = "hqd,hkd->hqk"}> : () -> ()
    %cst_8 = arith.constant dense<0.000000e+00> : vector<4x16x16xf32>
    %21 = tpu.matmul %16, %18, %cst_8 {dimension_numbers = #tpu.dot_dimension_numbers<[2], [2], [1], [1], [0, 0, 0, 1, 1, 1], [0], [0]>} : vector<4x16x8xf32>, vector<4x16x8xf32>, vector<4x16x16xf32> -> vector<4x16x16xf32>
    "tpu.trace_stop"() : () -> ()
    %cst_9 = arith.constant 0.353553385 : f32
    %22 = vector.broadcast %cst_9 : f32 to vector<4x16x16xf32>
    %23 = arith.mulf %21, %22 : vector<4x16x16xf32>
    %24 = vector.shape_cast %4 : vector<16x16xi1> to vector<1x16x16xi1>
    %cst_10 = arith.constant -1.000000e+30 : f32
    %25 = vector.shape_cast %24 : vector<1x16x16xi1> to vector<1x16x16xi1>
    %26 = vector.broadcast %25 : vector<1x16x16xi1> to vector<4x16x16xi1>
    %27 = vector.broadcast %cst_10 : f32 to vector<4x16x16xf32>
    %28 = arith.select %26, %23, %27 : vector<4x16x16xi1>, vector<4x16x16xf32>
    %cst_11 = arith.constant dense<0xFF800000> : vector<4x16xf32>
    %29 = vector.multi_reduction <maximumf>, %28, %cst_11 [2] : vector<4x16x16xf32> to vector<4x16xf32>
    %30 = vector.shape_cast %29 : vector<4x16xf32> to vector<4x16x1xf32>
    %31 = vector.broadcast %30 : vector<4x16x1xf32> to vector<4x16x16xf32>
    %32 = arith.subf %28, %31 : vector<4x16x16xf32>
    %33 = math.exp %32 : vector<4x16x16xf32>
    %cst_12 = arith.constant dense<0.000000e+00> : vector<4x16xf32>
    %34 = vector.multi_reduction <add>, %33, %cst_12 [2] : vector<4x16x16xf32> to vector<4x16xf32>
    %35 = vector.shape_cast %34 : vector<4x16xf32> to vector<4x16x1xf32>
    %36 = vector.broadcast %35 : vector<4x16x1xf32> to vector<4x16x16xf32>
    %37 = arith.divf %33, %36 : vector<4x16x16xf32>
    "tpu.trace_start"() <{level = 10 : i32, message = "hqk,hkd->hqd"}> : () -> ()
    %cst_13 = arith.constant dense<0.000000e+00> : vector<4x16x8xf32>
    %38 = tpu.matmul %37, %20, %cst_13 {dimension_numbers = #tpu.dot_dimension_numbers<[2], [1], [1], [2], [0, 0, 0, 1, 1, 2], [0], [0]>} : vector<4x16x16xf32>, vector<4x16x8xf32>, vector<4x16x8xf32> -> vector<4x16x8xf32>
    "tpu.trace_stop"() : () -> ()
    %39 = tpu.transpose %38, [1, 0, 2] : vector<4x16x8xf32> -> vector<16x4x8xf32>
    %40 = vector.shape_cast %39 : vector<16x4x8xf32> to vector<16x32xf32>
    %c0_14 = arith.constant 0 : index
    %c0_15 = arith.constant 0 : index
    %c0_16 = arith.constant 0 : index
    %41 = vector.load %arg4[%c0_14, %c0_15, %c0_16] : memref<2x32x32xf32, #tpu.memory_space<vmem>>, vector<1x32x32xf32>
    %42 = vector.shape_cast %41 : vector<1x32x32xf32> to vector<32x32xf32>
    %cst_17 = arith.constant dense<0.000000e+00> : vector<16x32xf32>
    %43 = tpu.matmul %40, %42, %cst_17 {dimension_numbers = #tpu.dot_dimension_numbers<[1], [0], [0], [1], [0, 0, 1, 1], [], []>} : vector<16x32xf32>, vector<32x32xf32>, vector<16x32xf32> -> vector<16x32xf32>
    %c0_18 = arith.constant 0 : index
    %c0_19 = arith.constant 0 : index
    %c0_20 = arith.constant 0 : index
    %44 = vector.load %arg5[%c0_18, %c0_19, %c0_20] : memref<2x1x32xf32, #tpu.memory_space<vmem>>, vector<1x1x32xf32>
    %45 = vector.shape_cast %44 : vector<1x1x32xf32> to vector<1x32xf32>
    %46 = vector.broadcast %45 : vector<1x32xf32> to vector<16x32xf32>
    %47 = arith.addf %43, %46 : vector<16x32xf32>
    %48 = arith.addf %1, %47 : vector<16x32xf32>
    %c0_21 = arith.constant 0 : index
    %c0_22 = arith.constant 0 : index
    %c0_23 = arith.constant 0 : index
    %49 = vector.load %arg12[%c0_21, %c0_22, %c0_23] : memref<2x1x32xf32, #tpu.memory_space<vmem>>, vector<1x1x32xf32>
    %50 = vector.shape_cast %49 : vector<1x1x32xf32> to vector<1x32xf32>
    %c0_24 = arith.constant 0 : index
    %c0_25 = arith.constant 0 : index
    %c0_26 = arith.constant 0 : index
    %51 = vector.load %arg13[%c0_24, %c0_25, %c0_26] : memref<2x1x32xf32, #tpu.memory_space<vmem>>, vector<1x1x32xf32>
    %52 = vector.shape_cast %51 : vector<1x1x32xf32> to vector<1x32xf32>
    %cst_27 = arith.constant dense<0.000000e+00> : vector<16xf32>
    %53 = vector.multi_reduction <add>, %48, %cst_27 [1] : vector<16x32xf32> to vector<16xf32>
    %54 = vector.shape_cast %53 : vector<16xf32> to vector<16x1xf32>
    %cst_28 = arith.constant 3.200000e+01 : f32
    %55 = vector.broadcast %cst_28 : f32 to vector<16x1xf32>
    %56 = arith.divf %54, %55 : vector<16x1xf32>
    %57 = vector.broadcast %56 : vector<16x1xf32> to vector<16x32xf32>
    %58 = arith.subf %48, %57 : vector<16x32xf32>
    %59 = arith.mulf %58, %58 : vector<16x32xf32>
    %cst_29 = arith.constant dense<0.000000e+00> : vector<16xf32>
    %60 = vector.multi_reduction <add>, %59, %cst_29 [1] : vector<16x32xf32> to vector<16xf32>
    %61 = vector.shape_cast %60 : vector<16xf32> to vector<16x1xf32>
    %cst_30 = arith.constant 3.200000e+01 : f32
    %62 = vector.broadcast %cst_30 : f32 to vector<16x1xf32>
    %63 = arith.divf %61, %62 : vector<16x1xf32>
    %cst_31 = arith.constant 9.99999974E-6 : f32
    %64 = vector.broadcast %cst_31 : f32 to vector<16x1xf32>
    %65 = arith.addf %63, %64 : vector<16x1xf32>
    %66 = math.rsqrt %65 : vector<16x1xf32>
    %67 = vector.broadcast %66 : vector<16x1xf32> to vector<16x32xf32>
    %68 = arith.mulf %58, %67 : vector<16x32xf32>
    %69 = vector.broadcast %50 : vector<1x32xf32> to vector<16x32xf32>
    %70 = arith.mulf %68, %69 : vector<16x32xf32>
    %71 = vector.broadcast %52 : vector<1x32xf32> to vector<16x32xf32>
    %72 = arith.addf %70, %71 : vector<16x32xf32>
    %c0_32 = arith.constant 0 : index
    %c0_33 = arith.constant 0 : index
    %c0_34 = arith.constant 0 : index
    %73 = vector.load %arg6[%c0_32, %c0_33, %c0_34] : memref<2x32x32xf32, #tpu.memory_space<vmem>>, vector<1x32x32xf32>
    %74 = vector.shape_cast %73 : vector<1x32x32xf32> to vector<32x32xf32>
    %cst_35 = arith.constant dense<0.000000e+00> : vector<16x32xf32>
    %75 = tpu.matmul %72, %74, %cst_35 {dimension_numbers = #tpu.dot_dimension_numbers<[1], [0], [0], [1], [0, 0, 1, 1], [], []>} : vector<16x32xf32>, vector<32x32xf32>, vector<16x32xf32> -> vector<16x32xf32>
    %c0_36 = arith.constant 0 : index
    %c0_37 = arith.constant 0 : index
    %c0_38 = arith.constant 0 : index
    %76 = vector.load %arg7[%c0_36, %c0_37, %c0_38] : memref<2x1x32xf32, #tpu.memory_space<vmem>>, vector<1x1x32xf32>
    %77 = vector.shape_cast %76 : vector<1x1x32xf32> to vector<1x32xf32>
    %78 = vector.broadcast %77 : vector<1x32xf32> to vector<16x32xf32>
    %79 = arith.addf %75, %78 : vector<16x32xf32>
    %c0_39 = arith.constant 0 : index
    %c0_40 = arith.constant 0 : index
    %c0_41 = arith.constant 0 : index
    %80 = vector.load %arg8[%c0_39, %c0_40, %c0_41] : memref<2x32x64xf32, #tpu.memory_space<vmem>>, vector<1x32x64xf32>
    %81 = vector.shape_cast %80 : vector<1x32x64xf32> to vector<32x64xf32>
    %cst_42 = arith.constant dense<0.000000e+00> : vector<16x64xf32>
    %82 = tpu.matmul %1, %81, %cst_42 {dimension_numbers = #tpu.dot_dimension_numbers<[1], [0], [0], [1], [0, 0, 1, 1], [], []>} : vector<16x32xf32>, vector<32x64xf32>, vector<16x64xf32> -> vector<16x64xf32>
    %c0_43 = arith.constant 0 : index
    %c0_44 = arith.constant 0 : index
    %c0_45 = arith.constant 0 : index
    %83 = vector.load %arg9[%c0_43, %c0_44, %c0_45] : memref<2x1x64xf32, #tpu.memory_space<vmem>>, vector<1x1x64xf32>
    %84 = vector.shape_cast %83 : vector<1x1x64xf32> to vector<1x64xf32>
    %85 = vector.broadcast %84 : vector<1x64xf32> to vector<16x64xf32>
    %86 = arith.addf %82, %85 : vector<16x64xf32>
    %87 = vector.extract_strided_slice %86 {offsets = [0, 0], sizes = [16, 32], strides = [1, 1]} : vector<16x64xf32> to vector<16x32xf32>
    %88 = vector.extract_strided_slice %86 {offsets = [0, 32], sizes = [16, 32], strides = [1, 1]} : vector<16x64xf32> to vector<16x32xf32>
    %89 = vector.shape_cast %79 : vector<16x32xf32> to vector<16x4x8xf32>
    %90 = tpu.transpose %89, [1, 0, 2] : vector<16x4x8xf32> -> vector<4x16x8xf32>
    %91 = vector.shape_cast %87 : vector<16x32xf32> to vector<16x4x8xf32>
    %92 = tpu.transpose %91, [1, 0, 2] : vector<16x4x8xf32> -> vector<4x16x8xf32>
    %93 = vector.shape_cast %88 : vector<16x32xf32> to vector<16x4x8xf32>
    %94 = tpu.transpose %93, [1, 0, 2] : vector<16x4x8xf32> -> vector<4x16x8xf32>
    "tpu.trace_start"() <{level = 10 : i32, message = "hqd,hkd->hqk"}> : () -> ()
    %cst_46 = arith.constant dense<0.000000e+00> : vector<4x16x16xf32>
    %95 = tpu.matmul %90, %92, %cst_46 {dimension_numbers = #tpu.dot_dimension_numbers<[2], [2], [1], [1], [0, 0, 0, 1, 1, 1], [0], [0]>} : vector<4x16x8xf32>, vector<4x16x8xf32>, vector<4x16x16xf32> -> vector<4x16x16xf32>
    "tpu.trace_stop"() : () -> ()
    %cst_47 = arith.constant 0.353553385 : f32
    %96 = vector.broadcast %cst_47 : f32 to vector<4x16x16xf32>
    %97 = arith.mulf %95, %96 : vector<4x16x16xf32>
    %98 = vector.shape_cast %4 : vector<16x16xi1> to vector<1x16x16xi1>
    %cst_48 = arith.constant -1.000000e+30 : f32
    %99 = vector.shape_cast %98 : vector<1x16x16xi1> to vector<1x16x16xi1>
    %100 = vector.broadcast %99 : vector<1x16x16xi1> to vector<4x16x16xi1>
    %101 = vector.broadcast %cst_48 : f32 to vector<4x16x16xf32>
    %102 = arith.select %100, %97, %101 : vector<4x16x16xi1>, vector<4x16x16xf32>
    %cst_49 = arith.constant dense<0xFF800000> : vector<4x16xf32>
    %103 = vector.multi_reduction <maximumf>, %102, %cst_49 [2] : vector<4x16x16xf32> to vector<4x16xf32>
    %104 = vector.shape_cast %103 : vector<4x16xf32> to vector<4x16x1xf32>
    %105 = vector.broadcast %104 : vector<4x16x1xf32> to vector<4x16x16xf32>
    %106 = arith.subf %102, %105 : vector<4x16x16xf32>
    %107 = math.exp %106 : vector<4x16x16xf32>
    %cst_50 = arith.constant dense<0.000000e+00> : vector<4x16xf32>
    %108 = vector.multi_reduction <add>, %107, %cst_50 [2] : vector<4x16x16xf32> to vector<4x16xf32>
    %109 = vector.shape_cast %108 : vector<4x16xf32> to vector<4x16x1xf32>
    %110 = vector.broadcast %109 : vector<4x16x1xf32> to vector<4x16x16xf32>
    %111 = arith.divf %107, %110 : vector<4x16x16xf32>
    "tpu.trace_start"() <{level = 10 : i32, message = "hqk,hkd->hqd"}> : () -> ()
    %cst_51 = arith.constant dense<0.000000e+00> : vector<4x16x8xf32>
    %112 = tpu.matmul %111, %94, %cst_51 {dimension_numbers = #tpu.dot_dimension_numbers<[2], [1], [1], [2], [0, 0, 0, 1, 1, 2], [0], [0]>} : vector<4x16x16xf32>, vector<4x16x8xf32>, vector<4x16x8xf32> -> vector<4x16x8xf32>
    "tpu.trace_stop"() : () -> ()
    %113 = tpu.transpose %112, [1, 0, 2] : vector<4x16x8xf32> -> vector<16x4x8xf32>
    %114 = vector.shape_cast %113 : vector<16x4x8xf32> to vector<16x32xf32>
    %c0_52 = arith.constant 0 : index
    %c0_53 = arith.constant 0 : index
    %c0_54 = arith.constant 0 : index
    %115 = vector.load %arg10[%c0_52, %c0_53, %c0_54] : memref<2x32x32xf32, #tpu.memory_space<vmem>>, vector<1x32x32xf32>
    %116 = vector.shape_cast %115 : vector<1x32x32xf32> to vector<32x32xf32>
    %cst_55 = arith.constant dense<0.000000e+00> : vector<16x32xf32>
    %117 = tpu.matmul %114, %116, %cst_55 {dimension_numbers = #tpu.dot_dimension_numbers<[1], [0], [0], [1], [0, 0, 1, 1], [], []>} : vector<16x32xf32>, vector<32x32xf32>, vector<16x32xf32> -> vector<16x32xf32>
    %c0_56 = arith.constant 0 : index
    %c0_57 = arith.constant 0 : index
    %c0_58 = arith.constant 0 : index
    %118 = vector.load %arg11[%c0_56, %c0_57, %c0_58] : memref<2x1x32xf32, #tpu.memory_space<vmem>>, vector<1x1x32xf32>
    %119 = vector.shape_cast %118 : vector<1x1x32xf32> to vector<1x32xf32>
    %120 = vector.broadcast %119 : vector<1x32xf32> to vector<16x32xf32>
    %121 = arith.addf %117, %120 : vector<16x32xf32>
    %122 = arith.addf %72, %121 : vector<16x32xf32>
    %c0_59 = arith.constant 0 : index
    %c0_60 = arith.constant 0 : index
    %c0_61 = arith.constant 0 : index
    %123 = vector.load %arg14[%c0_59, %c0_60, %c0_61] : memref<2x1x32xf32, #tpu.memory_space<vmem>>, vector<1x1x32xf32>
    %124 = vector.shape_cast %123 : vector<1x1x32xf32> to vector<1x32xf32>
    %c0_62 = arith.constant 0 : index
    %c0_63 = arith.constant 0 : index
    %c0_64 = arith.constant 0 : index
    %125 = vector.load %arg15[%c0_62, %c0_63, %c0_64] : memref<2x1x32xf32, #tpu.memory_space<vmem>>, vector<1x1x32xf32>
    %126 = vector.shape_cast %125 : vector<1x1x32xf32> to vector<1x32xf32>
    %cst_65 = arith.constant dense<0.000000e+00> : vector<16xf32>
    %127 = vector.multi_reduction <add>, %122, %cst_65 [1] : vector<16x32xf32> to vector<16xf32>
    %128 = vector.shape_cast %127 : vector<16xf32> to vector<16x1xf32>
    %cst_66 = arith.constant 3.200000e+01 : f32
    %129 = vector.broadcast %cst_66 : f32 to vector<16x1xf32>
    %130 = arith.divf %128, %129 : vector<16x1xf32>
    %131 = vector.broadcast %130 : vector<16x1xf32> to vector<16x32xf32>
    %132 = arith.subf %122, %131 : vector<16x32xf32>
    %133 = arith.mulf %132, %132 : vector<16x32xf32>
    %cst_67 = arith.constant dense<0.000000e+00> : vector<16xf32>
    %134 = vector.multi_reduction <add>, %133, %cst_67 [1] : vector<16x32xf32> to vector<16xf32>
    %135 = vector.shape_cast %134 : vector<16xf32> to vector<16x1xf32>
    %cst_68 = arith.constant 3.200000e+01 : f32
    %136 = vector.broadcast %cst_68 : f32 to vector<16x1xf32>
    %137 = arith.divf %135, %136 : vector<16x1xf32>
    %cst_69 = arith.constant 9.99999974E-6 : f32
    %138 = vector.broadcast %cst_69 : f32 to vector<16x1xf32>
    %139 = arith.addf %137, %138 : vector<16x1xf32>
    %140 = math.rsqrt %139 : vector<16x1xf32>
    %141 = vector.broadcast %140 : vector<16x1xf32> to vector<16x32xf32>
    %142 = arith.mulf %132, %141 : vector<16x32xf32>
    %143 = vector.broadcast %124 : vector<1x32xf32> to vector<16x32xf32>
    %144 = arith.mulf %142, %143 : vector<16x32xf32>
    %145 = vector.broadcast %126 : vector<1x32xf32> to vector<16x32xf32>
    %146 = arith.addf %144, %145 : vector<16x32xf32>
    %cst_70 = arith.constant 0.000000e+00 : f32
    %147 = vector.broadcast %cst_70 : f32 to vector<16x32xf32>
    %c0_71 = arith.constant 0 : index
    %c0_72 = arith.constant 0 : index
    %c0_73 = arith.constant 0 : index
    %148 = vector.load %arg18[%c0_71, %c0_72, %c0_73] : memref<2x32x2048xf32, #tpu.memory_space<vmem>>, vector<1x32x512xf32>
    %149 = vector.shape_cast %148 : vector<1x32x512xf32> to vector<32x512xf32>
    %cst_74 = arith.constant dense<0.000000e+00> : vector<16x512xf32>
    %150 = tpu.matmul %146, %149, %cst_74 {dimension_numbers = #tpu.dot_dimension_numbers<[1], [0], [0], [1], [0, 0, 1, 1], [], []>} : vector<16x32xf32>, vector<32x512xf32>, vector<16x512xf32> -> vector<16x512xf32>
    %c0_75 = arith.constant 0 : index
    %c0_76 = arith.constant 0 : index
    %c0_77 = arith.constant 0 : index
    %151 = vector.load %arg19[%c0_75, %c0_76, %c0_77] : memref<2x1x2048xf32, #tpu.memory_space<vmem>>, vector<1x1x512xf32>
    %152 = vector.shape_cast %151 : vector<1x1x512xf32> to vector<1x512xf32>
    %153 = vector.broadcast %152 : vector<1x512xf32> to vector<16x512xf32>
    %154 = arith.addf %150, %153 : vector<16x512xf32>
    %cst_78 = arith.constant 0.000000e+00 : f32
    %155 = vector.broadcast %cst_78 : f32 to vector<16x512xf32>
    %156 = arith.maximumf %154, %155 : vector<16x512xf32>
    %c0_79 = arith.constant 0 : index
    %c0_80 = arith.constant 0 : index
    %c0_81 = arith.constant 0 : index
    %157 = vector.load %arg20[%c0_79, %c0_80, %c0_81] : memref<2x2048x32xf32, #tpu.memory_space<vmem>>, vector<1x512x32xf32>
    %158 = vector.shape_cast %157 : vector<1x512x32xf32> to vector<512x32xf32>
    %cst_82 = arith.constant dense<0.000000e+00> : vector<16x32xf32>
    %159 = tpu.matmul %156, %158, %cst_82 {dimension_numbers = #tpu.dot_dimension_numbers<[1], [0], [0], [1], [0, 0, 1, 1], [], []>} : vector<16x512xf32>, vector<512x32xf32>, vector<16x32xf32> -> vector<16x32xf32>
    %160 = arith.addf %147, %159 : vector<16x32xf32>
    %c0_83 = arith.constant 0 : index
    %c0_84 = arith.constant 0 : index
    %c512 = arith.constant 512 : index
    %161 = vector.load %arg18[%c0_83, %c0_84, %c512] : memref<2x32x2048xf32, #tpu.memory_space<vmem>>, vector<1x32x512xf32>
    %162 = vector.shape_cast %161 : vector<1x32x512xf32> to vector<32x512xf32>
    %cst_85 = arith.constant dense<0.000000e+00> : vector<16x512xf32>
    %163 = tpu.matmul %146, %162, %cst_85 {dimension_numbers = #tpu.dot_dimension_numbers<[1], [0], [0], [1], [0, 0, 1, 1], [], []>} : vector<16x32xf32>, vector<32x512xf32>, vector<16x512xf32> -> vector<16x512xf32>
    %c0_86 = arith.constant 0 : index
    %c0_87 = arith.constant 0 : index
    %c512_88 = arith.constant 512 : index
    %164 = vector.load %arg19[%c0_86, %c0_87, %c512_88] : memref<2x1x2048xf32, #tpu.memory_space<vmem>>, vector<1x1x512xf32>
    %165 = vector.shape_cast %164 : vector<1x1x512xf32> to vector<1x512xf32>
    %166 = vector.broadcast %165 : vector<1x512xf32> to vector<16x512xf32>
    %167 = arith.addf %163, %166 : vector<16x512xf32>
    %cst_89 = arith.constant 0.000000e+00 : f32
    %168 = vector.broadcast %cst_89 : f32 to vector<16x512xf32>
    %169 = arith.maximumf %167, %168 : vector<16x512xf32>
    %c0_90 = arith.constant 0 : index
    %c512_91 = arith.constant 512 : index
    %c0_92 = arith.constant 0 : index
    %170 = vector.load %arg20[%c0_90, %c512_91, %c0_92] : memref<2x2048x32xf32, #tpu.memory_space<vmem>>, vector<1x512x32xf32>
    %171 = vector.shape_cast %170 : vector<1x512x32xf32> to vector<512x32xf32>
    %cst_93 = arith.constant dense<0.000000e+00> : vector<16x32xf32>
    %172 = tpu.matmul %169, %171, %cst_93 {dimension_numbers = #tpu.dot_dimension_numbers<[1], [0], [0], [1], [0, 0, 1, 1], [], []>} : vector<16x512xf32>, vector<512x32xf32>, vector<16x32xf32> -> vector<16x32xf32>
    %173 = arith.addf %160, %172 : vector<16x32xf32>
    %c0_94 = arith.constant 0 : index
    %c0_95 = arith.constant 0 : index
    %c1024 = arith.constant 1024 : index
    %174 = vector.load %arg18[%c0_94, %c0_95, %c1024] : memref<2x32x2048xf32, #tpu.memory_space<vmem>>, vector<1x32x512xf32>
    %175 = vector.shape_cast %174 : vector<1x32x512xf32> to vector<32x512xf32>
    %cst_96 = arith.constant dense<0.000000e+00> : vector<16x512xf32>
    %176 = tpu.matmul %146, %175, %cst_96 {dimension_numbers = #tpu.dot_dimension_numbers<[1], [0], [0], [1], [0, 0, 1, 1], [], []>} : vector<16x32xf32>, vector<32x512xf32>, vector<16x512xf32> -> vector<16x512xf32>
    %c0_97 = arith.constant 0 : index
    %c0_98 = arith.constant 0 : index
    %c1024_99 = arith.constant 1024 : index
    %177 = vector.load %arg19[%c0_97, %c0_98, %c1024_99] : memref<2x1x2048xf32, #tpu.memory_space<vmem>>, vector<1x1x512xf32>
    %178 = vector.shape_cast %177 : vector<1x1x512xf32> to vector<1x512xf32>
    %179 = vector.broadcast %178 : vector<1x512xf32> to vector<16x512xf32>
    %180 = arith.addf %176, %179 : vector<16x512xf32>
    %cst_100 = arith.constant 0.000000e+00 : f32
    %181 = vector.broadcast %cst_100 : f32 to vector<16x512xf32>
    %182 = arith.maximumf %180, %181 : vector<16x512xf32>
    %c0_101 = arith.constant 0 : index
    %c1024_102 = arith.constant 1024 : index
    %c0_103 = arith.constant 0 : index
    %183 = vector.load %arg20[%c0_101, %c1024_102, %c0_103] : memref<2x2048x32xf32, #tpu.memory_space<vmem>>, vector<1x512x32xf32>
    %184 = vector.shape_cast %183 : vector<1x512x32xf32> to vector<512x32xf32>
    %cst_104 = arith.constant dense<0.000000e+00> : vector<16x32xf32>
    %185 = tpu.matmul %182, %184, %cst_104 {dimension_numbers = #tpu.dot_dimension_numbers<[1], [0], [0], [1], [0, 0, 1, 1], [], []>} : vector<16x512xf32>, vector<512x32xf32>, vector<16x32xf32> -> vector<16x32xf32>
    %186 = arith.addf %173, %185 : vector<16x32xf32>
    %c0_105 = arith.constant 0 : index
    %c0_106 = arith.constant 0 : index
    %c1536 = arith.constant 1536 : index
    %187 = vector.load %arg18[%c0_105, %c0_106, %c1536] : memref<2x32x2048xf32, #tpu.memory_space<vmem>>, vector<1x32x512xf32>
    %188 = vector.shape_cast %187 : vector<1x32x512xf32> to vector<32x512xf32>
    %cst_107 = arith.constant dense<0.000000e+00> : vector<16x512xf32>
    %189 = tpu.matmul %146, %188, %cst_107 {dimension_numbers = #tpu.dot_dimension_numbers<[1], [0], [0], [1], [0, 0, 1, 1], [], []>} : vector<16x32xf32>, vector<32x512xf32>, vector<16x512xf32> -> vector<16x512xf32>
    %c0_108 = arith.constant 0 : index
    %c0_109 = arith.constant 0 : index
    %c1536_110 = arith.constant 1536 : index
    %190 = vector.load %arg19[%c0_108, %c0_109, %c1536_110] : memref<2x1x2048xf32, #tpu.memory_space<vmem>>, vector<1x1x512xf32>
    %191 = vector.shape_cast %190 : vector<1x1x512xf32> to vector<1x512xf32>
    %192 = vector.broadcast %191 : vector<1x512xf32> to vector<16x512xf32>
    %193 = arith.addf %189, %192 : vector<16x512xf32>
    %cst_111 = arith.constant 0.000000e+00 : f32
    %194 = vector.broadcast %cst_111 : f32 to vector<16x512xf32>
    %195 = arith.maximumf %193, %194 : vector<16x512xf32>
    %c0_112 = arith.constant 0 : index
    %c1536_113 = arith.constant 1536 : index
    %c0_114 = arith.constant 0 : index
    %196 = vector.load %arg20[%c0_112, %c1536_113, %c0_114] : memref<2x2048x32xf32, #tpu.memory_space<vmem>>, vector<1x512x32xf32>
    %197 = vector.shape_cast %196 : vector<1x512x32xf32> to vector<512x32xf32>
    %cst_115 = arith.constant dense<0.000000e+00> : vector<16x32xf32>
    %198 = tpu.matmul %195, %197, %cst_115 {dimension_numbers = #tpu.dot_dimension_numbers<[1], [0], [0], [1], [0, 0, 1, 1], [], []>} : vector<16x512xf32>, vector<512x32xf32>, vector<16x32xf32> -> vector<16x32xf32>
    %199 = arith.addf %186, %198 : vector<16x32xf32>
    %c0_116 = arith.constant 0 : index
    %c0_117 = arith.constant 0 : index
    %c0_118 = arith.constant 0 : index
    %200 = vector.load %arg21[%c0_116, %c0_117, %c0_118] : memref<2x1x32xf32, #tpu.memory_space<vmem>>, vector<1x1x32xf32>
    %201 = vector.shape_cast %200 : vector<1x1x32xf32> to vector<1x32xf32>
    %202 = vector.broadcast %201 : vector<1x32xf32> to vector<16x32xf32>
    %203 = arith.addf %199, %202 : vector<16x32xf32>
    %204 = arith.addf %146, %203 : vector<16x32xf32>
    %c0_119 = arith.constant 0 : index
    %c0_120 = arith.constant 0 : index
    %c0_121 = arith.constant 0 : index
    %205 = vector.load %arg16[%c0_119, %c0_120, %c0_121] : memref<2x1x32xf32, #tpu.memory_space<vmem>>, vector<1x1x32xf32>
    %206 = vector.shape_cast %205 : vector<1x1x32xf32> to vector<1x32xf32>
    %c0_122 = arith.constant 0 : index
    %c0_123 = arith.constant 0 : index
    %c0_124 = arith.constant 0 : index
    %207 = vector.load %arg17[%c0_122, %c0_123, %c0_124] : memref<2x1x32xf32, #tpu.memory_space<vmem>>, vector<1x1x32xf32>
    %208 = vector.shape_cast %207 : vector<1x1x32xf32> to vector<1x32xf32>
    %cst_125 = arith.constant dense<0.000000e+00> : vector<16xf32>
    %209 = vector.multi_reduction <add>, %204, %cst_125 [1] : vector<16x32xf32> to vector<16xf32>
    %210 = vector.shape_cast %209 : vector<16xf32> to vector<16x1xf32>
    %cst_126 = arith.constant 3.200000e+01 : f32
    %211 = vector.broadcast %cst_126 : f32 to vector<16x1xf32>
    %212 = arith.divf %210, %211 : vector<16x1xf32>
    %213 = vector.broadcast %212 : vector<16x1xf32> to vector<16x32xf32>
    %214 = arith.subf %204, %213 : vector<16x32xf32>
    %215 = arith.mulf %214, %214 : vector<16x32xf32>
    %cst_127 = arith.constant dense<0.000000e+00> : vector<16xf32>
    %216 = vector.multi_reduction <add>, %215, %cst_127 [1] : vector<16x32xf32> to vector<16xf32>
    %217 = vector.shape_cast %216 : vector<16xf32> to vector<16x1xf32>
    %cst_128 = arith.constant 3.200000e+01 : f32
    %218 = vector.broadcast %cst_128 : f32 to vector<16x1xf32>
    %219 = arith.divf %217, %218 : vector<16x1xf32>
    %cst_129 = arith.constant 9.99999974E-6 : f32
    %220 = vector.broadcast %cst_129 : f32 to vector<16x1xf32>
    %221 = arith.addf %219, %220 : vector<16x1xf32>
    %222 = math.rsqrt %221 : vector<16x1xf32>
    %223 = vector.broadcast %222 : vector<16x1xf32> to vector<16x32xf32>
    %224 = arith.mulf %214, %223 : vector<16x32xf32>
    %225 = vector.broadcast %206 : vector<1x32xf32> to vector<16x32xf32>
    %226 = arith.mulf %224, %225 : vector<16x32xf32>
    %227 = vector.broadcast %208 : vector<1x32xf32> to vector<16x32xf32>
    %228 = arith.addf %226, %227 : vector<16x32xf32>
    %c1 = arith.constant 1 : index
    %c0_130 = arith.constant 0 : index
    %c0_131 = arith.constant 0 : index
    %229 = vector.load %arg2[%c1, %c0_130, %c0_131] : memref<2x32x96xf32, #tpu.memory_space<vmem>>, vector<1x32x96xf32>
    %230 = vector.shape_cast %229 : vector<1x32x96xf32> to vector<32x96xf32>
    %cst_132 = arith.constant dense<0.000000e+00> : vector<16x96xf32>
    %231 = tpu.matmul %228, %230, %cst_132 {dimension_numbers = #tpu.dot_dimension_numbers<[1], [0], [0], [1], [0, 0, 1, 1], [], []>} : vector<16x32xf32>, vector<32x96xf32>, vector<16x96xf32> -> vector<16x96xf32>
    %c1_133 = arith.constant 1 : index
    %c0_134 = arith.constant 0 : index
    %c0_135 = arith.constant 0 : index
    %232 = vector.load %arg3[%c1_133, %c0_134, %c0_135] : memref<2x1x96xf32, #tpu.memory_space<vmem>>, vector<1x1x96xf32>
    %233 = vector.shape_cast %232 : vector<1x1x96xf32> to vector<1x96xf32>
    %234 = vector.broadcast %233 : vector<1x96xf32> to vector<16x96xf32>
    %235 = arith.addf %231, %234 : vector<16x96xf32>
    %236 = vector.extract_strided_slice %235 {offsets = [0, 0], sizes = [16, 32], strides = [1, 1]} : vector<16x96xf32> to vector<16x32xf32>
    %237 = vector.extract_strided_slice %235 {offsets = [0, 32], sizes = [16, 32], strides = [1, 1]} : vector<16x96xf32> to vector<16x32xf32>
    %238 = vector.extract_strided_slice %235 {offsets = [0, 64], sizes = [16, 32], strides = [1, 1]} : vector<16x96xf32> to vector<16x32xf32>
    %239 = vector.shape_cast %236 : vector<16x32xf32> to vector<16x4x8xf32>
    %240 = tpu.transpose %239, [1, 0, 2] : vector<16x4x8xf32> -> vector<4x16x8xf32>
    %241 = vector.shape_cast %237 : vector<16x32xf32> to vector<16x4x8xf32>
    %242 = tpu.transpose %241, [1, 0, 2] : vector<16x4x8xf32> -> vector<4x16x8xf32>
    %243 = vector.shape_cast %238 : vector<16x32xf32> to vector<16x4x8xf32>
    %244 = tpu.transpose %243, [1, 0, 2] : vector<16x4x8xf32> -> vector<4x16x8xf32>
    "tpu.trace_start"() <{level = 10 : i32, message = "hqd,hkd->hqk"}> : () -> ()
    %cst_136 = arith.constant dense<0.000000e+00> : vector<4x16x16xf32>
    %245 = tpu.matmul %240, %242, %cst_136 {dimension_numbers = #tpu.dot_dimension_numbers<[2], [2], [1], [1], [0, 0, 0, 1, 1, 1], [0], [0]>} : vector<4x16x8xf32>, vector<4x16x8xf32>, vector<4x16x16xf32> -> vector<4x16x16xf32>
    "tpu.trace_stop"() : () -> ()
    %cst_137 = arith.constant 0.353553385 : f32
    %246 = vector.broadcast %cst_137 : f32 to vector<4x16x16xf32>
    %247 = arith.mulf %245, %246 : vector<4x16x16xf32>
    %248 = vector.shape_cast %4 : vector<16x16xi1> to vector<1x16x16xi1>
    %cst_138 = arith.constant -1.000000e+30 : f32
    %249 = vector.shape_cast %248 : vector<1x16x16xi1> to vector<1x16x16xi1>
    %250 = vector.broadcast %249 : vector<1x16x16xi1> to vector<4x16x16xi1>
    %251 = vector.broadcast %cst_138 : f32 to vector<4x16x16xf32>
    %252 = arith.select %250, %247, %251 : vector<4x16x16xi1>, vector<4x16x16xf32>
    %cst_139 = arith.constant dense<0xFF800000> : vector<4x16xf32>
    %253 = vector.multi_reduction <maximumf>, %252, %cst_139 [2] : vector<4x16x16xf32> to vector<4x16xf32>
    %254 = vector.shape_cast %253 : vector<4x16xf32> to vector<4x16x1xf32>
    %255 = vector.broadcast %254 : vector<4x16x1xf32> to vector<4x16x16xf32>
    %256 = arith.subf %252, %255 : vector<4x16x16xf32>
    %257 = math.exp %256 : vector<4x16x16xf32>
    %cst_140 = arith.constant dense<0.000000e+00> : vector<4x16xf32>
    %258 = vector.multi_reduction <add>, %257, %cst_140 [2] : vector<4x16x16xf32> to vector<4x16xf32>
    %259 = vector.shape_cast %258 : vector<4x16xf32> to vector<4x16x1xf32>
    %260 = vector.broadcast %259 : vector<4x16x1xf32> to vector<4x16x16xf32>
    %261 = arith.divf %257, %260 : vector<4x16x16xf32>
    "tpu.trace_start"() <{level = 10 : i32, message = "hqk,hkd->hqd"}> : () -> ()
    %cst_141 = arith.constant dense<0.000000e+00> : vector<4x16x8xf32>
    %262 = tpu.matmul %261, %244, %cst_141 {dimension_numbers = #tpu.dot_dimension_numbers<[2], [1], [1], [2], [0, 0, 0, 1, 1, 2], [0], [0]>} : vector<4x16x16xf32>, vector<4x16x8xf32>, vector<4x16x8xf32> -> vector<4x16x8xf32>
    "tpu.trace_stop"() : () -> ()
    %263 = tpu.transpose %262, [1, 0, 2] : vector<4x16x8xf32> -> vector<16x4x8xf32>
    %264 = vector.shape_cast %263 : vector<16x4x8xf32> to vector<16x32xf32>
    %c1_142 = arith.constant 1 : index
    %c0_143 = arith.constant 0 : index
    %c0_144 = arith.constant 0 : index
    %265 = vector.load %arg4[%c1_142, %c0_143, %c0_144] : memref<2x32x32xf32, #tpu.memory_space<vmem>>, vector<1x32x32xf32>
    %266 = vector.shape_cast %265 : vector<1x32x32xf32> to vector<32x32xf32>
    %cst_145 = arith.constant dense<0.000000e+00> : vector<16x32xf32>
    %267 = tpu.matmul %264, %266, %cst_145 {dimension_numbers = #tpu.dot_dimension_numbers<[1], [0], [0], [1], [0, 0, 1, 1], [], []>} : vector<16x32xf32>, vector<32x32xf32>, vector<16x32xf32> -> vector<16x32xf32>
    %c1_146 = arith.constant 1 : index
    %c0_147 = arith.constant 0 : index
    %c0_148 = arith.constant 0 : index
    %268 = vector.load %arg5[%c1_146, %c0_147, %c0_148] : memref<2x1x32xf32, #tpu.memory_space<vmem>>, vector<1x1x32xf32>
    %269 = vector.shape_cast %268 : vector<1x1x32xf32> to vector<1x32xf32>
    %270 = vector.broadcast %269 : vector<1x32xf32> to vector<16x32xf32>
    %271 = arith.addf %267, %270 : vector<16x32xf32>
    %272 = arith.addf %228, %271 : vector<16x32xf32>
    %c1_149 = arith.constant 1 : index
    %c0_150 = arith.constant 0 : index
    %c0_151 = arith.constant 0 : index
    %273 = vector.load %arg12[%c1_149, %c0_150, %c0_151] : memref<2x1x32xf32, #tpu.memory_space<vmem>>, vector<1x1x32xf32>
    %274 = vector.shape_cast %273 : vector<1x1x32xf32> to vector<1x32xf32>
    %c1_152 = arith.constant 1 : index
    %c0_153 = arith.constant 0 : index
    %c0_154 = arith.constant 0 : index
    %275 = vector.load %arg13[%c1_152, %c0_153, %c0_154] : memref<2x1x32xf32, #tpu.memory_space<vmem>>, vector<1x1x32xf32>
    %276 = vector.shape_cast %275 : vector<1x1x32xf32> to vector<1x32xf32>
    %cst_155 = arith.constant dense<0.000000e+00> : vector<16xf32>
    %277 = vector.multi_reduction <add>, %272, %cst_155 [1] : vector<16x32xf32> to vector<16xf32>
    %278 = vector.shape_cast %277 : vector<16xf32> to vector<16x1xf32>
    %cst_156 = arith.constant 3.200000e+01 : f32
    %279 = vector.broadcast %cst_156 : f32 to vector<16x1xf32>
    %280 = arith.divf %278, %279 : vector<16x1xf32>
    %281 = vector.broadcast %280 : vector<16x1xf32> to vector<16x32xf32>
    %282 = arith.subf %272, %281 : vector<16x32xf32>
    %283 = arith.mulf %282, %282 : vector<16x32xf32>
    %cst_157 = arith.constant dense<0.000000e+00> : vector<16xf32>
    %284 = vector.multi_reduction <add>, %283, %cst_157 [1] : vector<16x32xf32> to vector<16xf32>
    %285 = vector.shape_cast %284 : vector<16xf32> to vector<16x1xf32>
    %cst_158 = arith.constant 3.200000e+01 : f32
    %286 = vector.broadcast %cst_158 : f32 to vector<16x1xf32>
    %287 = arith.divf %285, %286 : vector<16x1xf32>
    %cst_159 = arith.constant 9.99999974E-6 : f32
    %288 = vector.broadcast %cst_159 : f32 to vector<16x1xf32>
    %289 = arith.addf %287, %288 : vector<16x1xf32>
    %290 = math.rsqrt %289 : vector<16x1xf32>
    %291 = vector.broadcast %290 : vector<16x1xf32> to vector<16x32xf32>
    %292 = arith.mulf %282, %291 : vector<16x32xf32>
    %293 = vector.broadcast %274 : vector<1x32xf32> to vector<16x32xf32>
    %294 = arith.mulf %292, %293 : vector<16x32xf32>
    %295 = vector.broadcast %276 : vector<1x32xf32> to vector<16x32xf32>
    %296 = arith.addf %294, %295 : vector<16x32xf32>
    %c1_160 = arith.constant 1 : index
    %c0_161 = arith.constant 0 : index
    %c0_162 = arith.constant 0 : index
    %297 = vector.load %arg6[%c1_160, %c0_161, %c0_162] : memref<2x32x32xf32, #tpu.memory_space<vmem>>, vector<1x32x32xf32>
    %298 = vector.shape_cast %297 : vector<1x32x32xf32> to vector<32x32xf32>
    %cst_163 = arith.constant dense<0.000000e+00> : vector<16x32xf32>
    %299 = tpu.matmul %296, %298, %cst_163 {dimension_numbers = #tpu.dot_dimension_numbers<[1], [0], [0], [1], [0, 0, 1, 1], [], []>} : vector<16x32xf32>, vector<32x32xf32>, vector<16x32xf32> -> vector<16x32xf32>
    %c1_164 = arith.constant 1 : index
    %c0_165 = arith.constant 0 : index
    %c0_166 = arith.constant 0 : index
    %300 = vector.load %arg7[%c1_164, %c0_165, %c0_166] : memref<2x1x32xf32, #tpu.memory_space<vmem>>, vector<1x1x32xf32>
    %301 = vector.shape_cast %300 : vector<1x1x32xf32> to vector<1x32xf32>
    %302 = vector.broadcast %301 : vector<1x32xf32> to vector<16x32xf32>
    %303 = arith.addf %299, %302 : vector<16x32xf32>
    %c1_167 = arith.constant 1 : index
    %c0_168 = arith.constant 0 : index
    %c0_169 = arith.constant 0 : index
    %304 = vector.load %arg8[%c1_167, %c0_168, %c0_169] : memref<2x32x64xf32, #tpu.memory_space<vmem>>, vector<1x32x64xf32>
    %305 = vector.shape_cast %304 : vector<1x32x64xf32> to vector<32x64xf32>
    %cst_170 = arith.constant dense<0.000000e+00> : vector<16x64xf32>
    %306 = tpu.matmul %1, %305, %cst_170 {dimension_numbers = #tpu.dot_dimension_numbers<[1], [0], [0], [1], [0, 0, 1, 1], [], []>} : vector<16x32xf32>, vector<32x64xf32>, vector<16x64xf32> -> vector<16x64xf32>
    %c1_171 = arith.constant 1 : index
    %c0_172 = arith.constant 0 : index
    %c0_173 = arith.constant 0 : index
    %307 = vector.load %arg9[%c1_171, %c0_172, %c0_173] : memref<2x1x64xf32, #tpu.memory_space<vmem>>, vector<1x1x64xf32>
    %308 = vector.shape_cast %307 : vector<1x1x64xf32> to vector<1x64xf32>
    %309 = vector.broadcast %308 : vector<1x64xf32> to vector<16x64xf32>
    %310 = arith.addf %306, %309 : vector<16x64xf32>
    %311 = vector.extract_strided_slice %310 {offsets = [0, 0], sizes = [16, 32], strides = [1, 1]} : vector<16x64xf32> to vector<16x32xf32>
    %312 = vector.extract_strided_slice %310 {offsets = [0, 32], sizes = [16, 32], strides = [1, 1]} : vector<16x64xf32> to vector<16x32xf32>
    %313 = vector.shape_cast %303 : vector<16x32xf32> to vector<16x4x8xf32>
    %314 = tpu.transpose %313, [1, 0, 2] : vector<16x4x8xf32> -> vector<4x16x8xf32>
    %315 = vector.shape_cast %311 : vector<16x32xf32> to vector<16x4x8xf32>
    %316 = tpu.transpose %315, [1, 0, 2] : vector<16x4x8xf32> -> vector<4x16x8xf32>
    %317 = vector.shape_cast %312 : vector<16x32xf32> to vector<16x4x8xf32>
    %318 = tpu.transpose %317, [1, 0, 2] : vector<16x4x8xf32> -> vector<4x16x8xf32>
    "tpu.trace_start"() <{level = 10 : i32, message = "hqd,hkd->hqk"}> : () -> ()
    %cst_174 = arith.constant dense<0.000000e+00> : vector<4x16x16xf32>
    %319 = tpu.matmul %314, %316, %cst_174 {dimension_numbers = #tpu.dot_dimension_numbers<[2], [2], [1], [1], [0, 0, 0, 1, 1, 1], [0], [0]>} : vector<4x16x8xf32>, vector<4x16x8xf32>, vector<4x16x16xf32> -> vector<4x16x16xf32>
    "tpu.trace_stop"() : () -> ()
    %cst_175 = arith.constant 0.353553385 : f32
    %320 = vector.broadcast %cst_175 : f32 to vector<4x16x16xf32>
    %321 = arith.mulf %319, %320 : vector<4x16x16xf32>
    %322 = vector.shape_cast %4 : vector<16x16xi1> to vector<1x16x16xi1>
    %cst_176 = arith.constant -1.000000e+30 : f32
    %323 = vector.shape_cast %322 : vector<1x16x16xi1> to vector<1x16x16xi1>
    %324 = vector.broadcast %323 : vector<1x16x16xi1> to vector<4x16x16xi1>
    %325 = vector.broadcast %cst_176 : f32 to vector<4x16x16xf32>
    %326 = arith.select %324, %321, %325 : vector<4x16x16xi1>, vector<4x16x16xf32>
    %cst_177 = arith.constant dense<0xFF800000> : vector<4x16xf32>
    %327 = vector.multi_reduction <maximumf>, %326, %cst_177 [2] : vector<4x16x16xf32> to vector<4x16xf32>
    %328 = vector.shape_cast %327 : vector<4x16xf32> to vector<4x16x1xf32>
    %329 = vector.broadcast %328 : vector<4x16x1xf32> to vector<4x16x16xf32>
    %330 = arith.subf %326, %329 : vector<4x16x16xf32>
    %331 = math.exp %330 : vector<4x16x16xf32>
    %cst_178 = arith.constant dense<0.000000e+00> : vector<4x16xf32>
    %332 = vector.multi_reduction <add>, %331, %cst_178 [2] : vector<4x16x16xf32> to vector<4x16xf32>
    %333 = vector.shape_cast %332 : vector<4x16xf32> to vector<4x16x1xf32>
    %334 = vector.broadcast %333 : vector<4x16x1xf32> to vector<4x16x16xf32>
    %335 = arith.divf %331, %334 : vector<4x16x16xf32>
    "tpu.trace_start"() <{level = 10 : i32, message = "hqk,hkd->hqd"}> : () -> ()
    %cst_179 = arith.constant dense<0.000000e+00> : vector<4x16x8xf32>
    %336 = tpu.matmul %335, %318, %cst_179 {dimension_numbers = #tpu.dot_dimension_numbers<[2], [1], [1], [2], [0, 0, 0, 1, 1, 2], [0], [0]>} : vector<4x16x16xf32>, vector<4x16x8xf32>, vector<4x16x8xf32> -> vector<4x16x8xf32>
    "tpu.trace_stop"() : () -> ()
    %337 = tpu.transpose %336, [1, 0, 2] : vector<4x16x8xf32> -> vector<16x4x8xf32>
    %338 = vector.shape_cast %337 : vector<16x4x8xf32> to vector<16x32xf32>
    %c1_180 = arith.constant 1 : index
    %c0_181 = arith.constant 0 : index
    %c0_182 = arith.constant 0 : index
    %339 = vector.load %arg10[%c1_180, %c0_181, %c0_182] : memref<2x32x32xf32, #tpu.memory_space<vmem>>, vector<1x32x32xf32>
    %340 = vector.shape_cast %339 : vector<1x32x32xf32> to vector<32x32xf32>
    %cst_183 = arith.constant dense<0.000000e+00> : vector<16x32xf32>
    %341 = tpu.matmul %338, %340, %cst_183 {dimension_numbers = #tpu.dot_dimension_numbers<[1], [0], [0], [1], [0, 0, 1, 1], [], []>} : vector<16x32xf32>, vector<32x32xf32>, vector<16x32xf32> -> vector<16x32xf32>
    %c1_184 = arith.constant 1 : index
    %c0_185 = arith.constant 0 : index
    %c0_186 = arith.constant 0 : index
    %342 = vector.load %arg11[%c1_184, %c0_185, %c0_186] : memref<2x1x32xf32, #tpu.memory_space<vmem>>, vector<1x1x32xf32>
    %343 = vector.shape_cast %342 : vector<1x1x32xf32> to vector<1x32xf32>
    %344 = vector.broadcast %343 : vector<1x32xf32> to vector<16x32xf32>
    %345 = arith.addf %341, %344 : vector<16x32xf32>
    %346 = arith.addf %296, %345 : vector<16x32xf32>
    %c1_187 = arith.constant 1 : index
    %c0_188 = arith.constant 0 : index
    %c0_189 = arith.constant 0 : index
    %347 = vector.load %arg14[%c1_187, %c0_188, %c0_189] : memref<2x1x32xf32, #tpu.memory_space<vmem>>, vector<1x1x32xf32>
    %348 = vector.shape_cast %347 : vector<1x1x32xf32> to vector<1x32xf32>
    %c1_190 = arith.constant 1 : index
    %c0_191 = arith.constant 0 : index
    %c0_192 = arith.constant 0 : index
    %349 = vector.load %arg15[%c1_190, %c0_191, %c0_192] : memref<2x1x32xf32, #tpu.memory_space<vmem>>, vector<1x1x32xf32>
    %350 = vector.shape_cast %349 : vector<1x1x32xf32> to vector<1x32xf32>
    %cst_193 = arith.constant dense<0.000000e+00> : vector<16xf32>
    %351 = vector.multi_reduction <add>, %346, %cst_193 [1] : vector<16x32xf32> to vector<16xf32>
    %352 = vector.shape_cast %351 : vector<16xf32> to vector<16x1xf32>
    %cst_194 = arith.constant 3.200000e+01 : f32
    %353 = vector.broadcast %cst_194 : f32 to vector<16x1xf32>
    %354 = arith.divf %352, %353 : vector<16x1xf32>
    %355 = vector.broadcast %354 : vector<16x1xf32> to vector<16x32xf32>
    %356 = arith.subf %346, %355 : vector<16x32xf32>
    %357 = arith.mulf %356, %356 : vector<16x32xf32>
    %cst_195 = arith.constant dense<0.000000e+00> : vector<16xf32>
    %358 = vector.multi_reduction <add>, %357, %cst_195 [1] : vector<16x32xf32> to vector<16xf32>
    %359 = vector.shape_cast %358 : vector<16xf32> to vector<16x1xf32>
    %cst_196 = arith.constant 3.200000e+01 : f32
    %360 = vector.broadcast %cst_196 : f32 to vector<16x1xf32>
    %361 = arith.divf %359, %360 : vector<16x1xf32>
    %cst_197 = arith.constant 9.99999974E-6 : f32
    %362 = vector.broadcast %cst_197 : f32 to vector<16x1xf32>
    %363 = arith.addf %361, %362 : vector<16x1xf32>
    %364 = math.rsqrt %363 : vector<16x1xf32>
    %365 = vector.broadcast %364 : vector<16x1xf32> to vector<16x32xf32>
    %366 = arith.mulf %356, %365 : vector<16x32xf32>
    %367 = vector.broadcast %348 : vector<1x32xf32> to vector<16x32xf32>
    %368 = arith.mulf %366, %367 : vector<16x32xf32>
    %369 = vector.broadcast %350 : vector<1x32xf32> to vector<16x32xf32>
    %370 = arith.addf %368, %369 : vector<16x32xf32>
    %cst_198 = arith.constant 0.000000e+00 : f32
    %371 = vector.broadcast %cst_198 : f32 to vector<16x32xf32>
    %c1_199 = arith.constant 1 : index
    %c0_200 = arith.constant 0 : index
    %c0_201 = arith.constant 0 : index
    %372 = vector.load %arg18[%c1_199, %c0_200, %c0_201] : memref<2x32x2048xf32, #tpu.memory_space<vmem>>, vector<1x32x512xf32>
    %373 = vector.shape_cast %372 : vector<1x32x512xf32> to vector<32x512xf32>
    %cst_202 = arith.constant dense<0.000000e+00> : vector<16x512xf32>
    %374 = tpu.matmul %370, %373, %cst_202 {dimension_numbers = #tpu.dot_dimension_numbers<[1], [0], [0], [1], [0, 0, 1, 1], [], []>} : vector<16x32xf32>, vector<32x512xf32>, vector<16x512xf32> -> vector<16x512xf32>
    %c1_203 = arith.constant 1 : index
    %c0_204 = arith.constant 0 : index
    %c0_205 = arith.constant 0 : index
    %375 = vector.load %arg19[%c1_203, %c0_204, %c0_205] : memref<2x1x2048xf32, #tpu.memory_space<vmem>>, vector<1x1x512xf32>
    %376 = vector.shape_cast %375 : vector<1x1x512xf32> to vector<1x512xf32>
    %377 = vector.broadcast %376 : vector<1x512xf32> to vector<16x512xf32>
    %378 = arith.addf %374, %377 : vector<16x512xf32>
    %cst_206 = arith.constant 0.000000e+00 : f32
    %379 = vector.broadcast %cst_206 : f32 to vector<16x512xf32>
    %380 = arith.maximumf %378, %379 : vector<16x512xf32>
    %c1_207 = arith.constant 1 : index
    %c0_208 = arith.constant 0 : index
    %c0_209 = arith.constant 0 : index
    %381 = vector.load %arg20[%c1_207, %c0_208, %c0_209] : memref<2x2048x32xf32, #tpu.memory_space<vmem>>, vector<1x512x32xf32>
    %382 = vector.shape_cast %381 : vector<1x512x32xf32> to vector<512x32xf32>
    %cst_210 = arith.constant dense<0.000000e+00> : vector<16x32xf32>
    %383 = tpu.matmul %380, %382, %cst_210 {dimension_numbers = #tpu.dot_dimension_numbers<[1], [0], [0], [1], [0, 0, 1, 1], [], []>} : vector<16x512xf32>, vector<512x32xf32>, vector<16x32xf32> -> vector<16x32xf32>
    %384 = arith.addf %371, %383 : vector<16x32xf32>
    %c1_211 = arith.constant 1 : index
    %c0_212 = arith.constant 0 : index
    %c512_213 = arith.constant 512 : index
    %385 = vector.load %arg18[%c1_211, %c0_212, %c512_213] : memref<2x32x2048xf32, #tpu.memory_space<vmem>>, vector<1x32x512xf32>
    %386 = vector.shape_cast %385 : vector<1x32x512xf32> to vector<32x512xf32>
    %cst_214 = arith.constant dense<0.000000e+00> : vector<16x512xf32>
    %387 = tpu.matmul %370, %386, %cst_214 {dimension_numbers = #tpu.dot_dimension_numbers<[1], [0], [0], [1], [0, 0, 1, 1], [], []>} : vector<16x32xf32>, vector<32x512xf32>, vector<16x512xf32> -> vector<16x512xf32>
    %c1_215 = arith.constant 1 : index
    %c0_216 = arith.constant 0 : index
    %c512_217 = arith.constant 512 : index
    %388 = vector.load %arg19[%c1_215, %c0_216, %c512_217] : memref<2x1x2048xf32, #tpu.memory_space<vmem>>, vector<1x1x512xf32>
    %389 = vector.shape_cast %388 : vector<1x1x512xf32> to vector<1x512xf32>
    %390 = vector.broadcast %389 : vector<1x512xf32> to vector<16x512xf32>
    %391 = arith.addf %387, %390 : vector<16x512xf32>
    %cst_218 = arith.constant 0.000000e+00 : f32
    %392 = vector.broadcast %cst_218 : f32 to vector<16x512xf32>
    %393 = arith.maximumf %391, %392 : vector<16x512xf32>
    %c1_219 = arith.constant 1 : index
    %c512_220 = arith.constant 512 : index
    %c0_221 = arith.constant 0 : index
    %394 = vector.load %arg20[%c1_219, %c512_220, %c0_221] : memref<2x2048x32xf32, #tpu.memory_space<vmem>>, vector<1x512x32xf32>
    %395 = vector.shape_cast %394 : vector<1x512x32xf32> to vector<512x32xf32>
    %cst_222 = arith.constant dense<0.000000e+00> : vector<16x32xf32>
    %396 = tpu.matmul %393, %395, %cst_222 {dimension_numbers = #tpu.dot_dimension_numbers<[1], [0], [0], [1], [0, 0, 1, 1], [], []>} : vector<16x512xf32>, vector<512x32xf32>, vector<16x32xf32> -> vector<16x32xf32>
    %397 = arith.addf %384, %396 : vector<16x32xf32>
    %c1_223 = arith.constant 1 : index
    %c0_224 = arith.constant 0 : index
    %c1024_225 = arith.constant 1024 : index
    %398 = vector.load %arg18[%c1_223, %c0_224, %c1024_225] : memref<2x32x2048xf32, #tpu.memory_space<vmem>>, vector<1x32x512xf32>
    %399 = vector.shape_cast %398 : vector<1x32x512xf32> to vector<32x512xf32>
    %cst_226 = arith.constant dense<0.000000e+00> : vector<16x512xf32>
    %400 = tpu.matmul %370, %399, %cst_226 {dimension_numbers = #tpu.dot_dimension_numbers<[1], [0], [0], [1], [0, 0, 1, 1], [], []>} : vector<16x32xf32>, vector<32x512xf32>, vector<16x512xf32> -> vector<16x512xf32>
    %c1_227 = arith.constant 1 : index
    %c0_228 = arith.constant 0 : index
    %c1024_229 = arith.constant 1024 : index
    %401 = vector.load %arg19[%c1_227, %c0_228, %c1024_229] : memref<2x1x2048xf32, #tpu.memory_space<vmem>>, vector<1x1x512xf32>
    %402 = vector.shape_cast %401 : vector<1x1x512xf32> to vector<1x512xf32>
    %403 = vector.broadcast %402 : vector<1x512xf32> to vector<16x512xf32>
    %404 = arith.addf %400, %403 : vector<16x512xf32>
    %cst_230 = arith.constant 0.000000e+00 : f32
    %405 = vector.broadcast %cst_230 : f32 to vector<16x512xf32>
    %406 = arith.maximumf %404, %405 : vector<16x512xf32>
    %c1_231 = arith.constant 1 : index
    %c1024_232 = arith.constant 1024 : index
    %c0_233 = arith.constant 0 : index
    %407 = vector.load %arg20[%c1_231, %c1024_232, %c0_233] : memref<2x2048x32xf32, #tpu.memory_space<vmem>>, vector<1x512x32xf32>
    %408 = vector.shape_cast %407 : vector<1x512x32xf32> to vector<512x32xf32>
    %cst_234 = arith.constant dense<0.000000e+00> : vector<16x32xf32>
    %409 = tpu.matmul %406, %408, %cst_234 {dimension_numbers = #tpu.dot_dimension_numbers<[1], [0], [0], [1], [0, 0, 1, 1], [], []>} : vector<16x512xf32>, vector<512x32xf32>, vector<16x32xf32> -> vector<16x32xf32>
    %410 = arith.addf %397, %409 : vector<16x32xf32>
    %c1_235 = arith.constant 1 : index
    %c0_236 = arith.constant 0 : index
    %c1536_237 = arith.constant 1536 : index
    %411 = vector.load %arg18[%c1_235, %c0_236, %c1536_237] : memref<2x32x2048xf32, #tpu.memory_space<vmem>>, vector<1x32x512xf32>
    %412 = vector.shape_cast %411 : vector<1x32x512xf32> to vector<32x512xf32>
    %cst_238 = arith.constant dense<0.000000e+00> : vector<16x512xf32>
    %413 = tpu.matmul %370, %412, %cst_238 {dimension_numbers = #tpu.dot_dimension_numbers<[1], [0], [0], [1], [0, 0, 1, 1], [], []>} : vector<16x32xf32>, vector<32x512xf32>, vector<16x512xf32> -> vector<16x512xf32>
    %c1_239 = arith.constant 1 : index
    %c0_240 = arith.constant 0 : index
    %c1536_241 = arith.constant 1536 : index
    %414 = vector.load %arg19[%c1_239, %c0_240, %c1536_241] : memref<2x1x2048xf32, #tpu.memory_space<vmem>>, vector<1x1x512xf32>
    %415 = vector.shape_cast %414 : vector<1x1x512xf32> to vector<1x512xf32>
    %416 = vector.broadcast %415 : vector<1x512xf32> to vector<16x512xf32>
    %417 = arith.addf %413, %416 : vector<16x512xf32>
    %cst_242 = arith.constant 0.000000e+00 : f32
    %418 = vector.broadcast %cst_242 : f32 to vector<16x512xf32>
    %419 = arith.maximumf %417, %418 : vector<16x512xf32>
    %c1_243 = arith.constant 1 : index
    %c1536_244 = arith.constant 1536 : index
    %c0_245 = arith.constant 0 : index
    %420 = vector.load %arg20[%c1_243, %c1536_244, %c0_245] : memref<2x2048x32xf32, #tpu.memory_space<vmem>>, vector<1x512x32xf32>
    %421 = vector.shape_cast %420 : vector<1x512x32xf32> to vector<512x32xf32>
    %cst_246 = arith.constant dense<0.000000e+00> : vector<16x32xf32>
    %422 = tpu.matmul %419, %421, %cst_246 {dimension_numbers = #tpu.dot_dimension_numbers<[1], [0], [0], [1], [0, 0, 1, 1], [], []>} : vector<16x512xf32>, vector<512x32xf32>, vector<16x32xf32> -> vector<16x32xf32>
    %423 = arith.addf %410, %422 : vector<16x32xf32>
    %c1_247 = arith.constant 1 : index
    %c0_248 = arith.constant 0 : index
    %c0_249 = arith.constant 0 : index
    %424 = vector.load %arg21[%c1_247, %c0_248, %c0_249] : memref<2x1x32xf32, #tpu.memory_space<vmem>>, vector<1x1x32xf32>
    %425 = vector.shape_cast %424 : vector<1x1x32xf32> to vector<1x32xf32>
    %426 = vector.broadcast %425 : vector<1x32xf32> to vector<16x32xf32>
    %427 = arith.addf %423, %426 : vector<16x32xf32>
    %428 = arith.addf %370, %427 : vector<16x32xf32>
    %c1_250 = arith.constant 1 : index
    %c0_251 = arith.constant 0 : index
    %c0_252 = arith.constant 0 : index
    %429 = vector.load %arg16[%c1_250, %c0_251, %c0_252] : memref<2x1x32xf32, #tpu.memory_space<vmem>>, vector<1x1x32xf32>
    %430 = vector.shape_cast %429 : vector<1x1x32xf32> to vector<1x32xf32>
    %c1_253 = arith.constant 1 : index
    %c0_254 = arith.constant 0 : index
    %c0_255 = arith.constant 0 : index
    %431 = vector.load %arg17[%c1_253, %c0_254, %c0_255] : memref<2x1x32xf32, #tpu.memory_space<vmem>>, vector<1x1x32xf32>
    %432 = vector.shape_cast %431 : vector<1x1x32xf32> to vector<1x32xf32>
    %cst_256 = arith.constant dense<0.000000e+00> : vector<16xf32>
    %433 = vector.multi_reduction <add>, %428, %cst_256 [1] : vector<16x32xf32> to vector<16xf32>
    %434 = vector.shape_cast %433 : vector<16xf32> to vector<16x1xf32>
    %cst_257 = arith.constant 3.200000e+01 : f32
    %435 = vector.broadcast %cst_257 : f32 to vector<16x1xf32>
    %436 = arith.divf %434, %435 : vector<16x1xf32>
    %437 = vector.broadcast %436 : vector<16x1xf32> to vector<16x32xf32>
    %438 = arith.subf %428, %437 : vector<16x32xf32>
    %439 = arith.mulf %438, %438 : vector<16x32xf32>
    %cst_258 = arith.constant dense<0.000000e+00> : vector<16xf32>
    %440 = vector.multi_reduction <add>, %439, %cst_258 [1] : vector<16x32xf32> to vector<16xf32>
    %441 = vector.shape_cast %440 : vector<16xf32> to vector<16x1xf32>
    %cst_259 = arith.constant 3.200000e+01 : f32
    %442 = vector.broadcast %cst_259 : f32 to vector<16x1xf32>
    %443 = arith.divf %441, %442 : vector<16x1xf32>
    %cst_260 = arith.constant 9.99999974E-6 : f32
    %444 = vector.broadcast %cst_260 : f32 to vector<16x1xf32>
    %445 = arith.addf %443, %444 : vector<16x1xf32>
    %446 = math.rsqrt %445 : vector<16x1xf32>
    %447 = vector.broadcast %446 : vector<16x1xf32> to vector<16x32xf32>
    %448 = arith.mulf %438, %447 : vector<16x32xf32>
    %449 = vector.broadcast %430 : vector<1x32xf32> to vector<16x32xf32>
    %450 = arith.mulf %448, %449 : vector<16x32xf32>
    %451 = vector.broadcast %432 : vector<1x32xf32> to vector<16x32xf32>
    %452 = arith.addf %450, %451 : vector<16x32xf32>
    %c0_261 = arith.constant 0 : index
    %c0_262 = arith.constant 0 : index
    %453 = vector.load %arg22[%c0_261, %c0_262] : memref<32x128xf32, #tpu.memory_space<vmem>>, vector<32x128xf32>
    %cst_263 = arith.constant dense<0.000000e+00> : vector<16x128xf32>
    %454 = tpu.matmul %452, %453, %cst_263 {dimension_numbers = #tpu.dot_dimension_numbers<[1], [0], [0], [1], [0, 0, 1, 1], [], []>} : vector<16x32xf32>, vector<32x128xf32>, vector<16x128xf32> -> vector<16x128xf32>
    %c0_264 = arith.constant 0 : index
    %c0_265 = arith.constant 0 : index
    %455 = vector.load %arg23[%c0_264, %c0_265] : memref<1x128xf32, #tpu.memory_space<vmem>>, vector<1x128xf32>
    %456 = vector.broadcast %455 : vector<1x128xf32> to vector<16x128xf32>
    %457 = arith.addf %454, %456 : vector<16x128xf32>
    %c0_266 = arith.constant 0 : index
    %c0_267 = arith.constant 0 : index
    %c0_268 = arith.constant 0 : index
    %458 = vector.load %arg24[%c0_266, %c0_267, %c0_268] : memref<1x16x128xf32, #tpu.memory_space<vmem>>, vector<1x16x128xf32>
    %459 = vector.shape_cast %458 : vector<1x16x128xf32> to vector<16x128xf32>
    %460 = vector.shape_cast %457 : vector<16x128xf32> to vector<1x16x128xf32>
    tpu.vector_store %arg24[%c0_266, %c0_267, %c0_268], %460 {strides = array<i32>} : memref<1x16x128xf32, #tpu.memory_space<vmem>>, vector<1x16x128xf32>,
    return
  }
  func.func @transform_0(%arg0: i32) -> (i32, i32, i32) {
    %c0_i32 = arith.constant 0 : i32
    %c0_i32_0 = arith.constant 0 : i32
    %c0_i32_1 = arith.constant 0 : i32
    return %arg0, %c0_i32, %c0_i32_0 : i32, i32, i32
  }
  func.func @transform_1(%arg0: i32) -> (i32, i32, i32) {
    %c0_i32 = arith.constant 0 : i32
    %c0_i32_0 = arith.constant 0 : i32
    %c0_i32_1 = arith.constant 0 : i32
    %c0_i32_2 = arith.constant 0 : i32
    return %c0_i32, %c0_i32_0, %c0_i32_1 : i32, i32, i32
  }
  func.func @transform_2(%arg0: i32) -> (i32, i32, i32) {
    %c0_i32 = arith.constant 0 : i32
    %c0_i32_0 = arith.constant 0 : i32
    %c0_i32_1 = arith.constant 0 : i32
    %c0_i32_2 = arith.constant 0 : i32
    return %c0_i32, %c0_i32_0, %c0_i32_1 : i32, i32, i32
  }
  func.func @transform_3(%arg0: i32) -> (i32, i32, i32) {
    %c0_i32 = arith.constant 0 : i32
    %c0_i32_0 = arith.constant 0 : i32
    %c0_i32_1 = arith.constant 0 : i32
    %c0_i32_2 = arith.constant 0 : i32
    return %c0_i32, %c0_i32_0, %c0_i32_1 : i32, i32, i32
  }
  func.func @transform_4(%arg0: i32) -> (i32, i32, i32) {
    %c0_i32 = arith.constant 0 : i32
    %c0_i32_0 = arith.constant 0 : i32
    %c0_i32_1 = arith.constant 0 : i32
    %c0_i32_2 = arith.constant 0 : i32
    return %c0_i32, %c0_i32_0, %c0_i32_1 : i32, i32, i32
  }
  func.func @transform_5(%arg0: i32) -> (i32, i32, i32) {
    %c0_i32 = arith.constant 0 : i32
    %c0_i32_0 = arith.constant 0 : i32
    %c0_i32_1 = arith.constant 0 : i32
    %c0_i32_2 = arith.constant 0 : i32
    return %c0_i32, %c0_i32_0, %c0_i32_1 : i32, i32, i32
  }
  func.func @transform_6(%arg0: i32) -> (i32, i32, i32) {
    %c0_i32 = arith.constant 0 : i32
    %c0_i32_0 = arith.constant 0 : i32
    %c0_i32_1 = arith.constant 0 : i32
    %c0_i32_2 = arith.constant 0 : i32
    return %c0_i32, %c0_i32_0, %c0_i32_1 : i32, i32, i32
  }
  func.func @transform_7(%arg0: i32) -> (i32, i32, i32) {
    %c0_i32 = arith.constant 0 : i32
    %c0_i32_0 = arith.constant 0 : i32
    %c0_i32_1 = arith.constant 0 : i32
    %c0_i32_2 = arith.constant 0 : i32
    return %c0_i32, %c0_i32_0, %c0_i32_1 : i32, i32, i32
  }
  func.func @transform_8(%arg0: i32) -> (i32, i32, i32) {
    %c0_i32 = arith.constant 0 : i32
    %c0_i32_0 = arith.constant 0 : i32
    %c0_i32_1 = arith.constant 0 : i32
    %c0_i32_2 = arith.constant 0 : i32
    return %c0_i32, %c0_i32_0, %c0_i32_1 : i32, i32, i32
  }
  func.func @transform_9(%arg0: i32) -> (i32, i32, i32) {
    %c0_i32 = arith.constant 0 : i32
    %c0_i32_0 = arith.constant 0 : i32
    %c0_i32_1 = arith.constant 0 : i32
    %c0_i32_2 = arith.constant 0 : i32
    return %c0_i32, %c0_i32_0, %c0_i32_1 : i32, i32, i32
  }
  func.func @transform_10(%arg0: i32) -> (i32, i32, i32) {
    %c0_i32 = arith.constant 0 : i32
    %c0_i32_0 = arith.constant 0 : i32
    %c0_i32_1 = arith.constant 0 : i32
    %c0_i32_2 = arith.constant 0 : i32
    return %c0_i32, %c0_i32_0, %c0_i32_1 : i32, i32, i32
  }
  func.func @transform_11(%arg0: i32) -> (i32, i32, i32) {
    %c0_i32 = arith.constant 0 : i32
    %c0_i32_0 = arith.constant 0 : i32
    %c0_i32_1 = arith.constant 0 : i32
    %c0_i32_2 = arith.constant 0 : i32
    return %c0_i32, %c0_i32_0, %c0_i32_1 : i32, i32, i32
  }
  func.func @transform_12(%arg0: i32) -> (i32, i32, i32) {
    %c0_i32 = arith.constant 0 : i32
    %c0_i32_0 = arith.constant 0 : i32
    %c0_i32_1 = arith.constant 0 : i32
    %c0_i32_2 = arith.constant 0 : i32
    return %c0_i32, %c0_i32_0, %c0_i32_1 : i32, i32, i32
  }
  func.func @transform_13(%arg0: i32) -> (i32, i32, i32) {
    %c0_i32 = arith.constant 0 : i32
    %c0_i32_0 = arith.constant 0 : i32
    %c0_i32_1 = arith.constant 0 : i32
    %c0_i32_2 = arith.constant 0 : i32
    return %c0_i32, %c0_i32_0, %c0_i32_1 : i32, i32, i32
  }
  func.func @transform_14(%arg0: i32) -> (i32, i32, i32) {
    %c0_i32 = arith.constant 0 : i32
    %c0_i32_0 = arith.constant 0 : i32
    %c0_i32_1 = arith.constant 0 : i32
    %c0_i32_2 = arith.constant 0 : i32
    return %c0_i32, %c0_i32_0, %c0_i32_1 : i32, i32, i32
  }
  func.func @transform_15(%arg0: i32) -> (i32, i32, i32) {
    %c0_i32 = arith.constant 0 : i32
    %c0_i32_0 = arith.constant 0 : i32
    %c0_i32_1 = arith.constant 0 : i32
    %c0_i32_2 = arith.constant 0 : i32
    return %c0_i32, %c0_i32_0, %c0_i32_1 : i32, i32, i32
  }
  func.func @transform_16(%arg0: i32) -> (i32, i32, i32) {
    %c0_i32 = arith.constant 0 : i32
    %c0_i32_0 = arith.constant 0 : i32
    %c0_i32_1 = arith.constant 0 : i32
    %c0_i32_2 = arith.constant 0 : i32
    return %c0_i32, %c0_i32_0, %c0_i32_1 : i32, i32, i32
  }
  func.func @transform_17(%arg0: i32) -> (i32, i32, i32) {
    %c0_i32 = arith.constant 0 : i32
    %c0_i32_0 = arith.constant 0 : i32
    %c0_i32_1 = arith.constant 0 : i32
    %c0_i32_2 = arith.constant 0 : i32
    return %c0_i32, %c0_i32_0, %c0_i32_1 : i32, i32, i32
  }
  func.func @transform_18(%arg0: i32) -> (i32, i32, i32) {
    %c0_i32 = arith.constant 0 : i32
    %c0_i32_0 = arith.constant 0 : i32
    %c0_i32_1 = arith.constant 0 : i32
    %c0_i32_2 = arith.constant 0 : i32
    return %c0_i32, %c0_i32_0, %c0_i32_1 : i32, i32, i32
  }
  func.func @transform_19(%arg0: i32) -> (i32, i32, i32) {
    %c0_i32 = arith.constant 0 : i32
    %c0_i32_0 = arith.constant 0 : i32
    %c0_i32_1 = arith.constant 0 : i32
    %c0_i32_2 = arith.constant 0 : i32
    return %c0_i32, %c0_i32_0, %c0_i32_1 : i32, i32, i32
  }
  func.func @transform_20(%arg0: i32) -> (i32, i32, i32) {
    %c0_i32 = arith.constant 0 : i32
    %c0_i32_0 = arith.constant 0 : i32
    %c0_i32_1 = arith.constant 0 : i32
    %c0_i32_2 = arith.constant 0 : i32
    return %c0_i32, %c0_i32_0, %c0_i32_1 : i32, i32, i32
  }
  func.func @transform_21(%arg0: i32) -> (i32, i32) {
    %c0_i32 = arith.constant 0 : i32
    %c0_i32_0 = arith.constant 0 : i32
    %c0_i32_1 = arith.constant 0 : i32
    return %c0_i32, %c0_i32_0 : i32, i32
  }
  func.func @transform_22(%arg0: i32) -> (i32, i32) {
    %c0_i32 = arith.constant 0 : i32
    %c0_i32_0 = arith.constant 0 : i32
    %c0_i32_1 = arith.constant 0 : i32
    return %c0_i32, %c0_i32_0 : i32, i32
  }
  func.func @transform_23(%arg0: i32) -> (i32, i32, i32) {
    %c0_i32 = arith.constant 0 : i32
    %c0_i32_0 = arith.constant 0 : i32
    %c0_i32_1 = arith.constant 0 : i32
    return %arg0, %c0_i32, %c0_i32_0 : i32, i32, i32
  }
}

</mosaic_0001>

<llo_original>
// kernel: textgen_forward.1
$region0: #{textgen_forward.1}
  #allocation0 [shape = 'u32[]', space=smem, size = 0x4, offset = 0x4, fixed_abs, tag = 'smem constant byte address 0x4 - core index']
  #allocation1 [shape = 'u32[72,128]{1,0:T(1,128)}', space=vmem, size = 0x9000, scoped, tag = 'internal scratch']
  %s0 = inlined_call_operand.vmem [shape: f32[2,16,32], index: 0, kind: input, shape index: {}]
  %s1 = inlined_call_operand.vmem [shape: f32[2,32,96], index: 1, kind: input, shape index: {}]
  %s2 = inlined_call_operand.vmem [shape: f32[2,1,96], index: 2, kind: input, shape index: {}]
  %s3 = inlined_call_operand.vmem [shape: f32[2,32,32], index: 3, kind: input, shape index: {}]
  %s4 = inlined_call_operand.vmem [shape: f32[2,1,32], index: 4, kind: input, shape index: {}]
  %s5 = inlined_call_operand.vmem [shape: f32[2,32,32], index: 5, kind: input, shape index: {}]
  %s6 = inlined_call_operand.vmem [shape: f32[2,1,32], index: 6, kind: input, shape index: {}]
  %s7 = inlined_call_operand.vmem [shape: f32[2,32,64], index: 7, kind: input, shape index: {}]
  %s8 = inlined_call_operand.vmem [shape: f32[2,1,64], index: 8, kind: input, shape index: {}]
  %s9 = inlined_call_operand.vmem [shape: f32[2,32,32], index: 9, kind: input, shape index: {}]
  %s10 = inlined_call_operand.vmem [shape: f32[2,1,32], index: 10, kind: input, shape index: {}]
  %s11 = inlined_call_operand.vmem [shape: f32[2,1,32], index: 11, kind: input, shape index: {}]
  %s12 = inlined_call_operand.vmem [shape: f32[2,1,32], index: 12, kind: input, shape index: {}]
  %s13 = inlined_call_operand.vmem [shape: f32[2,1,32], index: 13, kind: input, shape index: {}]
  %s14 = inlined_call_operand.vmem [shape: f32[2,1,32], index: 14, kind: input, shape index: {}]
  %s15 = inlined_call_operand.vmem [shape: f32[2,1,32], index: 15, kind: input, shape index: {}]
  %s16 = inlined_call_operand.vmem [shape: f32[2,1,32], index: 16, kind: input, shape index: {}]
  %s17 = inlined_call_operand.vmem [shape: f32[2,32,2048], index: 17, kind: input, shape index: {}]
  %s18 = inlined_call_operand.vmem [shape: f32[2,1,2048], index: 18, kind: input, shape index: {}]
  %s19 = inlined_call_operand.vmem [shape: f32[2,2048,32], index: 19, kind: input, shape index: {}]
  %s20 = inlined_call_operand.vmem [shape: f32[2,1,32], index: 20, kind: input, shape index: {}]
  %s21 = inlined_call_operand.vmem [shape: f32[32,128], index: 21, kind: input, shape index: {}]
  %s22 = inlined_call_operand.vmem [shape: f32[1,128], index: 22, kind: input, shape index: {}]
  %s23 = inlined_call_operand.hbm [shape: f32[2,16,128], index: 23, kind: output, shape index: {}]
  %s24 = sld [smem:[#allocation0]]
  $region125: #{textgen_forward.1} parent=0
    _
  %s26 = ssub.s32 1, %s24
  %s27 = scalar_select 0, %s26, %s24
  $region1: #{textgen_forward.1} parent=0
    #allocation2 [shape = 'u8[16384]{0}', space=vmem, size = 0x4000, scoped, tag = 'output window, operand 0']
    #allocation3 [shape = 's32[2]{0}', space=sflag, size = 0x8, scoped, tag = 'scoped memory for textgen_forward.1']
    %28 = vsyncpa [#allocation3], 0
    %s29 = scalar_lea.sflag [#allocation3], 1
    %30 = vsyncpa %s29, 0
    loop: start=0, step=1, limit=4
    $region2: #{textgen_forward.1} parent=1 // loop_pre_header
      _
    $region3: #{textgen_forward.1} parent=1 // loop_header
      %s32 = sphi 0, %s36
      %p33 = scmp.ge.s32.totalorder %s32, 4
      %s42 = sphi 0, %s44
      %s45 = sphi 0, %s42
      %s46 = sphi 0, %s45
      %s62 = sphi 0, %s46
      %s66 = sphi 0, %s66
      %s68 = sphi 0, %s66
      %s69 = sphi 0, %s68
      %s83 = sphi 0, %s69
      %s87 = sphi 0, %s87
      %s89 = sphi 0, %s87
      %s90 = sphi 0, %s89
      %s104 = sphi 0, %s90
      %s108 = sphi 0, %s108
      %s110 = sphi 0, %s108
      %s111 = sphi 0, %s110
      %s125 = sphi 0, %s111
      %s129 = sphi 0, %s129
      %s131 = sphi 0, %s129
      %s132 = sphi 0, %s131
      %s146 = sphi 0, %s132
      %s150 = sphi 0, %s150
      %s152 = sphi 0, %s150
      %s153 = sphi 0, %s152
      %s167 = sphi 0, %s153
      %s171 = sphi 0, %s171
      %s173 = sphi 0, %s171
      %s174 = sphi 0, %s173
      %s188 = sphi 0, %s174
      %s192 = sphi 0, %s192
      %s194 = sphi 0, %s192
      %s195 = sphi 0, %s194
      %s209 = sphi 0, %s195
      %s213 = sphi 0, %s213
      %s215 = sphi 0, %s213
      %s216 = sphi 0, %s215
      %s230 = sphi 0, %s216
      %s234 = sphi 0, %s234
      %s236 = sphi 0, %s234
      %s237 = sphi 0, %s236
      %s251 = sphi 0, %s237
      %s255 = sphi 0, %s255
      %s257 = sphi 0, %s255
      %s258 = sphi 0, %s257
      %s272 = sphi 0, %s258
      %s276 = sphi 0, %s276
      %s278 = sphi 0, %s276
      %s279 = sphi 0, %s278
      %s293 = sphi 0, %s279
      %s297 = sphi 0, %s297
      %s299 = sphi 0, %s297
      %s300 = sphi 0, %s299
      %s314 = sphi 0, %s300
      %s318 = sphi 0, %s318
      %s320 = sphi 0, %s318
      %s321 = sphi 0, %s320
      %s335 = sphi 0, %s321
      %s339 = sphi 0, %s339
      %s341 = sphi 0, %s339
      %s342 = sphi 0, %s341
      %s356 = sphi 0, %s342
      %s360 = sphi 0, %s360
      %s362 = sphi 0, %s360
      %s363 = sphi 0, %s362
      %s377 = sphi 0, %s363
      %s381 = sphi 0, %s381
      %s383 = sphi 0, %s381
      %s384 = sphi 0, %s383
      %s398 = sphi 0, %s384
      %s402 = sphi 0, %s402
      %s404 = sphi 0, %s402
      %s405 = sphi 0, %s404
      %s419 = sphi 0, %s405
      %s423 = sphi 0, %s423
      %s425 = sphi 0, %s423
      %s426 = sphi 0, %s425
      %s440 = sphi 0, %s426
      %s444 = sphi 0, %s444
      %s446 = sphi 0, %s444
      %s447 = sphi 0, %s446
      %s461 = sphi 0, %s447
      %s465 = sphi 0, %s465
      %s467 = sphi 0, %s465
      %s468 = sphi 0, %s467
      %s482 = sphi 0, %s468
      %s486 = sphi 0, %s486
      %s488 = sphi 0, %s486
      %s489 = sphi 0, %s488
      %s503 = sphi 0, %s489
      %s507 = sphi 0, %s507
      %s509 = sphi 0, %s507
      %s510 = sphi 0, %s509
      %s524 = sphi 0, %s510
      %s530 = sphi 0, %s532
      %s533 = sphi 0, %s530
      %s534 = sphi 0, %s533
      %s550 = sphi 0, %s534
    $region4: #{textgen_forward.1} parent=1 // loop_header_branch
      %35 = sbr.rel (%p33) target = $region8
    $region5: #{textgen_forward.1} parent=1 // loop_body
      %s37 = ssub.s32 %s32, 1
      %s38 = ssub.s32 %s32, 2
      %s39 = sadd.s32 %s32, 1
      %s40 = ssub.s32 %s32, %s39
      %p41 = scmp.eq.s32.totalorder %s40, 0
      %s43 = sadd.s32 %s42, 1
      %s44 = scalar_select %p41, %s42, %s43
      %p47 = pneg %p41
      %p48 = scmp.eq.s32.totalorder %s32, 1
      %p49 = por %p47, %p48
      %p50 = scmp.ne.s32.totalorder %s42, %s45
      %p51 = scmp.eq.s32.totalorder %s32, 0
      %p52 = por %p50, %p51
      %p53 = scmp.ne.s32.totalorder %s42, %s45
      %p54 = scmp.eq.s32.totalorder %s37, 1
      %p55 = por %p53, %p54
      %p56 = scmp.ne.s32.totalorder %s45, %s46
      %p57 = scmp.eq.s32.totalorder %s37, 0
      %p58 = por %p56, %p57
      %p59 = scmp.ne.s32.totalorder %s45, %s46
      %p60 = scmp.eq.s32.totalorder %s38, 1
      %p61 = por %p59, %p60
      %p63 = scmp.ne.s32.totalorder %s46, %s62
      %p64 = scmp.eq.s32.totalorder %s38, 0
      %p65 = por %p63, %p64
      %s67 = sadd.s32 %s66, 1
      %p70 = scmp.eq.s32.totalorder %s32, 1
      %p71 = scmp.ne.s32.totalorder %s66, %s68
      %p72 = scmp.eq.s32.totalorder %s32, 0
      %p73 = por %p71, %p72
      %p74 = scmp.ne.s32.totalorder %s66, %s68
      %p75 = scmp.eq.s32.totalorder %s37, 1
      %p76 = por %p74, %p75
      %p77 = scmp.ne.s32.totalorder %s68, %s69
      %p78 = scmp.eq.s32.totalorder %s37, 0
      %p79 = por %p77, %p78
      %p80 = scmp.ne.s32.totalorder %s68, %s69
      %p81 = scmp.eq.s32.totalorder %s38, 1
      %p82 = por %p80, %p81
      %p84 = scmp.ne.s32.totalorder %s69, %s83
      %p85 = scmp.eq.s32.totalorder %s38, 0
      %p86 = por %p84, %p85
      %s88 = sadd.s32 %s87, 1
      %p91 = scmp.eq.s32.totalorder %s32, 1
      %p92 = scmp.ne.s32.totalorder %s87, %s89
      %p93 = scmp.eq.s32.totalorder %s32, 0
      %p94 = por %p92, %p93
      %p95 = scmp.ne.s32.totalorder %s87, %s89
      %p96 = scmp.eq.s32.totalorder %s37, 1
      %p97 = por %p95, %p96
      %p98 = scmp.ne.s32.totalorder %s89, %s90
      %p99 = scmp.eq.s32.totalorder %s37, 0
      %p100 = por %p98, %p99
      %p101 = scmp.ne.s32.totalorder %s89, %s90
      %p102 = scmp.eq.s32.totalorder %s38, 1
      %p103 = por %p101, %p102
      %p105 = scmp.ne.s32.totalorder %s90, %s104
      %p106 = scmp.eq.s32.totalorder %s38, 0
      %p107 = por %p105, %p106
      %s109 = sadd.s32 %s108, 1
      %p112 = scmp.eq.s32.totalorder %s32, 1
      %p113 = scmp.ne.s32.totalorder %s108, %s110
      %p114 = scmp.eq.s32.totalorder %s32, 0
      %p115 = por %p113, %p114
      %p116 = scmp.ne.s32.totalorder %s108, %s110
      %p117 = scmp.eq.s32.totalorder %s37, 1
      %p118 = por %p116, %p117
      %p119 = scmp.ne.s32.totalorder %s110, %s111
      %p120 = scmp.eq.s32.totalorder %s37, 0
      %p121 = por %p119, %p120
      %p122 = scmp.ne.s32.totalorder %s110, %s111
      %p123 = scmp.eq.s32.totalorder %s38, 1
      %p124 = por %p122, %p123
      %p126 = scmp.ne.s32.totalorder %s111, %s125
      %p127 = scmp.eq.s32.totalorder %s38, 0
      %p128 = por %p126, %p127
      %s130 = sadd.s32 %s129, 1
      %p133 = scmp.eq.s32.totalorder %s32, 1
      %p134 = scmp.ne.s32.totalorder %s129, %s131
      %p135 = scmp.eq.s32.totalorder %s32, 0
      %p136 = por %p134, %p135
      %p137 = scmp.ne.s32.totalorder %s129, %s131
      %p138 = scmp.eq.s32.totalorder %s37, 1
      %p139 = por %p137, %p138
      %p140 = scmp.ne.s32.totalorder %s131, %s132
      %p141 = scmp.eq.s32.totalorder %s37, 0
      %p142 = por %p140, %p141
      %p143 = scmp.ne.s32.totalorder %s131, %s132
      %p144 = scmp.eq.s32.totalorder %s38, 1
      %p145 = por %p143, %p144
      %p147 = scmp.ne.s32.totalorder %s132, %s146
      %p148 = scmp.eq.s32.totalorder %s38, 0
      %p149 = por %p147, %p148
      %s151 = sadd.s32 %s150, 1
      %p154 = scmp.eq.s32.totalorder %s32, 1
      %p155 = scmp.ne.s32.totalorder %s150, %s152
      %p156 = scmp.eq.s32.totalorder %s32, 0
      %p157 = por %p155, %p156
      %p158 = scmp.ne.s32.totalorder %s150, %s152
      %p159 = scmp.eq.s32.totalorder %s37, 1
      %p160 = por %p158, %p159
      %p161 = scmp.ne.s32.totalorder %s152, %s153
      %p162 = scmp.eq.s32.totalorder %s37, 0
      %p163 = por %p161, %p162
      %p164 = scmp.ne.s32.totalorder %s152, %s153
      %p165 = scmp.eq.s32.totalorder %s38, 1
      %p166 = por %p164, %p165
      %p168 = scmp.ne.s32.totalorder %s153, %s167
      %p169 = scmp.eq.s32.totalorder %s38, 0
      %p170 = por %p168, %p169
      %s172 = sadd.s32 %s171, 1
      %p175 = scmp.eq.s32.totalorder %s32, 1
      %p176 = scmp.ne.s32.totalorder %s171, %s173
      %p177 = scmp.eq.s32.totalorder %s32, 0
      %p178 = por %p176, %p177
      %p179 = scmp.ne.s32.totalorder %s171, %s173
      %p180 = scmp.eq.s32.totalorder %s37, 1
      %p181 = por %p179, %p180
      %p182 = scmp.ne.s32.totalorder %s173, %s174
      %p183 = scmp.eq.s32.totalorder %s37, 0
      %p184 = por %p182, %p183
      %p185 = scmp.ne.s32.totalorder %s173, %s174
      %p186 = scmp.eq.s32.totalorder %s38, 1
      %p187 = por %p185, %p186
      %p189 = scmp.ne.s32.totalorder %s174, %s188
      %p190 = scmp.eq.s32.totalorder %s38, 0
      %p191 = por %p189, %p190
      %s193 = sadd.s32 %s192, 1
      %p196 = scmp.eq.s32.totalorder %s32, 1
      %p197 = scmp.ne.s32.totalorder %s192, %s194
      %p198 = scmp.eq.s32.totalorder %s32, 0
      %p199 = por %p197, %p198
      %p200 = scmp.ne.s32.totalorder %s192, %s194
      %p201 = scmp.eq.s32.totalorder %s37, 1
      %p202 = por %p200, %p201
      %p203 = scmp.ne.s32.totalorder %s194, %s195
      %p204 = scmp.eq.s32.totalorder %s37, 0
      %p205 = por %p203, %p204
      %p206 = scmp.ne.s32.totalorder %s194, %s195
      %p207 = scmp.eq.s32.totalorder %s38, 1
      %p208 = por %p206, %p207
      %p210 = scmp.ne.s32.totalorder %s195, %s209
      %p211 = scmp.eq.s32.totalorder %s38, 0
      %p212 = por %p210, %p211
      %s214 = sadd.s32 %s213, 1
      %p217 = scmp.eq.s32.totalorder %s32, 1
      %p218 = scmp.ne.s32.totalorder %s213, %s215
      %p219 = scmp.eq.s32.totalorder %s32, 0
      %p220 = por %p218, %p219
      %p221 = scmp.ne.s32.totalorder %s213, %s215
      %p222 = scmp.eq.s32.totalorder %s37, 1
      %p223 = por %p221, %p222
      %p224 = scmp.ne.s32.totalorder %s215, %s216
      %p225 = scmp.eq.s32.totalorder %s37, 0
      %p226 = por %p224, %p225
      %p227 = scmp.ne.s32.totalorder %s215, %s216
      %p228 = scmp.eq.s32.totalorder %s38, 1
      %p229 = por %p227, %p228
      %p231 = scmp.ne.s32.totalorder %s216, %s230
      %p232 = scmp.eq.s32.totalorder %s38, 0
      %p233 = por %p231, %p232
      %s235 = sadd.s32 %s234, 1
      %p238 = scmp.eq.s32.totalorder %s32, 1
      %p239 = scmp.ne.s32.totalorder %s234, %s236
      %p240 = scmp.eq.s32.totalorder %s32, 0
      %p241 = por %p239, %p240
      %p242 = scmp.ne.s32.totalorder %s234, %s236
      %p243 = scmp.eq.s32.totalorder %s37, 1
      %p244 = por %p242, %p243
      %p245 = scmp.ne.s32.totalorder %s236, %s237
      %p246 = scmp.eq.s32.totalorder %s37, 0
      %p247 = por %p245, %p246
      %p248 = scmp.ne.s32.totalorder %s236, %s237
      %p249 = scmp.eq.s32.totalorder %s38, 1
      %p250 = por %p248, %p249
      %p252 = scmp.ne.s32.totalorder %s237, %s251
      %p253 = scmp.eq.s32.totalorder %s38, 0
      %p254 = por %p252, %p253
      %s256 = sadd.s32 %s255, 1
      %p259 = scmp.eq.s32.totalorder %s32, 1
      %p260 = scmp.ne.s32.totalorder %s255, %s257
      %p261 = scmp.eq.s32.totalorder %s32, 0
      %p262 = por %p260, %p261
      %p263 = scmp.ne.s32.totalorder %s255, %s257
      %p264 = scmp.eq.s32.totalorder %s37, 1
      %p265 = por %p263, %p264
      %p266 = scmp.ne.s32.totalorder %s257, %s258
      %p267 = scmp.eq.s32.totalorder %s37, 0
      %p268 = por %p266, %p267
      %p269 = scmp.ne.s32.totalorder %s257, %s258
      %p270 = scmp.eq.s32.totalorder %s38, 1
      %p271 = por %p269, %p270
      %p273 = scmp.ne.s32.totalorder %s258, %s272
      %p274 = scmp.eq.s32.totalorder %s38, 0
      %p275 = por %p273, %p274
      %s277 = sadd.s32 %s276, 1
      %p280 = scmp.eq.s32.totalorder %s32, 1
      %p281 = scmp.ne.s32.totalorder %s276, %s278
      %p282 = scmp.eq.s32.totalorder %s32, 0
      %p283 = por %p281, %p282
      %p284 = scmp.ne.s32.totalorder %s276, %s278
      %p285 = scmp.eq.s32.totalorder %s37, 1
      %p286 = por %p284, %p285
      %p287 = scmp.ne.s32.totalorder %s278, %s279
      %p288 = scmp.eq.s32.totalorder %s37, 0
      %p289 = por %p287, %p288
      %p290 = scmp.ne.s32.totalorder %s278, %s279
      %p291 = scmp.eq.s32.totalorder %s38, 1
      %p292 = por %p290, %p291
      %p294 = scmp.ne.s32.totalorder %s279, %s293
      %p295 = scmp.eq.s32.totalorder %s38, 0
      %p296 = por %p294, %p295
      %s298 = sadd.s32 %s297, 1
      %p301 = scmp.eq.s32.totalorder %s32, 1
      %p302 = scmp.ne.s32.totalorder %s297, %s299
      %p303 = scmp.eq.s32.totalorder %s32, 0
      %p304 = por %p302, %p303
      %p305 = scmp.ne.s32.totalorder %s297, %s299
      %p306 = scmp.eq.s32.totalorder %s37, 1
      %p307 = por %p305, %p306
      %p308 = scmp.ne.s32.totalorder %s299, %s300
      %p309 = scmp.eq.s32.totalorder %s37, 0
      %p310 = por %p308, %p309
      %p311 = scmp.ne.s32.totalorder %s299, %s300
      %p312 = scmp.eq.s32.totalorder %s38, 1
      %p313 = por %p311, %p312
      %p315 = scmp.ne.s32.totalorder %s300, %s314
      %p316 = scmp.eq.s32.totalorder %s38, 0
      %p317 = por %p315, %p316
      %s319 = sadd.s32 %s318, 1
      %p322 = scmp.eq.s32.totalorder %s32, 1
      %p323 = scmp.ne.s32.totalorder %s318, %s320
      %p324 = scmp.eq.s32.totalorder %s32, 0
      %p325 = por %p323, %p324
      %p326 = scmp.ne.s32.totalorder %s318, %s320
      %p327 = scmp.eq.s32.totalorder %s37, 1
      %p328 = por %p326, %p327
      %p329 = scmp.ne.s32.totalorder %s320, %s321
      %p330 = scmp.eq.s32.totalorder %s37, 0
      %p331 = por %p329, %p330
      %p332 = scmp.ne.s32.totalorder %s320, %s321
      %p333 = scmp.eq.s32.totalorder %s38, 1
      %p334 = por %p332, %p333
      %p336 = scmp.ne.s32.totalorder %s321, %s335
      %p337 = scmp.eq.s32.totalorder %s38, 0
      %p338 = por %p336, %p337
      %s340 = sadd.s32 %s339, 1
      %p343 = scmp.eq.s32.totalorder %s32, 1
      %p344 = scmp.ne.s32.totalorder %s339, %s341
      %p345 = scmp.eq.s32.totalorder %s32, 0
      %p346 = por %p344, %p345
      %p347 = scmp.ne.s32.totalorder %s339, %s341
      %p348 = scmp.eq.s32.totalorder %s37, 1
      %p349 = por %p347, %p348
      %p350 = scmp.ne.s32.totalorder %s341, %s342
      %p351 = scmp.eq.s32.totalorder %s37, 0
      %p352 = por %p350, %p351
      %p353 = scmp.ne.s32.totalorder %s341, %s342
      %p354 = scmp.eq.s32.totalorder %s38, 1
      %p355 = por %p353, %p354
      %p357 = scmp.ne.s32.totalorder %s342, %s356
      %p358 = scmp.eq.s32.totalorder %s38, 0
      %p359 = por %p357, %p358
      %s361 = sadd.s32 %s360, 1
      %p364 = scmp.eq.s32.totalorder %s32, 1
      %p365 = scmp.ne.s32.totalorder %s360, %s362
      %p366 = scmp.eq.s32.totalorder %s32, 0
      %p367 = por %p365, %p366
      %p368 = scmp.ne.s32.totalorder %s360, %s362
      %p369 = scmp.eq.s32.totalorder %s37, 1
      %p370 = por %p368, %p369
      %p371 = scmp.ne.s32.totalorder %s362, %s363
      %p372 = scmp.eq.s32.totalorder %s37, 0
      %p373 = por %p371, %p372
      %p374 = scmp.ne.s32.totalorder %s362, %s363
      %p375 = scmp.eq.s32.totalorder %s38, 1
      %p376 = por %p374, %p375
      %p378 = scmp.ne.s32.totalorder %s363, %s377
      %p379 = scmp.eq.s32.totalorder %s38, 0
      %p380 = por %p378, %p379
      %s382 = sadd.s32 %s381, 1
      %p385 = scmp.eq.s32.totalorder %s32, 1
      %p386 = scmp.ne.s32.totalorder %s381, %s383
      %p387 = scmp.eq.s32.totalorder %s32, 0
      %p388 = por %p386, %p387
      %p389 = scmp.ne.s32.totalorder %s381, %s383
      %p390 = scmp.eq.s32.totalorder %s37, 1
      %p391 = por %p389, %p390
      %p392 = scmp.ne.s32.totalorder %s383, %s384
      %p393 = scmp.eq.s32.totalorder %s37, 0
      %p394 = por %p392, %p393
      %p395 = scmp.ne.s32.totalorder %s383, %s384
      %p396 = scmp.eq.s32.totalorder %s38, 1
      %p397 = por %p395, %p396
      %p399 = scmp.ne.s32.totalorder %s384, %s398
      %p400 = scmp.eq.s32.totalorder %s38, 0
      %p401 = por %p399, %p400
      %s403 = sadd.s32 %s402, 1
      %p406 = scmp.eq.s32.totalorder %s32, 1
      %p407 = scmp.ne.s32.totalorder %s402, %s404
      %p408 = scmp.eq.s32.totalorder %s32, 0
      %p409 = por %p407, %p408
      %p410 = scmp.ne.s32.totalorder %s402, %s404
      %p411 = scmp.eq.s32.totalorder %s37, 1
      %p412 = por %p410, %p411
      %p413 = scmp.ne.s32.totalorder %s404, %s405
      %p414 = scmp.eq.s32.totalorder %s37, 0
      %p415 = por %p413, %p414
      %p416 = scmp.ne.s32.totalorder %s404, %s405
      %p417 = scmp.eq.s32.totalorder %s38, 1
      %p418 = por %p416, %p417
      %p420 = scmp.ne.s32.totalorder %s405, %s419
      %p421 = scmp.eq.s32.totalorder %s38, 0
      %p422 = por %p420, %p421
      %s424 = sadd.s32 %s423, 1
      %p427 = scmp.eq.s32.totalorder %s32, 1
      %p428 = scmp.ne.s32.totalorder %s423, %s425
      %p429 = scmp.eq.s32.totalorder %s32, 0
      %p430 = por %p428, %p429
      %p431 = scmp.ne.s32.totalorder %s423, %s425
      %p432 = scmp.eq.s32.totalorder %s37, 1
      %p433 = por %p431, %p432
      %p434 = scmp.ne.s32.totalorder %s425, %s426
      %p435 = scmp.eq.s32.totalorder %s37, 0
      %p436 = por %p434, %p435
      %p437 = scmp.ne.s32.totalorder %s425, %s426
      %p438 = scmp.eq.s32.totalorder %s38, 1
      %p439 = por %p437, %p438
      %p441 = scmp.ne.s32.totalorder %s426, %s440
      %p442 = scmp.eq.s32.totalorder %s38, 0
      %p443 = por %p441, %p442
      %s445 = sadd.s32 %s444, 1
      %p448 = scmp.eq.s32.totalorder %s32, 1
      %p449 = scmp.ne.s32.totalorder %s444, %s446
      %p450 = scmp.eq.s32.totalorder %s32, 0
      %p451 = por %p449, %p450
      %p452 = scmp.ne.s32.totalorder %s444, %s446
      %p453 = scmp.eq.s32.totalorder %s37, 1
      %p454 = por %p452, %p453
      %p455 = scmp.ne.s32.totalorder %s446, %s447
      %p456 = scmp.eq.s32.totalorder %s37, 0
      %p457 = por %p455, %p456
      %p458 = scmp.ne.s32.totalorder %s446, %s447
      %p459 = scmp.eq.s32.totalorder %s38, 1
      %p460 = por %p458, %p459
      %p462 = scmp.ne.s32.totalorder %s447, %s461
      %p463 = scmp.eq.s32.totalorder %s38, 0
      %p464 = por %p462, %p463
      %s466 = sadd.s32 %s465, 1
      %p469 = scmp.eq.s32.totalorder %s32, 1
      %p470 = scmp.ne.s32.totalorder %s465, %s467
      %p471 = scmp.eq.s32.totalorder %s32, 0
      %p472 = por %p470, %p471
      %p473 = scmp.ne.s32.totalorder %s465, %s467
      %p474 = scmp.eq.s32.totalorder %s37, 1
      %p475 = por %p473, %p474
      %p476 = scmp.ne.s32.totalorder %s467, %s468
      %p477 = scmp.eq.s32.totalorder %s37, 0
      %p478 = por %p476, %p477
      %p479 = scmp.ne.s32.totalorder %s467, %s468
      %p480 = scmp.eq.s32.totalorder %s38, 1
      %p481 = por %p479, %p480
      %p483 = scmp.ne.s32.totalorder %s468, %s482
      %p484 = scmp.eq.s32.totalorder %s38, 0
      %p485 = por %p483, %p484
      %s487 = sadd.s32 %s486, 1
      %p490 = scmp.eq.s32.totalorder %s32, 1
      %p491 = scmp.ne.s32.totalorder %s486, %s488
      %p492 = scmp.eq.s32.totalorder %s32, 0
      %p493 = por %p491, %p492
      %p494 = scmp.ne.s32.totalorder %s486, %s488
      %p495 = scmp.eq.s32.totalorder %s37, 1
      %p496 = por %p494, %p495
      %p497 = scmp.ne.s32.totalorder %s488, %s489
      %p498 = scmp.eq.s32.totalorder %s37, 0
      %p499 = por %p497, %p498
      %p500 = scmp.ne.s32.totalorder %s488, %s489
      %p501 = scmp.eq.s32.totalorder %s38, 1
      %p502 = por %p500, %p501
      %p504 = scmp.ne.s32.totalorder %s489, %s503
      %p505 = scmp.eq.s32.totalorder %s38, 0
      %p506 = por %p504, %p505
      %s508 = sadd.s32 %s507, 1
      %p511 = scmp.eq.s32.totalorder %s32, 1
      %p512 = scmp.ne.s32.totalorder %s507, %s509
      %p513 = scmp.eq.s32.totalorder %s32, 0
      %p514 = por %p512, %p513
      %p515 = scmp.ne.s32.totalorder %s507, %s509
      %p516 = scmp.eq.s32.totalorder %s37, 1
      %p517 = por %p515, %p516
      %p518 = scmp.ne.s32.totalorder %s509, %s510
      %p519 = scmp.eq.s32.totalorder %s37, 0
      %p520 = por %p518, %p519
      %p521 = scmp.ne.s32.totalorder %s509, %s510
      %p522 = scmp.eq.s32.totalorder %s38, 1
      %p523 = por %p521, %p522
      %p525 = scmp.ne.s32.totalorder %s510, %s524
      %p526 = scmp.eq.s32.totalorder %s38, 0
      %p527 = por %p525, %p526
      %s528 = ssub.s32 %s32, %s39
      %p529 = scmp.eq.s32.totalorder %s528, 0
      %s531 = sadd.s32 %s530, 1
      %s532 = scalar_select %p529, %s530, %s531
      %p535 = pneg %p529
      %p536 = scmp.eq.s32.totalorder %s32, 1
      %p537 = por %p535, %p536
      %p538 = scmp.ne.s32.totalorder %s530, %s533
      %p539 = scmp.eq.s32.totalorder %s32, 0
      %p540 = por %p538, %p539
      %p541 = scmp.ne.s32.totalorder %s530, %s533
      %p542 = scmp.eq.s32.totalorder %s37, 1
      %p543 = por %p541, %p542
      %p544 = scmp.ne.s32.totalorder %s533, %s534
      %p545 = scmp.eq.s32.totalorder %s37, 0
      %p546 = por %p544, %p545
      %p547 = scmp.ne.s32.totalorder %s533, %s534
      %p548 = scmp.eq.s32.totalorder %s38, 1
      %p549 = por %p547, %p548
      %p551 = scmp.ne.s32.totalorder %s534, %s550
      %p552 = scmp.eq.s32.totalorder %s38, 0
      %p553 = por %p551, %p552
      %p554 = scmp.le.s32.totalorder 1, %s32
      %p555 = scmp.lt.s32.totalorder %s32, 3
      %p556 = pnand %p554, %p555
      %p557 = pneg %p556
      // Predicated region
      $region9: #{textgen_forward.1} parent=5 // pred_check
        _
      $region10: #{textgen_forward.1} parent=5 // pred_check_branch
        %559 = sbr.rel (%p556) target = $region12
      $region11: #{textgen_forward.1} parent=5 // pred_region
        %s560 = ssub.s32 %s32, 1
        // Predicated region
        $region13: #{textgen_forward.1} parent=11 // pred_check
          %p561 = pneg %p79
        $region14: #{textgen_forward.1} parent=11 // pred_check_branch
          %563 = sbr.rel (%p561) target = $region16
        $region15: #{textgen_forward.1} parent=11 // pred_region
          _
        $region16: #{textgen_forward.1} parent=11 // pred_fallthru
          _
        // Predicated region
        $region17: #{textgen_forward.1} parent=11 // pred_check
          %p564 = pneg %p100
        $region18: #{textgen_forward.1} parent=11 // pred_check_branch
          %566 = sbr.rel (%p564) target = $region20
        $region19: #{textgen_forward.1} parent=11 // pred_region
          _
        $region20: #{textgen_forward.1} parent=11 // pred_fallthru
          _
        // Predicated region
        $region21: #{textgen_forward.1} parent=11 // pred_check
          %p567 = pneg %p121
        $region22: #{textgen_forward.1} parent=11 // pred_check_branch
          %569 = sbr.rel (%p567) target = $region24
        $region23: #{textgen_forward.1} parent=11 // pred_region
          _
        $region24: #{textgen_forward.1} parent=11 // pred_fallthru
          _
        // Predicated region
        $region25: #{textgen_forward.1} parent=11 // pred_check
          %p570 = pneg %p142
        $region26: #{textgen_forward.1} parent=11 // pred_check_branch
          %572 = sbr.rel (%p570) target = $region28
        $region27: #{textgen_forward.1} parent=11 // pred_region
          _
        $region28: #{textgen_forward.1} parent=11 // pred_fallthru
          _
        // Predicated region
        $region29: #{textgen_forward.1} parent=11 // pred_check
          %p573 = pneg %p163
        $region30: #{textgen_forward.1} parent=11 // pred_check_branch
          %575 = sbr.rel (%p573) target = $region32
        $region31: #{textgen_forward.1} parent=11 // pred_region
          _
        $region32: #{textgen_forward.1} parent=11 // pred_fallthru
          _
        // Predicated region
        $region33: #{textgen_forward.1} parent=11 // pred_check
          %p576 = pneg %p184
        $region34: #{textgen_forward.1} parent=11 // pred_check_branch
          %578 = sbr.rel (%p576) target = $region36
        $region35: #{textgen_forward.1} parent=11 // pred_region
          _
        $region36: #{textgen_forward.1} parent=11 // pred_fallthru
          _
        // Predicated region
        $region37: #{textgen_forward.1} parent=11 // pred_check
          %p579 = pneg %p205
        $region38: #{textgen_forward.1} parent=11 // pred_check_branch
          %581 = sbr.rel (%p579) target = $region40
        $region39: #{textgen_forward.1} parent=11 // pred_region
          _
        $region40: #{textgen_forward.1} parent=11 // pred_fallthru
          _
        // Predicated region
        $region41: #{textgen_forward.1} parent=11 // pred_check
          %p582 = pneg %p226
        $region42: #{textgen_forward.1} parent=11 // pred_check_branch
          %584 = sbr.rel (%p582) target = $region44
        $region43: #{textgen_forward.1} parent=11 // pred_region
          _
        $region44: #{textgen_forward.1} parent=11 // pred_fallthru
          _
        // Predicated region
        $region45: #{textgen_forward.1} parent=11 // pred_check
          %p585 = pneg %p247
        $region46: #{textgen_forward.1} parent=11 // pred_check_branch
          %587 = sbr.rel (%p585) target = $region48
        $region47: #{textgen_forward.1} parent=11 // pred_region
          _
        $region48: #{textgen_forward.1} parent=11 // pred_fallthru
          _
        // Predicated region
        $region49: #{textgen_forward.1} parent=11 // pred_check
          %p588 = pneg %p268
        $region50: #{textgen_forward.1} parent=11 // pred_check_branch
          %590 = sbr.rel (%p588) target = $region52
        $region51: #{textgen_forward.1} parent=11 // pred_region
          _
        $region52: #{textgen_forward.1} parent=11 // pred_fallthru
          _
        // Predicated region
        $region53: #{textgen_forward.1} parent=11 // pred_check
          %p591 = pneg %p289
        $region54: #{textgen_forward.1} parent=11 // pred_check_branch
          %593 = sbr.rel (%p591) target = $region56
        $region55: #{textgen_forward.1} parent=11 // pred_region
          _
        $region56: #{textgen_forward.1} parent=11 // pred_fallthru
          _
        // Predicated region
        $region57: #{textgen_forward.1} parent=11 // pred_check
          %p594 = pneg %p310
        $region58: #{textgen_forward.1} parent=11 // pred_check_branch
          %596 = sbr.rel (%p594) target = $region60
        $region59: #{textgen_forward.1} parent=11 // pred_region
          _
        $region60: #{textgen_forward.1} parent=11 // pred_fallthru
          _
        // Predicated region
        $region61: #{textgen_forward.1} parent=11 // pred_check
          %p597 = pneg %p331
        $region62: #{textgen_forward.1} parent=11 // pred_check_branch
          %599 = sbr.rel (%p597) target = $region64
        $region63: #{textgen_forward.1} parent=11 // pred_region
          _
        $region64: #{textgen_forward.1} parent=11 // pred_fallthru
          _
        // Predicated region
        $region65: #{textgen_forward.1} parent=11 // pred_check
          %p600 = pneg %p352
        $region66: #{textgen_forward.1} parent=11 // pred_check_branch
          %602 = sbr.rel (%p600) target = $region68
        $region67: #{textgen_forward.1} parent=11 // pred_region
          _
        $region68: #{textgen_forward.1} parent=11 // pred_fallthru
          _
        // Predicated region
        $region69: #{textgen_forward.1} parent=11 // pred_check
          %p603 = pneg %p373
        $region70: #{textgen_forward.1} parent=11 // pred_check_branch
          %605 = sbr.rel (%p603) target = $region72
        $region71: #{textgen_forward.1} parent=11 // pred_region
          _
        $region72: #{textgen_forward.1} parent=11 // pred_fallthru
          _
        // Predicated region
        $region73: #{textgen_forward.1} parent=11 // pred_check
          %p606 = pneg %p394
        $region74: #{textgen_forward.1} parent=11 // pred_check_branch
          %608 = sbr.rel (%p606) target = $region76
        $region75: #{textgen_forward.1} parent=11 // pred_region
          _
        $region76: #{textgen_forward.1} parent=11 // pred_fallthru
          _
        // Predicated region
        $region77: #{textgen_forward.1} parent=11 // pred_check
          %p609 = pneg %p415
        $region78: #{textgen_forward.1} parent=11 // pred_check_branch
          %611 = sbr.rel (%p609) target = $region80
        $region79: #{textgen_forward.1} parent=11 // pred_region
          _
        $region80: #{textgen_forward.1} parent=11 // pred_fallthru
          _
        // Predicated region
        $region81: #{textgen_forward.1} parent=11 // pred_check
          %p612 = pneg %p436
        $region82: #{textgen_forward.1} parent=11 // pred_check_branch
          %614 = sbr.rel (%p612) target = $region84
        $region83: #{textgen_forward.1} parent=11 // pred_region
          _
        $region84: #{textgen_forward.1} parent=11 // pred_fallthru
          _
        // Predicated region
        $region85: #{textgen_forward.1} parent=11 // pred_check
          %p615 = pneg %p457
        $region86: #{textgen_forward.1} parent=11 // pred_check_branch
          %617 = sbr.rel (%p615) target = $region88
        $region87: #{textgen_forward.1} parent=11 // pred_region
          _
        $region88: #{textgen_forward.1} parent=11 // pred_fallthru
          _
        // Predicated region
        $region89: #{textgen_forward.1} parent=11 // pred_check
          %p618 = pneg %p478
        $region90: #{textgen_forward.1} parent=11 // pred_check_branch
          %620 = sbr.rel (%p618) target = $region92
        $region91: #{textgen_forward.1} parent=11 // pred_region
          _
        $region92: #{textgen_forward.1} parent=11 // pred_fallthru
          _
        // Predicated region
        $region93: #{textgen_forward.1} parent=11 // pred_check
          %p621 = pneg %p499
        $region94: #{textgen_forward.1} parent=11 // pred_check_branch
          %623 = sbr.rel (%p621) target = $region96
        $region95: #{textgen_forward.1} parent=11 // pred_region
          _
        $region96: #{textgen_forward.1} parent=11 // pred_fallthru
          _
        // Predicated region
        $region97: #{textgen_forward.1} parent=11 // pred_check
          %p624 = pneg %p520
        $region98: #{textgen_forward.1} parent=11 // pred_check_branch
          %626 = sbr.rel (%p624) target = $region100
        $region99: #{textgen_forward.1} parent=11 // pred_region
          _
        $region100: #{textgen_forward.1} parent=11 // pred_fallthru
          _
      $region12: #{textgen_forward.1} parent=5 // pred_fallthru
        _
      %p627 = scmp.lt.s32.totalorder %s32, 2
      // Predicated region
      $region101: #{textgen_forward.1} parent=5 // pred_check
        %p628 = pneg %p627
      $region102: #{textgen_forward.1} parent=5 // pred_check_branch
        %630 = sbr.rel (%p628) target = $region104
      $region103: #{textgen_forward.1} parent=5 // pred_region
        // Predicated region
        $region105: #{textgen_forward.1} parent=103 // pred_check
          %p631 = pneg %p52
        $region106: #{textgen_forward.1} parent=103 // pred_check_branch
          %633 = sbr.rel (%p631) target = $region108
        $region107: #{textgen_forward.1} parent=103 // pred_region
          %p634 = scmp.lt.s32.totalorder %s32, 1
          %s635 = scalar_select %p634, %s32, 1
          %s636 = smul.addr %s635, 2
          %s637 = smul.addr %s636, 8
          %s638 = scalar_lea.vmem %s0, %s637
        $region108: #{textgen_forward.1} parent=103 // pred_fallthru
          _
      $region104: #{textgen_forward.1} parent=5 // pred_fallthru
        _
      %p639 = scmp.le.s32.totalorder 1, %s32
      %p640 = scmp.lt.s32.totalorder %s32, 3
      %p641 = pnand %p639, %p640
      %p642 = pneg %p641
      // Predicated region
      $region109: #{textgen_forward.1} parent=5 // pred_check
        _
      $region110: #{textgen_forward.1} parent=5 // pred_check_branch
        %644 = sbr.rel (%p641) target = $region112
      $region111: #{textgen_forward.1} parent=5 // pred_region
        %s645 = ssub.s32 %s32, 1
        %p646 = scmp.lt.s32.totalorder %s37, 1
        %s647 = scalar_select %p646, %s37, 1
        %s648 = smul.addr %s647, 2
        %s649 = smul.addr %s648, 8
        %s650 = scalar_lea.vmem %s0, %s649
        %p651 = pneg %p58
        %p652 = pneg %p55
        %p653 = pneg %p79
        %p654 = pneg %p76
        %p655 = pneg %p100
        %p656 = pneg %p97
        %p657 = pneg %p121
        %p658 = pneg %p118
        %p659 = pneg %p142
        %p660 = pneg %p139
        %p661 = pneg %p163
        %p662 = pneg %p160
        %p663 = pneg %p184
        %p664 = pneg %p181
        %p665 = pneg %p205
        %p666 = pneg %p202
        %p667 = pneg %p226
        %p668 = pneg %p223
        %p669 = pneg %p247
        %p670 = pneg %p244
        %p671 = pneg %p268
        %p672 = pneg %p265
        %p673 = pneg %p289
        %p674 = pneg %p286
        %p675 = pneg %p310
        %p676 = pneg %p307
        %p677 = pneg %p331
        %p678 = pneg %p328
        %p679 = pneg %p352
        %p680 = pneg %p349
        %p681 = pneg %p373
        %p682 = pneg %p370
        %p683 = pneg %p394
        %p684 = pneg %p391
        %p685 = pneg %p415
        %p686 = pneg %p412
        %p687 = pneg %p436
        %p688 = pneg %p433
        %p689 = pneg %p457
        %p690 = pneg %p454
        %p691 = pneg %p478
        %p692 = pneg %p475
        %p693 = pneg %p499
        %p694 = pneg %p496
        %p695 = pneg %p520
        %p696 = pneg %p517
        %p697 = pneg %p546
        %p698 = pneg %p543
        %s699 = sand.u32 %s533, 1
        %s700 = scalar_lea.sflag [#allocation3], %s699
        %s701 = sand.u32 %s533, 1
        %s702 = smul.addr %s701, 16
        %s703 = scalar_lea.vmem [#allocation2], %s702
        %p704 = scmp.lt.s32.totalorder %s37, 1
        %s705 = scalar_select %p704, %s37, 1
        %s706 = smul.addr %s705, 2
        %s707 = smul.addr %s706, 8
        %s708 = scalar_lea.vmem %s0, %s707
        %v709 = vld [vmem:[%s708] sm:$0xff]
        %v710 = vld [vmem:[%s708 + $0x8] sm:$0xff]
        %v711 = vlaneseq
        %v712 = vshrl.u32 %v711, 7
        %v713 = vadd.s32 %v712, 8
        %v714 = vlaneseq
        %v715 = vand.u32 %v714, 127
        %vm716 = vcmp.le.s32.totalorder %v715, %v712
        %vm717 = vcmp.le.s32.totalorder %v715, %v713
        %v718 = vld [vmem:[%s1] sm:$0xff]
        %v719 = vld [vmem:[%s1 + $0x8] sm:$0xff]
        %v720 = vld [vmem:[%s1 + $0x10] sm:$0xff]
        %v721 = vld [vmem:[%s1 + $0x18] sm:$0xff]
        %v722 = vld [vmem:[%s2] sm:$0x1]
        %v724 = vperm.slane %v722, 0
        %vm726 = vcmask 261120
        %v728 = vsel %vm726, %v709, 0
        %v731 = vsel %vm726, %v710, 0
        %733 = vmatpush.msra.mxu0 0.0
        %734 = vmatpush.msra.mxu0 0.0
        %735 = vmatpush.msra.mxu0 0.0
        %736 = vmatpush.msra.mxu0 0.0
        %737 = vmatpush.msra.mxu0 0.0
        %738 = vmatpush.msra.mxu0 0.0
        %739 = vmatpush.msra.mxu0 0.0
        %740 = vmatpush.msra.mxu0 0.0
        %741 = vmatpush.msra.mxu0 0.0
        %742 = vmatpush.msra.mxu0 0.0
        %743 = vmatpush.msra.mxu0 0.0
        %744 = vmatpush.msra.mxu0 0.0
        %745 = vmatpush.msra.mxu0 %v721
        %746 = vmatpush.msra.mxu0 %v720
        %747 = vmatpush.msra.mxu0 %v719
        %748 = vmatpush.msra.mxu0 %v718
        %749 = vmatmul.f32.gmra.mxu0 %v728
        %v750 = vpop.f32.mrf.mxu0
        %v751 = vadd.f32 %v724, %v750
        %752 = vmatmul.f32.gmra.mxu0 %v731
        %v753 = vpop.f32.mrf.mxu0
        %v754 = vadd.f32 %v724, %v753
        %755 = vdwg.mxu0
        %758 = vrot.lane.b32.xlu0 %v751, 120
        %v759 = vpop.permute.xlu0 %758
        %760 = vrot.lane.b32.xlu0 %v754, 120
        %v761 = vpop.permute.xlu0 %760
        %764 = vrot.lane.b32.xlu0 %v751, 112
        %v765 = vpop.permute.xlu0 %764
        %766 = vrot.lane.b32.xlu0 %v754, 112
        %v767 = vpop.permute.xlu0 %766
        %770 = vrot.lane.b32.xlu0 %v751, 104
        %v771 = vpop.permute.xlu0 %770
        %772 = vrot.lane.b32.xlu0 %v754, 104
        %v773 = vpop.permute.xlu0 %772
        %v776 = vrot.slane %v765, 4
        %vm777 = vcmask 1047556
        %v778 = vsel %vm777, %v776, %v751
        %v779 = vrot.slane %v751, 4
        %v780 = vsel %vm777, %v765, %v779
        %v782 = vunpack.c.l.s4 1983009808
        %v783 = vunpack.c.0.s8 %v782
        %v784 = vperm.slane %v778, %v783
        %v786 = vunpack.c.l.s4 1983009808
        %v787 = vunpack.c.0.s8 %v786
        %v788 = vperm.slane %v780, %v787
        %v789 = vrot.slane %v771, 4
        %v790 = vsel %vm777, %v789, %v759
        %v791 = vrot.slane %v759, 4
        %v792 = vsel %vm777, %v771, %v791
        %v794 = vunpack.c.l.s4 1983009808
        %v795 = vunpack.c.0.s8 %v794
        %v796 = vperm.slane %v790, %v795
        %v798 = vunpack.c.l.s4 1983009808
        %v799 = vunpack.c.0.s8 %v798
        %v800 = vperm.slane %v792, %v799
        %v801 = vrot.slane %v796, 4
        %v802 = vsel %vm777, %v801, %v784
        %v803 = vrot.slane %v784, 4
        %v804 = vsel %vm777, %v796, %v803
        %v806 = vunpack.c.l.s4 1934713408
        %v807 = vunpack.c.0.s8 %v806
        %v808 = vperm.slane %v802, %v807
        %v810 = vunpack.c.l.s4 1934713408
        %v811 = vunpack.c.0.s8 %v810
        %v812 = vperm.slane %v804, %v811
        %v813 = vrot.slane %v800, 4
        %v814 = vsel %vm777, %v813, %v788
        %v815 = vrot.slane %v788, 4
        %v816 = vsel %vm777, %v800, %v815
        %v818 = vunpack.c.l.s4 1934713408
        %v819 = vunpack.c.0.s8 %v818
        %v820 = vperm.slane %v814, %v819
        %v822 = vunpack.c.l.s4 1934713408
        %v823 = vunpack.c.0.s8 %v822
        %v824 = vperm.slane %v816, %v823
        %v825 = vrot.slane %v808, 4
        %v826 = vsel %vm777, 0.0, %v825
        %v827 = vrot.slane %v812, 4
        %v828 = vsel %vm777, 0.0, %v827
        %v829 = vrot.slane %v820, 4
        %v830 = vsel %vm777, 0.0, %v829
        %v831 = vrot.slane %v824, 4
        %v832 = vsel %vm777, 0.0, %v831
        %v833 = vrot.slane %v767, 4
        %v834 = vsel %vm777, %v833, %v754
        %v835 = vrot.slane %v754, 4
        %v836 = vsel %vm777, %v767, %v835
        %v838 = vunpack.c.l.s4 1983009808
        %v839 = vunpack.c.0.s8 %v838
        %v840 = vperm.slane %v834, %v839
        %v842 = vunpack.c.l.s4 1983009808
        %v843 = vunpack.c.0.s8 %v842
        %v844 = vperm.slane %v836, %v843
        %v845 = vrot.slane %v773, 4
        %v846 = vsel %vm777, %v845, %v761
        %v847 = vrot.slane %v761, 4
        %v848 = vsel %vm777, %v773, %v847
        %v850 = vunpack.c.l.s4 1983009808
        %v851 = vunpack.c.0.s8 %v850
        %v852 = vperm.slane %v846, %v851
        %v854 = vunpack.c.l.s4 1983009808
        %v855 = vunpack.c.0.s8 %v854
        %v856 = vperm.slane %v848, %v855
        %v857 = vrot.slane %v852, 4
        %v858 = vsel %vm777, %v857, %v840
        %v859 = vrot.slane %v840, 4
        %v860 = vsel %vm777, %v852, %v859
        %v862 = vunpack.c.l.s4 1934713408
        %v863 = vunpack.c.0.s8 %v862
        %v864 = vperm.slane %v858, %v863
        %v866 = vunpack.c.l.s4 1934713408
        %v867 = vunpack.c.0.s8 %v866
        %v868 = vperm.slane %v860, %v867
        %v869 = vrot.slane %v856, 4
        %v870 = vsel %vm777, %v869, %v844
        %v871 = vrot.slane %v844, 4
        %v872 = vsel %vm777, %v856, %v871
        %v874 = vunpack.c.l.s4 1934713408
        %v875 = vunpack.c.0.s8 %v874
        %v876 = vperm.slane %v870, %v875
        %v878 = vunpack.c.l.s4 1934713408
        %v879 = vunpack.c.0.s8 %v878
        %v880 = vperm.slane %v872, %v879
        %v881 = vrot.slane %v864, 4
        %v882 = vsel %vm777, 0.0, %v881
        %v883 = vrot.slane %v868, 4
        %v884 = vsel %vm777, 0.0, %v883
        %v885 = vrot.slane %v876, 4
        %v886 = vsel %vm777, 0.0, %v885
        %v887 = vrot.slane %v880, 4
        %v888 = vsel %vm777, 0.0, %v887
        %v889 = vsel %vm777, %v827, %v808
        %v891 = vunpack.c.l.s4 1983009808
        %v892 = vunpack.c.0.s8 %v891
        %v893 = vperm.slane %v889, %v892
        %v894 = vrot.slane %v828, 4
        %v895 = vsel %vm777, %v894, %v826
        %v897 = vunpack.c.l.s4 1983009808
        %v898 = vunpack.c.0.s8 %v897
        %v899 = vperm.slane %v895, %v898
        %v900 = vsel %vm777, %v831, %v820
        %v902 = vunpack.c.l.s4 1983009808
        %v903 = vunpack.c.0.s8 %v902
        %v904 = vperm.slane %v900, %v903
        %v905 = vrot.slane %v832, 4
        %v906 = vsel %vm777, %v905, %v830
        %v908 = vunpack.c.l.s4 1983009808
        %v909 = vunpack.c.0.s8 %v908
        %v910 = vperm.slane %v906, %v909
        %v911 = vrot.slane %v899, 4
        %v912 = vsel %vm777, %v911, %v893
        %v913 = vrot.slane %v893, 4
        %v914 = vsel %vm777, %v899, %v913
        %v916 = vunpack.c.l.s4 1934713408
        %v917 = vunpack.c.0.s8 %v916
        %v918 = vperm.slane %v912, %v917
        %v920 = vunpack.c.l.s4 1934713408
        %v921 = vunpack.c.0.s8 %v920
        %v922 = vperm.slane %v914, %v921
        %v923 = vrot.slane %v910, 4
        %v924 = vsel %vm777, %v923, %v904
        %v925 = vrot.slane %v904, 4
        %v926 = vsel %vm777, %v910, %v925
        %v928 = vunpack.c.l.s4 1934713408
        %v929 = vunpack.c.0.s8 %v928
        %v930 = vperm.slane %v924, %v929
        %v932 = vunpack.c.l.s4 1934713408
        %v933 = vunpack.c.0.s8 %v932
        %v934 = vperm.slane %v926, %v933
        %v935 = vrot.slane %v930, 4
        %v936 = vsel %vm777, %v935, %v918
        %v937 = vrot.slane %v918, 4
        %v938 = vsel %vm777, %v930, %v937
        %v939 = vrot.slane %v934, 4
        %v940 = vsel %vm777, %v939, %v922
        %v941 = vrot.slane %v922, 4
        %v942 = vsel %vm777, %v934, %v941
        %v943 = vsel %vm777, %v883, %v864
        %v945 = vunpack.c.l.s4 1983009808
        %v946 = vunpack.c.0.s8 %v945
        %v947 = vperm.slane %v943, %v946
        %v948 = vrot.slane %v884, 4
        %v949 = vsel %vm777, %v948, %v882
        %v951 = vunpack.c.l.s4 1983009808
        %v952 = vunpack.c.0.s8 %v951
        %v953 = vperm.slane %v949, %v952
        %v954 = vsel %vm777, %v887, %v876
        %v956 = vunpack.c.l.s4 1983009808
        %v957 = vunpack.c.0.s8 %v956
        %v958 = vperm.slane %v954, %v957
        %v959 = vrot.slane %v888, 4
        %v960 = vsel %vm777, %v959, %v886
        %v962 = vunpack.c.l.s4 1983009808
        %v963 = vunpack.c.0.s8 %v962
        %v964 = vperm.slane %v960, %v963
        %v965 = vrot.slane %v953, 4
        %v966 = vsel %vm777, %v965, %v947
        %v967 = vrot.slane %v947, 4
        %v968 = vsel %vm777, %v953, %v967
        %v970 = vunpack.c.l.s4 1934713408
        %v971 = vunpack.c.0.s8 %v970
        %v972 = vperm.slane %v966, %v971
        %v974 = vunpack.c.l.s4 1934713408
        %v975 = vunpack.c.0.s8 %v974
        %v976 = vperm.slane %v968, %v975
        %v977 = vrot.slane %v964, 4
        %v978 = vsel %vm777, %v977, %v958
        %v979 = vrot.slane %v958, 4
        %v980 = vsel %vm777, %v964, %v979
        %v982 = vunpack.c.l.s4 1934713408
        %v983 = vunpack.c.0.s8 %v982
        %v984 = vperm.slane %v978, %v983
        %v986 = vunpack.c.l.s4 1934713408
        %v987 = vunpack.c.0.s8 %v986
        %v988 = vperm.slane %v980, %v987
        %v989 = vrot.slane %v984, 4
        %v990 = vsel %vm777, %v989, %v972
        %v991 = vrot.slane %v972, 4
        %v992 = vsel %vm777, %v984, %v991
        %v993 = vrot.slane %v988, 4
        %v994 = vsel %vm777, %v993, %v976
        %v995 = vrot.slane %v976, 4
        %v996 = vsel %vm777, %v988, %v995
        %997 = vrot.lane.b32.xlu0 %v751, 96
        %v998 = vpop.permute.xlu0 %997
        %999 = vrot.lane.b32.xlu0 %v754, 96
        %v1000 = vpop.permute.xlu0 %999
        %1001 = vrot.lane.b32.xlu0 %v759, 96
        %v1002 = vpop.permute.xlu0 %1001
        %1003 = vrot.lane.b32.xlu0 %v761, 96
        %v1004 = vpop.permute.xlu0 %1003
        %1005 = vrot.lane.b32.xlu0 %v765, 96
        %v1006 = vpop.permute.xlu0 %1005
        %1007 = vrot.lane.b32.xlu0 %v767, 96
        %v1008 = vpop.permute.xlu0 %1007
        %1009 = vrot.lane.b32.xlu0 %v771, 96
        %v1010 = vpop.permute.xlu0 %1009
        %1011 = vrot.lane.b32.xlu0 %v773, 96
        %v1012 = vpop.permute.xlu0 %1011
        %v1021 = vrot.slane %v1006, 4
        %v1022 = vsel %vm777, %v1021, %v998
        %v1023 = vrot.slane %v998, 4
        %v1024 = vsel %vm777, %v1006, %v1023
        %v1026 = vunpack.c.l.s4 1983009808
        %v1027 = vunpack.c.0.s8 %v1026
        %v1028 = vperm.slane %v1022, %v1027
        %v1030 = vunpack.c.l.s4 1983009808
        %v1031 = vunpack.c.0.s8 %v1030
        %v1032 = vperm.slane %v1024, %v1031
        %v1033 = vrot.slane %v1010, 4
        %v1034 = vsel %vm777, %v1033, %v1002
        %v1035 = vrot.slane %v1002, 4
        %v1036 = vsel %vm777, %v1010, %v1035
        %v1038 = vunpack.c.l.s4 1983009808
        %v1039 = vunpack.c.0.s8 %v1038
        %v1040 = vperm.slane %v1034, %v1039
        %v1042 = vunpack.c.l.s4 1983009808
        %v1043 = vunpack.c.0.s8 %v1042
        %v1044 = vperm.slane %v1036, %v1043
        %v1045 = vrot.slane %v1040, 4
        %v1046 = vsel %vm777, %v1045, %v1028
        %v1047 = vrot.slane %v1028, 4
        %v1048 = vsel %vm777, %v1040, %v1047
        %v1050 = vunpack.c.l.s4 1934713408
        %v1051 = vunpack.c.0.s8 %v1050
        %v1052 = vperm.slane %v1046, %v1051
        %v1054 = vunpack.c.l.s4 1934713408
        %v1055 = vunpack.c.0.s8 %v1054
        %v1056 = vperm.slane %v1048, %v1055
        %v1057 = vrot.slane %v1044, 4
        %v1058 = vsel %vm777, %v1057, %v1032
        %v1059 = vrot.slane %v1032, 4
        %v1060 = vsel %vm777, %v1044, %v1059
        %v1062 = vunpack.c.l.s4 1934713408
        %v1063 = vunpack.c.0.s8 %v1062
        %v1064 = vperm.slane %v1058, %v1063
        %v1066 = vunpack.c.l.s4 1934713408
        %v1067 = vunpack.c.0.s8 %v1066
        %v1068 = vperm.slane %v1060, %v1067
        %v1069 = vrot.slane %v1052, 4
        %v1070 = vsel %vm777, 0.0, %v1069
        %v1071 = vrot.slane %v1056, 4
        %v1072 = vsel %vm777, 0.0, %v1071
        %v1073 = vrot.slane %v1064, 4
        %v1074 = vsel %vm777, 0.0, %v1073
        %v1075 = vrot.slane %v1068, 4
        %v1076 = vsel %vm777, 0.0, %v1075
        %v1077 = vrot.slane %v1008, 4
        %v1078 = vsel %vm777, %v1077, %v1000
        %v1079 = vrot.slane %v1000, 4
        %v1080 = vsel %vm777, %v1008, %v1079
        %v1082 = vunpack.c.l.s4 1983009808
        %v1083 = vunpack.c.0.s8 %v1082
        %v1084 = vperm.slane %v1078, %v1083
        %v1086 = vunpack.c.l.s4 1983009808
        %v1087 = vunpack.c.0.s8 %v1086
        %v1088 = vperm.slane %v1080, %v1087
        %v1089 = vrot.slane %v1012, 4
        %v1090 = vsel %vm777, %v1089, %v1004
        %v1091 = vrot.slane %v1004, 4
        %v1092 = vsel %vm777, %v1012, %v1091
        %v1094 = vunpack.c.l.s4 1983009808
        %v1095 = vunpack.c.0.s8 %v1094
        %v1096 = vperm.slane %v1090, %v1095
        %v1098 = vunpack.c.l.s4 1983009808
        %v1099 = vunpack.c.0.s8 %v1098
        %v1100 = vperm.slane %v1092, %v1099
        %v1101 = vrot.slane %v1096, 4
        %v1102 = vsel %vm777, %v1101, %v1084
        %v1103 = vrot.slane %v1084, 4
        %v1104 = vsel %vm777, %v1096, %v1103
        %v1106 = vunpack.c.l.s4 1934713408
        %v1107 = vunpack.c.0.s8 %v1106
        %v1108 = vperm.slane %v1102, %v1107
        %v1110 = vunpack.c.l.s4 1934713408
        %v1111 = vunpack.c.0.s8 %v1110
        %v1112 = vperm.slane %v1104, %v1111
        %v1113 = vrot.slane %v1100, 4
        %v1114 = vsel %vm777, %v1113, %v1088
        %v1115 = vrot.slane %v1088, 4
        %v1116 = vsel %vm777, %v1100, %v1115
        %v1118 = vunpack.c.l.s4 1934713408
        %v1119 = vunpack.c.0.s8 %v1118
        %v1120 = vperm.slane %v1114, %v1119
        %v1122 = vunpack.c.l.s4 1934713408
        %v1123 = vunpack.c.0.s8 %v1122
        %v1124 = vperm.slane %v1116, %v1123
        %v1125 = vrot.slane %v1108, 4
        %v1126 = vsel %vm777, 0.0, %v1125
        %v1127 = vrot.slane %v1112, 4
        %v1128 = vsel %vm777, 0.0, %v1127
        %v1129 = vrot.slane %v1120, 4
        %v1130 = vsel %vm777, 0.0, %v1129
        %v1131 = vrot.slane %v1124, 4
        %v1132 = vsel %vm777, 0.0, %v1131
        %v1133 = vsel %vm777, %v1071, %v1052
        %v1135 = vunpack.c.l.s4 1983009808
        %v1136 = vunpack.c.0.s8 %v1135
        %v1137 = vperm.slane %v1133, %v1136
        %v1138 = vrot.slane %v1072, 4
        %v1139 = vsel %vm777, %v1138, %v1070
        %v1141 = vunpack.c.l.s4 1983009808
        %v1142 = vunpack.c.0.s8 %v1141
        %v1143 = vperm.slane %v1139, %v1142
        %v1144 = vsel %vm777, %v1075, %v1064
        %v1146 = vunpack.c.l.s4 1983009808
        %v1147 = vunpack.c.0.s8 %v1146
        %v1148 = vperm.slane %v1144, %v1147
        %v1149 = vrot.slane %v1076, 4
        %v1150 = vsel %vm777, %v1149, %v1074
        %v1152 = vunpack.c.l.s4 1983009808
        %v1153 = vunpack.c.0.s8 %v1152
        %v1154 = vperm.slane %v1150, %v1153
        %v1155 = vrot.slane %v1143, 4
        %v1156 = vsel %vm777, %v1155, %v1137
        %v1157 = vrot.slane %v1137, 4
        %v1158 = vsel %vm777, %v1143, %v1157
        %v1160 = vunpack.c.l.s4 1934713408
        %v1161 = vunpack.c.0.s8 %v1160
        %v1162 = vperm.slane %v1156, %v1161
        %v1164 = vunpack.c.l.s4 1934713408
        %v1165 = vunpack.c.0.s8 %v1164
        %v1166 = vperm.slane %v1158, %v1165
        %v1167 = vrot.slane %v1154, 4
        %v1168 = vsel %vm777, %v1167, %v1148
        %v1169 = vrot.slane %v1148, 4
        %v1170 = vsel %vm777, %v1154, %v1169
        %v1172 = vunpack.c.l.s4 1934713408
        %v1173 = vunpack.c.0.s8 %v1172
        %v1174 = vperm.slane %v1168, %v1173
        %v1176 = vunpack.c.l.s4 1934713408
        %v1177 = vunpack.c.0.s8 %v1176
        %v1178 = vperm.slane %v1170, %v1177
        %v1179 = vrot.slane %v1174, 4
        %v1180 = vsel %vm777, %v1179, %v1162
        %v1181 = vrot.slane %v1162, 4
        %v1182 = vsel %vm777, %v1174, %v1181
        %v1183 = vrot.slane %v1178, 4
        %v1184 = vsel %vm777, %v1183, %v1166
        %v1185 = vrot.slane %v1166, 4
        %v1186 = vsel %vm777, %v1178, %v1185
        %v1187 = vsel %vm777, %v1127, %v1108
        %v1189 = vunpack.c.l.s4 1983009808
        %v1190 = vunpack.c.0.s8 %v1189
        %v1191 = vperm.slane %v1187, %v1190
        %v1192 = vrot.slane %v1128, 4
        %v1193 = vsel %vm777, %v1192, %v1126
        %v1195 = vunpack.c.l.s4 1983009808
        %v1196 = vunpack.c.0.s8 %v1195
        %v1197 = vperm.slane %v1193, %v1196
        %v1198 = vsel %vm777, %v1131, %v1120
        %v1200 = vunpack.c.l.s4 1983009808
        %v1201 = vunpack.c.0.s8 %v1200
        %v1202 = vperm.slane %v1198, %v1201
        %v1203 = vrot.slane %v1132, 4
        %v1204 = vsel %vm777, %v1203, %v1130
        %v1206 = vunpack.c.l.s4 1983009808
        %v1207 = vunpack.c.0.s8 %v1206
        %v1208 = vperm.slane %v1204, %v1207
        %v1209 = vrot.slane %v1197, 4
        %v1210 = vsel %vm777, %v1209, %v1191
        %v1211 = vrot.slane %v1191, 4
        %v1212 = vsel %vm777, %v1197, %v1211
        %v1214 = vunpack.c.l.s4 1934713408
        %v1215 = vunpack.c.0.s8 %v1214
        %v1216 = vperm.slane %v1210, %v1215
        %v1218 = vunpack.c.l.s4 1934713408
        %v1219 = vunpack.c.0.s8 %v1218
        %v1220 = vperm.slane %v1212, %v1219
        %v1221 = vrot.slane %v1208, 4
        %v1222 = vsel %vm777, %v1221, %v1202
        %v1223 = vrot.slane %v1202, 4
        %v1224 = vsel %vm777, %v1208, %v1223
        %v1226 = vunpack.c.l.s4 1934713408
        %v1227 = vunpack.c.0.s8 %v1226
        %v1228 = vperm.slane %v1222, %v1227
        %v1230 = vunpack.c.l.s4 1934713408
        %v1231 = vunpack.c.0.s8 %v1230
        %v1232 = vperm.slane %v1224, %v1231
        %v1233 = vrot.slane %v1228, 4
        %v1234 = vsel %vm777, %v1233, %v1216
        %v1235 = vrot.slane %v1216, 4
        %v1236 = vsel %vm777, %v1228, %v1235
        %v1237 = vrot.slane %v1232, 4
        %v1238 = vsel %vm777, %v1237, %v1220
        %v1239 = vrot.slane %v1220, 4
        %v1240 = vsel %vm777, %v1232, %v1239
        %1241 = vrot.lane.b32.xlu0 %v751, 64
        %v1242 = vpop.permute.xlu0 %1241
        %1243 = vrot.lane.b32.xlu0 %v754, 64
        %v1244 = vpop.permute.xlu0 %1243
        %1245 = vrot.lane.b32.xlu0 %v759, 64
        %v1246 = vpop.permute.xlu0 %1245
        %1247 = vrot.lane.b32.xlu0 %v761, 64
        %v1248 = vpop.permute.xlu0 %1247
        %1249 = vrot.lane.b32.xlu0 %v765, 64
        %v1250 = vpop.permute.xlu0 %1249
        %1251 = vrot.lane.b32.xlu0 %v767, 64
        %v1252 = vpop.permute.xlu0 %1251
        %1253 = vrot.lane.b32.xlu0 %v771, 64
        %v1254 = vpop.permute.xlu0 %1253
        %1255 = vrot.lane.b32.xlu0 %v773, 64
        %v1256 = vpop.permute.xlu0 %1255
        %v1265 = vrot.slane %v1250, 4
        %v1266 = vsel %vm777, %v1265, %v1242
        %v1267 = vrot.slane %v1242, 4
        %v1268 = vsel %vm777, %v1250, %v1267
        %v1270 = vunpack.c.l.s4 1983009808
        %v1271 = vunpack.c.0.s8 %v1270
        %v1272 = vperm.slane %v1266, %v1271
        %v1274 = vunpack.c.l.s4 1983009808
        %v1275 = vunpack.c.0.s8 %v1274
        %v1276 = vperm.slane %v1268, %v1275
        %v1277 = vrot.slane %v1254, 4
        %v1278 = vsel %vm777, %v1277, %v1246
        %v1279 = vrot.slane %v1246, 4
        %v1280 = vsel %vm777, %v1254, %v1279
        %v1282 = vunpack.c.l.s4 1983009808
        %v1283 = vunpack.c.0.s8 %v1282
        %v1284 = vperm.slane %v1278, %v1283
        %v1286 = vunpack.c.l.s4 1983009808
        %v1287 = vunpack.c.0.s8 %v1286
        %v1288 = vperm.slane %v1280, %v1287
        %v1289 = vrot.slane %v1284, 4
        %v1290 = vsel %vm777, %v1289, %v1272
        %v1291 = vrot.slane %v1272, 4
        %v1292 = vsel %vm777, %v1284, %v1291
        %v1294 = vunpack.c.l.s4 1934713408
        %v1295 = vunpack.c.0.s8 %v1294
        %v1296 = vperm.slane %v1290, %v1295
        %v1298 = vunpack.c.l.s4 1934713408
        %v1299 = vunpack.c.0.s8 %v1298
        %v1300 = vperm.slane %v1292, %v1299
        %v1301 = vrot.slane %v1288, 4
        %v1302 = vsel %vm777, %v1301, %v1276
        %v1303 = vrot.slane %v1276, 4
        %v1304 = vsel %vm777, %v1288, %v1303
        %v1306 = vunpack.c.l.s4 1934713408
        %v1307 = vunpack.c.0.s8 %v1306
        %v1308 = vperm.slane %v1302, %v1307
        %v1310 = vunpack.c.l.s4 1934713408
        %v1311 = vunpack.c.0.s8 %v1310
        %v1312 = vperm.slane %v1304, %v1311
        %v1313 = vrot.slane %v1296, 4
        %v1314 = vsel %vm777, 0.0, %v1313
        %v1315 = vrot.slane %v1300, 4
        %v1316 = vsel %vm777, 0.0, %v1315
        %v1317 = vrot.slane %v1308, 4
        %v1318 = vsel %vm777, 0.0, %v1317
        %v1319 = vrot.slane %v1312, 4
        %v1320 = vsel %vm777, 0.0, %v1319
        %v1321 = vrot.slane %v1252, 4
        %v1322 = vsel %vm777, %v1321, %v1244
        %v1323 = vrot.slane %v1244, 4
        %v1324 = vsel %vm777, %v1252, %v1323
        %v1326 = vunpack.c.l.s4 1983009808
        %v1327 = vunpack.c.0.s8 %v1326
        %v1328 = vperm.slane %v1322, %v1327
        %v1330 = vunpack.c.l.s4 1983009808
        %v1331 = vunpack.c.0.s8 %v1330
        %v1332 = vperm.slane %v1324, %v1331
        %v1333 = vrot.slane %v1256, 4
        %v1334 = vsel %vm777, %v1333, %v1248
        %v1335 = vrot.slane %v1248, 4
        %v1336 = vsel %vm777, %v1256, %v1335
        %v1338 = vunpack.c.l.s4 1983009808
        %v1339 = vunpack.c.0.s8 %v1338
        %v1340 = vperm.slane %v1334, %v1339
        %v1342 = vunpack.c.l.s4 1983009808
        %v1343 = vunpack.c.0.s8 %v1342
        %v1344 = vperm.slane %v1336, %v1343
        %v1345 = vrot.slane %v1340, 4
        %v1346 = vsel %vm777, %v1345, %v1328
        %v1347 = vrot.slane %v1328, 4
        %v1348 = vsel %vm777, %v1340, %v1347
        %v1350 = vunpack.c.l.s4 1934713408
        %v1351 = vunpack.c.0.s8 %v1350
        %v1352 = vperm.slane %v1346, %v1351
        %v1354 = vunpack.c.l.s4 1934713408
        %v1355 = vunpack.c.0.s8 %v1354
        %v1356 = vperm.slane %v1348, %v1355
        %v1357 = vrot.slane %v1344, 4
        %v1358 = vsel %vm777, %v1357, %v1332
        %v1359 = vrot.slane %v1332, 4
        %v1360 = vsel %vm777, %v1344, %v1359
        %v1362 = vunpack.c.l.s4 1934713408
        %v1363 = vunpack.c.0.s8 %v1362
        %v1364 = vperm.slane %v1358, %v1363
        %v1366 = vunpack.c.l.s4 1934713408
        %v1367 = vunpack.c.0.s8 %v1366
        %v1368 = vperm.slane %v1360, %v1367
        %v1369 = vrot.slane %v1352, 4
        %v1370 = vsel %vm777, 0.0, %v1369
        %v1371 = vrot.slane %v1356, 4
        %v1372 = vsel %vm777, 0.0, %v1371
        %v1373 = vrot.slane %v1364, 4
        %v1374 = vsel %vm777, 0.0, %v1373
        %v1375 = vrot.slane %v1368, 4
        %v1376 = vsel %vm777, 0.0, %v1375
        %v1377 = vsel %vm777, %v1315, %v1296
        %v1379 = vunpack.c.l.s4 1983009808
        %v1380 = vunpack.c.0.s8 %v1379
        %v1381 = vperm.slane %v1377, %v1380
        %v1382 = vrot.slane %v1316, 4
        %v1383 = vsel %vm777, %v1382, %v1314
        %v1385 = vunpack.c.l.s4 1983009808
        %v1386 = vunpack.c.0.s8 %v1385
        %v1387 = vperm.slane %v1383, %v1386
        %v1388 = vsel %vm777, %v1319, %v1308
        %v1390 = vunpack.c.l.s4 1983009808
        %v1391 = vunpack.c.0.s8 %v1390
        %v1392 = vperm.slane %v1388, %v1391
        %v1393 = vrot.slane %v1320, 4
        %v1394 = vsel %vm777, %v1393, %v1318
        %v1396 = vunpack.c.l.s4 1983009808
        %v1397 = vunpack.c.0.s8 %v1396
        %v1398 = vperm.slane %v1394, %v1397
        %v1399 = vrot.slane %v1387, 4
        %v1400 = vsel %vm777, %v1399, %v1381
        %v1401 = vrot.slane %v1381, 4
        %v1402 = vsel %vm777, %v1387, %v1401
        %v1404 = vunpack.c.l.s4 1934713408
        %v1405 = vunpack.c.0.s8 %v1404
        %v1406 = vperm.slane %v1400, %v1405
        %v1408 = vunpack.c.l.s4 1934713408
        %v1409 = vunpack.c.0.s8 %v1408
        %v1410 = vperm.slane %v1402, %v1409
        %v1411 = vrot.slane %v1398, 4
        %v1412 = vsel %vm777, %v1411, %v1392
        %v1413 = vrot.slane %v1392, 4
        %v1414 = vsel %vm777, %v1398, %v1413
        %v1416 = vunpack.c.l.s4 1934713408
        %v1417 = vunpack.c.0.s8 %v1416
        %v1418 = vperm.slane %v1412, %v1417
        %v1420 = vunpack.c.l.s4 1934713408
        %v1421 = vunpack.c.0.s8 %v1420
        %v1422 = vperm.slane %v1414, %v1421
        %v1423 = vrot.slane %v1418, 4
        %v1424 = vsel %vm777, %v1423, %v1406
        %v1425 = vrot.slane %v1406, 4
        %v1426 = vsel %vm777, %v1418, %v1425
        %v1427 = vrot.slane %v1422, 4
        %v1428 = vsel %vm777, %v1427, %v1410
        %v1429 = vrot.slane %v1410, 4
        %v1430 = vsel %vm777, %v1422, %v1429
        %v1431 = vsel %vm777, %v1371, %v1352
        %v1433 = vunpack.c.l.s4 1983009808
        %v1434 = vunpack.c.0.s8 %v1433
        %v1435 = vperm.slane %v1431, %v1434
        %v1436 = vrot.slane %v1372, 4
        %v1437 = vsel %vm777, %v1436, %v1370
        %v1439 = vunpack.c.l.s4 1983009808
        %v1440 = vunpack.c.0.s8 %v1439
        %v1441 = vperm.slane %v1437, %v1440
        %v1442 = vsel %vm777, %v1375, %v1364
        %v1444 = vunpack.c.l.s4 1983009808
        %v1445 = vunpack.c.0.s8 %v1444
        %v1446 = vperm.slane %v1442, %v1445
        %v1447 = vrot.slane %v1376, 4
        %v1448 = vsel %vm777, %v1447, %v1374
        %v1450 = vunpack.c.l.s4 1983009808
        %v1451 = vunpack.c.0.s8 %v1450
        %v1452 = vperm.slane %v1448, %v1451
        %v1453 = vrot.slane %v1441, 4
        %v1454 = vsel %vm777, %v1453, %v1435
        %v1455 = vrot.slane %v1435, 4
        %v1456 = vsel %vm777, %v1441, %v1455
        %v1458 = vunpack.c.l.s4 1934713408
        %v1459 = vunpack.c.0.s8 %v1458
        %v1460 = vperm.slane %v1454, %v1459
        %v1462 = vunpack.c.l.s4 1934713408
        %v1463 = vunpack.c.0.s8 %v1462
        %v1464 = vperm.slane %v1456, %v1463
        %v1465 = vrot.slane %v1452, 4
        %v1466 = vsel %vm777, %v1465, %v1446
        %v1467 = vrot.slane %v1446, 4
        %v1468 = vsel %vm777, %v1452, %v1467
        %v1470 = vunpack.c.l.s4 1934713408
        %v1471 = vunpack.c.0.s8 %v1470
        %v1472 = vperm.slane %v1466, %v1471
        %v1474 = vunpack.c.l.s4 1934713408
        %v1475 = vunpack.c.0.s8 %v1474
        %v1476 = vperm.slane %v1468, %v1475
        %v1477 = vrot.slane %v1472, 4
        %v1478 = vsel %vm777, %v1477, %v1460
        %v1479 = vrot.slane %v1460, 4
        %v1480 = vsel %vm777, %v1472, %v1479
        %v1481 = vrot.slane %v1476, 4
        %v1482 = vsel %vm777, %v1481, %v1464
        %v1483 = vrot.slane %v1464, 4
        %v1484 = vsel %vm777, %v1476, %v1483
        %vm1485 = vcmask 64512
        %v1487 = vsel %vm1485, %v936, 0
        %v1490 = vsel %vm1485, %v990, 0
        %v1493 = vsel %vm1485, %v1180, 0
        %v1496 = vsel %vm1485, %v1234, 0
        %1498 = vmatpush.xpose.msra.mxu0 0.0
        %1499 = vmatpush.xpose.msra.mxu0 0.0
        %1500 = vmatpush.xpose.msra.mxu0 0.0
        %1501 = vmatpush.xpose.msra.mxu0 0.0
        %1502 = vmatpush.xpose.msra.mxu0 0.0
        %1503 = vmatpush.xpose.msra.mxu0 0.0
        %1504 = vmatpush.xpose.msra.mxu0 0.0
        %1505 = vmatpush.xpose.msra.mxu0 0.0
        %1506 = vmatpush.xpose.msra.mxu0 0.0
        %1507 = vmatpush.xpose.msra.mxu0 0.0
        %1508 = vmatpush.xpose.msra.mxu0 0.0
        %1509 = vmatpush.xpose.msra.mxu0 0.0
        %1510 = vmatpush.xpose.msra.mxu0 0.0
        %1511 = vmatpush.xpose.msra.mxu0 0.0
        %1512 = vmatpush.xpose.msra.mxu0 %v1496
        %1513 = vmatpush.xpose.msra.mxu0 %v1493
        %1514 = vmatmul.f32.gmra.mxu0 %v1487
        %v1515 = vpop.f32.mrf.mxu0
        %v1516 = vadd.f32 0.0, %v1515
        %1517 = vmatmul.f32.gmra.mxu0 %v1490
        %v1518 = vpop.f32.mrf.mxu0
        %v1519 = vadd.f32 0.0, %v1518
        %1520 = vdwg.mxu0
        %v1522 = vsel %vm1485, %v938, 0
        %v1525 = vsel %vm1485, %v992, 0
        %v1528 = vsel %vm1485, %v1182, 0
        %v1531 = vsel %vm1485, %v1236, 0
        %1533 = vmatpush.xpose.msra.mxu0 0.0
        %1534 = vmatpush.xpose.msra.mxu0 0.0
        %1535 = vmatpush.xpose.msra.mxu0 0.0
        %1536 = vmatpush.xpose.msra.mxu0 0.0
        %1537 = vmatpush.xpose.msra.mxu0 0.0
        %1538 = vmatpush.xpose.msra.mxu0 0.0
        %1539 = vmatpush.xpose.msra.mxu0 0.0
        %1540 = vmatpush.xpose.msra.mxu0 0.0
        %1541 = vmatpush.xpose.msra.mxu0 0.0
        %1542 = vmatpush.xpose.msra.mxu0 0.0
        %1543 = vmatpush.xpose.msra.mxu0 0.0
        %1544 = vmatpush.xpose.msra.mxu0 0.0
        %1545 = vmatpush.xpose.msra.mxu0 0.0
        %1546 = vmatpush.xpose.msra.mxu0 0.0
        %1547 = vmatpush.xpose.msra.mxu0 %v1531
        %1548 = vmatpush.xpose.msra.mxu0 %v1528
        %1549 = vmatmul.f32.gmra.mxu0 %v1522
        %v1550 = vpop.f32.mrf.mxu0
        %v1551 = vadd.f32 0.0, %v1550
        %1552 = vmatmul.f32.gmra.mxu0 %v1525
        %v1553 = vpop.f32.mrf.mxu0
        %v1554 = vadd.f32 0.0, %v1553
        %1555 = vdwg.mxu0
        %v1557 = vsel %vm1485, %v940, 0
        %v1560 = vsel %vm1485, %v994, 0
        %v1563 = vsel %vm1485, %v1184, 0
        %v1566 = vsel %vm1485, %v1238, 0
        %1568 = vmatpush.xpose.msra.mxu0 0.0
        %1569 = vmatpush.xpose.msra.mxu0 0.0
        %1570 = vmatpush.xpose.msra.mxu0 0.0
        %1571 = vmatpush.xpose.msra.mxu0 0.0
        %1572 = vmatpush.xpose.msra.mxu0 0.0
        %1573 = vmatpush.xpose.msra.mxu0 0.0
        %1574 = vmatpush.xpose.msra.mxu0 0.0
        %1575 = vmatpush.xpose.msra.mxu0 0.0
        %1576 = vmatpush.xpose.msra.mxu0 0.0
        %1577 = vmatpush.xpose.msra.mxu0 0.0
        %1578 = vmatpush.xpose.msra.mxu0 0.0
        %1579 = vmatpush.xpose.msra.mxu0 0.0
        %1580 = vmatpush.xpose.msra.mxu0 0.0
        %1581 = vmatpush.xpose.msra.mxu0 0.0
        %1582 = vmatpush.xpose.msra.mxu0 %v1566
        %1583 = vmatpush.xpose.msra.mxu0 %v1563
        %1584 = vmatmul.f32.gmra.mxu0 %v1557
        %v1585 = vpop.f32.mrf.mxu0
        %v1586 = vadd.f32 0.0, %v1585
        %1587 = vmatmul.f32.gmra.mxu0 %v1560
        %v1588 = vpop.f32.mrf.mxu0
        %v1589 = vadd.f32 0.0, %v1588
        %1590 = vdwg.mxu0
        %v1592 = vsel %vm1485, %v942, 0
        %v1595 = vsel %vm1485, %v996, 0
        %v1598 = vsel %vm1485, %v1186, 0
        %v1601 = vsel %vm1485, %v1240, 0
        %1603 = vmatpush.xpose.msra.mxu0 0.0
        %1604 = vmatpush.xpose.msra.mxu0 0.0
        %1605 = vmatpush.xpose.msra.mxu0 0.0
        %1606 = vmatpush.xpose.msra.mxu0 0.0
        %1607 = vmatpush.xpose.msra.mxu0 0.0
        %1608 = vmatpush.xpose.msra.mxu0 0.0
        %1609 = vmatpush.xpose.msra.mxu0 0.0
        %1610 = vmatpush.xpose.msra.mxu0 0.0
        %1611 = vmatpush.xpose.msra.mxu0 0.0
        %1612 = vmatpush.xpose.msra.mxu0 0.0
        %1613 = vmatpush.xpose.msra.mxu0 0.0
        %1614 = vmatpush.xpose.msra.mxu0 0.0
        %1615 = vmatpush.xpose.msra.mxu0 0.0
        %1616 = vmatpush.xpose.msra.mxu0 0.0
        %1617 = vmatpush.xpose.msra.mxu0 %v1601
        %1618 = vmatpush.xpose.msra.mxu0 %v1598
        %1619 = vmatmul.f32.gmra.mxu0 %v1592
        %v1620 = vpop.f32.mrf.mxu0
        %v1621 = vadd.f32 0.0, %v1620
        %1622 = vmatmul.f32.gmra.mxu0 %v1595
        %v1623 = vpop.f32.mrf.mxu0
        %v1624 = vadd.f32 0.0, %v1623
        %1625 = vdwg.mxu0
        %v1626 = vmul.f32 %v1516, 0.35355338
        %v1627 = vmul.f32 %v1519, 0.35355338
        %v1628 = vmul.f32 %v1551, 0.35355338
        %v1629 = vmul.f32 %v1554, 0.35355338
        %v1630 = vmul.f32 %v1586, 0.35355338
        %v1631 = vmul.f32 %v1589, 0.35355338
        %v1632 = vmul.f32 %v1621, 0.35355338
        %v1633 = vmul.f32 %v1624, 0.35355338
        %v1634 = vsel %vm716, 1, 0
        %v1635 = vsel %vm717, 1, 0
        %vm1636 = vcmp.eq.s32.totalorder %v1634, 1
        %vm1637 = vcmp.eq.s32.totalorder %v1635, 1
        %v1638 = vsel %vm1636, %v1626, -1e+30
        %v1639 = vsel %vm1637, %v1627, -1e+30
        %v1640 = vsel %vm1636, %v1628, -1e+30
        %v1641 = vsel %vm1637, %v1629, -1e+30
        %v1642 = vsel %vm1636, %v1630, -1e+30
        %v1643 = vsel %vm1637, %v1631, -1e+30
        %v1644 = vsel %vm1636, %v1632, -1e+30
        %v1645 = vsel %vm1637, %v1633, -1e+30
        %vm1646 = vcmask 130048
        %v1647 = vsel %vm1646, %v1638, -inf
        %1648 = vmax.xlane.f32.xlu0 %v1647
        %v1649 = vpop.xlane.xlu0 %1648
        %v1650 = vsel %vm1646, %v1639, -inf
        %1651 = vmax.xlane.f32.xlu0 %v1650
        %v1652 = vpop.xlane.xlu0 %1651
        %v1653 = vsel %vm1646, %v1640, -inf
        %1654 = vmax.xlane.f32.xlu0 %v1653
        %v1655 = vpop.xlane.xlu0 %1654
        %v1656 = vsel %vm1646, %v1641, -inf
        %1657 = vmax.xlane.f32.xlu0 %v1656
        %v1658 = vpop.xlane.xlu0 %1657
        %v1659 = vsel %vm1646, %v1642, -inf
        %1660 = vmax.xlane.f32.xlu0 %v1659
        %v1661 = vpop.xlane.xlu0 %1660
        %v1662 = vsel %vm1646, %v1643, -inf
        %1663 = vmax.xlane.f32.xlu0 %v1662
        %v1664 = vpop.xlane.xlu0 %1663
        %v1665 = vsel %vm1646, %v1644, -inf
        %1666 = vmax.xlane.f32.xlu0 %v1665
        %v1667 = vpop.xlane.xlu0 %1666
        %v1668 = vsel %vm1646, %v1645, -inf
        %1669 = vmax.xlane.f32.xlu0 %v1668
        %v1670 = vpop.xlane.xlu0 %1669
        %v1671 = vsub.f32 %v1638, %v1649
        %v1672 = vsub.f32 %v1639, %v1652
        %v1673 = vsub.f32 %v1640, %v1655
        %v1674 = vsub.f32 %v1641, %v1658
        %v1675 = vsub.f32 %v1642, %v1661
        %v1676 = vsub.f32 %v1643, %v1664
        %v1677 = vsub.f32 %v1644, %v1667
        %v1678 = vsub.f32 %v1645, %v1670
        %v1679 = vmul.f32 %v1671, 1.442695
        %v1680 = vpow.pop %v1679
        %v1681 = vmul.f32 %v1672, 1.442695
        %v1682 = vpow.pop %v1681
        %v1683 = vmul.f32 %v1673, 1.442695
        %v1684 = vpow.pop %v1683
        %v1685 = vmul.f32 %v1674, 1.442695
        %v1686 = vpow.pop %v1685
        %v1687 = vmul.f32 %v1675, 1.442695
        %v1688 = vpow.pop %v1687
        %v1689 = vmul.f32 %v1676, 1.442695
        %v1690 = vpow.pop %v1689
        %v1691 = vmul.f32 %v1677, 1.442695
        %v1692 = vpow.pop %v1691
        %v1693 = vmul.f32 %v1678, 1.442695
        %v1694 = vpow.pop %v1693
        %v1695 = vsel %vm1646, %v1680, 0.0
        %1696 = vadd.xlane.f32.xlu0 %v1695
        %v1697 = vpop.xlane.xlu0 %1696
        %v1698 = vsel %vm1646, %v1682, 0.0
        %1699 = vadd.xlane.f32.xlu0 %v1698
        %v1700 = vpop.xlane.xlu0 %1699
        %v1701 = vsel %vm1646, %v1684, 0.0
        %1702 = vadd.xlane.f32.xlu0 %v1701
        %v1703 = vpop.xlane.xlu0 %1702
        %v1704 = vsel %vm1646, %v1686, 0.0
        %1705 = vadd.xlane.f32.xlu0 %v1704
        %v1706 = vpop.xlane.xlu0 %1705
        %v1707 = vsel %vm1646, %v1688, 0.0
        %1708 = vadd.xlane.f32.xlu0 %v1707
        %v1709 = vpop.xlane.xlu0 %1708
        %v1710 = vsel %vm1646, %v1690, 0.0
        %1711 = vadd.xlane.f32.xlu0 %v1710
        %v1712 = vpop.xlane.xlu0 %1711
        %v1713 = vsel %vm1646, %v1692, 0.0
        %1714 = vadd.xlane.f32.xlu0 %v1713
        %v1715 = vpop.xlane.xlu0 %1714
        %v1716 = vsel %vm1646, %v1694, 0.0
        %1717 = vadd.xlane.f32.xlu0 %v1716
        %v1718 = vpop.xlane.xlu0 %1717
        %v1719 = vrcp.pop %v1697
        %v1720 = vmul.f32 %v1697, %v1719
        %v1721 = vsub.f32 1.0, %v1720
        %v1722 = vmul.f32 %v1719, %v1721
        %v1723 = vadd.f32 %v1719, %v1722
        %vm1724 = vweird.f32 %v1697
        %vm1725 = vweird.f32 %v1719
        %vm1726 = vmor %vm1724, %vm1725
        %v1727 = vsel %vm1726, %v1719, %v1723
        %v1728 = vand.u32 2147483647, %v1697
        %vm1729 = vcmp.eq.f32.partialorder %v1728, 8.507059e+37
        %v1730 = vand.u32 %v1697, 2147483648
        %v1731 = vor.u32 1.1754944e-38, %v1730
        %v1732 = vsel %vm1729, %v1731, %v1727
        %v1733 = vmul.f32 %v1680, %v1732
        %v1734 = vrcp.pop %v1700
        %v1735 = vmul.f32 %v1700, %v1734
        %v1736 = vsub.f32 1.0, %v1735
        %v1737 = vmul.f32 %v1734, %v1736
        %v1738 = vadd.f32 %v1734, %v1737
        %vm1739 = vweird.f32 %v1700
        %vm1740 = vweird.f32 %v1734
        %vm1741 = vmor %vm1739, %vm1740
        %v1742 = vsel %vm1741, %v1734, %v1738
        %v1743 = vand.u32 2147483647, %v1700
        %vm1744 = vcmp.eq.f32.partialorder %v1743, 8.507059e+37
        %v1745 = vand.u32 %v1700, 2147483648
        %v1746 = vor.u32 1.1754944e-38, %v1745
        %v1747 = vsel %vm1744, %v1746, %v1742
        %v1748 = vmul.f32 %v1682, %v1747
        %v1749 = vrcp.pop %v1703
        %v1750 = vmul.f32 %v1703, %v1749
        %v1751 = vsub.f32 1.0, %v1750
        %v1752 = vmul.f32 %v1749, %v1751
        %v1753 = vadd.f32 %v1749, %v1752
        %vm1754 = vweird.f32 %v1703
        %vm1755 = vweird.f32 %v1749
        %vm1756 = vmor %vm1754, %vm1755
        %v1757 = vsel %vm1756, %v1749, %v1753
        %v1758 = vand.u32 2147483647, %v1703
        %vm1759 = vcmp.eq.f32.partialorder %v1758, 8.507059e+37
        %v1760 = vand.u32 %v1703, 2147483648
        %v1761 = vor.u32 1.1754944e-38, %v1760
        %v1762 = vsel %vm1759, %v1761, %v1757
        %v1763 = vmul.f32 %v1684, %v1762
        %v1764 = vrcp.pop %v1706
        %v1765 = vmul.f32 %v1706, %v1764
        %v1766 = vsub.f32 1.0, %v1765
        %v1767 = vmul.f32 %v1764, %v1766
        %v1768 = vadd.f32 %v1764, %v1767
        %vm1769 = vweird.f32 %v1706
        %vm1770 = vweird.f32 %v1764
        %vm1771 = vmor %vm1769, %vm1770
        %v1772 = vsel %vm1771, %v1764, %v1768
        %v1773 = vand.u32 2147483647, %v1706
        %vm1774 = vcmp.eq.f32.partialorder %v1773, 8.507059e+37
        %v1775 = vand.u32 %v1706, 2147483648
        %v1776 = vor.u32 1.1754944e-38, %v1775
        %v1777 = vsel %vm1774, %v1776, %v1772
        %v1778 = vmul.f32 %v1686, %v1777
        %v1779 = vrcp.pop %v1709
        %v1780 = vmul.f32 %v1709, %v1779
        %v1781 = vsub.f32 1.0, %v1780
        %v1782 = vmul.f32 %v1779, %v1781
        %v1783 = vadd.f32 %v1779, %v1782
        %vm1784 = vweird.f32 %v1709
        %vm1785 = vweird.f32 %v1779
        %vm1786 = vmor %vm1784, %vm1785
        %v1787 = vsel %vm1786, %v1779, %v1783
        %v1788 = vand.u32 2147483647, %v1709
        %vm1789 = vcmp.eq.f32.partialorder %v1788, 8.507059e+37
        %v1790 = vand.u32 %v1709, 2147483648
        %v1791 = vor.u32 1.1754944e-38, %v1790
        %v1792 = vsel %vm1789, %v1791, %v1787
        %v1793 = vmul.f32 %v1688, %v1792
        %v1794 = vrcp.pop %v1712
        %v1795 = vmul.f32 %v1712, %v1794
        %v1796 = vsub.f32 1.0, %v1795
        %v1797 = vmul.f32 %v1794, %v1796
        %v1798 = vadd.f32 %v1794, %v1797
        %vm1799 = vweird.f32 %v1712
        %vm1800 = vweird.f32 %v1794
        %vm1801 = vmor %vm1799, %vm1800
        %v1802 = vsel %vm1801, %v1794, %v1798
        %v1803 = vand.u32 2147483647, %v1712
        %vm1804 = vcmp.eq.f32.partialorder %v1803, 8.507059e+37
        %v1805 = vand.u32 %v1712, 2147483648
        %v1806 = vor.u32 1.1754944e-38, %v1805
        %v1807 = vsel %vm1804, %v1806, %v1802
        %v1808 = vmul.f32 %v1690, %v1807
        %v1809 = vrcp.pop %v1715
        %v1810 = vmul.f32 %v1715, %v1809
        %v1811 = vsub.f32 1.0, %v1810
        %v1812 = vmul.f32 %v1809, %v1811
        %v1813 = vadd.f32 %v1809, %v1812
        %vm1814 = vweird.f32 %v1715
        %vm1815 = vweird.f32 %v1809
        %vm1816 = vmor %vm1814, %vm1815
        %v1817 = vsel %vm1816, %v1809, %v1813
        %v1818 = vand.u32 2147483647, %v1715
        %vm1819 = vcmp.eq.f32.partialorder %v1818, 8.507059e+37
        %v1820 = vand.u32 %v1715, 2147483648
        %v1821 = vor.u32 1.1754944e-38, %v1820
        %v1822 = vsel %vm1819, %v1821, %v1817
        %v1823 = vmul.f32 %v1692, %v1822
        %v1824 = vrcp.pop %v1718
        %v1825 = vmul.f32 %v1718, %v1824
        %v1826 = vsub.f32 1.0, %v1825
        %v1827 = vmul.f32 %v1824, %v1826
        %v1828 = vadd.f32 %v1824, %v1827
        %vm1829 = vweird.f32 %v1718
        %vm1830 = vweird.f32 %v1824
        %vm1831 = vmor %vm1829, %vm1830
        %v1832 = vsel %vm1831, %v1824, %v1828
        %v1833 = vand.u32 2147483647, %v1718
        %vm1834 = vcmp.eq.f32.partialorder %v1833, 8.507059e+37
        %v1835 = vand.u32 %v1718, 2147483648
        %v1836 = vor.u32 1.1754944e-38, %v1835
        %v1837 = vsel %vm1834, %v1836, %v1832
        %v1838 = vmul.f32 %v1694, %v1837
        %v1840 = vsel %vm1646, %v1733, 0
        %v1843 = vsel %vm1646, %v1748, 0
        %1845 = vmatpush.msra.mxu0 0.0
        %1846 = vmatpush.msra.mxu0 0.0
        %1847 = vmatpush.msra.mxu0 0.0
        %1848 = vmatpush.msra.mxu0 0.0
        %1849 = vmatpush.msra.mxu0 0.0
        %1850 = vmatpush.msra.mxu0 0.0
        %1851 = vmatpush.msra.mxu0 0.0
        %1852 = vmatpush.msra.mxu0 0.0
        %1853 = vmatpush.msra.mxu0 0.0
        %1854 = vmatpush.msra.mxu0 0.0
        %1855 = vmatpush.msra.mxu0 0.0
        %1856 = vmatpush.msra.mxu0 0.0
        %1857 = vmatpush.msra.mxu0 0.0
        %1858 = vmatpush.msra.mxu0 0.0
        %1859 = vmatpush.msra.mxu0 %v1478
        %1860 = vmatpush.msra.mxu0 %v1424
        %1861 = vmatmul.f32.gmra.mxu0 %v1840
        %v1862 = vpop.f32.mrf.mxu0
        %v1863 = vadd.f32 0.0, %v1862
        %1864 = vmatmul.f32.gmra.mxu0 %v1843
        %v1865 = vpop.f32.mrf.mxu0
        %v1866 = vadd.f32 0.0, %v1865
        %1867 = vdwg.mxu0
        %v1869 = vsel %vm1646, %v1763, 0
        %v1872 = vsel %vm1646, %v1778, 0
        %1874 = vmatpush.msra.mxu0 0.0
        %1875 = vmatpush.msra.mxu0 0.0
        %1876 = vmatpush.msra.mxu0 0.0
        %1877 = vmatpush.msra.mxu0 0.0
        %1878 = vmatpush.msra.mxu0 0.0
        %1879 = vmatpush.msra.mxu0 0.0
        %1880 = vmatpush.msra.mxu0 0.0
        %1881 = vmatpush.msra.mxu0 0.0
        %1882 = vmatpush.msra.mxu0 0.0
        %1883 = vmatpush.msra.mxu0 0.0
        %1884 = vmatpush.msra.mxu0 0.0
        %1885 = vmatpush.msra.mxu0 0.0
        %1886 = vmatpush.msra.mxu0 0.0
        %1887 = vmatpush.msra.mxu0 0.0
        %1888 = vmatpush.msra.mxu0 %v1480
        %1889 = vmatpush.msra.mxu0 %v1426
        %1890 = vmatmul.f32.gmra.mxu0 %v1869
        %v1891 = vpop.f32.mrf.mxu0
        %v1892 = vadd.f32 0.0, %v1891
        %1893 = vmatmul.f32.gmra.mxu0 %v1872
        %v1894 = vpop.f32.mrf.mxu0
        %v1895 = vadd.f32 0.0, %v1894
        %1896 = vdwg.mxu0
        %v1898 = vsel %vm1646, %v1793, 0
        %v1901 = vsel %vm1646, %v1808, 0
        %1903 = vmatpush.msra.mxu0 0.0
        %1904 = vmatpush.msra.mxu0 0.0
        %1905 = vmatpush.msra.mxu0 0.0
        %1906 = vmatpush.msra.mxu0 0.0
        %1907 = vmatpush.msra.mxu0 0.0
        %1908 = vmatpush.msra.mxu0 0.0
        %1909 = vmatpush.msra.mxu0 0.0
        %1910 = vmatpush.msra.mxu0 0.0
        %1911 = vmatpush.msra.mxu0 0.0
        %1912 = vmatpush.msra.mxu0 0.0
        %1913 = vmatpush.msra.mxu0 0.0
        %1914 = vmatpush.msra.mxu0 0.0
        %1915 = vmatpush.msra.mxu0 0.0
        %1916 = vmatpush.msra.mxu0 0.0
        %1917 = vmatpush.msra.mxu0 %v1482
        %1918 = vmatpush.msra.mxu0 %v1428
        %1919 = vmatmul.f32.gmra.mxu0 %v1898
        %v1920 = vpop.f32.mrf.mxu0
        %v1921 = vadd.f32 0.0, %v1920
        %1922 = vmatmul.f32.gmra.mxu0 %v1901
        %v1923 = vpop.f32.mrf.mxu0
        %v1924 = vadd.f32 0.0, %v1923
        %1925 = vdwg.mxu0
        %v1927 = vsel %vm1646, %v1823, 0
        %v1930 = vsel %vm1646, %v1838, 0
        %1932 = vmatpush.msra.mxu0 0.0
        %1933 = vmatpush.msra.mxu0 0.0
        %1934 = vmatpush.msra.mxu0 0.0
        %1935 = vmatpush.msra.mxu0 0.0
        %1936 = vmatpush.msra.mxu0 0.0
        %1937 = vmatpush.msra.mxu0 0.0
        %1938 = vmatpush.msra.mxu0 0.0
        %1939 = vmatpush.msra.mxu0 0.0
        %1940 = vmatpush.msra.mxu0 0.0
        %1941 = vmatpush.msra.mxu0 0.0
        %1942 = vmatpush.msra.mxu0 0.0
        %1943 = vmatpush.msra.mxu0 0.0
        %1944 = vmatpush.msra.mxu0 0.0
        %1945 = vmatpush.msra.mxu0 0.0
        %1946 = vmatpush.msra.mxu0 %v1484
        %1947 = vmatpush.msra.mxu0 %v1430
        %1948 = vmatmul.f32.gmra.mxu0 %v1927
        %v1949 = vpop.f32.mrf.mxu0
        %v1950 = vadd.f32 0.0, %v1949
        %1951 = vmatmul.f32.gmra.mxu0 %v1930
        %v1952 = vpop.f32.mrf.mxu0
        %v1953 = vadd.f32 0.0, %v1952
        %1954 = vdwg.mxu0
        %v1955 = vrot.slane %v1921, 4
        %v1956 = vsel %vm777, %v1955, %v1863
        %v1957 = vrot.slane %v1863, 4
        %v1958 = vsel %vm777, %v1921, %v1957
        %v1960 = vunpack.c.l.s4 1983009808
        %v1961 = vunpack.c.0.s8 %v1960
        %v1962 = vperm.slane %v1956, %v1961
        %v1964 = vunpack.c.l.s4 1983009808
        %v1965 = vunpack.c.0.s8 %v1964
        %v1966 = vperm.slane %v1958, %v1965
        %v1967 = vrot.slane %v1950, 4
        %v1968 = vsel %vm777, %v1967, %v1892
        %v1969 = vrot.slane %v1892, 4
        %v1970 = vsel %vm777, %v1950, %v1969
        %v1972 = vunpack.c.l.s4 1983009808
        %v1973 = vunpack.c.0.s8 %v1972
        %v1974 = vperm.slane %v1968, %v1973
        %v1976 = vunpack.c.l.s4 1983009808
        %v1977 = vunpack.c.0.s8 %v1976
        %v1978 = vperm.slane %v1970, %v1977
        %v1979 = vrot.slane %v1974, 4
        %v1980 = vsel %vm777, %v1979, %v1962
        %v1981 = vrot.slane %v1962, 4
        %v1982 = vsel %vm777, %v1974, %v1981
        %v1984 = vunpack.c.l.s4 1934713408
        %v1985 = vunpack.c.0.s8 %v1984
        %v1986 = vperm.slane %v1980, %v1985
        %v1988 = vunpack.c.l.s4 1934713408
        %v1989 = vunpack.c.0.s8 %v1988
        %v1990 = vperm.slane %v1982, %v1989
        %v1991 = vrot.slane %v1978, 4
        %v1992 = vsel %vm777, %v1991, %v1966
        %v1993 = vrot.slane %v1966, 4
        %v1994 = vsel %vm777, %v1978, %v1993
        %v1996 = vunpack.c.l.s4 1934713408
        %v1997 = vunpack.c.0.s8 %v1996
        %v1998 = vperm.slane %v1992, %v1997
        %v2000 = vunpack.c.l.s4 1934713408
        %v2001 = vunpack.c.0.s8 %v2000
        %v2002 = vperm.slane %v1994, %v2001
        %v2003 = vrot.slane %v1986, 4
        %v2004 = vsel %vm777, 0.0, %v2003
        %v2005 = vrot.slane %v1990, 4
        %v2006 = vsel %vm777, 0.0, %v2005
        %v2007 = vrot.slane %v1998, 4
        %v2008 = vsel %vm777, 0.0, %v2007
        %v2009 = vrot.slane %v2002, 4
        %v2010 = vsel %vm777, 0.0, %v2009
        %v2011 = vrot.slane %v1924, 4
        %v2012 = vsel %vm777, %v2011, %v1866
        %v2013 = vrot.slane %v1866, 4
        %v2014 = vsel %vm777, %v1924, %v2013
        %v2016 = vunpack.c.l.s4 1983009808
        %v2017 = vunpack.c.0.s8 %v2016
        %v2018 = vperm.slane %v2012, %v2017
        %v2020 = vunpack.c.l.s4 1983009808
        %v2021 = vunpack.c.0.s8 %v2020
        %v2022 = vperm.slane %v2014, %v2021
        %v2023 = vrot.slane %v1953, 4
        %v2024 = vsel %vm777, %v2023, %v1895
        %v2025 = vrot.slane %v1895, 4
        %v2026 = vsel %vm777, %v1953, %v2025
        %v2028 = vunpack.c.l.s4 1983009808
        %v2029 = vunpack.c.0.s8 %v2028
        %v2030 = vperm.slane %v2024, %v2029
        %v2032 = vunpack.c.l.s4 1983009808
        %v2033 = vunpack.c.0.s8 %v2032
        %v2034 = vperm.slane %v2026, %v2033
        %v2035 = vrot.slane %v2030, 4
        %v2036 = vsel %vm777, %v2035, %v2018
        %v2037 = vrot.slane %v2018, 4
        %v2038 = vsel %vm777, %v2030, %v2037
        %v2040 = vunpack.c.l.s4 1934713408
        %v2041 = vunpack.c.0.s8 %v2040
        %v2042 = vperm.slane %v2036, %v2041
        %v2044 = vunpack.c.l.s4 1934713408
        %v2045 = vunpack.c.0.s8 %v2044
        %v2046 = vperm.slane %v2038, %v2045
        %v2047 = vrot.slane %v2034, 4
        %v2048 = vsel %vm777, %v2047, %v2022
        %v2049 = vrot.slane %v2022, 4
        %v2050 = vsel %vm777, %v2034, %v2049
        %v2052 = vunpack.c.l.s4 1934713408
        %v2053 = vunpack.c.0.s8 %v2052
        %v2054 = vperm.slane %v2048, %v2053
        %v2056 = vunpack.c.l.s4 1934713408
        %v2057 = vunpack.c.0.s8 %v2056
        %v2058 = vperm.slane %v2050, %v2057
        %v2059 = vrot.slane %v2042, 4
        %v2060 = vsel %vm777, 0.0, %v2059
        %v2061 = vrot.slane %v2046, 4
        %v2062 = vsel %vm777, 0.0, %v2061
        %v2063 = vrot.slane %v2054, 4
        %v2064 = vsel %vm777, 0.0, %v2063
        %v2065 = vrot.slane %v2058, 4
        %v2066 = vsel %vm777, 0.0, %v2065
        %v2067 = vsel %vm777, %v2005, %v1986
        %v2069 = vunpack.c.l.s4 1983009808
        %v2070 = vunpack.c.0.s8 %v2069
        %v2071 = vperm.slane %v2067, %v2070
        %v2072 = vrot.slane %v2006, 4
        %v2073 = vsel %vm777, %v2072, %v2004
        %v2075 = vunpack.c.l.s4 1983009808
        %v2076 = vunpack.c.0.s8 %v2075
        %v2077 = vperm.slane %v2073, %v2076
        %v2078 = vsel %vm777, %v2009, %v1998
        %v2080 = vunpack.c.l.s4 1983009808
        %v2081 = vunpack.c.0.s8 %v2080
        %v2082 = vperm.slane %v2078, %v2081
        %v2083 = vrot.slane %v2010, 4
        %v2084 = vsel %vm777, %v2083, %v2008
        %v2086 = vunpack.c.l.s4 1983009808
        %v2087 = vunpack.c.0.s8 %v2086
        %v2088 = vperm.slane %v2084, %v2087
        %v2089 = vrot.slane %v2077, 4
        %v2090 = vsel %vm777, %v2089, %v2071
        %v2091 = vrot.slane %v2071, 4
        %v2092 = vsel %vm777, %v2077, %v2091
        %v2094 = vunpack.c.l.s4 1934713408
        %v2095 = vunpack.c.0.s8 %v2094
        %v2096 = vperm.slane %v2090, %v2095
        %v2098 = vunpack.c.l.s4 1934713408
        %v2099 = vunpack.c.0.s8 %v2098
        %v2100 = vperm.slane %v2092, %v2099
        %v2101 = vrot.slane %v2088, 4
        %v2102 = vsel %vm777, %v2101, %v2082
        %v2103 = vrot.slane %v2082, 4
        %v2104 = vsel %vm777, %v2088, %v2103
        %v2106 = vunpack.c.l.s4 1934713408
        %v2107 = vunpack.c.0.s8 %v2106
        %v2108 = vperm.slane %v2102, %v2107
        %v2110 = vunpack.c.l.s4 1934713408
        %v2111 = vunpack.c.0.s8 %v2110
        %v2112 = vperm.slane %v2104, %v2111
        %v2113 = vrot.slane %v2108, 4
        %v2114 = vsel %vm777, %v2113, %v2096
        %v2115 = vrot.slane %v2096, 4
        %v2116 = vsel %vm777, %v2108, %v2115
        %v2117 = vrot.slane %v2112, 4
        %v2118 = vsel %vm777, %v2117, %v2100
        %v2119 = vrot.slane %v2100, 4
        %v2120 = vsel %vm777, %v2112, %v2119
        %v2121 = vsel %vm777, %v2061, %v2042
        %v2123 = vunpack.c.l.s4 1983009808
        %v2124 = vunpack.c.0.s8 %v2123
        %v2125 = vperm.slane %v2121, %v2124
        %v2126 = vrot.slane %v2062, 4
        %v2127 = vsel %vm777, %v2126, %v2060
        %v2129 = vunpack.c.l.s4 1983009808
        %v2130 = vunpack.c.0.s8 %v2129
        %v2131 = vperm.slane %v2127, %v2130
        %v2132 = vsel %vm777, %v2065, %v2054
        %v2134 = vunpack.c.l.s4 1983009808
        %v2135 = vunpack.c.0.s8 %v2134
        %v2136 = vperm.slane %v2132, %v2135
        %v2137 = vrot.slane %v2066, 4
        %v2138 = vsel %vm777, %v2137, %v2064
        %v2140 = vunpack.c.l.s4 1983009808
        %v2141 = vunpack.c.0.s8 %v2140
        %v2142 = vperm.slane %v2138, %v2141
        %v2143 = vrot.slane %v2131, 4
        %v2144 = vsel %vm777, %v2143, %v2125
        %v2145 = vrot.slane %v2125, 4
        %v2146 = vsel %vm777, %v2131, %v2145
        %v2148 = vunpack.c.l.s4 1934713408
        %v2149 = vunpack.c.0.s8 %v2148
        %v2150 = vperm.slane %v2144, %v2149
        %v2152 = vunpack.c.l.s4 1934713408
        %v2153 = vunpack.c.0.s8 %v2152
        %v2154 = vperm.slane %v2146, %v2153
        %v2155 = vrot.slane %v2142, 4
        %v2156 = vsel %vm777, %v2155, %v2136
        %v2157 = vrot.slane %v2136, 4
        %v2158 = vsel %vm777, %v2142, %v2157
        %v2160 = vunpack.c.l.s4 1934713408
        %v2161 = vunpack.c.0.s8 %v2160
        %v2162 = vperm.slane %v2156, %v2161
        %v2164 = vunpack.c.l.s4 1934713408
        %v2165 = vunpack.c.0.s8 %v2164
        %v2166 = vperm.slane %v2158, %v2165
        %v2167 = vrot.slane %v2162, 4
        %v2168 = vsel %vm777, %v2167, %v2150
        %v2169 = vrot.slane %v2150, 4
        %v2170 = vsel %vm777, %v2162, %v2169
        %v2171 = vrot.slane %v2166, 4
        %v2172 = vsel %vm777, %v2171, %v2154
        %v2173 = vrot.slane %v2154, 4
        %v2174 = vsel %vm777, %v2166, %v2173
        %2177 = vrot.lane.b32.xlu0 %v2116, 8
        %v2178 = vpop.permute.xlu0 %2177
        %2179 = vrot.lane.b32.xlu0 %v2170, 8
        %v2180 = vpop.permute.xlu0 %2179
        %2185 = vrot.lane.b32.xlu0 %v2118, 16
        %v2186 = vpop.permute.xlu0 %2185
        %2187 = vrot.lane.b32.xlu0 %v2172, 16
        %v2188 = vpop.permute.xlu0 %2187
        %2193 = vrot.lane.b32.xlu0 %v2120, 24
        %v2194 = vpop.permute.xlu0 %2193
        %2195 = vrot.lane.b32.xlu0 %v2174, 24
        %v2196 = vpop.permute.xlu0 %2195
        %v2199 = vsel %vm1485, %v2114, %v2178
        %v2200 = vsel %vm1485, %v2168, %v2180
        %v2201 = vsel %vm1646, %v2199, %v2186
        %v2202 = vsel %vm1646, %v2200, %v2188
        %vm2203 = vcmask 195584
        %v2204 = vsel %vm2203, %v2201, %v2194
        %v2205 = vsel %vm2203, %v2202, %v2196
        %v2206 = vld [vmem:[%s3] sm:$0xff]
        %v2207 = vld [vmem:[%s3 + $0x8] sm:$0xff]
        %v2208 = vld [vmem:[%s3 + $0x10] sm:$0xff]
        %v2209 = vld [vmem:[%s3 + $0x18] sm:$0xff]
        %v2210 = vld [vmem:[%s4] sm:$0x1]
        %v2212 = vperm.slane %v2210, 0
        %v2215 = vsel %vm726, %v2204, 0
        %v2218 = vsel %vm726, %v2205, 0
        %2220 = vmatpush.msra.mxu0 0.0
        %2221 = vmatpush.msra.mxu0 0.0
        %2222 = vmatpush.msra.mxu0 0.0
        %2223 = vmatpush.msra.mxu0 0.0
        %2224 = vmatpush.msra.mxu0 0.0
        %2225 = vmatpush.msra.mxu0 0.0
        %2226 = vmatpush.msra.mxu0 0.0
        %2227 = vmatpush.msra.mxu0 0.0
        %2228 = vmatpush.msra.mxu0 0.0
        %2229 = vmatpush.msra.mxu0 0.0
        %2230 = vmatpush.msra.mxu0 0.0
        %2231 = vmatpush.msra.mxu0 0.0
        %2232 = vmatpush.msra.mxu0 %v2209
        %2233 = vmatpush.msra.mxu0 %v2208
        %2234 = vmatpush.msra.mxu0 %v2207
        %2235 = vmatpush.msra.mxu0 %v2206
        %2236 = vmatmul.f32.gmra.mxu0 %v2215
        %v2237 = vpop.f32.mrf.mxu0
        %v2238 = vadd.f32 %v2212, %v2237
        %2239 = vmatmul.f32.gmra.mxu0 %v2218
        %v2240 = vpop.f32.mrf.mxu0
        %v2241 = vadd.f32 %v2212, %v2240
        %2242 = vdwg.mxu0
        %v2243 = vadd.f32 %v709, %v2238
        %v2244 = vadd.f32 %v710, %v2241
        %v2245 = vld [vmem:[%s11] sm:$0x1]
        %v2246 = vld [vmem:[%s12] sm:$0x1]
        %v2247 = vsel %vm726, %v2243, 0.0
        %2248 = vadd.xlane.f32.xlu0 %v2247
        %v2249 = vpop.xlane.xlu0 %2248
        %v2250 = vsel %vm726, %v2244, 0.0
        %2251 = vadd.xlane.f32.xlu0 %v2250
        %v2252 = vpop.xlane.xlu0 %2251
        %v2253 = vrcp.pop 32.0
        %v2254 = vmul.f32 32.0, %v2253
        %v2255 = vsub.f32 1.0, %v2254
        %v2256 = vmul.f32 %v2253, %v2255
        %v2257 = vadd.f32 %v2253, %v2256
        %vm2258 = vweird.f32 %v2253
        %v2259 = vsel %vm2258, %v2253, %v2257
        %v2260 = vmul.f32 %v2249, %v2259
        %v2261 = vmul.f32 %v2252, %v2259
        %v2262 = vsub.f32 %v2243, %v2260
        %v2263 = vsub.f32 %v2244, %v2261
        %v2264 = vmul.f32 %v2262, %v2262
        %v2265 = vmul.f32 %v2263, %v2263
        %v2266 = vsel %vm726, %v2264, 0.0
        %2267 = vadd.xlane.f32.xlu0 %v2266
        %v2268 = vpop.xlane.xlu0 %2267
        %v2269 = vsel %vm726, %v2265, 0.0
        %2270 = vadd.xlane.f32.xlu0 %v2269
        %v2271 = vpop.xlane.xlu0 %2270
        %v2272 = vmul.f32 %v2268, %v2259
        %v2273 = vmul.f32 %v2271, %v2259
        %v2274 = vadd.f32 %v2272, 1e-05
        %v2275 = vadd.f32 %v2273, 1e-05
        %v2276 = vrsqrt.pop %v2274
        %v2277 = vmul.f32 %v2276, %v2274
        %v2278 = vmul.f32 %v2277, %v2276
        %v2279 = vmul.f32 0.5, %v2278
        %v2280 = vsub.f32 1.5, %v2279
        %v2281 = vmul.f32 %v2276, %v2280
        %vm2282 = vweird.f32 %v2274
        %vm2283 = vweird.f32 %v2276
        %vm2284 = vmor %vm2282, %vm2283
        %v2285 = vsel %vm2284, %v2276, %v2281
        %v2286 = vrsqrt.pop %v2275
        %v2287 = vmul.f32 %v2286, %v2275
        %v2288 = vmul.f32 %v2287, %v2286
        %v2289 = vmul.f32 0.5, %v2288
        %v2290 = vsub.f32 1.5, %v2289
        %v2291 = vmul.f32 %v2286, %v2290
        %vm2292 = vweird.f32 %v2275
        %vm2293 = vweird.f32 %v2286
        %vm2294 = vmor %vm2292, %vm2293
        %v2295 = vsel %vm2294, %v2286, %v2291
        %v2296 = vmul.f32 %v2262, %v2285
        %v2297 = vmul.f32 %v2263, %v2295
        %v2299 = vperm.slane %v2245, 0
        %v2301 = vmul.f32 %v2296, %v2299
        %v2302 = vmul.f32 %v2297, %v2299
        %v2304 = vperm.slane %v2246, 0
        %v2306 = vadd.f32 %v2301, %v2304
        %v2307 = vadd.f32 %v2302, %v2304
        %v2308 = vld [vmem:[%s5] sm:$0xff]
        %v2309 = vld [vmem:[%s5 + $0x8] sm:$0xff]
        %v2310 = vld [vmem:[%s5 + $0x10] sm:$0xff]
        %v2311 = vld [vmem:[%s5 + $0x18] sm:$0xff]
        %v2312 = vld [vmem:[%s6] sm:$0x1]
        %v2314 = vperm.slane %v2312, 0
        %v2317 = vsel %vm726, %v2306, 0
        %v2320 = vsel %vm726, %v2307, 0
        %2322 = vmatpush.msra.mxu0 0.0
        %2323 = vmatpush.msra.mxu0 0.0
        %2324 = vmatpush.msra.mxu0 0.0
        %2325 = vmatpush.msra.mxu0 0.0
        %2326 = vmatpush.msra.mxu0 0.0
        %2327 = vmatpush.msra.mxu0 0.0
        %2328 = vmatpush.msra.mxu0 0.0
        %2329 = vmatpush.msra.mxu0 0.0
        %2330 = vmatpush.msra.mxu0 0.0
        %2331 = vmatpush.msra.mxu0 0.0
        %2332 = vmatpush.msra.mxu0 0.0
        %2333 = vmatpush.msra.mxu0 0.0
        %2334 = vmatpush.msra.mxu0 %v2311
        %2335 = vmatpush.msra.mxu0 %v2310
        %2336 = vmatpush.msra.mxu0 %v2309
        %2337 = vmatpush.msra.mxu0 %v2308
        %2338 = vmatmul.f32.gmra.mxu0 %v2317
        %v2339 = vpop.f32.mrf.mxu0
        %v2340 = vadd.f32 %v2314, %v2339
        %2341 = vmatmul.f32.gmra.mxu0 %v2320
        %v2342 = vpop.f32.mrf.mxu0
        %v2343 = vadd.f32 %v2314, %v2342
        %2344 = vdwg.mxu0
        %v2345 = vld [vmem:[%s7] sm:$0xff]
        %v2346 = vld [vmem:[%s7 + $0x8] sm:$0xff]
        %v2347 = vld [vmem:[%s7 + $0x10] sm:$0xff]
        %v2348 = vld [vmem:[%s7 + $0x18] sm:$0xff]
        %v2349 = vld [vmem:[%s8] sm:$0x1]
        %v2351 = vperm.slane %v2349, 0
        %2353 = vmatpush.msra.mxu0 0.0
        %2354 = vmatpush.msra.mxu0 0.0
        %2355 = vmatpush.msra.mxu0 0.0
        %2356 = vmatpush.msra.mxu0 0.0
        %2357 = vmatpush.msra.mxu0 0.0
        %2358 = vmatpush.msra.mxu0 0.0
        %2359 = vmatpush.msra.mxu0 0.0
        %2360 = vmatpush.msra.mxu0 0.0
        %2361 = vmatpush.msra.mxu0 0.0
        %2362 = vmatpush.msra.mxu0 0.0
        %2363 = vmatpush.msra.mxu0 0.0
        %2364 = vmatpush.msra.mxu0 0.0
        %2365 = vmatpush.msra.mxu0 %v2348
        %2366 = vmatpush.msra.mxu0 %v2347
        %2367 = vmatpush.msra.mxu0 %v2346
        %2368 = vmatpush.msra.mxu0 %v2345
        %2369 = vmatmul.f32.gmra.mxu0 %v728
        %v2370 = vpop.f32.mrf.mxu0
        %v2371 = vadd.f32 %v2351, %v2370
        %2372 = vmatmul.f32.gmra.mxu0 %v731
        %v2373 = vpop.f32.mrf.mxu0
        %v2374 = vadd.f32 %v2351, %v2373
        %2375 = vdwg.mxu0
        %2378 = vrot.lane.b32.xlu0 %v2340, 120
        %v2379 = vpop.permute.xlu0 %2378
        %2380 = vrot.lane.b32.xlu0 %v2343, 120
        %v2381 = vpop.permute.xlu0 %2380
        %2384 = vrot.lane.b32.xlu0 %v2340, 112
        %v2385 = vpop.permute.xlu0 %2384
        %2386 = vrot.lane.b32.xlu0 %v2343, 112
        %v2387 = vpop.permute.xlu0 %2386
        %2390 = vrot.lane.b32.xlu0 %v2340, 104
        %v2391 = vpop.permute.xlu0 %2390
        %2392 = vrot.lane.b32.xlu0 %v2343, 104
        %v2393 = vpop.permute.xlu0 %2392
        %v2396 = vrot.slane %v2385, 4
        %v2397 = vsel %vm777, %v2396, %v2340
        %v2398 = vrot.slane %v2340, 4
        %v2399 = vsel %vm777, %v2385, %v2398
        %v2401 = vunpack.c.l.s4 1983009808
        %v2402 = vunpack.c.0.s8 %v2401
        %v2403 = vperm.slane %v2397, %v2402
        %v2405 = vunpack.c.l.s4 1983009808
        %v2406 = vunpack.c.0.s8 %v2405
        %v2407 = vperm.slane %v2399, %v2406
        %v2408 = vrot.slane %v2391, 4
        %v2409 = vsel %vm777, %v2408, %v2379
        %v2410 = vrot.slane %v2379, 4
        %v2411 = vsel %vm777, %v2391, %v2410
        %v2413 = vunpack.c.l.s4 1983009808
        %v2414 = vunpack.c.0.s8 %v2413
        %v2415 = vperm.slane %v2409, %v2414
        %v2417 = vunpack.c.l.s4 1983009808
        %v2418 = vunpack.c.0.s8 %v2417
        %v2419 = vperm.slane %v2411, %v2418
        %v2420 = vrot.slane %v2415, 4
        %v2421 = vsel %vm777, %v2420, %v2403
        %v2422 = vrot.slane %v2403, 4
        %v2423 = vsel %vm777, %v2415, %v2422
        %v2425 = vunpack.c.l.s4 1934713408
        %v2426 = vunpack.c.0.s8 %v2425
        %v2427 = vperm.slane %v2421, %v2426
        %v2429 = vunpack.c.l.s4 1934713408
        %v2430 = vunpack.c.0.s8 %v2429
        %v2431 = vperm.slane %v2423, %v2430
        %v2432 = vrot.slane %v2419, 4
        %v2433 = vsel %vm777, %v2432, %v2407
        %v2434 = vrot.slane %v2407, 4
        %v2435 = vsel %vm777, %v2419, %v2434
        %v2437 = vunpack.c.l.s4 1934713408
        %v2438 = vunpack.c.0.s8 %v2437
        %v2439 = vperm.slane %v2433, %v2438
        %v2441 = vunpack.c.l.s4 1934713408
        %v2442 = vunpack.c.0.s8 %v2441
        %v2443 = vperm.slane %v2435, %v2442
        %v2444 = vrot.slane %v2427, 4
        %v2445 = vsel %vm777, 0.0, %v2444
        %v2446 = vrot.slane %v2431, 4
        %v2447 = vsel %vm777, 0.0, %v2446
        %v2448 = vrot.slane %v2439, 4
        %v2449 = vsel %vm777, 0.0, %v2448
        %v2450 = vrot.slane %v2443, 4
        %v2451 = vsel %vm777, 0.0, %v2450
        %v2452 = vrot.slane %v2387, 4
        %v2453 = vsel %vm777, %v2452, %v2343
        %v2454 = vrot.slane %v2343, 4
        %v2455 = vsel %vm777, %v2387, %v2454
        %v2457 = vunpack.c.l.s4 1983009808
        %v2458 = vunpack.c.0.s8 %v2457
        %v2459 = vperm.slane %v2453, %v2458
        %v2461 = vunpack.c.l.s4 1983009808
        %v2462 = vunpack.c.0.s8 %v2461
        %v2463 = vperm.slane %v2455, %v2462
        %v2464 = vrot.slane %v2393, 4
        %v2465 = vsel %vm777, %v2464, %v2381
        %v2466 = vrot.slane %v2381, 4
        %v2467 = vsel %vm777, %v2393, %v2466
        %v2469 = vunpack.c.l.s4 1983009808
        %v2470 = vunpack.c.0.s8 %v2469
        %v2471 = vperm.slane %v2465, %v2470
        %v2473 = vunpack.c.l.s4 1983009808
        %v2474 = vunpack.c.0.s8 %v2473
        %v2475 = vperm.slane %v2467, %v2474
        %v2476 = vrot.slane %v2471, 4
        %v2477 = vsel %vm777, %v2476, %v2459
        %v2478 = vrot.slane %v2459, 4
        %v2479 = vsel %vm777, %v2471, %v2478
        %v2481 = vunpack.c.l.s4 1934713408
        %v2482 = vunpack.c.0.s8 %v2481
        %v2483 = vperm.slane %v2477, %v2482
        %v2485 = vunpack.c.l.s4 1934713408
        %v2486 = vunpack.c.0.s8 %v2485
        %v2487 = vperm.slane %v2479, %v2486
        %v2488 = vrot.slane %v2475, 4
        %v2489 = vsel %vm777, %v2488, %v2463
        %v2490 = vrot.slane %v2463, 4
        %v2491 = vsel %vm777, %v2475, %v2490
        %v2493 = vunpack.c.l.s4 1934713408
        %v2494 = vunpack.c.0.s8 %v2493
        %v2495 = vperm.slane %v2489, %v2494
        %v2497 = vunpack.c.l.s4 1934713408
        %v2498 = vunpack.c.0.s8 %v2497
        %v2499 = vperm.slane %v2491, %v2498
        %v2500 = vrot.slane %v2483, 4
        %v2501 = vsel %vm777, 0.0, %v2500
        %v2502 = vrot.slane %v2487, 4
        %v2503 = vsel %vm777, 0.0, %v2502
        %v2504 = vrot.slane %v2495, 4
        %v2505 = vsel %vm777, 0.0, %v2504
        %v2506 = vrot.slane %v2499, 4
        %v2507 = vsel %vm777, 0.0, %v2506
        %v2508 = vsel %vm777, %v2446, %v2427
        %v2510 = vunpack.c.l.s4 1983009808
        %v2511 = vunpack.c.0.s8 %v2510
        %v2512 = vperm.slane %v2508, %v2511
        %v2513 = vrot.slane %v2447, 4
        %v2514 = vsel %vm777, %v2513, %v2445
        %v2516 = vunpack.c.l.s4 1983009808
        %v2517 = vunpack.c.0.s8 %v2516
        %v2518 = vperm.slane %v2514, %v2517
        %v2519 = vsel %vm777, %v2450, %v2439
        %v2521 = vunpack.c.l.s4 1983009808
        %v2522 = vunpack.c.0.s8 %v2521
        %v2523 = vperm.slane %v2519, %v2522
        %v2524 = vrot.slane %v2451, 4
        %v2525 = vsel %vm777, %v2524, %v2449
        %v2527 = vunpack.c.l.s4 1983009808
        %v2528 = vunpack.c.0.s8 %v2527
        %v2529 = vperm.slane %v2525, %v2528
        %v2530 = vrot.slane %v2518, 4
        %v2531 = vsel %vm777, %v2530, %v2512
        %v2532 = vrot.slane %v2512, 4
        %v2533 = vsel %vm777, %v2518, %v2532
        %v2535 = vunpack.c.l.s4 1934713408
        %v2536 = vunpack.c.0.s8 %v2535
        %v2537 = vperm.slane %v2531, %v2536
        %v2539 = vunpack.c.l.s4 1934713408
        %v2540 = vunpack.c.0.s8 %v2539
        %v2541 = vperm.slane %v2533, %v2540
        %v2542 = vrot.slane %v2529, 4
        %v2543 = vsel %vm777, %v2542, %v2523
        %v2544 = vrot.slane %v2523, 4
        %v2545 = vsel %vm777, %v2529, %v2544
        %v2547 = vunpack.c.l.s4 1934713408
        %v2548 = vunpack.c.0.s8 %v2547
        %v2549 = vperm.slane %v2543, %v2548
        %v2551 = vunpack.c.l.s4 1934713408
        %v2552 = vunpack.c.0.s8 %v2551
        %v2553 = vperm.slane %v2545, %v2552
        %v2554 = vrot.slane %v2549, 4
        %v2555 = vsel %vm777, %v2554, %v2537
        %v2556 = vrot.slane %v2537, 4
        %v2557 = vsel %vm777, %v2549, %v2556
        %v2558 = vrot.slane %v2553, 4
        %v2559 = vsel %vm777, %v2558, %v2541
        %v2560 = vrot.slane %v2541, 4
        %v2561 = vsel %vm777, %v2553, %v2560
        %v2562 = vsel %vm777, %v2502, %v2483
        %v2564 = vunpack.c.l.s4 1983009808
        %v2565 = vunpack.c.0.s8 %v2564
        %v2566 = vperm.slane %v2562, %v2565
        %v2567 = vrot.slane %v2503, 4
        %v2568 = vsel %vm777, %v2567, %v2501
        %v2570 = vunpack.c.l.s4 1983009808
        %v2571 = vunpack.c.0.s8 %v2570
        %v2572 = vperm.slane %v2568, %v2571
        %v2573 = vsel %vm777, %v2506, %v2495
        %v2575 = vunpack.c.l.s4 1983009808
        %v2576 = vunpack.c.0.s8 %v2575
        %v2577 = vperm.slane %v2573, %v2576
        %v2578 = vrot.slane %v2507, 4
        %v2579 = vsel %vm777, %v2578, %v2505
        %v2581 = vunpack.c.l.s4 1983009808
        %v2582 = vunpack.c.0.s8 %v2581
        %v2583 = vperm.slane %v2579, %v2582
        %v2584 = vrot.slane %v2572, 4
        %v2585 = vsel %vm777, %v2584, %v2566
        %v2586 = vrot.slane %v2566, 4
        %v2587 = vsel %vm777, %v2572, %v2586
        %v2589 = vunpack.c.l.s4 1934713408
        %v2590 = vunpack.c.0.s8 %v2589
        %v2591 = vperm.slane %v2585, %v2590
        %v2593 = vunpack.c.l.s4 1934713408
        %v2594 = vunpack.c.0.s8 %v2593
        %v2595 = vperm.slane %v2587, %v2594
        %v2596 = vrot.slane %v2583, 4
        %v2597 = vsel %vm777, %v2596, %v2577
        %v2598 = vrot.slane %v2577, 4
        %v2599 = vsel %vm777, %v2583, %v2598
        %v2601 = vunpack.c.l.s4 1934713408
        %v2602 = vunpack.c.0.s8 %v2601
        %v2603 = vperm.slane %v2597, %v2602
        %v2605 = vunpack.c.l.s4 1934713408
        %v2606 = vunpack.c.0.s8 %v2605
        %v2607 = vperm.slane %v2599, %v2606
        %v2608 = vrot.slane %v2603, 4
        %v2609 = vsel %vm777, %v2608, %v2591
        %v2610 = vrot.slane %v2591, 4
        %v2611 = vsel %vm777, %v2603, %v2610
        %v2612 = vrot.slane %v2607, 4
        %v2613 = vsel %vm777, %v2612, %v2595
        %v2614 = vrot.slane %v2595, 4
        %v2615 = vsel %vm777, %v2607, %v2614
        %2618 = vrot.lane.b32.xlu0 %v2371, 120
        %v2619 = vpop.permute.xlu0 %2618
        %2620 = vrot.lane.b32.xlu0 %v2374, 120
        %v2621 = vpop.permute.xlu0 %2620
        %2624 = vrot.lane.b32.xlu0 %v2371, 112
        %v2625 = vpop.permute.xlu0 %2624
        %2626 = vrot.lane.b32.xlu0 %v2374, 112
        %v2627 = vpop.permute.xlu0 %2626
        %2630 = vrot.lane.b32.xlu0 %v2371, 104
        %v2631 = vpop.permute.xlu0 %2630
        %2632 = vrot.lane.b32.xlu0 %v2374, 104
        %v2633 = vpop.permute.xlu0 %2632
        %v2636 = vrot.slane %v2625, 4
        %v2637 = vsel %vm777, %v2636, %v2371
        %v2638 = vrot.slane %v2371, 4
        %v2639 = vsel %vm777, %v2625, %v2638
        %v2641 = vunpack.c.l.s4 1983009808
        %v2642 = vunpack.c.0.s8 %v2641
        %v2643 = vperm.slane %v2637, %v2642
        %v2645 = vunpack.c.l.s4 1983009808
        %v2646 = vunpack.c.0.s8 %v2645
        %v2647 = vperm.slane %v2639, %v2646
        %v2648 = vrot.slane %v2631, 4
        %v2649 = vsel %vm777, %v2648, %v2619
        %v2650 = vrot.slane %v2619, 4
        %v2651 = vsel %vm777, %v2631, %v2650
        %v2653 = vunpack.c.l.s4 1983009808
        %v2654 = vunpack.c.0.s8 %v2653
        %v2655 = vperm.slane %v2649, %v2654
        %v2657 = vunpack.c.l.s4 1983009808
        %v2658 = vunpack.c.0.s8 %v2657
        %v2659 = vperm.slane %v2651, %v2658
        %v2660 = vrot.slane %v2655, 4
        %v2661 = vsel %vm777, %v2660, %v2643
        %v2662 = vrot.slane %v2643, 4
        %v2663 = vsel %vm777, %v2655, %v2662
        %v2665 = vunpack.c.l.s4 1934713408
        %v2666 = vunpack.c.0.s8 %v2665
        %v2667 = vperm.slane %v2661, %v2666
        %v2669 = vunpack.c.l.s4 1934713408
        %v2670 = vunpack.c.0.s8 %v2669
        %v2671 = vperm.slane %v2663, %v2670
        %v2672 = vrot.slane %v2659, 4
        %v2673 = vsel %vm777, %v2672, %v2647
        %v2674 = vrot.slane %v2647, 4
        %v2675 = vsel %vm777, %v2659, %v2674
        %v2677 = vunpack.c.l.s4 1934713408
        %v2678 = vunpack.c.0.s8 %v2677
        %v2679 = vperm.slane %v2673, %v2678
        %v2681 = vunpack.c.l.s4 1934713408
        %v2682 = vunpack.c.0.s8 %v2681
        %v2683 = vperm.slane %v2675, %v2682
        %v2684 = vrot.slane %v2667, 4
        %v2685 = vsel %vm777, 0.0, %v2684
        %v2686 = vrot.slane %v2671, 4
        %v2687 = vsel %vm777, 0.0, %v2686
        %v2688 = vrot.slane %v2679, 4
        %v2689 = vsel %vm777, 0.0, %v2688
        %v2690 = vrot.slane %v2683, 4
        %v2691 = vsel %vm777, 0.0, %v2690
        %v2692 = vrot.slane %v2627, 4
        %v2693 = vsel %vm777, %v2692, %v2374
        %v2694 = vrot.slane %v2374, 4
        %v2695 = vsel %vm777, %v2627, %v2694
        %v2697 = vunpack.c.l.s4 1983009808
        %v2698 = vunpack.c.0.s8 %v2697
        %v2699 = vperm.slane %v2693, %v2698
        %v2701 = vunpack.c.l.s4 1983009808
        %v2702 = vunpack.c.0.s8 %v2701
        %v2703 = vperm.slane %v2695, %v2702
        %v2704 = vrot.slane %v2633, 4
        %v2705 = vsel %vm777, %v2704, %v2621
        %v2706 = vrot.slane %v2621, 4
        %v2707 = vsel %vm777, %v2633, %v2706
        %v2709 = vunpack.c.l.s4 1983009808
        %v2710 = vunpack.c.0.s8 %v2709
        %v2711 = vperm.slane %v2705, %v2710
        %v2713 = vunpack.c.l.s4 1983009808
        %v2714 = vunpack.c.0.s8 %v2713
        %v2715 = vperm.slane %v2707, %v2714
        %v2716 = vrot.slane %v2711, 4
        %v2717 = vsel %vm777, %v2716, %v2699
        %v2718 = vrot.slane %v2699, 4
        %v2719 = vsel %vm777, %v2711, %v2718
        %v2721 = vunpack.c.l.s4 1934713408
        %v2722 = vunpack.c.0.s8 %v2721
        %v2723 = vperm.slane %v2717, %v2722
        %v2725 = vunpack.c.l.s4 1934713408
        %v2726 = vunpack.c.0.s8 %v2725
        %v2727 = vperm.slane %v2719, %v2726
        %v2728 = vrot.slane %v2715, 4
        %v2729 = vsel %vm777, %v2728, %v2703
        %v2730 = vrot.slane %v2703, 4
        %v2731 = vsel %vm777, %v2715, %v2730
        %v2733 = vunpack.c.l.s4 1934713408
        %v2734 = vunpack.c.0.s8 %v2733
        %v2735 = vperm.slane %v2729, %v2734
        %v2737 = vunpack.c.l.s4 1934713408
        %v2738 = vunpack.c.0.s8 %v2737
        %v2739 = vperm.slane %v2731, %v2738
        %v2740 = vrot.slane %v2723, 4
        %v2741 = vsel %vm777, 0.0, %v2740
        %v2742 = vrot.slane %v2727, 4
        %v2743 = vsel %vm777, 0.0, %v2742
        %v2744 = vrot.slane %v2735, 4
        %v2745 = vsel %vm777, 0.0, %v2744
        %v2746 = vrot.slane %v2739, 4
        %v2747 = vsel %vm777, 0.0, %v2746
        %v2748 = vsel %vm777, %v2686, %v2667
        %v2750 = vunpack.c.l.s4 1983009808
        %v2751 = vunpack.c.0.s8 %v2750
        %v2752 = vperm.slane %v2748, %v2751
        %v2753 = vrot.slane %v2687, 4
        %v2754 = vsel %vm777, %v2753, %v2685
        %v2756 = vunpack.c.l.s4 1983009808
        %v2757 = vunpack.c.0.s8 %v2756
        %v2758 = vperm.slane %v2754, %v2757
        %v2759 = vsel %vm777, %v2690, %v2679
        %v2761 = vunpack.c.l.s4 1983009808
        %v2762 = vunpack.c.0.s8 %v2761
        %v2763 = vperm.slane %v2759, %v2762
        %v2764 = vrot.slane %v2691, 4
        %v2765 = vsel %vm777, %v2764, %v2689
        %v2767 = vunpack.c.l.s4 1983009808
        %v2768 = vunpack.c.0.s8 %v2767
        %v2769 = vperm.slane %v2765, %v2768
        %v2770 = vrot.slane %v2758, 4
        %v2771 = vsel %vm777, %v2770, %v2752
        %v2772 = vrot.slane %v2752, 4
        %v2773 = vsel %vm777, %v2758, %v2772
        %v2775 = vunpack.c.l.s4 1934713408
        %v2776 = vunpack.c.0.s8 %v2775
        %v2777 = vperm.slane %v2771, %v2776
        %v2779 = vunpack.c.l.s4 1934713408
        %v2780 = vunpack.c.0.s8 %v2779
        %v2781 = vperm.slane %v2773, %v2780
        %v2782 = vrot.slane %v2769, 4
        %v2783 = vsel %vm777, %v2782, %v2763
        %v2784 = vrot.slane %v2763, 4
        %v2785 = vsel %vm777, %v2769, %v2784
        %v2787 = vunpack.c.l.s4 1934713408
        %v2788 = vunpack.c.0.s8 %v2787
        %v2789 = vperm.slane %v2783, %v2788
        %v2791 = vunpack.c.l.s4 1934713408
        %v2792 = vunpack.c.0.s8 %v2791
        %v2793 = vperm.slane %v2785, %v2792
        %v2794 = vrot.slane %v2789, 4
        %v2795 = vsel %vm777, %v2794, %v2777
        %v2796 = vrot.slane %v2777, 4
        %v2797 = vsel %vm777, %v2789, %v2796
        %v2798 = vrot.slane %v2793, 4
        %v2799 = vsel %vm777, %v2798, %v2781
        %v2800 = vrot.slane %v2781, 4
        %v2801 = vsel %vm777, %v2793, %v2800
        %v2802 = vsel %vm777, %v2742, %v2723
        %v2804 = vunpack.c.l.s4 1983009808
        %v2805 = vunpack.c.0.s8 %v2804
        %v2806 = vperm.slane %v2802, %v2805
        %v2807 = vrot.slane %v2743, 4
        %v2808 = vsel %vm777, %v2807, %v2741
        %v2810 = vunpack.c.l.s4 1983009808
        %v2811 = vunpack.c.0.s8 %v2810
        %v2812 = vperm.slane %v2808, %v2811
        %v2813 = vsel %vm777, %v2746, %v2735
        %v2815 = vunpack.c.l.s4 1983009808
        %v2816 = vunpack.c.0.s8 %v2815
        %v2817 = vperm.slane %v2813, %v2816
        %v2818 = vrot.slane %v2747, 4
        %v2819 = vsel %vm777, %v2818, %v2745
        %v2821 = vunpack.c.l.s4 1983009808
        %v2822 = vunpack.c.0.s8 %v2821
        %v2823 = vperm.slane %v2819, %v2822
        %v2824 = vrot.slane %v2812, 4
        %v2825 = vsel %vm777, %v2824, %v2806
        %v2826 = vrot.slane %v2806, 4
        %v2827 = vsel %vm777, %v2812, %v2826
        %v2829 = vunpack.c.l.s4 1934713408
        %v2830 = vunpack.c.0.s8 %v2829
        %v2831 = vperm.slane %v2825, %v2830
        %v2833 = vunpack.c.l.s4 1934713408
        %v2834 = vunpack.c.0.s8 %v2833
        %v2835 = vperm.slane %v2827, %v2834
        %v2836 = vrot.slane %v2823, 4
        %v2837 = vsel %vm777, %v2836, %v2817
        %v2838 = vrot.slane %v2817, 4
        %v2839 = vsel %vm777, %v2823, %v2838
        %v2841 = vunpack.c.l.s4 1934713408
        %v2842 = vunpack.c.0.s8 %v2841
        %v2843 = vperm.slane %v2837, %v2842
        %v2845 = vunpack.c.l.s4 1934713408
        %v2846 = vunpack.c.0.s8 %v2845
        %v2847 = vperm.slane %v2839, %v2846
        %v2848 = vrot.slane %v2843, 4
        %v2849 = vsel %vm777, %v2848, %v2831
        %v2850 = vrot.slane %v2831, 4
        %v2851 = vsel %vm777, %v2843, %v2850
        %v2852 = vrot.slane %v2847, 4
        %v2853 = vsel %vm777, %v2852, %v2835
        %v2854 = vrot.slane %v2835, 4
        %v2855 = vsel %vm777, %v2847, %v2854
        %2856 = vrot.lane.b32.xlu0 %v2371, 96
        %v2857 = vpop.permute.xlu0 %2856
        %2858 = vrot.lane.b32.xlu0 %v2374, 96
        %v2859 = vpop.permute.xlu0 %2858
        %2860 = vrot.lane.b32.xlu0 %v2619, 96
        %v2861 = vpop.permute.xlu0 %2860
        %2862 = vrot.lane.b32.xlu0 %v2621, 96
        %v2863 = vpop.permute.xlu0 %2862
        %2864 = vrot.lane.b32.xlu0 %v2625, 96
        %v2865 = vpop.permute.xlu0 %2864
        %2866 = vrot.lane.b32.xlu0 %v2627, 96
        %v2867 = vpop.permute.xlu0 %2866
        %2868 = vrot.lane.b32.xlu0 %v2631, 96
        %v2869 = vpop.permute.xlu0 %2868
        %2870 = vrot.lane.b32.xlu0 %v2633, 96
        %v2871 = vpop.permute.xlu0 %2870
        %v2880 = vrot.slane %v2865, 4
        %v2881 = vsel %vm777, %v2880, %v2857
        %v2882 = vrot.slane %v2857, 4
        %v2883 = vsel %vm777, %v2865, %v2882
        %v2885 = vunpack.c.l.s4 1983009808
        %v2886 = vunpack.c.0.s8 %v2885
        %v2887 = vperm.slane %v2881, %v2886
        %v2889 = vunpack.c.l.s4 1983009808
        %v2890 = vunpack.c.0.s8 %v2889
        %v2891 = vperm.slane %v2883, %v2890
        %v2892 = vrot.slane %v2869, 4
        %v2893 = vsel %vm777, %v2892, %v2861
        %v2894 = vrot.slane %v2861, 4
        %v2895 = vsel %vm777, %v2869, %v2894
        %v2897 = vunpack.c.l.s4 1983009808
        %v2898 = vunpack.c.0.s8 %v2897
        %v2899 = vperm.slane %v2893, %v2898
        %v2901 = vunpack.c.l.s4 1983009808
        %v2902 = vunpack.c.0.s8 %v2901
        %v2903 = vperm.slane %v2895, %v2902
        %v2904 = vrot.slane %v2899, 4
        %v2905 = vsel %vm777, %v2904, %v2887
        %v2906 = vrot.slane %v2887, 4
        %v2907 = vsel %vm777, %v2899, %v2906
        %v2909 = vunpack.c.l.s4 1934713408
        %v2910 = vunpack.c.0.s8 %v2909
        %v2911 = vperm.slane %v2905, %v2910
        %v2913 = vunpack.c.l.s4 1934713408
        %v2914 = vunpack.c.0.s8 %v2913
        %v2915 = vperm.slane %v2907, %v2914
        %v2916 = vrot.slane %v2903, 4
        %v2917 = vsel %vm777, %v2916, %v2891
        %v2918 = vrot.slane %v2891, 4
        %v2919 = vsel %vm777, %v2903, %v2918
        %v2921 = vunpack.c.l.s4 1934713408
        %v2922 = vunpack.c.0.s8 %v2921
        %v2923 = vperm.slane %v2917, %v2922
        %v2925 = vunpack.c.l.s4 1934713408
        %v2926 = vunpack.c.0.s8 %v2925
        %v2927 = vperm.slane %v2919, %v2926
        %v2928 = vrot.slane %v2911, 4
        %v2929 = vsel %vm777, 0.0, %v2928
        %v2930 = vrot.slane %v2915, 4
        %v2931 = vsel %vm777, 0.0, %v2930
        %v2932 = vrot.slane %v2923, 4
        %v2933 = vsel %vm777, 0.0, %v2932
        %v2934 = vrot.slane %v2927, 4
        %v2935 = vsel %vm777, 0.0, %v2934
        %v2936 = vrot.slane %v2867, 4
        %v2937 = vsel %vm777, %v2936, %v2859
        %v2938 = vrot.slane %v2859, 4
        %v2939 = vsel %vm777, %v2867, %v2938
        %v2941 = vunpack.c.l.s4 1983009808
        %v2942 = vunpack.c.0.s8 %v2941
        %v2943 = vperm.slane %v2937, %v2942
        %v2945 = vunpack.c.l.s4 1983009808
        %v2946 = vunpack.c.0.s8 %v2945
        %v2947 = vperm.slane %v2939, %v2946
        %v2948 = vrot.slane %v2871, 4
        %v2949 = vsel %vm777, %v2948, %v2863
        %v2950 = vrot.slane %v2863, 4
        %v2951 = vsel %vm777, %v2871, %v2950
        %v2953 = vunpack.c.l.s4 1983009808
        %v2954 = vunpack.c.0.s8 %v2953
        %v2955 = vperm.slane %v2949, %v2954
        %v2957 = vunpack.c.l.s4 1983009808
        %v2958 = vunpack.c.0.s8 %v2957
        %v2959 = vperm.slane %v2951, %v2958
        %v2960 = vrot.slane %v2955, 4
        %v2961 = vsel %vm777, %v2960, %v2943
        %v2962 = vrot.slane %v2943, 4
        %v2963 = vsel %vm777, %v2955, %v2962
        %v2965 = vunpack.c.l.s4 1934713408
        %v2966 = vunpack.c.0.s8 %v2965
        %v2967 = vperm.slane %v2961, %v2966
        %v2969 = vunpack.c.l.s4 1934713408
        %v2970 = vunpack.c.0.s8 %v2969
        %v2971 = vperm.slane %v2963, %v2970
        %v2972 = vrot.slane %v2959, 4
        %v2973 = vsel %vm777, %v2972, %v2947
        %v2974 = vrot.slane %v2947, 4
        %v2975 = vsel %vm777, %v2959, %v2974
        %v2977 = vunpack.c.l.s4 1934713408
        %v2978 = vunpack.c.0.s8 %v2977
        %v2979 = vperm.slane %v2973, %v2978
        %v2981 = vunpack.c.l.s4 1934713408
        %v2982 = vunpack.c.0.s8 %v2981
        %v2983 = vperm.slane %v2975, %v2982
        %v2984 = vrot.slane %v2967, 4
        %v2985 = vsel %vm777, 0.0, %v2984
        %v2986 = vrot.slane %v2971, 4
        %v2987 = vsel %vm777, 0.0, %v2986
        %v2988 = vrot.slane %v2979, 4
        %v2989 = vsel %vm777, 0.0, %v2988
        %v2990 = vrot.slane %v2983, 4
        %v2991 = vsel %vm777, 0.0, %v2990
        %v2992 = vsel %vm777, %v2930, %v2911
        %v2994 = vunpack.c.l.s4 1983009808
        %v2995 = vunpack.c.0.s8 %v2994
        %v2996 = vperm.slane %v2992, %v2995
        %v2997 = vrot.slane %v2931, 4
        %v2998 = vsel %vm777, %v2997, %v2929
        %v3000 = vunpack.c.l.s4 1983009808
        %v3001 = vunpack.c.0.s8 %v3000
        %v3002 = vperm.slane %v2998, %v3001
        %v3003 = vsel %vm777, %v2934, %v2923
        %v3005 = vunpack.c.l.s4 1983009808
        %v3006 = vunpack.c.0.s8 %v3005
        %v3007 = vperm.slane %v3003, %v3006
        %v3008 = vrot.slane %v2935, 4
        %v3009 = vsel %vm777, %v3008, %v2933
        %v3011 = vunpack.c.l.s4 1983009808
        %v3012 = vunpack.c.0.s8 %v3011
        %v3013 = vperm.slane %v3009, %v3012
        %v3014 = vrot.slane %v3002, 4
        %v3015 = vsel %vm777, %v3014, %v2996
        %v3016 = vrot.slane %v2996, 4
        %v3017 = vsel %vm777, %v3002, %v3016
        %v3019 = vunpack.c.l.s4 1934713408
        %v3020 = vunpack.c.0.s8 %v3019
        %v3021 = vperm.slane %v3015, %v3020
        %v3023 = vunpack.c.l.s4 1934713408
        %v3024 = vunpack.c.0.s8 %v3023
        %v3025 = vperm.slane %v3017, %v3024
        %v3026 = vrot.slane %v3013, 4
        %v3027 = vsel %vm777, %v3026, %v3007
        %v3028 = vrot.slane %v3007, 4
        %v3029 = vsel %vm777, %v3013, %v3028
        %v3031 = vunpack.c.l.s4 1934713408
        %v3032 = vunpack.c.0.s8 %v3031
        %v3033 = vperm.slane %v3027, %v3032
        %v3035 = vunpack.c.l.s4 1934713408
        %v3036 = vunpack.c.0.s8 %v3035
        %v3037 = vperm.slane %v3029, %v3036
        %v3038 = vrot.slane %v3033, 4
        %v3039 = vsel %vm777, %v3038, %v3021
        %v3040 = vrot.slane %v3021, 4
        %v3041 = vsel %vm777, %v3033, %v3040
        %v3042 = vrot.slane %v3037, 4
        %v3043 = vsel %vm777, %v3042, %v3025
        %v3044 = vrot.slane %v3025, 4
        %v3045 = vsel %vm777, %v3037, %v3044
        %v3046 = vsel %vm777, %v2986, %v2967
        %v3048 = vunpack.c.l.s4 1983009808
        %v3049 = vunpack.c.0.s8 %v3048
        %v3050 = vperm.slane %v3046, %v3049
        %v3051 = vrot.slane %v2987, 4
        %v3052 = vsel %vm777, %v3051, %v2985
        %v3054 = vunpack.c.l.s4 1983009808
        %v3055 = vunpack.c.0.s8 %v3054
        %v3056 = vperm.slane %v3052, %v3055
        %v3057 = vsel %vm777, %v2990, %v2979
        %v3059 = vunpack.c.l.s4 1983009808
        %v3060 = vunpack.c.0.s8 %v3059
        %v3061 = vperm.slane %v3057, %v3060
        %v3062 = vrot.slane %v2991, 4
        %v3063 = vsel %vm777, %v3062, %v2989
        %v3065 = vunpack.c.l.s4 1983009808
        %v3066 = vunpack.c.0.s8 %v3065
        %v3067 = vperm.slane %v3063, %v3066
        %v3068 = vrot.slane %v3056, 4
        %v3069 = vsel %vm777, %v3068, %v3050
        %v3070 = vrot.slane %v3050, 4
        %v3071 = vsel %vm777, %v3056, %v3070
        %v3073 = vunpack.c.l.s4 1934713408
        %v3074 = vunpack.c.0.s8 %v3073
        %v3075 = vperm.slane %v3069, %v3074
        %v3077 = vunpack.c.l.s4 1934713408
        %v3078 = vunpack.c.0.s8 %v3077
        %v3079 = vperm.slane %v3071, %v3078
        %v3080 = vrot.slane %v3067, 4
        %v3081 = vsel %vm777, %v3080, %v3061
        %v3082 = vrot.slane %v3061, 4
        %v3083 = vsel %vm777, %v3067, %v3082
        %v3085 = vunpack.c.l.s4 1934713408
        %v3086 = vunpack.c.0.s8 %v3085
        %v3087 = vperm.slane %v3081, %v3086
        %v3089 = vunpack.c.l.s4 1934713408
        %v3090 = vunpack.c.0.s8 %v3089
        %v3091 = vperm.slane %v3083, %v3090
        %v3092 = vrot.slane %v3087, 4
        %v3093 = vsel %vm777, %v3092, %v3075
        %v3094 = vrot.slane %v3075, 4
        %v3095 = vsel %vm777, %v3087, %v3094
        %v3096 = vrot.slane %v3091, 4
        %v3097 = vsel %vm777, %v3096, %v3079
        %v3098 = vrot.slane %v3079, 4
        %v3099 = vsel %vm777, %v3091, %v3098
        %v3101 = vsel %vm1485, %v2555, 0
        %v3104 = vsel %vm1485, %v2609, 0
        %v3107 = vsel %vm1485, %v2795, 0
        %v3110 = vsel %vm1485, %v2849, 0
        %3112 = vmatpush.xpose.msra.mxu0 0.0
        %3113 = vmatpush.xpose.msra.mxu0 0.0
        %3114 = vmatpush.xpose.msra.mxu0 0.0
        %3115 = vmatpush.xpose.msra.mxu0 0.0
        %3116 = vmatpush.xpose.msra.mxu0 0.0
        %3117 = vmatpush.xpose.msra.mxu0 0.0
        %3118 = vmatpush.xpose.msra.mxu0 0.0
        %3119 = vmatpush.xpose.msra.mxu0 0.0
        %3120 = vmatpush.xpose.msra.mxu0 0.0
        %3121 = vmatpush.xpose.msra.mxu0 0.0
        %3122 = vmatpush.xpose.msra.mxu0 0.0
        %3123 = vmatpush.xpose.msra.mxu0 0.0
        %3124 = vmatpush.xpose.msra.mxu0 0.0
        %3125 = vmatpush.xpose.msra.mxu0 0.0
        %3126 = vmatpush.xpose.msra.mxu0 %v3110
        %3127 = vmatpush.xpose.msra.mxu0 %v3107
        %3128 = vmatmul.f32.gmra.mxu0 %v3101
        %v3129 = vpop.f32.mrf.mxu0
        %v3130 = vadd.f32 0.0, %v3129
        %3131 = vmatmul.f32.gmra.mxu0 %v3104
        %v3132 = vpop.f32.mrf.mxu0
        %v3133 = vadd.f32 0.0, %v3132
        %3134 = vdwg.mxu0
        %v3136 = vsel %vm1485, %v2557, 0
        %v3139 = vsel %vm1485, %v2611, 0
        %v3142 = vsel %vm1485, %v2797, 0
        %v3145 = vsel %vm1485, %v2851, 0
        %3147 = vmatpush.xpose.msra.mxu0 0.0
        %3148 = vmatpush.xpose.msra.mxu0 0.0
        %3149 = vmatpush.xpose.msra.mxu0 0.0
        %3150 = vmatpush.xpose.msra.mxu0 0.0
        %3151 = vmatpush.xpose.msra.mxu0 0.0
        %3152 = vmatpush.xpose.msra.mxu0 0.0
        %3153 = vmatpush.xpose.msra.mxu0 0.0
        %3154 = vmatpush.xpose.msra.mxu0 0.0
        %3155 = vmatpush.xpose.msra.mxu0 0.0
        %3156 = vmatpush.xpose.msra.mxu0 0.0
        %3157 = vmatpush.xpose.msra.mxu0 0.0
        %3158 = vmatpush.xpose.msra.mxu0 0.0
        %3159 = vmatpush.xpose.msra.mxu0 0.0
        %3160 = vmatpush.xpose.msra.mxu0 0.0
        %3161 = vmatpush.xpose.msra.mxu0 %v3145
        %3162 = vmatpush.xpose.msra.mxu0 %v3142
        %3163 = vmatmul.f32.gmra.mxu0 %v3136
        %v3164 = vpop.f32.mrf.mxu0
        %v3165 = vadd.f32 0.0, %v3164
        %3166 = vmatmul.f32.gmra.mxu0 %v3139
        %v3167 = vpop.f32.mrf.mxu0
        %v3168 = vadd.f32 0.0, %v3167
        %3169 = vdwg.mxu0
        %v3171 = vsel %vm1485, %v2559, 0
        %v3174 = vsel %vm1485, %v2613, 0
        %v3177 = vsel %vm1485, %v2799, 0
        %v3180 = vsel %vm1485, %v2853, 0
        %3182 = vmatpush.xpose.msra.mxu0 0.0
        %3183 = vmatpush.xpose.msra.mxu0 0.0
        %3184 = vmatpush.xpose.msra.mxu0 0.0
        %3185 = vmatpush.xpose.msra.mxu0 0.0
        %3186 = vmatpush.xpose.msra.mxu0 0.0
        %3187 = vmatpush.xpose.msra.mxu0 0.0
        %3188 = vmatpush.xpose.msra.mxu0 0.0
        %3189 = vmatpush.xpose.msra.mxu0 0.0
        %3190 = vmatpush.xpose.msra.mxu0 0.0
        %3191 = vmatpush.xpose.msra.mxu0 0.0
        %3192 = vmatpush.xpose.msra.mxu0 0.0
        %3193 = vmatpush.xpose.msra.mxu0 0.0
        %3194 = vmatpush.xpose.msra.mxu0 0.0
        %3195 = vmatpush.xpose.msra.mxu0 0.0
        %3196 = vmatpush.xpose.msra.mxu0 %v3180
        %3197 = vmatpush.xpose.msra.mxu0 %v3177
        %3198 = vmatmul.f32.gmra.mxu0 %v3171
        %v3199 = vpop.f32.mrf.mxu0
        %v3200 = vadd.f32 0.0, %v3199
        %3201 = vmatmul.f32.gmra.mxu0 %v3174
        %v3202 = vpop.f32.mrf.mxu0
        %v3203 = vadd.f32 0.0, %v3202
        %3204 = vdwg.mxu0
        %v3206 = vsel %vm1485, %v2561, 0
        %v3209 = vsel %vm1485, %v2615, 0
        %v3212 = vsel %vm1485, %v2801, 0
        %v3215 = vsel %vm1485, %v2855, 0
        %3217 = vmatpush.xpose.msra.mxu0 0.0
        %3218 = vmatpush.xpose.msra.mxu0 0.0
        %3219 = vmatpush.xpose.msra.mxu0 0.0
        %3220 = vmatpush.xpose.msra.mxu0 0.0
        %3221 = vmatpush.xpose.msra.mxu0 0.0
        %3222 = vmatpush.xpose.msra.mxu0 0.0
        %3223 = vmatpush.xpose.msra.mxu0 0.0
        %3224 = vmatpush.xpose.msra.mxu0 0.0
        %3225 = vmatpush.xpose.msra.mxu0 0.0
        %3226 = vmatpush.xpose.msra.mxu0 0.0
        %3227 = vmatpush.xpose.msra.mxu0 0.0
        %3228 = vmatpush.xpose.msra.mxu0 0.0
        %3229 = vmatpush.xpose.msra.mxu0 0.0
        %3230 = vmatpush.xpose.msra.mxu0 0.0
        %3231 = vmatpush.xpose.msra.mxu0 %v3215
        %3232 = vmatpush.xpose.msra.mxu0 %v3212
        %3233 = vmatmul.f32.gmra.mxu0 %v3206
        %v3234 = vpop.f32.mrf.mxu0
        %v3235 = vadd.f32 0.0, %v3234
        %3236 = vmatmul.f32.gmra.mxu0 %v3209
        %v3237 = vpop.f32.mrf.mxu0
        %v3238 = vadd.f32 0.0, %v3237
        %3239 = vdwg.mxu0
        %v3240 = vmul.f32 %v3130, 0.35355338
        %v3241 = vmul.f32 %v3133, 0.35355338
        %v3242 = vmul.f32 %v3165, 0.35355338
        %v3243 = vmul.f32 %v3168, 0.35355338
        %v3244 = vmul.f32 %v3200, 0.35355338
        %v3245 = vmul.f32 %v3203, 0.35355338
        %v3246 = vmul.f32 %v3235, 0.35355338
        %v3247 = vmul.f32 %v3238, 0.35355338
        %v3248 = vsel %vm1636, %v3240, -1e+30
        %v3249 = vsel %vm1637, %v3241, -1e+30
        %v3250 = vsel %vm1636, %v3242, -1e+30
        %v3251 = vsel %vm1637, %v3243, -1e+30
        %v3252 = vsel %vm1636, %v3244, -1e+30
        %v3253 = vsel %vm1637, %v3245, -1e+30
        %v3254 = vsel %vm1636, %v3246, -1e+30
        %v3255 = vsel %vm1637, %v3247, -1e+30
        %v3256 = vsel %vm1646, %v3248, -inf
        %3257 = vmax.xlane.f32.xlu0 %v3256
        %v3258 = vpop.xlane.xlu0 %3257
        %v3259 = vsel %vm1646, %v3249, -inf
        %3260 = vmax.xlane.f32.xlu0 %v3259
        %v3261 = vpop.xlane.xlu0 %3260
        %v3262 = vsel %vm1646, %v3250, -inf
        %3263 = vmax.xlane.f32.xlu0 %v3262
        %v3264 = vpop.xlane.xlu0 %3263
        %v3265 = vsel %vm1646, %v3251, -inf
        %3266 = vmax.xlane.f32.xlu0 %v3265
        %v3267 = vpop.xlane.xlu0 %3266
        %v3268 = vsel %vm1646, %v3252, -inf
        %3269 = vmax.xlane.f32.xlu0 %v3268
        %v3270 = vpop.xlane.xlu0 %3269
        %v3271 = vsel %vm1646, %v3253, -inf
        %3272 = vmax.xlane.f32.xlu0 %v3271
        %v3273 = vpop.xlane.xlu0 %3272
        %v3274 = vsel %vm1646, %v3254, -inf
        %3275 = vmax.xlane.f32.xlu0 %v3274
        %v3276 = vpop.xlane.xlu0 %3275
        %v3277 = vsel %vm1646, %v3255, -inf
        %3278 = vmax.xlane.f32.xlu0 %v3277
        %v3279 = vpop.xlane.xlu0 %3278
        %v3280 = vsub.f32 %v3248, %v3258
        %v3281 = vsub.f32 %v3249, %v3261
        %v3282 = vsub.f32 %v3250, %v3264
        %v3283 = vsub.f32 %v3251, %v3267
        %v3284 = vsub.f32 %v3252, %v3270
        %v3285 = vsub.f32 %v3253, %v3273
        %v3286 = vsub.f32 %v3254, %v3276
        %v3287 = vsub.f32 %v3255, %v3279
        %v3288 = vmul.f32 %v3280, 1.442695
        %v3289 = vpow.pop %v3288
        %v3290 = vmul.f32 %v3281, 1.442695
        %v3291 = vpow.pop %v3290
        %v3292 = vmul.f32 %v3282, 1.442695
        %v3293 = vpow.pop %v3292
        %v3294 = vmul.f32 %v3283, 1.442695
        %v3295 = vpow.pop %v3294
        %v3296 = vmul.f32 %v3284, 1.442695
        %v3297 = vpow.pop %v3296
        %v3298 = vmul.f32 %v3285, 1.442695
        %v3299 = vpow.pop %v3298
        %v3300 = vmul.f32 %v3286, 1.442695
        %v3301 = vpow.pop %v3300
        %v3302 = vmul.f32 %v3287, 1.442695
        %v3303 = vpow.pop %v3302
        %v3304 = vsel %vm1646, %v3289, 0.0
        %3305 = vadd.xlane.f32.xlu0 %v3304
        %v3306 = vpop.xlane.xlu0 %3305
        %v3307 = vsel %vm1646, %v3291, 0.0
        %3308 = vadd.xlane.f32.xlu0 %v3307
        %v3309 = vpop.xlane.xlu0 %3308
        %v3310 = vsel %vm1646, %v3293, 0.0
        %3311 = vadd.xlane.f32.xlu0 %v3310
        %v3312 = vpop.xlane.xlu0 %3311
        %v3313 = vsel %vm1646, %v3295, 0.0
        %3314 = vadd.xlane.f32.xlu0 %v3313
        %v3315 = vpop.xlane.xlu0 %3314
        %v3316 = vsel %vm1646, %v3297, 0.0
        %3317 = vadd.xlane.f32.xlu0 %v3316
        %v3318 = vpop.xlane.xlu0 %3317
        %v3319 = vsel %vm1646, %v3299, 0.0
        %3320 = vadd.xlane.f32.xlu0 %v3319
        %v3321 = vpop.xlane.xlu0 %3320
        %v3322 = vsel %vm1646, %v3301, 0.0
        %3323 = vadd.xlane.f32.xlu0 %v3322
        %v3324 = vpop.xlane.xlu0 %3323
        %v3325 = vsel %vm1646, %v3303, 0.0
        %3326 = vadd.xlane.f32.xlu0 %v3325
        %v3327 = vpop.xlane.xlu0 %3326
        %v3328 = vrcp.pop %v3306
        %v3329 = vmul.f32 %v3306, %v3328
        %v3330 = vsub.f32 1.0, %v3329
        %v3331 = vmul.f32 %v3328, %v3330
        %v3332 = vadd.f32 %v3328, %v3331
        %vm3333 = vweird.f32 %v3306
        %vm3334 = vweird.f32 %v3328
        %vm3335 = vmor %vm3333, %vm3334
        %v3336 = vsel %vm3335, %v3328, %v3332
        %v3337 = vand.u32 2147483647, %v3306
        %vm3338 = vcmp.eq.f32.partialorder %v3337, 8.507059e+37
        %v3339 = vand.u32 %v3306, 2147483648
        %v3340 = vor.u32 1.1754944e-38, %v3339
        %v3341 = vsel %vm3338, %v3340, %v3336
        %v3342 = vmul.f32 %v3289, %v3341
        %v3343 = vrcp.pop %v3309
        %v3344 = vmul.f32 %v3309, %v3343
        %v3345 = vsub.f32 1.0, %v3344
        %v3346 = vmul.f32 %v3343, %v3345
        %v3347 = vadd.f32 %v3343, %v3346
        %vm3348 = vweird.f32 %v3309
        %vm3349 = vweird.f32 %v3343
        %vm3350 = vmor %vm3348, %vm3349
        %v3351 = vsel %vm3350, %v3343, %v3347
        %v3352 = vand.u32 2147483647, %v3309
        %vm3353 = vcmp.eq.f32.partialorder %v3352, 8.507059e+37
        %v3354 = vand.u32 %v3309, 2147483648
        %v3355 = vor.u32 1.1754944e-38, %v3354
        %v3356 = vsel %vm3353, %v3355, %v3351
        %v3357 = vmul.f32 %v3291, %v3356
        %v3358 = vrcp.pop %v3312
        %v3359 = vmul.f32 %v3312, %v3358
        %v3360 = vsub.f32 1.0, %v3359
        %v3361 = vmul.f32 %v3358, %v3360
        %v3362 = vadd.f32 %v3358, %v3361
        %vm3363 = vweird.f32 %v3312
        %vm3364 = vweird.f32 %v3358
        %vm3365 = vmor %vm3363, %vm3364
        %v3366 = vsel %vm3365, %v3358, %v3362
        %v3367 = vand.u32 2147483647, %v3312
        %vm3368 = vcmp.eq.f32.partialorder %v3367, 8.507059e+37
        %v3369 = vand.u32 %v3312, 2147483648
        %v3370 = vor.u32 1.1754944e-38, %v3369
        %v3371 = vsel %vm3368, %v3370, %v3366
        %v3372 = vmul.f32 %v3293, %v3371
        %v3373 = vrcp.pop %v3315
        %v3374 = vmul.f32 %v3315, %v3373
        %v3375 = vsub.f32 1.0, %v3374
        %v3376 = vmul.f32 %v3373, %v3375
        %v3377 = vadd.f32 %v3373, %v3376
        %vm3378 = vweird.f32 %v3315
        %vm3379 = vweird.f32 %v3373
        %vm3380 = vmor %vm3378, %vm3379
        %v3381 = vsel %vm3380, %v3373, %v3377
        %v3382 = vand.u32 2147483647, %v3315
        %vm3383 = vcmp.eq.f32.partialorder %v3382, 8.507059e+37
        %v3384 = vand.u32 %v3315, 2147483648
        %v3385 = vor.u32 1.1754944e-38, %v3384
        %v3386 = vsel %vm3383, %v3385, %v3381
        %v3387 = vmul.f32 %v3295, %v3386
        %v3388 = vrcp.pop %v3318
        %v3389 = vmul.f32 %v3318, %v3388
        %v3390 = vsub.f32 1.0, %v3389
        %v3391 = vmul.f32 %v3388, %v3390
        %v3392 = vadd.f32 %v3388, %v3391
        %vm3393 = vweird.f32 %v3318
        %vm3394 = vweird.f32 %v3388
        %vm3395 = vmor %vm3393, %vm3394
        %v3396 = vsel %vm3395, %v3388, %v3392
        %v3397 = vand.u32 2147483647, %v3318
        %vm3398 = vcmp.eq.f32.partialorder %v3397, 8.507059e+37
        %v3399 = vand.u32 %v3318, 2147483648
        %v3400 = vor.u32 1.1754944e-38, %v3399
        %v3401 = vsel %vm3398, %v3400, %v3396
        %v3402 = vmul.f32 %v3297, %v3401
        %v3403 = vrcp.pop %v3321
        %v3404 = vmul.f32 %v3321, %v3403
        %v3405 = vsub.f32 1.0, %v3404
        %v3406 = vmul.f32 %v3403, %v3405
        %v3407 = vadd.f32 %v3403, %v3406
        %vm3408 = vweird.f32 %v3321
        %vm3409 = vweird.f32 %v3403
        %vm3410 = vmor %vm3408, %vm3409
        %v3411 = vsel %vm3410, %v3403, %v3407
        %v3412 = vand.u32 2147483647, %v3321
        %vm3413 = vcmp.eq.f32.partialorder %v3412, 8.507059e+37
        %v3414 = vand.u32 %v3321, 2147483648
        %v3415 = vor.u32 1.1754944e-38, %v3414
        %v3416 = vsel %vm3413, %v3415, %v3411
        %v3417 = vmul.f32 %v3299, %v3416
        %v3418 = vrcp.pop %v3324
        %v3419 = vmul.f32 %v3324, %v3418
        %v3420 = vsub.f32 1.0, %v3419
        %v3421 = vmul.f32 %v3418, %v3420
        %v3422 = vadd.f32 %v3418, %v3421
        %vm3423 = vweird.f32 %v3324
        %vm3424 = vweird.f32 %v3418
        %vm3425 = vmor %vm3423, %vm3424
        %v3426 = vsel %vm3425, %v3418, %v3422
        %v3427 = vand.u32 2147483647, %v3324
        %vm3428 = vcmp.eq.f32.partialorder %v3427, 8.507059e+37
        %v3429 = vand.u32 %v3324, 2147483648
        %v3430 = vor.u32 1.1754944e-38, %v3429
        %v3431 = vsel %vm3428, %v3430, %v3426
        %v3432 = vmul.f32 %v3301, %v3431
        %v3433 = vrcp.pop %v3327
        %v3434 = vmul.f32 %v3327, %v3433
        %v3435 = vsub.f32 1.0, %v3434
        %v3436 = vmul.f32 %v3433, %v3435
        %v3437 = vadd.f32 %v3433, %v3436
        %vm3438 = vweird.f32 %v3327
        %vm3439 = vweird.f32 %v3433
        %vm3440 = vmor %vm3438, %vm3439
        %v3441 = vsel %vm3440, %v3433, %v3437
        %v3442 = vand.u32 2147483647, %v3327
        %vm3443 = vcmp.eq.f32.partialorder %v3442, 8.507059e+37
        %v3444 = vand.u32 %v3327, 2147483648
        %v3445 = vor.u32 1.1754944e-38, %v3444
        %v3446 = vsel %vm3443, %v3445, %v3441
        %v3447 = vmul.f32 %v3303, %v3446
        %v3449 = vsel %vm1646, %v3342, 0
        %v3452 = vsel %vm1646, %v3357, 0
        %3454 = vmatpush.msra.mxu0 0.0
        %3455 = vmatpush.msra.mxu0 0.0
        %3456 = vmatpush.msra.mxu0 0.0
        %3457 = vmatpush.msra.mxu0 0.0
        %3458 = vmatpush.msra.mxu0 0.0
        %3459 = vmatpush.msra.mxu0 0.0
        %3460 = vmatpush.msra.mxu0 0.0
        %3461 = vmatpush.msra.mxu0 0.0
        %3462 = vmatpush.msra.mxu0 0.0
        %3463 = vmatpush.msra.mxu0 0.0
        %3464 = vmatpush.msra.mxu0 0.0
        %3465 = vmatpush.msra.mxu0 0.0
        %3466 = vmatpush.msra.mxu0 0.0
        %3467 = vmatpush.msra.mxu0 0.0
        %3468 = vmatpush.msra.mxu0 %v3093
        %3469 = vmatpush.msra.mxu0 %v3039
        %3470 = vmatmul.f32.gmra.mxu0 %v3449
        %v3471 = vpop.f32.mrf.mxu0
        %v3472 = vadd.f32 0.0, %v3471
        %3473 = vmatmul.f32.gmra.mxu0 %v3452
        %v3474 = vpop.f32.mrf.mxu0
        %v3475 = vadd.f32 0.0, %v3474
        %3476 = vdwg.mxu0
        %v3478 = vsel %vm1646, %v3372, 0
        %v3481 = vsel %vm1646, %v3387, 0
        %3483 = vmatpush.msra.mxu0 0.0
        %3484 = vmatpush.msra.mxu0 0.0
        %3485 = vmatpush.msra.mxu0 0.0
        %3486 = vmatpush.msra.mxu0 0.0
        %3487 = vmatpush.msra.mxu0 0.0
        %3488 = vmatpush.msra.mxu0 0.0
        %3489 = vmatpush.msra.mxu0 0.0
        %3490 = vmatpush.msra.mxu0 0.0
        %3491 = vmatpush.msra.mxu0 0.0
        %3492 = vmatpush.msra.mxu0 0.0
        %3493 = vmatpush.msra.mxu0 0.0
        %3494 = vmatpush.msra.mxu0 0.0
        %3495 = vmatpush.msra.mxu0 0.0
        %3496 = vmatpush.msra.mxu0 0.0
        %3497 = vmatpush.msra.mxu0 %v3095
        %3498 = vmatpush.msra.mxu0 %v3041
        %3499 = vmatmul.f32.gmra.mxu0 %v3478
        %v3500 = vpop.f32.mrf.mxu0
        %v3501 = vadd.f32 0.0, %v3500
        %3502 = vmatmul.f32.gmra.mxu0 %v3481
        %v3503 = vpop.f32.mrf.mxu0
        %v3504 = vadd.f32 0.0, %v3503
        %3505 = vdwg.mxu0
        %v3507 = vsel %vm1646, %v3402, 0
        %v3510 = vsel %vm1646, %v3417, 0
        %3512 = vmatpush.msra.mxu0 0.0
        %3513 = vmatpush.msra.mxu0 0.0
        %3514 = vmatpush.msra.mxu0 0.0
        %3515 = vmatpush.msra.mxu0 0.0
        %3516 = vmatpush.msra.mxu0 0.0
        %3517 = vmatpush.msra.mxu0 0.0
        %3518 = vmatpush.msra.mxu0 0.0
        %3519 = vmatpush.msra.mxu0 0.0
        %3520 = vmatpush.msra.mxu0 0.0
        %3521 = vmatpush.msra.mxu0 0.0
        %3522 = vmatpush.msra.mxu0 0.0
        %3523 = vmatpush.msra.mxu0 0.0
        %3524 = vmatpush.msra.mxu0 0.0
        %3525 = vmatpush.msra.mxu0 0.0
        %3526 = vmatpush.msra.mxu0 %v3097
        %3527 = vmatpush.msra.mxu0 %v3043
        %3528 = vmatmul.f32.gmra.mxu0 %v3507
        %v3529 = vpop.f32.mrf.mxu0
        %v3530 = vadd.f32 0.0, %v3529
        %3531 = vmatmul.f32.gmra.mxu0 %v3510
        %v3532 = vpop.f32.mrf.mxu0
        %v3533 = vadd.f32 0.0, %v3532
        %3534 = vdwg.mxu0
        %v3536 = vsel %vm1646, %v3432, 0
        %v3539 = vsel %vm1646, %v3447, 0
        %3541 = vmatpush.msra.mxu0 0.0
        %3542 = vmatpush.msra.mxu0 0.0
        %3543 = vmatpush.msra.mxu0 0.0
        %3544 = vmatpush.msra.mxu0 0.0
        %3545 = vmatpush.msra.mxu0 0.0
        %3546 = vmatpush.msra.mxu0 0.0
        %3547 = vmatpush.msra.mxu0 0.0
        %3548 = vmatpush.msra.mxu0 0.0
        %3549 = vmatpush.msra.mxu0 0.0
        %3550 = vmatpush.msra.mxu0 0.0
        %3551 = vmatpush.msra.mxu0 0.0
        %3552 = vmatpush.msra.mxu0 0.0
        %3553 = vmatpush.msra.mxu0 0.0
        %3554 = vmatpush.msra.mxu0 0.0
        %3555 = vmatpush.msra.mxu0 %v3099
        %3556 = vmatpush.msra.mxu0 %v3045
        %3557 = vmatmul.f32.gmra.mxu0 %v3536
        %v3558 = vpop.f32.mrf.mxu0
        %v3559 = vadd.f32 0.0, %v3558
        %3560 = vmatmul.f32.gmra.mxu0 %v3539
        %v3561 = vpop.f32.mrf.mxu0
        %v3562 = vadd.f32 0.0, %v3561
        %3563 = vdwg.mxu0
        %v3564 = vrot.slane %v3530, 4
        %v3565 = vsel %vm777, %v3564, %v3472
        %v3566 = vrot.slane %v3472, 4
        %v3567 = vsel %vm777, %v3530, %v3566
        %v3569 = vunpack.c.l.s4 1983009808
        %v3570 = vunpack.c.0.s8 %v3569
        %v3571 = vperm.slane %v3565, %v3570
        %v3573 = vunpack.c.l.s4 1983009808
        %v3574 = vunpack.c.0.s8 %v3573
        %v3575 = vperm.slane %v3567, %v3574
        %v3576 = vrot.slane %v3559, 4
        %v3577 = vsel %vm777, %v3576, %v3501
        %v3578 = vrot.slane %v3501, 4
        %v3579 = vsel %vm777, %v3559, %v3578
        %v3581 = vunpack.c.l.s4 1983009808
        %v3582 = vunpack.c.0.s8 %v3581
        %v3583 = vperm.slane %v3577, %v3582
        %v3585 = vunpack.c.l.s4 1983009808
        %v3586 = vunpack.c.0.s8 %v3585
        %v3587 = vperm.slane %v3579, %v3586
        %v3588 = vrot.slane %v3583, 4
        %v3589 = vsel %vm777, %v3588, %v3571
        %v3590 = vrot.slane %v3571, 4
        %v3591 = vsel %vm777, %v3583, %v3590
        %v3593 = vunpack.c.l.s4 1934713408
        %v3594 = vunpack.c.0.s8 %v3593
        %v3595 = vperm.slane %v3589, %v3594
        %v3597 = vunpack.c.l.s4 1934713408
        %v3598 = vunpack.c.0.s8 %v3597
        %v3599 = vperm.slane %v3591, %v3598
        %v3600 = vrot.slane %v3587, 4
        %v3601 = vsel %vm777, %v3600, %v3575
        %v3602 = vrot.slane %v3575, 4
        %v3603 = vsel %vm777, %v3587, %v3602
        %v3605 = vunpack.c.l.s4 1934713408
        %v3606 = vunpack.c.0.s8 %v3605
        %v3607 = vperm.slane %v3601, %v3606
        %v3609 = vunpack.c.l.s4 1934713408
        %v3610 = vunpack.c.0.s8 %v3609
        %v3611 = vperm.slane %v3603, %v3610
        %v3612 = vrot.slane %v3595, 4
        %v3613 = vsel %vm777, 0.0, %v3612
        %v3614 = vrot.slane %v3599, 4
        %v3615 = vsel %vm777, 0.0, %v3614
        %v3616 = vrot.slane %v3607, 4
        %v3617 = vsel %vm777, 0.0, %v3616
        %v3618 = vrot.slane %v3611, 4
        %v3619 = vsel %vm777, 0.0, %v3618
        %v3620 = vrot.slane %v3533, 4
        %v3621 = vsel %vm777, %v3620, %v3475
        %v3622 = vrot.slane %v3475, 4
        %v3623 = vsel %vm777, %v3533, %v3622
        %v3625 = vunpack.c.l.s4 1983009808
        %v3626 = vunpack.c.0.s8 %v3625
        %v3627 = vperm.slane %v3621, %v3626
        %v3629 = vunpack.c.l.s4 1983009808
        %v3630 = vunpack.c.0.s8 %v3629
        %v3631 = vperm.slane %v3623, %v3630
        %v3632 = vrot.slane %v3562, 4
        %v3633 = vsel %vm777, %v3632, %v3504
        %v3634 = vrot.slane %v3504, 4
        %v3635 = vsel %vm777, %v3562, %v3634
        %v3637 = vunpack.c.l.s4 1983009808
        %v3638 = vunpack.c.0.s8 %v3637
        %v3639 = vperm.slane %v3633, %v3638
        %v3641 = vunpack.c.l.s4 1983009808
        %v3642 = vunpack.c.0.s8 %v3641
        %v3643 = vperm.slane %v3635, %v3642
        %v3644 = vrot.slane %v3639, 4
        %v3645 = vsel %vm777, %v3644, %v3627
        %v3646 = vrot.slane %v3627, 4
        %v3647 = vsel %vm777, %v3639, %v3646
        %v3649 = vunpack.c.l.s4 1934713408
        %v3650 = vunpack.c.0.s8 %v3649
        %v3651 = vperm.slane %v3645, %v3650
        %v3653 = vunpack.c.l.s4 1934713408
        %v3654 = vunpack.c.0.s8 %v3653
        %v3655 = vperm.slane %v3647, %v3654
        %v3656 = vrot.slane %v3643, 4
        %v3657 = vsel %vm777, %v3656, %v3631
        %v3658 = vrot.slane %v3631, 4
        %v3659 = vsel %vm777, %v3643, %v3658
        %v3661 = vunpack.c.l.s4 1934713408
        %v3662 = vunpack.c.0.s8 %v3661
        %v3663 = vperm.slane %v3657, %v3662
        %v3665 = vunpack.c.l.s4 1934713408
        %v3666 = vunpack.c.0.s8 %v3665
        %v3667 = vperm.slane %v3659, %v3666
        %v3668 = vrot.slane %v3651, 4
        %v3669 = vsel %vm777, 0.0, %v3668
        %v3670 = vrot.slane %v3655, 4
        %v3671 = vsel %vm777, 0.0, %v3670
        %v3672 = vrot.slane %v3663, 4
        %v3673 = vsel %vm777, 0.0, %v3672
        %v3674 = vrot.slane %v3667, 4
        %v3675 = vsel %vm777, 0.0, %v3674
        %v3676 = vsel %vm777, %v3614, %v3595
        %v3678 = vunpack.c.l.s4 1983009808
        %v3679 = vunpack.c.0.s8 %v3678
        %v3680 = vperm.slane %v3676, %v3679
        %v3681 = vrot.slane %v3615, 4
        %v3682 = vsel %vm777, %v3681, %v3613
        %v3684 = vunpack.c.l.s4 1983009808
        %v3685 = vunpack.c.0.s8 %v3684
        %v3686 = vperm.slane %v3682, %v3685
        %v3687 = vsel %vm777, %v3618, %v3607
        %v3689 = vunpack.c.l.s4 1983009808
        %v3690 = vunpack.c.0.s8 %v3689
        %v3691 = vperm.slane %v3687, %v3690
        %v3692 = vrot.slane %v3619, 4
        %v3693 = vsel %vm777, %v3692, %v3617
        %v3695 = vunpack.c.l.s4 1983009808
        %v3696 = vunpack.c.0.s8 %v3695
        %v3697 = vperm.slane %v3693, %v3696
        %v3698 = vrot.slane %v3686, 4
        %v3699 = vsel %vm777, %v3698, %v3680
        %v3700 = vrot.slane %v3680, 4
        %v3701 = vsel %vm777, %v3686, %v3700
        %v3703 = vunpack.c.l.s4 1934713408
        %v3704 = vunpack.c.0.s8 %v3703
        %v3705 = vperm.slane %v3699, %v3704
        %v3707 = vunpack.c.l.s4 1934713408
        %v3708 = vunpack.c.0.s8 %v3707
        %v3709 = vperm.slane %v3701, %v3708
        %v3710 = vrot.slane %v3697, 4
        %v3711 = vsel %vm777, %v3710, %v3691
        %v3712 = vrot.slane %v3691, 4
        %v3713 = vsel %vm777, %v3697, %v3712
        %v3715 = vunpack.c.l.s4 1934713408
        %v3716 = vunpack.c.0.s8 %v3715
        %v3717 = vperm.slane %v3711, %v3716
        %v3719 = vunpack.c.l.s4 1934713408
        %v3720 = vunpack.c.0.s8 %v3719
        %v3721 = vperm.slane %v3713, %v3720
        %v3722 = vrot.slane %v3717, 4
        %v3723 = vsel %vm777, %v3722, %v3705
        %v3724 = vrot.slane %v3705, 4
        %v3725 = vsel %vm777, %v3717, %v3724
        %v3726 = vrot.slane %v3721, 4
        %v3727 = vsel %vm777, %v3726, %v3709
        %v3728 = vrot.slane %v3709, 4
        %v3729 = vsel %vm777, %v3721, %v3728
        %v3730 = vsel %vm777, %v3670, %v3651
        %v3732 = vunpack.c.l.s4 1983009808
        %v3733 = vunpack.c.0.s8 %v3732
        %v3734 = vperm.slane %v3730, %v3733
        %v3735 = vrot.slane %v3671, 4
        %v3736 = vsel %vm777, %v3735, %v3669
        %v3738 = vunpack.c.l.s4 1983009808
        %v3739 = vunpack.c.0.s8 %v3738
        %v3740 = vperm.slane %v3736, %v3739
        %v3741 = vsel %vm777, %v3674, %v3663
        %v3743 = vunpack.c.l.s4 1983009808
        %v3744 = vunpack.c.0.s8 %v3743
        %v3745 = vperm.slane %v3741, %v3744
        %v3746 = vrot.slane %v3675, 4
        %v3747 = vsel %vm777, %v3746, %v3673
        %v3749 = vunpack.c.l.s4 1983009808
        %v3750 = vunpack.c.0.s8 %v3749
        %v3751 = vperm.slane %v3747, %v3750
        %v3752 = vrot.slane %v3740, 4
        %v3753 = vsel %vm777, %v3752, %v3734
        %v3754 = vrot.slane %v3734, 4
        %v3755 = vsel %vm777, %v3740, %v3754
        %v3757 = vunpack.c.l.s4 1934713408
        %v3758 = vunpack.c.0.s8 %v3757
        %v3759 = vperm.slane %v3753, %v3758
        %v3761 = vunpack.c.l.s4 1934713408
        %v3762 = vunpack.c.0.s8 %v3761
        %v3763 = vperm.slane %v3755, %v3762
        %v3764 = vrot.slane %v3751, 4
        %v3765 = vsel %vm777, %v3764, %v3745
        %v3766 = vrot.slane %v3745, 4
        %v3767 = vsel %vm777, %v3751, %v3766
        %v3769 = vunpack.c.l.s4 1934713408
        %v3770 = vunpack.c.0.s8 %v3769
        %v3771 = vperm.slane %v3765, %v3770
        %v3773 = vunpack.c.l.s4 1934713408
        %v3774 = vunpack.c.0.s8 %v3773
        %v3775 = vperm.slane %v3767, %v3774
        %v3776 = vrot.slane %v3771, 4
        %v3777 = vsel %vm777, %v3776, %v3759
        %v3778 = vrot.slane %v3759, 4
        %v3779 = vsel %vm777, %v3771, %v3778
        %v3780 = vrot.slane %v3775, 4
        %v3781 = vsel %vm777, %v3780, %v3763
        %v3782 = vrot.slane %v3763, 4
        %v3783 = vsel %vm777, %v3775, %v3782
        %3786 = vrot.lane.b32.xlu0 %v3725, 8
        %v3787 = vpop.permute.xlu0 %3786
        %3788 = vrot.lane.b32.xlu0 %v3779, 8
        %v3789 = vpop.permute.xlu0 %3788
        %3794 = vrot.lane.b32.xlu0 %v3727, 16
        %v3795 = vpop.permute.xlu0 %3794
        %3796 = vrot.lane.b32.xlu0 %v3781, 16
        %v3797 = vpop.permute.xlu0 %3796
        %3802 = vrot.lane.b32.xlu0 %v3729, 24
        %v3803 = vpop.permute.xlu0 %3802
        %3804 = vrot.lane.b32.xlu0 %v3783, 24
        %v3805 = vpop.permute.xlu0 %3804
        %v3808 = vsel %vm1485, %v3723, %v3787
        %v3809 = vsel %vm1485, %v3777, %v3789
        %v3810 = vsel %vm1646, %v3808, %v3795
        %v3811 = vsel %vm1646, %v3809, %v3797
        %v3812 = vsel %vm2203, %v3810, %v3803
        %v3813 = vsel %vm2203, %v3811, %v3805
        %v3814 = vld [vmem:[%s9] sm:$0xff]
        %v3815 = vld [vmem:[%s9 + $0x8] sm:$0xff]
        %v3816 = vld [vmem:[%s9 + $0x10] sm:$0xff]
        %v3817 = vld [vmem:[%s9 + $0x18] sm:$0xff]
        %v3818 = vld [vmem:[%s10] sm:$0x1]
        %v3820 = vperm.slane %v3818, 0
        %v3823 = vsel %vm726, %v3812, 0
        %v3826 = vsel %vm726, %v3813, 0
        %3828 = vmatpush.msra.mxu0 0.0
        %3829 = vmatpush.msra.mxu0 0.0
        %3830 = vmatpush.msra.mxu0 0.0
        %3831 = vmatpush.msra.mxu0 0.0
        %3832 = vmatpush.msra.mxu0 0.0
        %3833 = vmatpush.msra.mxu0 0.0
        %3834 = vmatpush.msra.mxu0 0.0
        %3835 = vmatpush.msra.mxu0 0.0
        %3836 = vmatpush.msra.mxu0 0.0
        %3837 = vmatpush.msra.mxu0 0.0
        %3838 = vmatpush.msra.mxu0 0.0
        %3839 = vmatpush.msra.mxu0 0.0
        %3840 = vmatpush.msra.mxu0 %v3817
        %3841 = vmatpush.msra.mxu0 %v3816
        %3842 = vmatpush.msra.mxu0 %v3815
        %3843 = vmatpush.msra.mxu0 %v3814
        %3844 = vmatmul.f32.gmra.mxu0 %v3823
        %v3845 = vpop.f32.mrf.mxu0
        %v3846 = vadd.f32 %v3820, %v3845
        %3847 = vmatmul.f32.gmra.mxu0 %v3826
        %v3848 = vpop.f32.mrf.mxu0
        %v3849 = vadd.f32 %v3820, %v3848
        %3850 = vdwg.mxu0
        %v3851 = vadd.f32 %v2306, %v3846
        %v3852 = vadd.f32 %v2307, %v3849
        %v3853 = vld [vmem:[%s13] sm:$0x1]
        %v3854 = vld [vmem:[%s14] sm:$0x1]
        %v3855 = vsel %vm726, %v3851, 0.0
        %3856 = vadd.xlane.f32.xlu0 %v3855
        %v3857 = vpop.xlane.xlu0 %3856
        %v3858 = vsel %vm726, %v3852, 0.0
        %3859 = vadd.xlane.f32.xlu0 %v3858
        %v3860 = vpop.xlane.xlu0 %3859
        %v3861 = vmul.f32 %v3857, %v2259
        %v3862 = vmul.f32 %v3860, %v2259
        %v3863 = vsub.f32 %v3851, %v3861
        %v3864 = vsub.f32 %v3852, %v3862
        %v3865 = vmul.f32 %v3863, %v3863
        %v3866 = vmul.f32 %v3864, %v3864
        %v3867 = vsel %vm726, %v3865, 0.0
        %3868 = vadd.xlane.f32.xlu0 %v3867
        %v3869 = vpop.xlane.xlu0 %3868
        %v3870 = vsel %vm726, %v3866, 0.0
        %3871 = vadd.xlane.f32.xlu0 %v3870
        %v3872 = vpop.xlane.xlu0 %3871
        %v3873 = vmul.f32 %v3869, %v2259
        %v3874 = vmul.f32 %v3872, %v2259
        %v3875 = vadd.f32 %v3873, 1e-05
        %v3876 = vadd.f32 %v3874, 1e-05
        %v3877 = vrsqrt.pop %v3875
        %v3878 = vmul.f32 %v3877, %v3875
        %v3879 = vmul.f32 %v3878, %v3877
        %v3880 = vmul.f32 0.5, %v3879
        %v3881 = vsub.f32 1.5, %v3880
        %v3882 = vmul.f32 %v3877, %v3881
        %vm3883 = vweird.f32 %v3875
        %vm3884 = vweird.f32 %v3877
        %vm3885 = vmor %vm3883, %vm3884
        %v3886 = vsel %vm3885, %v3877, %v3882
        %v3887 = vrsqrt.pop %v3876
        %v3888 = vmul.f32 %v3887, %v3876
        %v3889 = vmul.f32 %v3888, %v3887
        %v3890 = vmul.f32 0.5, %v3889
        %v3891 = vsub.f32 1.5, %v3890
        %v3892 = vmul.f32 %v3887, %v3891
        %vm3893 = vweird.f32 %v3876
        %vm3894 = vweird.f32 %v3887
        %vm3895 = vmor %vm3893, %vm3894
        %v3896 = vsel %vm3895, %v3887, %v3892
        %v3897 = vmul.f32 %v3863, %v3886
        %v3898 = vmul.f32 %v3864, %v3896
        %v3900 = vperm.slane %v3853, 0
        %v3902 = vmul.f32 %v3897, %v3900
        %v3903 = vmul.f32 %v3898, %v3900
        %v3905 = vperm.slane %v3854, 0
        %v3907 = vadd.f32 %v3902, %v3905
        %v3908 = vadd.f32 %v3903, %v3905
        %v3909 = vld [vmem:[%s17] sm:$0xff]
        %v3910 = vld [vmem:[%s17 + $0x8] sm:$0xff]
        %v3911 = vld [vmem:[%s17 + $0x10] sm:$0xff]
        %v3912 = vld [vmem:[%s17 + $0x18] sm:$0xff]
        %v3913 = vld [vmem:[%s17 + $0x80] sm:$0xff]
        %v3914 = vld [vmem:[%s17 + $0x88] sm:$0xff]
        %v3915 = vld [vmem:[%s17 + $0x90] sm:$0xff]
        %v3916 = vld [vmem:[%s17 + $0x98] sm:$0xff]
        %v3917 = vld [vmem:[%s17 + $0x100] sm:$0xff]
        %v3918 = vld [vmem:[%s17 + $0x108] sm:$0xff]
        %v3919 = vld [vmem:[%s17 + $0x110] sm:$0xff]
        %v3920 = vld [vmem:[%s17 + $0x118] sm:$0xff]
        %v3921 = vld [vmem:[%s17 + $0x180] sm:$0xff]
        %v3922 = vld [vmem:[%s17 + $0x188] sm:$0xff]
        %v3923 = vld [vmem:[%s17 + $0x190] sm:$0xff]
        %v3924 = vld [vmem:[%s17 + $0x198] sm:$0xff]
        %v3925 = vld [vmem:[%s18] sm:$0xf]
        %v3927 = vperm.slane %v3925, 0
        %v3928 = vperm.slane %v3925, 1
        %v3929 = vperm.slane %v3925, 2
        %v3930 = vperm.slane %v3925, 3
        %v3936 = vsel %vm726, %v3907, 0
        %v3939 = vsel %vm726, %v3908, 0
        %3941 = vmatpush.msra.mxu0 0.0
        %3942 = vmatpush.msra.mxu0 0.0
        %3943 = vmatpush.msra.mxu0 0.0
        %3944 = vmatpush.msra.mxu0 0.0
        %3945 = vmatpush.msra.mxu0 0.0
        %3946 = vmatpush.msra.mxu0 0.0
        %3947 = vmatpush.msra.mxu0 0.0
        %3948 = vmatpush.msra.mxu0 0.0
        %3949 = vmatpush.msra.mxu0 0.0
        %3950 = vmatpush.msra.mxu0 0.0
        %3951 = vmatpush.msra.mxu0 0.0
        %3952 = vmatpush.msra.mxu0 0.0
        %3953 = vmatpush.msra.mxu0 %v3921
        %3954 = vmatpush.msra.mxu0 %v3917
        %3955 = vmatpush.msra.mxu0 %v3913
        %3956 = vmatpush.msra.mxu0 %v3909
        %3957 = vmatmul.f32.gmra.mxu0 %v3936
        %v3958 = vpop.f32.mrf.mxu0
        %v3959 = vadd.f32 %v3927, %v3958
        %3960 = vmatmul.f32.gmra.mxu0 %v3939
        %v3961 = vpop.f32.mrf.mxu0
        %v3962 = vadd.f32 %v3927, %v3961
        %3963 = vdwg.mxu0
        %3964 = vmatpush.msra.mxu0 0.0
        %3965 = vmatpush.msra.mxu0 0.0
        %3966 = vmatpush.msra.mxu0 0.0
        %3967 = vmatpush.msra.mxu0 0.0
        %3968 = vmatpush.msra.mxu0 0.0
        %3969 = vmatpush.msra.mxu0 0.0
        %3970 = vmatpush.msra.mxu0 0.0
        %3971 = vmatpush.msra.mxu0 0.0
        %3972 = vmatpush.msra.mxu0 0.0
        %3973 = vmatpush.msra.mxu0 0.0
        %3974 = vmatpush.msra.mxu0 0.0
        %3975 = vmatpush.msra.mxu0 0.0
        %3976 = vmatpush.msra.mxu0 %v3922
        %3977 = vmatpush.msra.mxu0 %v3918
        %3978 = vmatpush.msra.mxu0 %v3914
        %3979 = vmatpush.msra.mxu0 %v3910
        %3980 = vmatmul.f32.gmra.mxu0 %v3936
        %v3981 = vpop.f32.mrf.mxu0
        %v3982 = vadd.f32 %v3928, %v3981
        %3983 = vmatmul.f32.gmra.mxu0 %v3939
        %v3984 = vpop.f32.mrf.mxu0
        %v3985 = vadd.f32 %v3928, %v3984
        %3986 = vdwg.mxu0
        %3987 = vmatpush.msra.mxu0 0.0
        %3988 = vmatpush.msra.mxu0 0.0
        %3989 = vmatpush.msra.mxu0 0.0
        %3990 = vmatpush.msra.mxu0 0.0
        %3991 = vmatpush.msra.mxu0 0.0
        %3992 = vmatpush.msra.mxu0 0.0
        %3993 = vmatpush.msra.mxu0 0.0
        %3994 = vmatpush.msra.mxu0 0.0
        %3995 = vmatpush.msra.mxu0 0.0
        %3996 = vmatpush.msra.mxu0 0.0
        %3997 = vmatpush.msra.mxu0 0.0
        %3998 = vmatpush.msra.mxu0 0.0
        %3999 = vmatpush.msra.mxu0 %v3923
        %4000 = vmatpush.msra.mxu0 %v3919
        %4001 = vmatpush.msra.mxu0 %v3915
        %4002 = vmatpush.msra.mxu0 %v3911
        %4003 = vmatmul.f32.gmra.mxu0 %v3936
        %v4004 = vpop.f32.mrf.mxu0
        %v4005 = vadd.f32 %v3929, %v4004
        %4006 = vmatmul.f32.gmra.mxu0 %v3939
        %v4007 = vpop.f32.mrf.mxu0
        %v4008 = vadd.f32 %v3929, %v4007
        %4009 = vdwg.mxu0
        %4010 = vmatpush.msra.mxu0 0.0
        %4011 = vmatpush.msra.mxu0 0.0
        %4012 = vmatpush.msra.mxu0 0.0
        %4013 = vmatpush.msra.mxu0 0.0
        %4014 = vmatpush.msra.mxu0 0.0
        %4015 = vmatpush.msra.mxu0 0.0
        %4016 = vmatpush.msra.mxu0 0.0
        %4017 = vmatpush.msra.mxu0 0.0
        %4018 = vmatpush.msra.mxu0 0.0
        %4019 = vmatpush.msra.mxu0 0.0
        %4020 = vmatpush.msra.mxu0 0.0
        %4021 = vmatpush.msra.mxu0 0.0
        %4022 = vmatpush.msra.mxu0 %v3924
        %4023 = vmatpush.msra.mxu0 %v3920
        %4024 = vmatpush.msra.mxu0 %v3916
        %4025 = vmatpush.msra.mxu0 %v3912
        %4026 = vmatmul.f32.gmra.mxu0 %v3936
        %v4027 = vpop.f32.mrf.mxu0
        %v4028 = vadd.f32 %v3930, %v4027
        %4029 = vmatmul.f32.gmra.mxu0 %v3939
        %v4030 = vpop.f32.mrf.mxu0
        %v4031 = vadd.f32 %v3930, %v4030
        %4032 = vdwg.mxu0
        %v4033 = vmax.f32 %v3959, 0.0
        %v4034 = vmax.f32 %v3982, 0.0
        %v4035 = vmax.f32 %v4005, 0.0
        %v4036 = vmax.f32 %v4028, 0.0
        %v4037 = vmax.f32 %v3962, 0.0
        %v4038 = vmax.f32 %v3985, 0.0
        %v4039 = vmax.f32 %v4008, 0.0
        %v4040 = vmax.f32 %v4031, 0.0
        %v4041 = vld [vmem:[%s19] sm:$0xff]
        %v4042 = vld [vmem:[%s19 + $0x8] sm:$0xff]
        %v4043 = vld [vmem:[%s19 + $0x10] sm:$0xff]
        %v4044 = vld [vmem:[%s19 + $0x18] sm:$0xff]
        %v4045 = vld [vmem:[%s19 + $0x20] sm:$0xff]
        %v4046 = vld [vmem:[%s19 + $0x28] sm:$0xff]
        %v4047 = vld [vmem:[%s19 + $0x30] sm:$0xff]
        %v4048 = vld [vmem:[%s19 + $0x38] sm:$0xff]
        %v4049 = vld [vmem:[%s19 + $0x40] sm:$0xff]
        %v4050 = vld [vmem:[%s19 + $0x48] sm:$0xff]
        %v4051 = vld [vmem:[%s19 + $0x50] sm:$0xff]
        %v4052 = vld [vmem:[%s19 + $0x58] sm:$0xff]
        %v4053 = vld [vmem:[%s19 + $0x60] sm:$0xff]
        %v4054 = vld [vmem:[%s19 + $0x68] sm:$0xff]
        %v4055 = vld [vmem:[%s19 + $0x70] sm:$0xff]
        %v4056 = vld [vmem:[%s19 + $0x78] sm:$0xff]
        %v4057 = vld [vmem:[%s19 + $0x80] sm:$0xff]
        %v4058 = vld [vmem:[%s19 + $0x88] sm:$0xff]
        %v4059 = vld [vmem:[%s19 + $0x90] sm:$0xff]
        %v4060 = vld [vmem:[%s19 + $0x98] sm:$0xff]
        %v4061 = vld [vmem:[%s19 + $0xa0] sm:$0xff]
        %v4062 = vld [vmem:[%s19 + $0xa8] sm:$0xff]
        %v4063 = vld [vmem:[%s19 + $0xb0] sm:$0xff]
        %v4064 = vld [vmem:[%s19 + $0xb8] sm:$0xff]
        %v4065 = vld [vmem:[%s19 + $0xc0] sm:$0xff]
        %v4066 = vld [vmem:[%s19 + $0xc8] sm:$0xff]
        %v4067 = vld [vmem:[%s19 + $0xd0] sm:$0xff]
        %v4068 = vld [vmem:[%s19 + $0xd8] sm:$0xff]
        %v4069 = vld [vmem:[%s19 + $0xe0] sm:$0xff]
        %v4070 = vld [vmem:[%s19 + $0xe8] sm:$0xff]
        %v4071 = vld [vmem:[%s19 + $0xf0] sm:$0xff]
        %v4072 = vld [vmem:[%s19 + $0xf8] sm:$0xff]
        %v4073 = vld [vmem:[%s19 + $0x100] sm:$0xff]
        %v4074 = vld [vmem:[%s19 + $0x108] sm:$0xff]
        %v4075 = vld [vmem:[%s19 + $0x110] sm:$0xff]
        %v4076 = vld [vmem:[%s19 + $0x118] sm:$0xff]
        %v4077 = vld [vmem:[%s19 + $0x120] sm:$0xff]
        %v4078 = vld [vmem:[%s19 + $0x128] sm:$0xff]
        %v4079 = vld [vmem:[%s19 + $0x130] sm:$0xff]
        %v4080 = vld [vmem:[%s19 + $0x138] sm:$0xff]
        %v4081 = vld [vmem:[%s19 + $0x140] sm:$0xff]
        %v4082 = vld [vmem:[%s19 + $0x148] sm:$0xff]
        %v4083 = vld [vmem:[%s19 + $0x150] sm:$0xff]
        %v4084 = vld [vmem:[%s19 + $0x158] sm:$0xff]
        %v4085 = vld [vmem:[%s19 + $0x160] sm:$0xff]
        %v4086 = vld [vmem:[%s19 + $0x168] sm:$0xff]
        %v4087 = vld [vmem:[%s19 + $0x170] sm:$0xff]
        %v4088 = vld [vmem:[%s19 + $0x178] sm:$0xff]
        %v4089 = vld [vmem:[%s19 + $0x180] sm:$0xff]
        %v4090 = vld [vmem:[%s19 + $0x188] sm:$0xff]
        %v4091 = vld [vmem:[%s19 + $0x190] sm:$0xff]
        %v4092 = vld [vmem:[%s19 + $0x198] sm:$0xff]
        %v4093 = vld [vmem:[%s19 + $0x1a0] sm:$0xff]
        %v4094 = vld [vmem:[%s19 + $0x1a8] sm:$0xff]
        %v4095 = vld [vmem:[%s19 + $0x1b0] sm:$0xff]
        %v4096 = vld [vmem:[%s19 + $0x1b8] sm:$0xff]
        %v4097 = vld [vmem:[%s19 + $0x1c0] sm:$0xff]
        %v4098 = vld [vmem:[%s19 + $0x1c8] sm:$0xff]
        %v4099 = vld [vmem:[%s19 + $0x1d0] sm:$0xff]
        %v4100 = vld [vmem:[%s19 + $0x1d8] sm:$0xff]
        %v4101 = vld [vmem:[%s19 + $0x1e0] sm:$0xff]
        %v4102 = vld [vmem:[%s19 + $0x1e8] sm:$0xff]
        %v4103 = vld [vmem:[%s19 + $0x1f0] sm:$0xff]
        %v4104 = vld [vmem:[%s19 + $0x1f8] sm:$0xff]
        %v4105 = vld [vmem:[%s17 + $0x20] sm:$0xff]
        %v4106 = vld [vmem:[%s17 + $0x28] sm:$0xff]
        %v4107 = vld [vmem:[%s17 + $0x30] sm:$0xff]
        %v4108 = vld [vmem:[%s17 + $0x38] sm:$0xff]
        %v4109 = vld [vmem:[%s17 + $0xa0] sm:$0xff]
        %v4110 = vld [vmem:[%s17 + $0xa8] sm:$0xff]
        %v4111 = vld [vmem:[%s17 + $0xb0] sm:$0xff]
        %v4112 = vld [vmem:[%s17 + $0xb8] sm:$0xff]
        %v4113 = vld [vmem:[%s17 + $0x120] sm:$0xff]
        %v4114 = vld [vmem:[%s17 + $0x128] sm:$0xff]
        %v4115 = vld [vmem:[%s17 + $0x130] sm:$0xff]
        %v4116 = vld [vmem:[%s17 + $0x138] sm:$0xff]
        %v4117 = vld [vmem:[%s17 + $0x1a0] sm:$0xff]
        %v4118 = vld [vmem:[%s17 + $0x1a8] sm:$0xff]
        %v4119 = vld [vmem:[%s17 + $0x1b0] sm:$0xff]
        %v4120 = vld [vmem:[%s17 + $0x1b8] sm:$0xff]
        %v4121 = vld [vmem:[%s18 + $0x4] sm:$0xf]
        %v4123 = vperm.slane %v4121, 0
        %v4124 = vperm.slane %v4121, 1
        %v4125 = vperm.slane %v4121, 2
        %v4126 = vperm.slane %v4121, 3
        %4131 = vmatpush.msra.mxu0 0.0
        %4132 = vmatpush.msra.mxu0 0.0
        %4133 = vmatpush.msra.mxu0 0.0
        %4134 = vmatpush.msra.mxu0 0.0
        %4135 = vmatpush.msra.mxu0 0.0
        %4136 = vmatpush.msra.mxu0 0.0
        %4137 = vmatpush.msra.mxu0 0.0
        %4138 = vmatpush.msra.mxu0 0.0
        %4139 = vmatpush.msra.mxu0 0.0
        %4140 = vmatpush.msra.mxu0 0.0
        %4141 = vmatpush.msra.mxu0 0.0
        %4142 = vmatpush.msra.mxu0 0.0
        %4143 = vmatpush.msra.mxu0 %v4117
        %4144 = vmatpush.msra.mxu0 %v4113
        %4145 = vmatpush.msra.mxu0 %v4109
        %4146 = vmatpush.msra.mxu0 %v4105
        %4147 = vmatmul.f32.gmra.mxu0 %v3936
        %v4148 = vpop.f32.mrf.mxu0
        %v4149 = vadd.f32 %v4123, %v4148
        %4150 = vmatmul.f32.gmra.mxu0 %v3939
        %v4151 = vpop.f32.mrf.mxu0
        %v4152 = vadd.f32 %v4123, %v4151
        %4153 = vdwg.mxu0
        %4154 = vmatpush.msra.mxu0 0.0
        %4155 = vmatpush.msra.mxu0 0.0
        %4156 = vmatpush.msra.mxu0 0.0
        %4157 = vmatpush.msra.mxu0 0.0
        %4158 = vmatpush.msra.mxu0 0.0
        %4159 = vmatpush.msra.mxu0 0.0
        %4160 = vmatpush.msra.mxu0 0.0
        %4161 = vmatpush.msra.mxu0 0.0
        %4162 = vmatpush.msra.mxu0 0.0
        %4163 = vmatpush.msra.mxu0 0.0
        %4164 = vmatpush.msra.mxu0 0.0
        %4165 = vmatpush.msra.mxu0 0.0
        %4166 = vmatpush.msra.mxu0 %v4118
        %4167 = vmatpush.msra.mxu0 %v4114
        %4168 = vmatpush.msra.mxu0 %v4110
        %4169 = vmatpush.msra.mxu0 %v4106
        %4170 = vmatmul.f32.gmra.mxu0 %v3936
        %v4171 = vpop.f32.mrf.mxu0
        %v4172 = vadd.f32 %v4124, %v4171
        %4173 = vmatmul.f32.gmra.mxu0 %v3939
        %v4174 = vpop.f32.mrf.mxu0
        %v4175 = vadd.f32 %v4124, %v4174
        %4176 = vdwg.mxu0
        %4177 = vmatpush.msra.mxu0 0.0
        %4178 = vmatpush.msra.mxu0 0.0
        %4179 = vmatpush.msra.mxu0 0.0
        %4180 = vmatpush.msra.mxu0 0.0
        %4181 = vmatpush.msra.mxu0 0.0
        %4182 = vmatpush.msra.mxu0 0.0
        %4183 = vmatpush.msra.mxu0 0.0
        %4184 = vmatpush.msra.mxu0 0.0
        %4185 = vmatpush.msra.mxu0 0.0
        %4186 = vmatpush.msra.mxu0 0.0
        %4187 = vmatpush.msra.mxu0 0.0
        %4188 = vmatpush.msra.mxu0 0.0
        %4189 = vmatpush.msra.mxu0 %v4119
        %4190 = vmatpush.msra.mxu0 %v4115
        %4191 = vmatpush.msra.mxu0 %v4111
        %4192 = vmatpush.msra.mxu0 %v4107
        %4193 = vmatmul.f32.gmra.mxu0 %v3936
        %v4194 = vpop.f32.mrf.mxu0
        %v4195 = vadd.f32 %v4125, %v4194
        %4196 = vmatmul.f32.gmra.mxu0 %v3939
        %v4197 = vpop.f32.mrf.mxu0
        %v4198 = vadd.f32 %v4125, %v4197
        %4199 = vdwg.mxu0
        %4200 = vmatpush.msra.mxu0 0.0
        %4201 = vmatpush.msra.mxu0 0.0
        %4202 = vmatpush.msra.mxu0 0.0
        %4203 = vmatpush.msra.mxu0 0.0
        %4204 = vmatpush.msra.mxu0 0.0
        %4205 = vmatpush.msra.mxu0 0.0
        %4206 = vmatpush.msra.mxu0 0.0
        %4207 = vmatpush.msra.mxu0 0.0
        %4208 = vmatpush.msra.mxu0 0.0
        %4209 = vmatpush.msra.mxu0 0.0
        %4210 = vmatpush.msra.mxu0 0.0
        %4211 = vmatpush.msra.mxu0 0.0
        %4212 = vmatpush.msra.mxu0 %v4120
        %4213 = vmatpush.msra.mxu0 %v4116
        %4214 = vmatpush.msra.mxu0 %v4112
        %4215 = vmatpush.msra.mxu0 %v4108
        %4216 = vmatmul.f32.gmra.mxu0 %v3936
        %v4217 = vpop.f32.mrf.mxu0
        %v4218 = vadd.f32 %v4126, %v4217
        %4219 = vmatmul.f32.gmra.mxu0 %v3939
        %v4220 = vpop.f32.mrf.mxu0
        %v4221 = vadd.f32 %v4126, %v4220
        %4222 = vdwg.mxu0
        %v4223 = vmax.f32 %v4149, 0.0
        %v4224 = vmax.f32 %v4172, 0.0
        %v4225 = vmax.f32 %v4195, 0.0
        %v4226 = vmax.f32 %v4218, 0.0
        %v4227 = vmax.f32 %v4152, 0.0
        %v4228 = vmax.f32 %v4175, 0.0
        %v4229 = vmax.f32 %v4198, 0.0
        %v4230 = vmax.f32 %v4221, 0.0
        %v4231 = vld [vmem:[%s19 + $0x200] sm:$0xff]
        %v4232 = vld [vmem:[%s19 + $0x208] sm:$0xff]
        %v4233 = vld [vmem:[%s19 + $0x210] sm:$0xff]
        %v4234 = vld [vmem:[%s19 + $0x218] sm:$0xff]
        %v4235 = vld [vmem:[%s19 + $0x220] sm:$0xff]
        %v4236 = vld [vmem:[%s19 + $0x228] sm:$0xff]
        %v4237 = vld [vmem:[%s19 + $0x230] sm:$0xff]
        %v4238 = vld [vmem:[%s19 + $0x238] sm:$0xff]
        %v4239 = vld [vmem:[%s19 + $0x240] sm:$0xff]
        %v4240 = vld [vmem:[%s19 + $0x248] sm:$0xff]
        %v4241 = vld [vmem:[%s19 + $0x250] sm:$0xff]
        %v4242 = vld [vmem:[%s19 + $0x258] sm:$0xff]
        %v4243 = vld [vmem:[%s19 + $0x260] sm:$0xff]
        %v4244 = vld [vmem:[%s19 + $0x268] sm:$0xff]
        %v4245 = vld [vmem:[%s19 + $0x270] sm:$0xff]
        %v4246 = vld [vmem:[%s19 + $0x278] sm:$0xff]
        %v4247 = vld [vmem:[%s19 + $0x280] sm:$0xff]
        %v4248 = vld [vmem:[%s19 + $0x288] sm:$0xff]
        %v4249 = vld [vmem:[%s19 + $0x290] sm:$0xff]
        %v4250 = vld [vmem:[%s19 + $0x298] sm:$0xff]
        %v4251 = vld [vmem:[%s19 + $0x2a0] sm:$0xff]
        %v4252 = vld [vmem:[%s19 + $0x2a8] sm:$0xff]
        %v4253 = vld [vmem:[%s19 + $0x2b0] sm:$0xff]
        %v4254 = vld [vmem:[%s19 + $0x2b8] sm:$0xff]
        %v4255 = vld [vmem:[%s19 + $0x2c0] sm:$0xff]
        %v4256 = vld [vmem:[%s19 + $0x2c8] sm:$0xff]
        %v4257 = vld [vmem:[%s19 + $0x2d0] sm:$0xff]
        %v4258 = vld [vmem:[%s19 + $0x2d8] sm:$0xff]
        %v4259 = vld [vmem:[%s19 + $0x2e0] sm:$0xff]
        %v4260 = vld [vmem:[%s19 + $0x2e8] sm:$0xff]
        %v4261 = vld [vmem:[%s19 + $0x2f0] sm:$0xff]
        %v4262 = vld [vmem:[%s19 + $0x2f8] sm:$0xff]
        %v4263 = vld [vmem:[%s19 + $0x300] sm:$0xff]
        %v4264 = vld [vmem:[%s19 + $0x308] sm:$0xff]
        %v4265 = vld [vmem:[%s19 + $0x310] sm:$0xff]
        %v4266 = vld [vmem:[%s19 + $0x318] sm:$0xff]
        %v4267 = vld [vmem:[%s19 + $0x320] sm:$0xff]
        %v4268 = vld [vmem:[%s19 + $0x328] sm:$0xff]
        %v4269 = vld [vmem:[%s19 + $0x330] sm:$0xff]
        %v4270 = vld [vmem:[%s19 + $0x338] sm:$0xff]
        %v4271 = vld [vmem:[%s19 + $0x340] sm:$0xff]
        %v4272 = vld [vmem:[%s19 + $0x348] sm:$0xff]
        %v4273 = vld [vmem:[%s19 + $0x350] sm:$0xff]
        %v4274 = vld [vmem:[%s19 + $0x358] sm:$0xff]
        %v4275 = vld [vmem:[%s19 + $0x360] sm:$0xff]
        %v4276 = vld [vmem:[%s19 + $0x368] sm:$0xff]
        %v4277 = vld [vmem:[%s19 + $0x370] sm:$0xff]
        %v4278 = vld [vmem:[%s19 + $0x378] sm:$0xff]
        %v4279 = vld [vmem:[%s19 + $0x380] sm:$0xff]
        %v4280 = vld [vmem:[%s19 + $0x388] sm:$0xff]
        %v4281 = vld [vmem:[%s19 + $0x390] sm:$0xff]
        %v4282 = vld [vmem:[%s19 + $0x398] sm:$0xff]
        %v4283 = vld [vmem:[%s19 + $0x3a0] sm:$0xff]
        %v4284 = vld [vmem:[%s19 + $0x3a8] sm:$0xff]
        %v4285 = vld [vmem:[%s19 + $0x3b0] sm:$0xff]
        %v4286 = vld [vmem:[%s19 + $0x3b8] sm:$0xff]
        %v4287 = vld [vmem:[%s19 + $0x3c0] sm:$0xff]
        %v4288 = vld [vmem:[%s19 + $0x3c8] sm:$0xff]
        %v4289 = vld [vmem:[%s19 + $0x3d0] sm:$0xff]
        %v4290 = vld [vmem:[%s19 + $0x3d8] sm:$0xff]
        %v4291 = vld [vmem:[%s19 + $0x3e0] sm:$0xff]
        %v4292 = vld [vmem:[%s19 + $0x3e8] sm:$0xff]
        %v4293 = vld [vmem:[%s19 + $0x3f0] sm:$0xff]
        %v4294 = vld [vmem:[%s19 + $0x3f8] sm:$0xff]
        %4295 = vmatpush.msra.mxu0 %v4246
        %4296 = vmatpush.msra.mxu0 %v4245
        %4297 = vmatpush.msra.mxu0 %v4244
        %4298 = vmatpush.msra.mxu0 %v4243
        %4299 = vmatpush.msra.mxu0 %v4242
        %4300 = vmatpush.msra.mxu0 %v4241
        %4301 = vmatpush.msra.mxu0 %v4240
        %4302 = vmatpush.msra.mxu0 %v4239
        %4303 = vmatpush.msra.mxu0 %v4238
        %4304 = vmatpush.msra.mxu0 %v4237
        %4305 = vmatpush.msra.mxu0 %v4236
        %4306 = vmatpush.msra.mxu0 %v4235
        %4307 = vmatpush.msra.mxu0 %v4234
        %4308 = vmatpush.msra.mxu0 %v4233
        %4309 = vmatpush.msra.mxu0 %v4232
        %4310 = vmatpush.msra.mxu0 %v4231
        %4311 = vmatmul.f32.gmra.mxu0 %v4223
        %v4312 = vpop.f32.mrf.mxu0
        %v4313 = vadd.f32 0.0, %v4312
        %4314 = vmatmul.f32.gmra.mxu0 %v4227
        %v4315 = vpop.f32.mrf.mxu0
        %v4316 = vadd.f32 0.0, %v4315
        %4317 = vdwg.mxu0
        %4318 = vmatpush.msra.mxu0 %v4262
        %4319 = vmatpush.msra.mxu0 %v4261
        %4320 = vmatpush.msra.mxu0 %v4260
        %4321 = vmatpush.msra.mxu0 %v4259
        %4322 = vmatpush.msra.mxu0 %v4258
        %4323 = vmatpush.msra.mxu0 %v4257
        %4324 = vmatpush.msra.mxu0 %v4256
        %4325 = vmatpush.msra.mxu0 %v4255
        %4326 = vmatpush.msra.mxu0 %v4254
        %4327 = vmatpush.msra.mxu0 %v4253
        %4328 = vmatpush.msra.mxu0 %v4252
        %4329 = vmatpush.msra.mxu0 %v4251
        %4330 = vmatpush.msra.mxu0 %v4250
        %4331 = vmatpush.msra.mxu0 %v4249
        %4332 = vmatpush.msra.mxu0 %v4248
        %4333 = vmatpush.msra.mxu0 %v4247
        %4334 = vmatmul.f32.gmra.mxu0 %v4224
        %v4335 = vpop.f32.mrf.mxu0
        %v4336 = vadd.f32 %v4313, %v4335
        %4337 = vmatmul.f32.gmra.mxu0 %v4228
        %v4338 = vpop.f32.mrf.mxu0
        %v4339 = vadd.f32 %v4316, %v4338
        %4340 = vdwg.mxu0
        %4341 = vmatpush.msra.mxu0 %v4278
        %4342 = vmatpush.msra.mxu0 %v4277
        %4343 = vmatpush.msra.mxu0 %v4276
        %4344 = vmatpush.msra.mxu0 %v4275
        %4345 = vmatpush.msra.mxu0 %v4274
        %4346 = vmatpush.msra.mxu0 %v4273
        %4347 = vmatpush.msra.mxu0 %v4272
        %4348 = vmatpush.msra.mxu0 %v4271
        %4349 = vmatpush.msra.mxu0 %v4270
        %4350 = vmatpush.msra.mxu0 %v4269
        %4351 = vmatpush.msra.mxu0 %v4268
        %4352 = vmatpush.msra.mxu0 %v4267
        %4353 = vmatpush.msra.mxu0 %v4266
        %4354 = vmatpush.msra.mxu0 %v4265
        %4355 = vmatpush.msra.mxu0 %v4264
        %4356 = vmatpush.msra.mxu0 %v4263
        %4357 = vmatmul.f32.gmra.mxu0 %v4225
        %v4358 = vpop.f32.mrf.mxu0
        %v4359 = vadd.f32 %v4336, %v4358
        %4360 = vmatmul.f32.gmra.mxu0 %v4229
        %v4361 = vpop.f32.mrf.mxu0
        %v4362 = vadd.f32 %v4339, %v4361
        %4363 = vdwg.mxu0
        %4364 = vmatpush.msra.mxu0 %v4294
        %4365 = vmatpush.msra.mxu0 %v4293
        %4366 = vmatpush.msra.mxu0 %v4292
        %4367 = vmatpush.msra.mxu0 %v4291
        %4368 = vmatpush.msra.mxu0 %v4290
        %4369 = vmatpush.msra.mxu0 %v4289
        %4370 = vmatpush.msra.mxu0 %v4288
        %4371 = vmatpush.msra.mxu0 %v4287
        %4372 = vmatpush.msra.mxu0 %v4286
        %4373 = vmatpush.msra.mxu0 %v4285
        %4374 = vmatpush.msra.mxu0 %v4284
        %4375 = vmatpush.msra.mxu0 %v4283
        %4376 = vmatpush.msra.mxu0 %v4282
        %4377 = vmatpush.msra.mxu0 %v4281
        %4378 = vmatpush.msra.mxu0 %v4280
        %4379 = vmatpush.msra.mxu0 %v4279
        %4380 = vmatmul.f32.gmra.mxu0 %v4226
        %v4381 = vpop.f32.mrf.mxu0
        %v4382 = vadd.f32 %v4359, %v4381
        %4383 = vmatmul.f32.gmra.mxu0 %v4230
        %v4384 = vpop.f32.mrf.mxu0
        %v4385 = vadd.f32 %v4362, %v4384
        %4386 = vdwg.mxu0
        %4387 = vmatpush.msra.mxu0 %v4056
        %4388 = vmatpush.msra.mxu0 %v4055
        %4389 = vmatpush.msra.mxu0 %v4054
        %4390 = vmatpush.msra.mxu0 %v4053
        %4391 = vmatpush.msra.mxu0 %v4052
        %4392 = vmatpush.msra.mxu0 %v4051
        %4393 = vmatpush.msra.mxu0 %v4050
        %4394 = vmatpush.msra.mxu0 %v4049
        %4395 = vmatpush.msra.mxu0 %v4048
        %4396 = vmatpush.msra.mxu0 %v4047
        %4397 = vmatpush.msra.mxu0 %v4046
        %4398 = vmatpush.msra.mxu0 %v4045
        %4399 = vmatpush.msra.mxu0 %v4044
        %4400 = vmatpush.msra.mxu0 %v4043
        %4401 = vmatpush.msra.mxu0 %v4042
        %4402 = vmatpush.msra.mxu0 %v4041
        %4403 = vmatmul.f32.gmra.mxu0 %v4033
        %v4404 = vpop.f32.mrf.mxu0
        %v4405 = vadd.f32 %v4382, %v4404
        %4406 = vmatmul.f32.gmra.mxu0 %v4037
        %v4407 = vpop.f32.mrf.mxu0
        %v4408 = vadd.f32 %v4385, %v4407
        %4409 = vdwg.mxu0
        %4410 = vmatpush.msra.mxu0 %v4072
        %4411 = vmatpush.msra.mxu0 %v4071
        %4412 = vmatpush.msra.mxu0 %v4070
        %4413 = vmatpush.msra.mxu0 %v4069
        %4414 = vmatpush.msra.mxu0 %v4068
        %4415 = vmatpush.msra.mxu0 %v4067
        %4416 = vmatpush.msra.mxu0 %v4066
        %4417 = vmatpush.msra.mxu0 %v4065
        %4418 = vmatpush.msra.mxu0 %v4064
        %4419 = vmatpush.msra.mxu0 %v4063
        %4420 = vmatpush.msra.mxu0 %v4062
        %4421 = vmatpush.msra.mxu0 %v4061
        %4422 = vmatpush.msra.mxu0 %v4060
        %4423 = vmatpush.msra.mxu0 %v4059
        %4424 = vmatpush.msra.mxu0 %v4058
        %4425 = vmatpush.msra.mxu0 %v4057
        %4426 = vmatmul.f32.gmra.mxu0 %v4034
        %v4427 = vpop.f32.mrf.mxu0
        %v4428 = vadd.f32 %v4405, %v4427
        %4429 = vmatmul.f32.gmra.mxu0 %v4038
        %v4430 = vpop.f32.mrf.mxu0
        %v4431 = vadd.f32 %v4408, %v4430
        %4432 = vdwg.mxu0
        %4433 = vmatpush.msra.mxu0 %v4088
        %4434 = vmatpush.msra.mxu0 %v4087
        %4435 = vmatpush.msra.mxu0 %v4086
        %4436 = vmatpush.msra.mxu0 %v4085
        %4437 = vmatpush.msra.mxu0 %v4084
        %4438 = vmatpush.msra.mxu0 %v4083
        %4439 = vmatpush.msra.mxu0 %v4082
        %4440 = vmatpush.msra.mxu0 %v4081
        %4441 = vmatpush.msra.mxu0 %v4080
        %4442 = vmatpush.msra.mxu0 %v4079
        %4443 = vmatpush.msra.mxu0 %v4078
        %4444 = vmatpush.msra.mxu0 %v4077
        %4445 = vmatpush.msra.mxu0 %v4076
        %4446 = vmatpush.msra.mxu0 %v4075
        %4447 = vmatpush.msra.mxu0 %v4074
        %4448 = vmatpush.msra.mxu0 %v4073
        %4449 = vmatmul.f32.gmra.mxu0 %v4035
        %v4450 = vpop.f32.mrf.mxu0
        %v4451 = vadd.f32 %v4428, %v4450
        %4452 = vmatmul.f32.gmra.mxu0 %v4039
        %v4453 = vpop.f32.mrf.mxu0
        %v4454 = vadd.f32 %v4431, %v4453
        %4455 = vdwg.mxu0
        %4456 = vmatpush.msra.mxu0 %v4104
        %4457 = vmatpush.msra.mxu0 %v4103
        %4458 = vmatpush.msra.mxu0 %v4102
        %4459 = vmatpush.msra.mxu0 %v4101
        %4460 = vmatpush.msra.mxu0 %v4100
        %4461 = vmatpush.msra.mxu0 %v4099
        %4462 = vmatpush.msra.mxu0 %v4098
        %4463 = vmatpush.msra.mxu0 %v4097
        %4464 = vmatpush.msra.mxu0 %v4096
        %4465 = vmatpush.msra.mxu0 %v4095
        %4466 = vmatpush.msra.mxu0 %v4094
        %4467 = vmatpush.msra.mxu0 %v4093
        %4468 = vmatpush.msra.mxu0 %v4092
        %4469 = vmatpush.msra.mxu0 %v4091
        %4470 = vmatpush.msra.mxu0 %v4090
        %4471 = vmatpush.msra.mxu0 %v4089
        %4472 = vmatmul.f32.gmra.mxu0 %v4036
        %v4473 = vpop.f32.mrf.mxu0
        %v4474 = vadd.f32 %v4451, %v4473
        %4475 = vmatmul.f32.gmra.mxu0 %v4040
        %v4476 = vpop.f32.mrf.mxu0
        %v4477 = vadd.f32 %v4454, %v4476
        %4478 = vdwg.mxu0
        %v4479 = vld [vmem:[%s17 + $0x40] sm:$0xff]
        %v4480 = vld [vmem:[%s17 + $0x48] sm:$0xff]
        %v4481 = vld [vmem:[%s17 + $0x50] sm:$0xff]
        %v4482 = vld [vmem:[%s17 + $0x58] sm:$0xff]
        %v4483 = vld [vmem:[%s17 + $0xc0] sm:$0xff]
        %v4484 = vld [vmem:[%s17 + $0xc8] sm:$0xff]
        %v4485 = vld [vmem:[%s17 + $0xd0] sm:$0xff]
        %v4486 = vld [vmem:[%s17 + $0xd8] sm:$0xff]
        %v4487 = vld [vmem:[%s17 + $0x140] sm:$0xff]
        %v4488 = vld [vmem:[%s17 + $0x148] sm:$0xff]
        %v4489 = vld [vmem:[%s17 + $0x150] sm:$0xff]
        %v4490 = vld [vmem:[%s17 + $0x158] sm:$0xff]
        %v4491 = vld [vmem:[%s17 + $0x1c0] sm:$0xff]
        %v4492 = vld [vmem:[%s17 + $0x1c8] sm:$0xff]
        %v4493 = vld [vmem:[%s17 + $0x1d0] sm:$0xff]
        %v4494 = vld [vmem:[%s17 + $0x1d8] sm:$0xff]
        %v4495 = vld [vmem:[%s18 + $0x8] sm:$0xf]
        %v4497 = vperm.slane %v4495, 0
        %v4498 = vperm.slane %v4495, 1
        %v4499 = vperm.slane %v4495, 2
        %v4500 = vperm.slane %v4495, 3
        %4505 = vmatpush.msra.mxu0 0.0
        %4506 = vmatpush.msra.mxu0 0.0
        %4507 = vmatpush.msra.mxu0 0.0
        %4508 = vmatpush.msra.mxu0 0.0
        %4509 = vmatpush.msra.mxu0 0.0
        %4510 = vmatpush.msra.mxu0 0.0
        %4511 = vmatpush.msra.mxu0 0.0
        %4512 = vmatpush.msra.mxu0 0.0
        %4513 = vmatpush.msra.mxu0 0.0
        %4514 = vmatpush.msra.mxu0 0.0
        %4515 = vmatpush.msra.mxu0 0.0
        %4516 = vmatpush.msra.mxu0 0.0
        %4517 = vmatpush.msra.mxu0 %v4491
        %4518 = vmatpush.msra.mxu0 %v4487
        %4519 = vmatpush.msra.mxu0 %v4483
        %4520 = vmatpush.msra.mxu0 %v4479
        %4521 = vmatmul.f32.gmra.mxu0 %v3936
        %v4522 = vpop.f32.mrf.mxu0
        %v4523 = vadd.f32 %v4497, %v4522
        %4524 = vmatmul.f32.gmra.mxu0 %v3939
        %v4525 = vpop.f32.mrf.mxu0
        %v4526 = vadd.f32 %v4497, %v4525
        %4527 = vdwg.mxu0
        %4528 = vmatpush.msra.mxu0 0.0
        %4529 = vmatpush.msra.mxu0 0.0
        %4530 = vmatpush.msra.mxu0 0.0
        %4531 = vmatpush.msra.mxu0 0.0
        %4532 = vmatpush.msra.mxu0 0.0
        %4533 = vmatpush.msra.mxu0 0.0
        %4534 = vmatpush.msra.mxu0 0.0
        %4535 = vmatpush.msra.mxu0 0.0
        %4536 = vmatpush.msra.mxu0 0.0
        %4537 = vmatpush.msra.mxu0 0.0
        %4538 = vmatpush.msra.mxu0 0.0
        %4539 = vmatpush.msra.mxu0 0.0
        %4540 = vmatpush.msra.mxu0 %v4492
        %4541 = vmatpush.msra.mxu0 %v4488
        %4542 = vmatpush.msra.mxu0 %v4484
        %4543 = vmatpush.msra.mxu0 %v4480
        %4544 = vmatmul.f32.gmra.mxu0 %v3936
        %v4545 = vpop.f32.mrf.mxu0
        %v4546 = vadd.f32 %v4498, %v4545
        %4547 = vmatmul.f32.gmra.mxu0 %v3939
        %v4548 = vpop.f32.mrf.mxu0
        %v4549 = vadd.f32 %v4498, %v4548
        %4550 = vdwg.mxu0
        %4551 = vmatpush.msra.mxu0 0.0
        %4552 = vmatpush.msra.mxu0 0.0
        %4553 = vmatpush.msra.mxu0 0.0
        %4554 = vmatpush.msra.mxu0 0.0
        %4555 = vmatpush.msra.mxu0 0.0
        %4556 = vmatpush.msra.mxu0 0.0
        %4557 = vmatpush.msra.mxu0 0.0
        %4558 = vmatpush.msra.mxu0 0.0
        %4559 = vmatpush.msra.mxu0 0.0
        %4560 = vmatpush.msra.mxu0 0.0
        %4561 = vmatpush.msra.mxu0 0.0
        %4562 = vmatpush.msra.mxu0 0.0
        %4563 = vmatpush.msra.mxu0 %v4493
        %4564 = vmatpush.msra.mxu0 %v4489
        %4565 = vmatpush.msra.mxu0 %v4485
        %4566 = vmatpush.msra.mxu0 %v4481
        %4567 = vmatmul.f32.gmra.mxu0 %v3936
        %v4568 = vpop.f32.mrf.mxu0
        %v4569 = vadd.f32 %v4499, %v4568
        %4570 = vmatmul.f32.gmra.mxu0 %v3939
        %v4571 = vpop.f32.mrf.mxu0
        %v4572 = vadd.f32 %v4499, %v4571
        %4573 = vdwg.mxu0
        %4574 = vmatpush.msra.mxu0 0.0
        %4575 = vmatpush.msra.mxu0 0.0
        %4576 = vmatpush.msra.mxu0 0.0
        %4577 = vmatpush.msra.mxu0 0.0
        %4578 = vmatpush.msra.mxu0 0.0
        %4579 = vmatpush.msra.mxu0 0.0
        %4580 = vmatpush.msra.mxu0 0.0
        %4581 = vmatpush.msra.mxu0 0.0
        %4582 = vmatpush.msra.mxu0 0.0
        %4583 = vmatpush.msra.mxu0 0.0
        %4584 = vmatpush.msra.mxu0 0.0
        %4585 = vmatpush.msra.mxu0 0.0
        %4586 = vmatpush.msra.mxu0 %v4494
        %4587 = vmatpush.msra.mxu0 %v4490
        %4588 = vmatpush.msra.mxu0 %v4486
        %4589 = vmatpush.msra.mxu0 %v4482
        %4590 = vmatmul.f32.gmra.mxu0 %v3936
        %v4591 = vpop.f32.mrf.mxu0
        %v4592 = vadd.f32 %v4500, %v4591
        %4593 = vmatmul.f32.gmra.mxu0 %v3939
        %v4594 = vpop.f32.mrf.mxu0
        %v4595 = vadd.f32 %v4500, %v4594
        %4596 = vdwg.mxu0
        %v4597 = vmax.f32 %v4523, 0.0
        %v4598 = vmax.f32 %v4546, 0.0
        %v4599 = vmax.f32 %v4569, 0.0
        %v4600 = vmax.f32 %v4592, 0.0
        %v4601 = vmax.f32 %v4526, 0.0
        %v4602 = vmax.f32 %v4549, 0.0
        %v4603 = vmax.f32 %v4572, 0.0
        %v4604 = vmax.f32 %v4595, 0.0
        %v4605 = vld [vmem:[%s19 + $0x400] sm:$0xff]
        %v4606 = vld [vmem:[%s19 + $0x408] sm:$0xff]
        %v4607 = vld [vmem:[%s19 + $0x410] sm:$0xff]
        %v4608 = vld [vmem:[%s19 + $0x418] sm:$0xff]
        %v4609 = vld [vmem:[%s19 + $0x420] sm:$0xff]
        %v4610 = vld [vmem:[%s19 + $0x428] sm:$0xff]
        %v4611 = vld [vmem:[%s19 + $0x430] sm:$0xff]
        %v4612 = vld [vmem:[%s19 + $0x438] sm:$0xff]
        %v4613 = vld [vmem:[%s19 + $0x440] sm:$0xff]
        %v4614 = vld [vmem:[%s19 + $0x448] sm:$0xff]
        %v4615 = vld [vmem:[%s19 + $0x450] sm:$0xff]
        %v4616 = vld [vmem:[%s19 + $0x458] sm:$0xff]
        %v4617 = vld [vmem:[%s19 + $0x460] sm:$0xff]
        %v4618 = vld [vmem:[%s19 + $0x468] sm:$0xff]
        %v4619 = vld [vmem:[%s19 + $0x470] sm:$0xff]
        %v4620 = vld [vmem:[%s19 + $0x478] sm:$0xff]
        %v4621 = vld [vmem:[%s19 + $0x480] sm:$0xff]
        %v4622 = vld [vmem:[%s19 + $0x488] sm:$0xff]
        %v4623 = vld [vmem:[%s19 + $0x490] sm:$0xff]
        %v4624 = vld [vmem:[%s19 + $0x498] sm:$0xff]
        %v4625 = vld [vmem:[%s19 + $0x4a0] sm:$0xff]
        %v4626 = vld [vmem:[%s19 + $0x4a8] sm:$0xff]
        %v4627 = vld [vmem:[%s19 + $0x4b0] sm:$0xff]
        %v4628 = vld [vmem:[%s19 + $0x4b8] sm:$0xff]
        %v4629 = vld [vmem:[%s19 + $0x4c0] sm:$0xff]
        %v4630 = vld [vmem:[%s19 + $0x4c8] sm:$0xff]
        %v4631 = vld [vmem:[%s19 + $0x4d0] sm:$0xff]
        %v4632 = vld [vmem:[%s19 + $0x4d8] sm:$0xff]
        %v4633 = vld [vmem:[%s19 + $0x4e0] sm:$0xff]
        %v4634 = vld [vmem:[%s19 + $0x4e8] sm:$0xff]
        %v4635 = vld [vmem:[%s19 + $0x4f0] sm:$0xff]
        %v4636 = vld [vmem:[%s19 + $0x4f8] sm:$0xff]
        %v4637 = vld [vmem:[%s19 + $0x500] sm:$0xff]
        %v4638 = vld [vmem:[%s19 + $0x508] sm:$0xff]
        %v4639 = vld [vmem:[%s19 + $0x510] sm:$0xff]
        %v4640 = vld [vmem:[%s19 + $0x518] sm:$0xff]
        %v4641 = vld [vmem:[%s19 + $0x520] sm:$0xff]
        %v4642 = vld [vmem:[%s19 + $0x528] sm:$0xff]
        %v4643 = vld [vmem:[%s19 + $0x530] sm:$0xff]
        %v4644 = vld [vmem:[%s19 + $0x538] sm:$0xff]
        %v4645 = vld [vmem:[%s19 + $0x540] sm:$0xff]
        %v4646 = vld [vmem:[%s19 + $0x548] sm:$0xff]
        %v4647 = vld [vmem:[%s19 + $0x550] sm:$0xff]
        %v4648 = vld [vmem:[%s19 + $0x558] sm:$0xff]
        %v4649 = vld [vmem:[%s19 + $0x560] sm:$0xff]
        %v4650 = vld [vmem:[%s19 + $0x568] sm:$0xff]
        %v4651 = vld [vmem:[%s19 + $0x570] sm:$0xff]
        %v4652 = vld [vmem:[%s19 + $0x578] sm:$0xff]
        %v4653 = vld [vmem:[%s19 + $0x580] sm:$0xff]
        %v4654 = vld [vmem:[%s19 + $0x588] sm:$0xff]
        %v4655 = vld [vmem:[%s19 + $0x590] sm:$0xff]
        %v4656 = vld [vmem:[%s19 + $0x598] sm:$0xff]
        %v4657 = vld [vmem:[%s19 + $0x5a0] sm:$0xff]
        %v4658 = vld [vmem:[%s19 + $0x5a8] sm:$0xff]
        %v4659 = vld [vmem:[%s19 + $0x5b0] sm:$0xff]
        %v4660 = vld [vmem:[%s19 + $0x5b8] sm:$0xff]
        %v4661 = vld [vmem:[%s19 + $0x5c0] sm:$0xff]
        %v4662 = vld [vmem:[%s19 + $0x5c8] sm:$0xff]
        %v4663 = vld [vmem:[%s19 + $0x5d0] sm:$0xff]
        %v4664 = vld [vmem:[%s19 + $0x5d8] sm:$0xff]
        %v4665 = vld [vmem:[%s19 + $0x5e0] sm:$0xff]
        %v4666 = vld [vmem:[%s19 + $0x5e8] sm:$0xff]
        %v4667 = vld [vmem:[%s19 + $0x5f0] sm:$0xff]
        %v4668 = vld [vmem:[%s19 + $0x5f8] sm:$0xff]
        %4669 = vmatpush.msra.mxu0 %v4620
        %4670 = vmatpush.msra.mxu0 %v4619
        %4671 = vmatpush.msra.mxu0 %v4618
        %4672 = vmatpush.msra.mxu0 %v4617
        %4673 = vmatpush.msra.mxu0 %v4616
        %4674 = vmatpush.msra.mxu0 %v4615
        %4675 = vmatpush.msra.mxu0 %v4614
        %4676 = vmatpush.msra.mxu0 %v4613
        %4677 = vmatpush.msra.mxu0 %v4612
        %4678 = vmatpush.msra.mxu0 %v4611
        %4679 = vmatpush.msra.mxu0 %v4610
        %4680 = vmatpush.msra.mxu0 %v4609
        %4681 = vmatpush.msra.mxu0 %v4608
        %4682 = vmatpush.msra.mxu0 %v4607
        %4683 = vmatpush.msra.mxu0 %v4606
        %4684 = vmatpush.msra.mxu0 %v4605
        %4685 = vmatmul.f32.gmra.mxu0 %v4597
        %v4686 = vpop.f32.mrf.mxu0
        %v4687 = vadd.f32 0.0, %v4686
        %4688 = vmatmul.f32.gmra.mxu0 %v4601
        %v4689 = vpop.f32.mrf.mxu0
        %v4690 = vadd.f32 0.0, %v4689
        %4691 = vdwg.mxu0
        %4692 = vmatpush.msra.mxu0 %v4636
        %4693 = vmatpush.msra.mxu0 %v4635
        %4694 = vmatpush.msra.mxu0 %v4634
        %4695 = vmatpush.msra.mxu0 %v4633
        %4696 = vmatpush.msra.mxu0 %v4632
        %4697 = vmatpush.msra.mxu0 %v4631
        %4698 = vmatpush.msra.mxu0 %v4630
        %4699 = vmatpush.msra.mxu0 %v4629
        %4700 = vmatpush.msra.mxu0 %v4628
        %4701 = vmatpush.msra.mxu0 %v4627
        %4702 = vmatpush.msra.mxu0 %v4626
        %4703 = vmatpush.msra.mxu0 %v4625
        %4704 = vmatpush.msra.mxu0 %v4624
        %4705 = vmatpush.msra.mxu0 %v4623
        %4706 = vmatpush.msra.mxu0 %v4622
        %4707 = vmatpush.msra.mxu0 %v4621
        %4708 = vmatmul.f32.gmra.mxu0 %v4598
        %v4709 = vpop.f32.mrf.mxu0
        %v4710 = vadd.f32 %v4687, %v4709
        %4711 = vmatmul.f32.gmra.mxu0 %v4602
        %v4712 = vpop.f32.mrf.mxu0
        %v4713 = vadd.f32 %v4690, %v4712
        %4714 = vdwg.mxu0
        %4715 = vmatpush.msra.mxu0 %v4652
        %4716 = vmatpush.msra.mxu0 %v4651
        %4717 = vmatpush.msra.mxu0 %v4650
        %4718 = vmatpush.msra.mxu0 %v4649
        %4719 = vmatpush.msra.mxu0 %v4648
        %4720 = vmatpush.msra.mxu0 %v4647
        %4721 = vmatpush.msra.mxu0 %v4646
        %4722 = vmatpush.msra.mxu0 %v4645
        %4723 = vmatpush.msra.mxu0 %v4644
        %4724 = vmatpush.msra.mxu0 %v4643
        %4725 = vmatpush.msra.mxu0 %v4642
        %4726 = vmatpush.msra.mxu0 %v4641
        %4727 = vmatpush.msra.mxu0 %v4640
        %4728 = vmatpush.msra.mxu0 %v4639
        %4729 = vmatpush.msra.mxu0 %v4638
        %4730 = vmatpush.msra.mxu0 %v4637
        %4731 = vmatmul.f32.gmra.mxu0 %v4599
        %v4732 = vpop.f32.mrf.mxu0
        %v4733 = vadd.f32 %v4710, %v4732
        %4734 = vmatmul.f32.gmra.mxu0 %v4603
        %v4735 = vpop.f32.mrf.mxu0
        %v4736 = vadd.f32 %v4713, %v4735
        %4737 = vdwg.mxu0
        %4738 = vmatpush.msra.mxu0 %v4668
        %4739 = vmatpush.msra.mxu0 %v4667
        %4740 = vmatpush.msra.mxu0 %v4666
        %4741 = vmatpush.msra.mxu0 %v4665
        %4742 = vmatpush.msra.mxu0 %v4664
        %4743 = vmatpush.msra.mxu0 %v4663
        %4744 = vmatpush.msra.mxu0 %v4662
        %4745 = vmatpush.msra.mxu0 %v4661
        %4746 = vmatpush.msra.mxu0 %v4660
        %4747 = vmatpush.msra.mxu0 %v4659
        %4748 = vmatpush.msra.mxu0 %v4658
        %4749 = vmatpush.msra.mxu0 %v4657
        %4750 = vmatpush.msra.mxu0 %v4656
        %4751 = vmatpush.msra.mxu0 %v4655
        %4752 = vmatpush.msra.mxu0 %v4654
        %4753 = vmatpush.msra.mxu0 %v4653
        %4754 = vmatmul.f32.gmra.mxu0 %v4600
        %v4755 = vpop.f32.mrf.mxu0
        %v4756 = vadd.f32 %v4733, %v4755
        %4757 = vmatmul.f32.gmra.mxu0 %v4604
        %v4758 = vpop.f32.mrf.mxu0
        %v4759 = vadd.f32 %v4736, %v4758
        %4760 = vdwg.mxu0
        %v4761 = vadd.f32 %v4474, %v4756
        %v4762 = vadd.f32 %v4477, %v4759
        %v4763 = vld [vmem:[%s17 + $0x60] sm:$0xff]
        %v4764 = vld [vmem:[%s17 + $0x68] sm:$0xff]
        %v4765 = vld [vmem:[%s17 + $0x70] sm:$0xff]
        %v4766 = vld [vmem:[%s17 + $0x78] sm:$0xff]
        %v4767 = vld [vmem:[%s17 + $0xe0] sm:$0xff]
        %v4768 = vld [vmem:[%s17 + $0xe8] sm:$0xff]
        %v4769 = vld [vmem:[%s17 + $0xf0] sm:$0xff]
        %v4770 = vld [vmem:[%s17 + $0xf8] sm:$0xff]
        %v4771 = vld [vmem:[%s17 + $0x160] sm:$0xff]
        %v4772 = vld [vmem:[%s17 + $0x168] sm:$0xff]
        %v4773 = vld [vmem:[%s17 + $0x170] sm:$0xff]
        %v4774 = vld [vmem:[%s17 + $0x178] sm:$0xff]
        %v4775 = vld [vmem:[%s17 + $0x1e0] sm:$0xff]
        %v4776 = vld [vmem:[%s17 + $0x1e8] sm:$0xff]
        %v4777 = vld [vmem:[%s17 + $0x1f0] sm:$0xff]
        %v4778 = vld [vmem:[%s17 + $0x1f8] sm:$0xff]
        %v4779 = vld [vmem:[%s18 + $0xc] sm:$0xf]
        %v4781 = vperm.slane %v4779, 0
        %v4782 = vperm.slane %v4779, 1
        %v4783 = vperm.slane %v4779, 2
        %v4784 = vperm.slane %v4779, 3
        %4789 = vmatpush.msra.mxu0 0.0
        %4790 = vmatpush.msra.mxu0 0.0
        %4791 = vmatpush.msra.mxu0 0.0
        %4792 = vmatpush.msra.mxu0 0.0
        %4793 = vmatpush.msra.mxu0 0.0
        %4794 = vmatpush.msra.mxu0 0.0
        %4795 = vmatpush.msra.mxu0 0.0
        %4796 = vmatpush.msra.mxu0 0.0
        %4797 = vmatpush.msra.mxu0 0.0
        %4798 = vmatpush.msra.mxu0 0.0
        %4799 = vmatpush.msra.mxu0 0.0
        %4800 = vmatpush.msra.mxu0 0.0
        %4801 = vmatpush.msra.mxu0 %v4775
        %4802 = vmatpush.msra.mxu0 %v4771
        %4803 = vmatpush.msra.mxu0 %v4767
        %4804 = vmatpush.msra.mxu0 %v4763
        %4805 = vmatmul.f32.gmra.mxu0 %v3936
        %v4806 = vpop.f32.mrf.mxu0
        %v4807 = vadd.f32 %v4781, %v4806
        %4808 = vmatmul.f32.gmra.mxu0 %v3939
        %v4809 = vpop.f32.mrf.mxu0
        %v4810 = vadd.f32 %v4781, %v4809
        %4811 = vdwg.mxu0
        %4812 = vmatpush.msra.mxu0 0.0
        %4813 = vmatpush.msra.mxu0 0.0
        %4814 = vmatpush.msra.mxu0 0.0
        %4815 = vmatpush.msra.mxu0 0.0
        %4816 = vmatpush.msra.mxu0 0.0
        %4817 = vmatpush.msra.mxu0 0.0
        %4818 = vmatpush.msra.mxu0 0.0
        %4819 = vmatpush.msra.mxu0 0.0
        %4820 = vmatpush.msra.mxu0 0.0
        %4821 = vmatpush.msra.mxu0 0.0
        %4822 = vmatpush.msra.mxu0 0.0
        %4823 = vmatpush.msra.mxu0 0.0
        %4824 = vmatpush.msra.mxu0 %v4776
        %4825 = vmatpush.msra.mxu0 %v4772
        %4826 = vmatpush.msra.mxu0 %v4768
        %4827 = vmatpush.msra.mxu0 %v4764
        %4828 = vmatmul.f32.gmra.mxu0 %v3936
        %v4829 = vpop.f32.mrf.mxu0
        %v4830 = vadd.f32 %v4782, %v4829
        %4831 = vmatmul.f32.gmra.mxu0 %v3939
        %v4832 = vpop.f32.mrf.mxu0
        %v4833 = vadd.f32 %v4782, %v4832
        %4834 = vdwg.mxu0
        %4835 = vmatpush.msra.mxu0 0.0
        %4836 = vmatpush.msra.mxu0 0.0
        %4837 = vmatpush.msra.mxu0 0.0
        %4838 = vmatpush.msra.mxu0 0.0
        %4839 = vmatpush.msra.mxu0 0.0
        %4840 = vmatpush.msra.mxu0 0.0
        %4841 = vmatpush.msra.mxu0 0.0
        %4842 = vmatpush.msra.mxu0 0.0
        %4843 = vmatpush.msra.mxu0 0.0
        %4844 = vmatpush.msra.mxu0 0.0
        %4845 = vmatpush.msra.mxu0 0.0
        %4846 = vmatpush.msra.mxu0 0.0
        %4847 = vmatpush.msra.mxu0 %v4777
        %4848 = vmatpush.msra.mxu0 %v4773
        %4849 = vmatpush.msra.mxu0 %v4769
        %4850 = vmatpush.msra.mxu0 %v4765
        %4851 = vmatmul.f32.gmra.mxu0 %v3936
        %v4852 = vpop.f32.mrf.mxu0
        %v4853 = vadd.f32 %v4783, %v4852
        %4854 = vmatmul.f32.gmra.mxu0 %v3939
        %v4855 = vpop.f32.mrf.mxu0
        %v4856 = vadd.f32 %v4783, %v4855
        %4857 = vdwg.mxu0
        %4858 = vmatpush.msra.mxu0 0.0
        %4859 = vmatpush.msra.mxu0 0.0
        %4860 = vmatpush.msra.mxu0 0.0
        %4861 = vmatpush.msra.mxu0 0.0
        %4862 = vmatpush.msra.mxu0 0.0
        %4863 = vmatpush.msra.mxu0 0.0
        %4864 = vmatpush.msra.mxu0 0.0
        %4865 = vmatpush.msra.mxu0 0.0
        %4866 = vmatpush.msra.mxu0 0.0
        %4867 = vmatpush.msra.mxu0 0.0
        %4868 = vmatpush.msra.mxu0 0.0
        %4869 = vmatpush.msra.mxu0 0.0
        %4870 = vmatpush.msra.mxu0 %v4778
        %4871 = vmatpush.msra.mxu0 %v4774
        %4872 = vmatpush.msra.mxu0 %v4770
        %4873 = vmatpush.msra.mxu0 %v4766
        %4874 = vmatmul.f32.gmra.mxu0 %v3936
        %v4875 = vpop.f32.mrf.mxu0
        %v4876 = vadd.f32 %v4784, %v4875
        %4877 = vmatmul.f32.gmra.mxu0 %v3939
        %v4878 = vpop.f32.mrf.mxu0
        %v4879 = vadd.f32 %v4784, %v4878
        %4880 = vdwg.mxu0
        %v4881 = vmax.f32 %v4807, 0.0
        %v4882 = vmax.f32 %v4830, 0.0
        %v4883 = vmax.f32 %v4853, 0.0
        %v4884 = vmax.f32 %v4876, 0.0
        %v4885 = vmax.f32 %v4810, 0.0
        %v4886 = vmax.f32 %v4833, 0.0
        %v4887 = vmax.f32 %v4856, 0.0
        %v4888 = vmax.f32 %v4879, 0.0
        %v4889 = vld [vmem:[%s19 + $0x600] sm:$0xff]
        %v4890 = vld [vmem:[%s19 + $0x608] sm:$0xff]
        %v4891 = vld [vmem:[%s19 + $0x610] sm:$0xff]
        %v4892 = vld [vmem:[%s19 + $0x618] sm:$0xff]
        %v4893 = vld [vmem:[%s19 + $0x620] sm:$0xff]
        %v4894 = vld [vmem:[%s19 + $0x628] sm:$0xff]
        %v4895 = vld [vmem:[%s19 + $0x630] sm:$0xff]
        %v4896 = vld [vmem:[%s19 + $0x638] sm:$0xff]
        %v4897 = vld [vmem:[%s19 + $0x640] sm:$0xff]
        %v4898 = vld [vmem:[%s19 + $0x648] sm:$0xff]
        %v4899 = vld [vmem:[%s19 + $0x650] sm:$0xff]
        %v4900 = vld [vmem:[%s19 + $0x658] sm:$0xff]
        %v4901 = vld [vmem:[%s19 + $0x660] sm:$0xff]
        %v4902 = vld [vmem:[%s19 + $0x668] sm:$0xff]
        %v4903 = vld [vmem:[%s19 + $0x670] sm:$0xff]
        %v4904 = vld [vmem:[%s19 + $0x678] sm:$0xff]
        %v4905 = vld [vmem:[%s19 + $0x680] sm:$0xff]
        %v4906 = vld [vmem:[%s19 + $0x688] sm:$0xff]
        %v4907 = vld [vmem:[%s19 + $0x690] sm:$0xff]
        %v4908 = vld [vmem:[%s19 + $0x698] sm:$0xff]
        %v4909 = vld [vmem:[%s19 + $0x6a0] sm:$0xff]
        %v4910 = vld [vmem:[%s19 + $0x6a8] sm:$0xff]
        %v4911 = vld [vmem:[%s19 + $0x6b0] sm:$0xff]
        %v4912 = vld [vmem:[%s19 + $0x6b8] sm:$0xff]
        %v4913 = vld [vmem:[%s19 + $0x6c0] sm:$0xff]
        %v4914 = vld [vmem:[%s19 + $0x6c8] sm:$0xff]
        %v4915 = vld [vmem:[%s19 + $0x6d0] sm:$0xff]
        %v4916 = vld [vmem:[%s19 + $0x6d8] sm:$0xff]
        %v4917 = vld [vmem:[%s19 + $0x6e0] sm:$0xff]
        %v4918 = vld [vmem:[%s19 + $0x6e8] sm:$0xff]
        %v4919 = vld [vmem:[%s19 + $0x6f0] sm:$0xff]
        %v4920 = vld [vmem:[%s19 + $0x6f8] sm:$0xff]
        %v4921 = vld [vmem:[%s19 + $0x700] sm:$0xff]
        %v4922 = vld [vmem:[%s19 + $0x708] sm:$0xff]
        %v4923 = vld [vmem:[%s19 + $0x710] sm:$0xff]
        %v4924 = vld [vmem:[%s19 + $0x718] sm:$0xff]
        %v4925 = vld [vmem:[%s19 + $0x720] sm:$0xff]
        %v4926 = vld [vmem:[%s19 + $0x728] sm:$0xff]
        %v4927 = vld [vmem:[%s19 + $0x730] sm:$0xff]
        %v4928 = vld [vmem:[%s19 + $0x738] sm:$0xff]
        %v4929 = vld [vmem:[%s19 + $0x740] sm:$0xff]
        %v4930 = vld [vmem:[%s19 + $0x748] sm:$0xff]
        %v4931 = vld [vmem:[%s19 + $0x750] sm:$0xff]
        %v4932 = vld [vmem:[%s19 + $0x758] sm:$0xff]
        %v4933 = vld [vmem:[%s19 + $0x760] sm:$0xff]
        %v4934 = vld [vmem:[%s19 + $0x768] sm:$0xff]
        %v4935 = vld [vmem:[%s19 + $0x770] sm:$0xff]
        %v4936 = vld [vmem:[%s19 + $0x778] sm:$0xff]
        %v4937 = vld [vmem:[%s19 + $0x780] sm:$0xff]
        %v4938 = vld [vmem:[%s19 + $0x788] sm:$0xff]
        %v4939 = vld [vmem:[%s19 + $0x790] sm:$0xff]
        %v4940 = vld [vmem:[%s19 + $0x798] sm:$0xff]
        %v4941 = vld [vmem:[%s19 + $0x7a0] sm:$0xff]
        %v4942 = vld [vmem:[%s19 + $0x7a8] sm:$0xff]
        %v4943 = vld [vmem:[%s19 + $0x7b0] sm:$0xff]
        %v4944 = vld [vmem:[%s19 + $0x7b8] sm:$0xff]
        %v4945 = vld [vmem:[%s19 + $0x7c0] sm:$0xff]
        %v4946 = vld [vmem:[%s19 + $0x7c8] sm:$0xff]
        %v4947 = vld [vmem:[%s19 + $0x7d0] sm:$0xff]
        %v4948 = vld [vmem:[%s19 + $0x7d8] sm:$0xff]
        %v4949 = vld [vmem:[%s19 + $0x7e0] sm:$0xff]
        %v4950 = vld [vmem:[%s19 + $0x7e8] sm:$0xff]
        %v4951 = vld [vmem:[%s19 + $0x7f0] sm:$0xff]
        %v4952 = vld [vmem:[%s19 + $0x7f8] sm:$0xff]
        %4953 = vmatpush.msra.mxu0 %v4904
        %4954 = vmatpush.msra.mxu0 %v4903
        %4955 = vmatpush.msra.mxu0 %v4902
        %4956 = vmatpush.msra.mxu0 %v4901
        %4957 = vmatpush.msra.mxu0 %v4900
        %4958 = vmatpush.msra.mxu0 %v4899
        %4959 = vmatpush.msra.mxu0 %v4898
        %4960 = vmatpush.msra.mxu0 %v4897
        %4961 = vmatpush.msra.mxu0 %v4896
        %4962 = vmatpush.msra.mxu0 %v4895
        %4963 = vmatpush.msra.mxu0 %v4894
        %4964 = vmatpush.msra.mxu0 %v4893
        %4965 = vmatpush.msra.mxu0 %v4892
        %4966 = vmatpush.msra.mxu0 %v4891
        %4967 = vmatpush.msra.mxu0 %v4890
        %4968 = vmatpush.msra.mxu0 %v4889
        %4969 = vmatmul.f32.gmra.mxu0 %v4881
        %v4970 = vpop.f32.mrf.mxu0
        %v4971 = vadd.f32 0.0, %v4970
        %4972 = vmatmul.f32.gmra.mxu0 %v4885
        %v4973 = vpop.f32.mrf.mxu0
        %v4974 = vadd.f32 0.0, %v4973
        %4975 = vdwg.mxu0
        %4976 = vmatpush.msra.mxu0 %v4920
        %4977 = vmatpush.msra.mxu0 %v4919
        %4978 = vmatpush.msra.mxu0 %v4918
        %4979 = vmatpush.msra.mxu0 %v4917
        %4980 = vmatpush.msra.mxu0 %v4916
        %4981 = vmatpush.msra.mxu0 %v4915
        %4982 = vmatpush.msra.mxu0 %v4914
        %4983 = vmatpush.msra.mxu0 %v4913
        %4984 = vmatpush.msra.mxu0 %v4912
        %4985 = vmatpush.msra.mxu0 %v4911
        %4986 = vmatpush.msra.mxu0 %v4910
        %4987 = vmatpush.msra.mxu0 %v4909
        %4988 = vmatpush.msra.mxu0 %v4908
        %4989 = vmatpush.msra.mxu0 %v4907
        %4990 = vmatpush.msra.mxu0 %v4906
        %4991 = vmatpush.msra.mxu0 %v4905
        %4992 = vmatmul.f32.gmra.mxu0 %v4882
        %v4993 = vpop.f32.mrf.mxu0
        %v4994 = vadd.f32 %v4971, %v4993
        %4995 = vmatmul.f32.gmra.mxu0 %v4886
        %v4996 = vpop.f32.mrf.mxu0
        %v4997 = vadd.f32 %v4974, %v4996
        %4998 = vdwg.mxu0
        %4999 = vmatpush.msra.mxu0 %v4936
        %5000 = vmatpush.msra.mxu0 %v4935
        %5001 = vmatpush.msra.mxu0 %v4934
        %5002 = vmatpush.msra.mxu0 %v4933
        %5003 = vmatpush.msra.mxu0 %v4932
        %5004 = vmatpush.msra.mxu0 %v4931
        %5005 = vmatpush.msra.mxu0 %v4930
        %5006 = vmatpush.msra.mxu0 %v4929
        %5007 = vmatpush.msra.mxu0 %v4928
        %5008 = vmatpush.msra.mxu0 %v4927
        %5009 = vmatpush.msra.mxu0 %v4926
        %5010 = vmatpush.msra.mxu0 %v4925
        %5011 = vmatpush.msra.mxu0 %v4924
        %5012 = vmatpush.msra.mxu0 %v4923
        %5013 = vmatpush.msra.mxu0 %v4922
        %5014 = vmatpush.msra.mxu0 %v4921
        %5015 = vmatmul.f32.gmra.mxu0 %v4883
        %v5016 = vpop.f32.mrf.mxu0
        %v5017 = vadd.f32 %v4994, %v5016
        %5018 = vmatmul.f32.gmra.mxu0 %v4887
        %v5019 = vpop.f32.mrf.mxu0
        %v5020 = vadd.f32 %v4997, %v5019
        %5021 = vdwg.mxu0
        %5022 = vmatpush.msra.mxu0 %v4952
        %5023 = vmatpush.msra.mxu0 %v4951
        %5024 = vmatpush.msra.mxu0 %v4950
        %5025 = vmatpush.msra.mxu0 %v4949
        %5026 = vmatpush.msra.mxu0 %v4948
        %5027 = vmatpush.msra.mxu0 %v4947
        %5028 = vmatpush.msra.mxu0 %v4946
        %5029 = vmatpush.msra.mxu0 %v4945
        %5030 = vmatpush.msra.mxu0 %v4944
        %5031 = vmatpush.msra.mxu0 %v4943
        %5032 = vmatpush.msra.mxu0 %v4942
        %5033 = vmatpush.msra.mxu0 %v4941
        %5034 = vmatpush.msra.mxu0 %v4940
        %5035 = vmatpush.msra.mxu0 %v4939
        %5036 = vmatpush.msra.mxu0 %v4938
        %5037 = vmatpush.msra.mxu0 %v4937
        %5038 = vmatmul.f32.gmra.mxu0 %v4884
        %v5039 = vpop.f32.mrf.mxu0
        %v5040 = vadd.f32 %v5017, %v5039
        %5041 = vmatmul.f32.gmra.mxu0 %v4888
        %v5042 = vpop.f32.mrf.mxu0
        %v5043 = vadd.f32 %v5020, %v5042
        %5044 = vdwg.mxu0
        %v5045 = vadd.f32 %v4761, %v5040
        %v5046 = vadd.f32 %v4762, %v5043
        %v5047 = vld [vmem:[%s20] sm:$0x1]
        %v5049 = vperm.slane %v5047, 0
        %v5051 = vadd.f32 %v5045, %v5049
        %v5052 = vadd.f32 %v5046, %v5049
        %v5053 = vadd.f32 %v3907, %v5051
        %v5054 = vadd.f32 %v3908, %v5052
        %v5055 = vld [vmem:[%s15] sm:$0x1]
        %v5056 = vld [vmem:[%s16] sm:$0x1]
        %v5057 = vsel %vm726, %v5053, 0.0
        %5058 = vadd.xlane.f32.xlu0 %v5057
        %v5059 = vpop.xlane.xlu0 %5058
        %v5060 = vsel %vm726, %v5054, 0.0
        %5061 = vadd.xlane.f32.xlu0 %v5060
        %v5062 = vpop.xlane.xlu0 %5061
        %v5063 = vmul.f32 %v5059, %v2259
        %v5064 = vmul.f32 %v5062, %v2259
        %v5065 = vsub.f32 %v5053, %v5063
        %v5066 = vsub.f32 %v5054, %v5064
        %v5067 = vmul.f32 %v5065, %v5065
        %v5068 = vmul.f32 %v5066, %v5066
        %v5069 = vsel %vm726, %v5067, 0.0
        %5070 = vadd.xlane.f32.xlu0 %v5069
        %v5071 = vpop.xlane.xlu0 %5070
        %v5072 = vsel %vm726, %v5068, 0.0
        %5073 = vadd.xlane.f32.xlu0 %v5072
        %v5074 = vpop.xlane.xlu0 %5073
        %v5075 = vmul.f32 %v5071, %v2259
        %v5076 = vmul.f32 %v5074, %v2259
        %v5077 = vadd.f32 %v5075, 1e-05
        %v5078 = vadd.f32 %v5076, 1e-05
        %v5079 = vrsqrt.pop %v5077
        %v5080 = vmul.f32 %v5079, %v5077
        %v5081 = vmul.f32 %v5080, %v5079
        %v5082 = vmul.f32 0.5, %v5081
        %v5083 = vsub.f32 1.5, %v5082
        %v5084 = vmul.f32 %v5079, %v5083
        %vm5085 = vweird.f32 %v5077
        %vm5086 = vweird.f32 %v5079
        %vm5087 = vmor %vm5085, %vm5086
        %v5088 = vsel %vm5087, %v5079, %v5084
        %v5089 = vrsqrt.pop %v5078
        %v5090 = vmul.f32 %v5089, %v5078
        %v5091 = vmul.f32 %v5090, %v5089
        %v5092 = vmul.f32 0.5, %v5091
        %v5093 = vsub.f32 1.5, %v5092
        %v5094 = vmul.f32 %v5089, %v5093
        %vm5095 = vweird.f32 %v5078
        %vm5096 = vweird.f32 %v5089
        %vm5097 = vmor %vm5095, %vm5096
        %v5098 = vsel %vm5097, %v5089, %v5094
        %v5099 = vmul.f32 %v5065, %v5088
        %v5100 = vmul.f32 %v5066, %v5098
        %v5102 = vperm.slane %v5055, 0
        %v5104 = vmul.f32 %v5099, %v5102
        %v5105 = vmul.f32 %v5100, %v5102
        %v5107 = vperm.slane %v5056, 0
        %v5109 = vadd.f32 %v5104, %v5107
        %v5110 = vadd.f32 %v5105, %v5107
        %s5111 = scalar_lea.vmem %s1, 32
        %v5112 = vld [vmem:[%s5111] sm:$0xff]
        %v5113 = vld [vmem:[%s5111 + $0x8] sm:$0xff]
        %v5114 = vld [vmem:[%s5111 + $0x10] sm:$0xff]
        %v5115 = vld [vmem:[%s5111 + $0x18] sm:$0xff]
        %s5116 = scalar_lea.vmem %s2, 1
        %v5117 = vld [vmem:[%s5116] sm:$0x1]
        %v5119 = vperm.slane %v5117, 0
        %v5122 = vsel %vm726, %v5109, 0
        %v5125 = vsel %vm726, %v5110, 0
        %5127 = vmatpush.msra.mxu0 0.0
        %5128 = vmatpush.msra.mxu0 0.0
        %5129 = vmatpush.msra.mxu0 0.0
        %5130 = vmatpush.msra.mxu0 0.0
        %5131 = vmatpush.msra.mxu0 0.0
        %5132 = vmatpush.msra.mxu0 0.0
        %5133 = vmatpush.msra.mxu0 0.0
        %5134 = vmatpush.msra.mxu0 0.0
        %5135 = vmatpush.msra.mxu0 0.0
        %5136 = vmatpush.msra.mxu0 0.0
        %5137 = vmatpush.msra.mxu0 0.0
        %5138 = vmatpush.msra.mxu0 0.0
        %5139 = vmatpush.msra.mxu0 %v5115
        %5140 = vmatpush.msra.mxu0 %v5114
        %5141 = vmatpush.msra.mxu0 %v5113
        %5142 = vmatpush.msra.mxu0 %v5112
        %5143 = vmatmul.f32.gmra.mxu0 %v5122
        %v5144 = vpop.f32.mrf.mxu0
        %v5145 = vadd.f32 %v5119, %v5144
        %5146 = vmatmul.f32.gmra.mxu0 %v5125
        %v5147 = vpop.f32.mrf.mxu0
        %v5148 = vadd.f32 %v5119, %v5147
        %5149 = vdwg.mxu0
        %5152 = vrot.lane.b32.xlu0 %v5145, 120
        %v5153 = vpop.permute.xlu0 %5152
        %5154 = vrot.lane.b32.xlu0 %v5148, 120
        %v5155 = vpop.permute.xlu0 %5154
        %5158 = vrot.lane.b32.xlu0 %v5145, 112
        %v5159 = vpop.permute.xlu0 %5158
        %5160 = vrot.lane.b32.xlu0 %v5148, 112
        %v5161 = vpop.permute.xlu0 %5160
        %5164 = vrot.lane.b32.xlu0 %v5145, 104
        %v5165 = vpop.permute.xlu0 %5164
        %5166 = vrot.lane.b32.xlu0 %v5148, 104
        %v5167 = vpop.permute.xlu0 %5166
        %v5170 = vrot.slane %v5159, 4
        %v5171 = vsel %vm777, %v5170, %v5145
        %v5172 = vrot.slane %v5145, 4
        %v5173 = vsel %vm777, %v5159, %v5172
        %v5175 = vunpack.c.l.s4 1983009808
        %v5176 = vunpack.c.0.s8 %v5175
        %v5177 = vperm.slane %v5171, %v5176
        %v5179 = vunpack.c.l.s4 1983009808
        %v5180 = vunpack.c.0.s8 %v5179
        %v5181 = vperm.slane %v5173, %v5180
        %v5182 = vrot.slane %v5165, 4
        %v5183 = vsel %vm777, %v5182, %v5153
        %v5184 = vrot.slane %v5153, 4
        %v5185 = vsel %vm777, %v5165, %v5184
        %v5187 = vunpack.c.l.s4 1983009808
        %v5188 = vunpack.c.0.s8 %v5187
        %v5189 = vperm.slane %v5183, %v5188
        %v5191 = vunpack.c.l.s4 1983009808
        %v5192 = vunpack.c.0.s8 %v5191
        %v5193 = vperm.slane %v5185, %v5192
        %v5194 = vrot.slane %v5189, 4
        %v5195 = vsel %vm777, %v5194, %v5177
        %v5196 = vrot.slane %v5177, 4
        %v5197 = vsel %vm777, %v5189, %v5196
        %v5199 = vunpack.c.l.s4 1934713408
        %v5200 = vunpack.c.0.s8 %v5199
        %v5201 = vperm.slane %v5195, %v5200
        %v5203 = vunpack.c.l.s4 1934713408
        %v5204 = vunpack.c.0.s8 %v5203
        %v5205 = vperm.slane %v5197, %v5204
        %v5206 = vrot.slane %v5193, 4
        %v5207 = vsel %vm777, %v5206, %v5181
        %v5208 = vrot.slane %v5181, 4
        %v5209 = vsel %vm777, %v5193, %v5208
        %v5211 = vunpack.c.l.s4 1934713408
        %v5212 = vunpack.c.0.s8 %v5211
        %v5213 = vperm.slane %v5207, %v5212
        %v5215 = vunpack.c.l.s4 1934713408
        %v5216 = vunpack.c.0.s8 %v5215
        %v5217 = vperm.slane %v5209, %v5216
        %v5218 = vrot.slane %v5201, 4
        %v5219 = vsel %vm777, 0.0, %v5218
        %v5220 = vrot.slane %v5205, 4
        %v5221 = vsel %vm777, 0.0, %v5220
        %v5222 = vrot.slane %v5213, 4
        %v5223 = vsel %vm777, 0.0, %v5222
        %v5224 = vrot.slane %v5217, 4
        %v5225 = vsel %vm777, 0.0, %v5224
        %v5226 = vrot.slane %v5161, 4
        %v5227 = vsel %vm777, %v5226, %v5148
        %v5228 = vrot.slane %v5148, 4
        %v5229 = vsel %vm777, %v5161, %v5228
        %v5231 = vunpack.c.l.s4 1983009808
        %v5232 = vunpack.c.0.s8 %v5231
        %v5233 = vperm.slane %v5227, %v5232
        %v5235 = vunpack.c.l.s4 1983009808
        %v5236 = vunpack.c.0.s8 %v5235
        %v5237 = vperm.slane %v5229, %v5236
        %v5238 = vrot.slane %v5167, 4
        %v5239 = vsel %vm777, %v5238, %v5155
        %v5240 = vrot.slane %v5155, 4
        %v5241 = vsel %vm777, %v5167, %v5240
        %v5243 = vunpack.c.l.s4 1983009808
        %v5244 = vunpack.c.0.s8 %v5243
        %v5245 = vperm.slane %v5239, %v5244
        %v5247 = vunpack.c.l.s4 1983009808
        %v5248 = vunpack.c.0.s8 %v5247
        %v5249 = vperm.slane %v5241, %v5248
        %v5250 = vrot.slane %v5245, 4
        %v5251 = vsel %vm777, %v5250, %v5233
        %v5252 = vrot.slane %v5233, 4
        %v5253 = vsel %vm777, %v5245, %v5252
        %v5255 = vunpack.c.l.s4 1934713408
        %v5256 = vunpack.c.0.s8 %v5255
        %v5257 = vperm.slane %v5251, %v5256
        %v5259 = vunpack.c.l.s4 1934713408
        %v5260 = vunpack.c.0.s8 %v5259
        %v5261 = vperm.slane %v5253, %v5260
        %v5262 = vrot.slane %v5249, 4
        %v5263 = vsel %vm777, %v5262, %v5237
        %v5264 = vrot.slane %v5237, 4
        %v5265 = vsel %vm777, %v5249, %v5264
        %v5267 = vunpack.c.l.s4 1934713408
        %v5268 = vunpack.c.0.s8 %v5267
        %v5269 = vperm.slane %v5263, %v5268
        %v5271 = vunpack.c.l.s4 1934713408
        %v5272 = vunpack.c.0.s8 %v5271
        %v5273 = vperm.slane %v5265, %v5272
        %v5274 = vrot.slane %v5257, 4
        %v5275 = vsel %vm777, 0.0, %v5274
        %v5276 = vrot.slane %v5261, 4
        %v5277 = vsel %vm777, 0.0, %v5276
        %v5278 = vrot.slane %v5269, 4
        %v5279 = vsel %vm777, 0.0, %v5278
        %v5280 = vrot.slane %v5273, 4
        %v5281 = vsel %vm777, 0.0, %v5280
        %v5282 = vsel %vm777, %v5220, %v5201
        %v5284 = vunpack.c.l.s4 1983009808
        %v5285 = vunpack.c.0.s8 %v5284
        %v5286 = vperm.slane %v5282, %v5285
        %v5287 = vrot.slane %v5221, 4
        %v5288 = vsel %vm777, %v5287, %v5219
        %v5290 = vunpack.c.l.s4 1983009808
        %v5291 = vunpack.c.0.s8 %v5290
        %v5292 = vperm.slane %v5288, %v5291
        %v5293 = vsel %vm777, %v5224, %v5213
        %v5295 = vunpack.c.l.s4 1983009808
        %v5296 = vunpack.c.0.s8 %v5295
        %v5297 = vperm.slane %v5293, %v5296
        %v5298 = vrot.slane %v5225, 4
        %v5299 = vsel %vm777, %v5298, %v5223
        %v5301 = vunpack.c.l.s4 1983009808
        %v5302 = vunpack.c.0.s8 %v5301
        %v5303 = vperm.slane %v5299, %v5302
        %v5304 = vrot.slane %v5292, 4
        %v5305 = vsel %vm777, %v5304, %v5286
        %v5306 = vrot.slane %v5286, 4
        %v5307 = vsel %vm777, %v5292, %v5306
        %v5309 = vunpack.c.l.s4 1934713408
        %v5310 = vunpack.c.0.s8 %v5309
        %v5311 = vperm.slane %v5305, %v5310
        %v5313 = vunpack.c.l.s4 1934713408
        %v5314 = vunpack.c.0.s8 %v5313
        %v5315 = vperm.slane %v5307, %v5314
        %v5316 = vrot.slane %v5303, 4
        %v5317 = vsel %vm777, %v5316, %v5297
        %v5318 = vrot.slane %v5297, 4
        %v5319 = vsel %vm777, %v5303, %v5318
        %v5321 = vunpack.c.l.s4 1934713408
        %v5322 = vunpack.c.0.s8 %v5321
        %v5323 = vperm.slane %v5317, %v5322
        %v5325 = vunpack.c.l.s4 1934713408
        %v5326 = vunpack.c.0.s8 %v5325
        %v5327 = vperm.slane %v5319, %v5326
        %v5328 = vrot.slane %v5323, 4
        %v5329 = vsel %vm777, %v5328, %v5311
        %v5330 = vrot.slane %v5311, 4
        %v5331 = vsel %vm777, %v5323, %v5330
        %v5332 = vrot.slane %v5327, 4
        %v5333 = vsel %vm777, %v5332, %v5315
        %v5334 = vrot.slane %v5315, 4
        %v5335 = vsel %vm777, %v5327, %v5334
        %v5336 = vsel %vm777, %v5276, %v5257
        %v5338 = vunpack.c.l.s4 1983009808
        %v5339 = vunpack.c.0.s8 %v5338
        %v5340 = vperm.slane %v5336, %v5339
        %v5341 = vrot.slane %v5277, 4
        %v5342 = vsel %vm777, %v5341, %v5275
        %v5344 = vunpack.c.l.s4 1983009808
        %v5345 = vunpack.c.0.s8 %v5344
        %v5346 = vperm.slane %v5342, %v5345
        %v5347 = vsel %vm777, %v5280, %v5269
        %v5349 = vunpack.c.l.s4 1983009808
        %v5350 = vunpack.c.0.s8 %v5349
        %v5351 = vperm.slane %v5347, %v5350
        %v5352 = vrot.slane %v5281, 4
        %v5353 = vsel %vm777, %v5352, %v5279
        %v5355 = vunpack.c.l.s4 1983009808
        %v5356 = vunpack.c.0.s8 %v5355
        %v5357 = vperm.slane %v5353, %v5356
        %v5358 = vrot.slane %v5346, 4
        %v5359 = vsel %vm777, %v5358, %v5340
        %v5360 = vrot.slane %v5340, 4
        %v5361 = vsel %vm777, %v5346, %v5360
        %v5363 = vunpack.c.l.s4 1934713408
        %v5364 = vunpack.c.0.s8 %v5363
        %v5365 = vperm.slane %v5359, %v5364
        %v5367 = vunpack.c.l.s4 1934713408
        %v5368 = vunpack.c.0.s8 %v5367
        %v5369 = vperm.slane %v5361, %v5368
        %v5370 = vrot.slane %v5357, 4
        %v5371 = vsel %vm777, %v5370, %v5351
        %v5372 = vrot.slane %v5351, 4
        %v5373 = vsel %vm777, %v5357, %v5372
        %v5375 = vunpack.c.l.s4 1934713408
        %v5376 = vunpack.c.0.s8 %v5375
        %v5377 = vperm.slane %v5371, %v5376
        %v5379 = vunpack.c.l.s4 1934713408
        %v5380 = vunpack.c.0.s8 %v5379
        %v5381 = vperm.slane %v5373, %v5380
        %v5382 = vrot.slane %v5377, 4
        %v5383 = vsel %vm777, %v5382, %v5365
        %v5384 = vrot.slane %v5365, 4
        %v5385 = vsel %vm777, %v5377, %v5384
        %v5386 = vrot.slane %v5381, 4
        %v5387 = vsel %vm777, %v5386, %v5369
        %v5388 = vrot.slane %v5369, 4
        %v5389 = vsel %vm777, %v5381, %v5388
        %5390 = vrot.lane.b32.xlu0 %v5145, 96
        %v5391 = vpop.permute.xlu0 %5390
        %5392 = vrot.lane.b32.xlu0 %v5148, 96
        %v5393 = vpop.permute.xlu0 %5392
        %5394 = vrot.lane.b32.xlu0 %v5153, 96
        %v5395 = vpop.permute.xlu0 %5394
        %5396 = vrot.lane.b32.xlu0 %v5155, 96
        %v5397 = vpop.permute.xlu0 %5396
        %5398 = vrot.lane.b32.xlu0 %v5159, 96
        %v5399 = vpop.permute.xlu0 %5398
        %5400 = vrot.lane.b32.xlu0 %v5161, 96
        %v5401 = vpop.permute.xlu0 %5400
        %5402 = vrot.lane.b32.xlu0 %v5165, 96
        %v5403 = vpop.permute.xlu0 %5402
        %5404 = vrot.lane.b32.xlu0 %v5167, 96
        %v5405 = vpop.permute.xlu0 %5404
        %v5414 = vrot.slane %v5399, 4
        %v5415 = vsel %vm777, %v5414, %v5391
        %v5416 = vrot.slane %v5391, 4
        %v5417 = vsel %vm777, %v5399, %v5416
        %v5419 = vunpack.c.l.s4 1983009808
        %v5420 = vunpack.c.0.s8 %v5419
        %v5421 = vperm.slane %v5415, %v5420
        %v5423 = vunpack.c.l.s4 1983009808
        %v5424 = vunpack.c.0.s8 %v5423
        %v5425 = vperm.slane %v5417, %v5424
        %v5426 = vrot.slane %v5403, 4
        %v5427 = vsel %vm777, %v5426, %v5395
        %v5428 = vrot.slane %v5395, 4
        %v5429 = vsel %vm777, %v5403, %v5428
        %v5431 = vunpack.c.l.s4 1983009808
        %v5432 = vunpack.c.0.s8 %v5431
        %v5433 = vperm.slane %v5427, %v5432
        %v5435 = vunpack.c.l.s4 1983009808
        %v5436 = vunpack.c.0.s8 %v5435
        %v5437 = vperm.slane %v5429, %v5436
        %v5438 = vrot.slane %v5433, 4
        %v5439 = vsel %vm777, %v5438, %v5421
        %v5440 = vrot.slane %v5421, 4
        %v5441 = vsel %vm777, %v5433, %v5440
        %v5443 = vunpack.c.l.s4 1934713408
        %v5444 = vunpack.c.0.s8 %v5443
        %v5445 = vperm.slane %v5439, %v5444
        %v5447 = vunpack.c.l.s4 1934713408
        %v5448 = vunpack.c.0.s8 %v5447
        %v5449 = vperm.slane %v5441, %v5448
        %v5450 = vrot.slane %v5437, 4
        %v5451 = vsel %vm777, %v5450, %v5425
        %v5452 = vrot.slane %v5425, 4
        %v5453 = vsel %vm777, %v5437, %v5452
        %v5455 = vunpack.c.l.s4 1934713408
        %v5456 = vunpack.c.0.s8 %v5455
        %v5457 = vperm.slane %v5451, %v5456
        %v5459 = vunpack.c.l.s4 1934713408
        %v5460 = vunpack.c.0.s8 %v5459
        %v5461 = vperm.slane %v5453, %v5460
        %v5462 = vrot.slane %v5445, 4
        %v5463 = vsel %vm777, 0.0, %v5462
        %v5464 = vrot.slane %v5449, 4
        %v5465 = vsel %vm777, 0.0, %v5464
        %v5466 = vrot.slane %v5457, 4
        %v5467 = vsel %vm777, 0.0, %v5466
        %v5468 = vrot.slane %v5461, 4
        %v5469 = vsel %vm777, 0.0, %v5468
        %v5470 = vrot.slane %v5401, 4
        %v5471 = vsel %vm777, %v5470, %v5393
        %v5472 = vrot.slane %v5393, 4
        %v5473 = vsel %vm777, %v5401, %v5472
        %v5475 = vunpack.c.l.s4 1983009808
        %v5476 = vunpack.c.0.s8 %v5475
        %v5477 = vperm.slane %v5471, %v5476
        %v5479 = vunpack.c.l.s4 1983009808
        %v5480 = vunpack.c.0.s8 %v5479
        %v5481 = vperm.slane %v5473, %v5480
        %v5482 = vrot.slane %v5405, 4
        %v5483 = vsel %vm777, %v5482, %v5397
        %v5484 = vrot.slane %v5397, 4
        %v5485 = vsel %vm777, %v5405, %v5484
        %v5487 = vunpack.c.l.s4 1983009808
        %v5488 = vunpack.c.0.s8 %v5487
        %v5489 = vperm.slane %v5483, %v5488
        %v5491 = vunpack.c.l.s4 1983009808
        %v5492 = vunpack.c.0.s8 %v5491
        %v5493 = vperm.slane %v5485, %v5492
        %v5494 = vrot.slane %v5489, 4
        %v5495 = vsel %vm777, %v5494, %v5477
        %v5496 = vrot.slane %v5477, 4
        %v5497 = vsel %vm777, %v5489, %v5496
        %v5499 = vunpack.c.l.s4 1934713408
        %v5500 = vunpack.c.0.s8 %v5499
        %v5501 = vperm.slane %v5495, %v5500
        %v5503 = vunpack.c.l.s4 1934713408
        %v5504 = vunpack.c.0.s8 %v5503
        %v5505 = vperm.slane %v5497, %v5504
        %v5506 = vrot.slane %v5493, 4
        %v5507 = vsel %vm777, %v5506, %v5481
        %v5508 = vrot.slane %v5481, 4
        %v5509 = vsel %vm777, %v5493, %v5508
        %v5511 = vunpack.c.l.s4 1934713408
        %v5512 = vunpack.c.0.s8 %v5511
        %v5513 = vperm.slane %v5507, %v5512
        %v5515 = vunpack.c.l.s4 1934713408
        %v5516 = vunpack.c.0.s8 %v5515
        %v5517 = vperm.slane %v5509, %v5516
        %v5518 = vrot.slane %v5501, 4
        %v5519 = vsel %vm777, 0.0, %v5518
        %v5520 = vrot.slane %v5505, 4
        %v5521 = vsel %vm777, 0.0, %v5520
        %v5522 = vrot.slane %v5513, 4
        %v5523 = vsel %vm777, 0.0, %v5522
        %v5524 = vrot.slane %v5517, 4
        %v5525 = vsel %vm777, 0.0, %v5524
        %v5526 = vsel %vm777, %v5464, %v5445
        %v5528 = vunpack.c.l.s4 1983009808
        %v5529 = vunpack.c.0.s8 %v5528
        %v5530 = vperm.slane %v5526, %v5529
        %v5531 = vrot.slane %v5465, 4
        %v5532 = vsel %vm777, %v5531, %v5463
        %v5534 = vunpack.c.l.s4 1983009808
        %v5535 = vunpack.c.0.s8 %v5534
        %v5536 = vperm.slane %v5532, %v5535
        %v5537 = vsel %vm777, %v5468, %v5457
        %v5539 = vunpack.c.l.s4 1983009808
        %v5540 = vunpack.c.0.s8 %v5539
        %v5541 = vperm.slane %v5537, %v5540
        %v5542 = vrot.slane %v5469, 4
        %v5543 = vsel %vm777, %v5542, %v5467
        %v5545 = vunpack.c.l.s4 1983009808
        %v5546 = vunpack.c.0.s8 %v5545
        %v5547 = vperm.slane %v5543, %v5546
        %v5548 = vrot.slane %v5536, 4
        %v5549 = vsel %vm777, %v5548, %v5530
        %v5550 = vrot.slane %v5530, 4
        %v5551 = vsel %vm777, %v5536, %v5550
        %v5553 = vunpack.c.l.s4 1934713408
        %v5554 = vunpack.c.0.s8 %v5553
        %v5555 = vperm.slane %v5549, %v5554
        %v5557 = vunpack.c.l.s4 1934713408
        %v5558 = vunpack.c.0.s8 %v5557
        %v5559 = vperm.slane %v5551, %v5558
        %v5560 = vrot.slane %v5547, 4
        %v5561 = vsel %vm777, %v5560, %v5541
        %v5562 = vrot.slane %v5541, 4
        %v5563 = vsel %vm777, %v5547, %v5562
        %v5565 = vunpack.c.l.s4 1934713408
        %v5566 = vunpack.c.0.s8 %v5565
        %v5567 = vperm.slane %v5561, %v5566
        %v5569 = vunpack.c.l.s4 1934713408
        %v5570 = vunpack.c.0.s8 %v5569
        %v5571 = vperm.slane %v5563, %v5570
        %v5572 = vrot.slane %v5567, 4
        %v5573 = vsel %vm777, %v5572, %v5555
        %v5574 = vrot.slane %v5555, 4
        %v5575 = vsel %vm777, %v5567, %v5574
        %v5576 = vrot.slane %v5571, 4
        %v5577 = vsel %vm777, %v5576, %v5559
        %v5578 = vrot.slane %v5559, 4
        %v5579 = vsel %vm777, %v5571, %v5578
        %v5580 = vsel %vm777, %v5520, %v5501
        %v5582 = vunpack.c.l.s4 1983009808
        %v5583 = vunpack.c.0.s8 %v5582
        %v5584 = vperm.slane %v5580, %v5583
        %v5585 = vrot.slane %v5521, 4
        %v5586 = vsel %vm777, %v5585, %v5519
        %v5588 = vunpack.c.l.s4 1983009808
        %v5589 = vunpack.c.0.s8 %v5588
        %v5590 = vperm.slane %v5586, %v5589
        %v5591 = vsel %vm777, %v5524, %v5513
        %v5593 = vunpack.c.l.s4 1983009808
        %v5594 = vunpack.c.0.s8 %v5593
        %v5595 = vperm.slane %v5591, %v5594
        %v5596 = vrot.slane %v5525, 4
        %v5597 = vsel %vm777, %v5596, %v5523
        %v5599 = vunpack.c.l.s4 1983009808
        %v5600 = vunpack.c.0.s8 %v5599
        %v5601 = vperm.slane %v5597, %v5600
        %v5602 = vrot.slane %v5590, 4
        %v5603 = vsel %vm777, %v5602, %v5584
        %v5604 = vrot.slane %v5584, 4
        %v5605 = vsel %vm777, %v5590, %v5604
        %v5607 = vunpack.c.l.s4 1934713408
        %v5608 = vunpack.c.0.s8 %v5607
        %v5609 = vperm.slane %v5603, %v5608
        %v5611 = vunpack.c.l.s4 1934713408
        %v5612 = vunpack.c.0.s8 %v5611
        %v5613 = vperm.slane %v5605, %v5612
        %v5614 = vrot.slane %v5601, 4
        %v5615 = vsel %vm777, %v5614, %v5595
        %v5616 = vrot.slane %v5595, 4
        %v5617 = vsel %vm777, %v5601, %v5616
        %v5619 = vunpack.c.l.s4 1934713408
        %v5620 = vunpack.c.0.s8 %v5619
        %v5621 = vperm.slane %v5615, %v5620
        %v5623 = vunpack.c.l.s4 1934713408
        %v5624 = vunpack.c.0.s8 %v5623
        %v5625 = vperm.slane %v5617, %v5624
        %v5626 = vrot.slane %v5621, 4
        %v5627 = vsel %vm777, %v5626, %v5609
        %v5628 = vrot.slane %v5609, 4
        %v5629 = vsel %vm777, %v5621, %v5628
        %v5630 = vrot.slane %v5625, 4
        %v5631 = vsel %vm777, %v5630, %v5613
        %v5632 = vrot.slane %v5613, 4
        %v5633 = vsel %vm777, %v5625, %v5632
        %5634 = vrot.lane.b32.xlu0 %v5145, 64
        %v5635 = vpop.permute.xlu0 %5634
        %5636 = vrot.lane.b32.xlu0 %v5148, 64
        %v5637 = vpop.permute.xlu0 %5636
        %5638 = vrot.lane.b32.xlu0 %v5153, 64
        %v5639 = vpop.permute.xlu0 %5638
        %5640 = vrot.lane.b32.xlu0 %v5155, 64
        %v5641 = vpop.permute.xlu0 %5640
        %5642 = vrot.lane.b32.xlu0 %v5159, 64
        %v5643 = vpop.permute.xlu0 %5642
        %5644 = vrot.lane.b32.xlu0 %v5161, 64
        %v5645 = vpop.permute.xlu0 %5644
        %5646 = vrot.lane.b32.xlu0 %v5165, 64
        %v5647 = vpop.permute.xlu0 %5646
        %5648 = vrot.lane.b32.xlu0 %v5167, 64
        %v5649 = vpop.permute.xlu0 %5648
        %v5658 = vrot.slane %v5643, 4
        %v5659 = vsel %vm777, %v5658, %v5635
        %v5660 = vrot.slane %v5635, 4
        %v5661 = vsel %vm777, %v5643, %v5660
        %v5663 = vunpack.c.l.s4 1983009808
        %v5664 = vunpack.c.0.s8 %v5663
        %v5665 = vperm.slane %v5659, %v5664
        %v5667 = vunpack.c.l.s4 1983009808
        %v5668 = vunpack.c.0.s8 %v5667
        %v5669 = vperm.slane %v5661, %v5668
        %v5670 = vrot.slane %v5647, 4
        %v5671 = vsel %vm777, %v5670, %v5639
        %v5672 = vrot.slane %v5639, 4
        %v5673 = vsel %vm777, %v5647, %v5672
        %v5675 = vunpack.c.l.s4 1983009808
        %v5676 = vunpack.c.0.s8 %v5675
        %v5677 = vperm.slane %v5671, %v5676
        %v5679 = vunpack.c.l.s4 1983009808
        %v5680 = vunpack.c.0.s8 %v5679
        %v5681 = vperm.slane %v5673, %v5680
        %v5682 = vrot.slane %v5677, 4
        %v5683 = vsel %vm777, %v5682, %v5665
        %v5684 = vrot.slane %v5665, 4
        %v5685 = vsel %vm777, %v5677, %v5684
        %v5687 = vunpack.c.l.s4 1934713408
        %v5688 = vunpack.c.0.s8 %v5687
        %v5689 = vperm.slane %v5683, %v5688
        %v5691 = vunpack.c.l.s4 1934713408
        %v5692 = vunpack.c.0.s8 %v5691
        %v5693 = vperm.slane %v5685, %v5692
        %v5694 = vrot.slane %v5681, 4
        %v5695 = vsel %vm777, %v5694, %v5669
        %v5696 = vrot.slane %v5669, 4
        %v5697 = vsel %vm777, %v5681, %v5696
        %v5699 = vunpack.c.l.s4 1934713408
        %v5700 = vunpack.c.0.s8 %v5699
        %v5701 = vperm.slane %v5695, %v5700
        %v5703 = vunpack.c.l.s4 1934713408
        %v5704 = vunpack.c.0.s8 %v5703
        %v5705 = vperm.slane %v5697, %v5704
        %v5706 = vrot.slane %v5689, 4
        %v5707 = vsel %vm777, 0.0, %v5706
        %v5708 = vrot.slane %v5693, 4
        %v5709 = vsel %vm777, 0.0, %v5708
        %v5710 = vrot.slane %v5701, 4
        %v5711 = vsel %vm777, 0.0, %v5710
        %v5712 = vrot.slane %v5705, 4
        %v5713 = vsel %vm777, 0.0, %v5712
        %v5714 = vrot.slane %v5645, 4
        %v5715 = vsel %vm777, %v5714, %v5637
        %v5716 = vrot.slane %v5637, 4
        %v5717 = vsel %vm777, %v5645, %v5716
        %v5719 = vunpack.c.l.s4 1983009808
        %v5720 = vunpack.c.0.s8 %v5719
        %v5721 = vperm.slane %v5715, %v5720
        %v5723 = vunpack.c.l.s4 1983009808
        %v5724 = vunpack.c.0.s8 %v5723
        %v5725 = vperm.slane %v5717, %v5724
        %v5726 = vrot.slane %v5649, 4
        %v5727 = vsel %vm777, %v5726, %v5641
        %v5728 = vrot.slane %v5641, 4
        %v5729 = vsel %vm777, %v5649, %v5728
        %v5731 = vunpack.c.l.s4 1983009808
        %v5732 = vunpack.c.0.s8 %v5731
        %v5733 = vperm.slane %v5727, %v5732
        %v5735 = vunpack.c.l.s4 1983009808
        %v5736 = vunpack.c.0.s8 %v5735
        %v5737 = vperm.slane %v5729, %v5736
        %v5738 = vrot.slane %v5733, 4
        %v5739 = vsel %vm777, %v5738, %v5721
        %v5740 = vrot.slane %v5721, 4
        %v5741 = vsel %vm777, %v5733, %v5740
        %v5743 = vunpack.c.l.s4 1934713408
        %v5744 = vunpack.c.0.s8 %v5743
        %v5745 = vperm.slane %v5739, %v5744
        %v5747 = vunpack.c.l.s4 1934713408
        %v5748 = vunpack.c.0.s8 %v5747
        %v5749 = vperm.slane %v5741, %v5748
        %v5750 = vrot.slane %v5737, 4
        %v5751 = vsel %vm777, %v5750, %v5725
        %v5752 = vrot.slane %v5725, 4
        %v5753 = vsel %vm777, %v5737, %v5752
        %v5755 = vunpack.c.l.s4 1934713408
        %v5756 = vunpack.c.0.s8 %v5755
        %v5757 = vperm.slane %v5751, %v5756
        %v5759 = vunpack.c.l.s4 1934713408
        %v5760 = vunpack.c.0.s8 %v5759
        %v5761 = vperm.slane %v5753, %v5760
        %v5762 = vrot.slane %v5745, 4
        %v5763 = vsel %vm777, 0.0, %v5762
        %v5764 = vrot.slane %v5749, 4
        %v5765 = vsel %vm777, 0.0, %v5764
        %v5766 = vrot.slane %v5757, 4
        %v5767 = vsel %vm777, 0.0, %v5766
        %v5768 = vrot.slane %v5761, 4
        %v5769 = vsel %vm777, 0.0, %v5768
        %v5770 = vsel %vm777, %v5708, %v5689
        %v5772 = vunpack.c.l.s4 1983009808
        %v5773 = vunpack.c.0.s8 %v5772
        %v5774 = vperm.slane %v5770, %v5773
        %v5775 = vrot.slane %v5709, 4
        %v5776 = vsel %vm777, %v5775, %v5707
        %v5778 = vunpack.c.l.s4 1983009808
        %v5779 = vunpack.c.0.s8 %v5778
        %v5780 = vperm.slane %v5776, %v5779
        %v5781 = vsel %vm777, %v5712, %v5701
        %v5783 = vunpack.c.l.s4 1983009808
        %v5784 = vunpack.c.0.s8 %v5783
        %v5785 = vperm.slane %v5781, %v5784
        %v5786 = vrot.slane %v5713, 4
        %v5787 = vsel %vm777, %v5786, %v5711
        %v5789 = vunpack.c.l.s4 1983009808
        %v5790 = vunpack.c.0.s8 %v5789
        %v5791 = vperm.slane %v5787, %v5790
        %v5792 = vrot.slane %v5780, 4
        %v5793 = vsel %vm777, %v5792, %v5774
        %v5794 = vrot.slane %v5774, 4
        %v5795 = vsel %vm777, %v5780, %v5794
        %v5797 = vunpack.c.l.s4 1934713408
        %v5798 = vunpack.c.0.s8 %v5797
        %v5799 = vperm.slane %v5793, %v5798
        %v5801 = vunpack.c.l.s4 1934713408
        %v5802 = vunpack.c.0.s8 %v5801
        %v5803 = vperm.slane %v5795, %v5802
        %v5804 = vrot.slane %v5791, 4
        %v5805 = vsel %vm777, %v5804, %v5785
        %v5806 = vrot.slane %v5785, 4
        %v5807 = vsel %vm777, %v5791, %v5806
        %v5809 = vunpack.c.l.s4 1934713408
        %v5810 = vunpack.c.0.s8 %v5809
        %v5811 = vperm.slane %v5805, %v5810
        %v5813 = vunpack.c.l.s4 1934713408
        %v5814 = vunpack.c.0.s8 %v5813
        %v5815 = vperm.slane %v5807, %v5814
        %v5816 = vrot.slane %v5811, 4
        %v5817 = vsel %vm777, %v5816, %v5799
        %v5818 = vrot.slane %v5799, 4
        %v5819 = vsel %vm777, %v5811, %v5818
        %v5820 = vrot.slane %v5815, 4
        %v5821 = vsel %vm777, %v5820, %v5803
        %v5822 = vrot.slane %v5803, 4
        %v5823 = vsel %vm777, %v5815, %v5822
        %v5824 = vsel %vm777, %v5764, %v5745
        %v5826 = vunpack.c.l.s4 1983009808
        %v5827 = vunpack.c.0.s8 %v5826
        %v5828 = vperm.slane %v5824, %v5827
        %v5829 = vrot.slane %v5765, 4
        %v5830 = vsel %vm777, %v5829, %v5763
        %v5832 = vunpack.c.l.s4 1983009808
        %v5833 = vunpack.c.0.s8 %v5832
        %v5834 = vperm.slane %v5830, %v5833
        %v5835 = vsel %vm777, %v5768, %v5757
        %v5837 = vunpack.c.l.s4 1983009808
        %v5838 = vunpack.c.0.s8 %v5837
        %v5839 = vperm.slane %v5835, %v5838
        %v5840 = vrot.slane %v5769, 4
        %v5841 = vsel %vm777, %v5840, %v5767
        %v5843 = vunpack.c.l.s4 1983009808
        %v5844 = vunpack.c.0.s8 %v5843
        %v5845 = vperm.slane %v5841, %v5844
        %v5846 = vrot.slane %v5834, 4
        %v5847 = vsel %vm777, %v5846, %v5828
        %v5848 = vrot.slane %v5828, 4
        %v5849 = vsel %vm777, %v5834, %v5848
        %v5851 = vunpack.c.l.s4 1934713408
        %v5852 = vunpack.c.0.s8 %v5851
        %v5853 = vperm.slane %v5847, %v5852
        %v5855 = vunpack.c.l.s4 1934713408
        %v5856 = vunpack.c.0.s8 %v5855
        %v5857 = vperm.slane %v5849, %v5856
        %v5858 = vrot.slane %v5845, 4
        %v5859 = vsel %vm777, %v5858, %v5839
        %v5860 = vrot.slane %v5839, 4
        %v5861 = vsel %vm777, %v5845, %v5860
        %v5863 = vunpack.c.l.s4 1934713408
        %v5864 = vunpack.c.0.s8 %v5863
        %v5865 = vperm.slane %v5859, %v5864
        %v5867 = vunpack.c.l.s4 1934713408
        %v5868 = vunpack.c.0.s8 %v5867
        %v5869 = vperm.slane %v5861, %v5868
        %v5870 = vrot.slane %v5865, 4
        %v5871 = vsel %vm777, %v5870, %v5853
        %v5872 = vrot.slane %v5853, 4
        %v5873 = vsel %vm777, %v5865, %v5872
        %v5874 = vrot.slane %v5869, 4
        %v5875 = vsel %vm777, %v5874, %v5857
        %v5876 = vrot.slane %v5857, 4
        %v5877 = vsel %vm777, %v5869, %v5876
        %v5879 = vsel %vm1485, %v5329, 0
        %v5882 = vsel %vm1485, %v5383, 0
        %v5885 = vsel %vm1485, %v5573, 0
        %v5888 = vsel %vm1485, %v5627, 0
        %5890 = vmatpush.xpose.msra.mxu0 0.0
        %5891 = vmatpush.xpose.msra.mxu0 0.0
        %5892 = vmatpush.xpose.msra.mxu0 0.0
        %5893 = vmatpush.xpose.msra.mxu0 0.0
        %5894 = vmatpush.xpose.msra.mxu0 0.0
        %5895 = vmatpush.xpose.msra.mxu0 0.0
        %5896 = vmatpush.xpose.msra.mxu0 0.0
        %5897 = vmatpush.xpose.msra.mxu0 0.0
        %5898 = vmatpush.xpose.msra.mxu0 0.0
        %5899 = vmatpush.xpose.msra.mxu0 0.0
        %5900 = vmatpush.xpose.msra.mxu0 0.0
        %5901 = vmatpush.xpose.msra.mxu0 0.0
        %5902 = vmatpush.xpose.msra.mxu0 0.0
        %5903 = vmatpush.xpose.msra.mxu0 0.0
        %5904 = vmatpush.xpose.msra.mxu0 %v5888
        %5905 = vmatpush.xpose.msra.mxu0 %v5885
        %5906 = vmatmul.f32.gmra.mxu0 %v5879
        %v5907 = vpop.f32.mrf.mxu0
        %v5908 = vadd.f32 0.0, %v5907
        %5909 = vmatmul.f32.gmra.mxu0 %v5882
        %v5910 = vpop.f32.mrf.mxu0
        %v5911 = vadd.f32 0.0, %v5910
        %5912 = vdwg.mxu0
        %v5914 = vsel %vm1485, %v5331, 0
        %v5917 = vsel %vm1485, %v5385, 0
        %v5920 = vsel %vm1485, %v5575, 0
        %v5923 = vsel %vm1485, %v5629, 0
        %5925 = vmatpush.xpose.msra.mxu0 0.0
        %5926 = vmatpush.xpose.msra.mxu0 0.0
        %5927 = vmatpush.xpose.msra.mxu0 0.0
        %5928 = vmatpush.xpose.msra.mxu0 0.0
        %5929 = vmatpush.xpose.msra.mxu0 0.0
        %5930 = vmatpush.xpose.msra.mxu0 0.0
        %5931 = vmatpush.xpose.msra.mxu0 0.0
        %5932 = vmatpush.xpose.msra.mxu0 0.0
        %5933 = vmatpush.xpose.msra.mxu0 0.0
        %5934 = vmatpush.xpose.msra.mxu0 0.0
        %5935 = vmatpush.xpose.msra.mxu0 0.0
        %5936 = vmatpush.xpose.msra.mxu0 0.0
        %5937 = vmatpush.xpose.msra.mxu0 0.0
        %5938 = vmatpush.xpose.msra.mxu0 0.0
        %5939 = vmatpush.xpose.msra.mxu0 %v5923
        %5940 = vmatpush.xpose.msra.mxu0 %v5920
        %5941 = vmatmul.f32.gmra.mxu0 %v5914
        %v5942 = vpop.f32.mrf.mxu0
        %v5943 = vadd.f32 0.0, %v5942
        %5944 = vmatmul.f32.gmra.mxu0 %v5917
        %v5945 = vpop.f32.mrf.mxu0
        %v5946 = vadd.f32 0.0, %v5945
        %5947 = vdwg.mxu0
        %v5949 = vsel %vm1485, %v5333, 0
        %v5952 = vsel %vm1485, %v5387, 0
        %v5955 = vsel %vm1485, %v5577, 0
        %v5958 = vsel %vm1485, %v5631, 0
        %5960 = vmatpush.xpose.msra.mxu0 0.0
        %5961 = vmatpush.xpose.msra.mxu0 0.0
        %5962 = vmatpush.xpose.msra.mxu0 0.0
        %5963 = vmatpush.xpose.msra.mxu0 0.0
        %5964 = vmatpush.xpose.msra.mxu0 0.0
        %5965 = vmatpush.xpose.msra.mxu0 0.0
        %5966 = vmatpush.xpose.msra.mxu0 0.0
        %5967 = vmatpush.xpose.msra.mxu0 0.0
        %5968 = vmatpush.xpose.msra.mxu0 0.0
        %5969 = vmatpush.xpose.msra.mxu0 0.0
        %5970 = vmatpush.xpose.msra.mxu0 0.0
        %5971 = vmatpush.xpose.msra.mxu0 0.0
        %5972 = vmatpush.xpose.msra.mxu0 0.0
        %5973 = vmatpush.xpose.msra.mxu0 0.0
        %5974 = vmatpush.xpose.msra.mxu0 %v5958
        %5975 = vmatpush.xpose.msra.mxu0 %v5955
        %5976 = vmatmul.f32.gmra.mxu0 %v5949
        %v5977 = vpop.f32.mrf.mxu0
        %v5978 = vadd.f32 0.0, %v5977
        %5979 = vmatmul.f32.gmra.mxu0 %v5952
        %v5980 = vpop.f32.mrf.mxu0
        %v5981 = vadd.f32 0.0, %v5980
        %5982 = vdwg.mxu0
        %v5984 = vsel %vm1485, %v5335, 0
        %v5987 = vsel %vm1485, %v5389, 0
        %v5990 = vsel %vm1485, %v5579, 0
        %v5993 = vsel %vm1485, %v5633, 0
        %5995 = vmatpush.xpose.msra.mxu0 0.0
        %5996 = vmatpush.xpose.msra.mxu0 0.0
        %5997 = vmatpush.xpose.msra.mxu0 0.0
        %5998 = vmatpush.xpose.msra.mxu0 0.0
        %5999 = vmatpush.xpose.msra.mxu0 0.0
        %6000 = vmatpush.xpose.msra.mxu0 0.0
        %6001 = vmatpush.xpose.msra.mxu0 0.0
        %6002 = vmatpush.xpose.msra.mxu0 0.0
        %6003 = vmatpush.xpose.msra.mxu0 0.0
        %6004 = vmatpush.xpose.msra.mxu0 0.0
        %6005 = vmatpush.xpose.msra.mxu0 0.0
        %6006 = vmatpush.xpose.msra.mxu0 0.0
        %6007 = vmatpush.xpose.msra.mxu0 0.0
        %6008 = vmatpush.xpose.msra.mxu0 0.0
        %6009 = vmatpush.xpose.msra.mxu0 %v5993
        %6010 = vmatpush.xpose.msra.mxu0 %v5990
        %6011 = vmatmul.f32.gmra.mxu0 %v5984
        %v6012 = vpop.f32.mrf.mxu0
        %v6013 = vadd.f32 0.0, %v6012
        %6014 = vmatmul.f32.gmra.mxu0 %v5987
        %v6015 = vpop.f32.mrf.mxu0
        %v6016 = vadd.f32 0.0, %v6015
        %6017 = vdwg.mxu0
        %v6018 = vmul.f32 %v5908, 0.35355338
        %v6019 = vmul.f32 %v5911, 0.35355338
        %v6020 = vmul.f32 %v5943, 0.35355338
        %v6021 = vmul.f32 %v5946, 0.35355338
        %v6022 = vmul.f32 %v5978, 0.35355338
        %v6023 = vmul.f32 %v5981, 0.35355338
        %v6024 = vmul.f32 %v6013, 0.35355338
        %v6025 = vmul.f32 %v6016, 0.35355338
        %v6026 = vsel %vm1636, %v6018, -1e+30
        %v6027 = vsel %vm1637, %v6019, -1e+30
        %v6028 = vsel %vm1636, %v6020, -1e+30
        %v6029 = vsel %vm1637, %v6021, -1e+30
        %v6030 = vsel %vm1636, %v6022, -1e+30
        %v6031 = vsel %vm1637, %v6023, -1e+30
        %v6032 = vsel %vm1636, %v6024, -1e+30
        %v6033 = vsel %vm1637, %v6025, -1e+30
        %v6034 = vsel %vm1646, %v6026, -inf
        %6035 = vmax.xlane.f32.xlu0 %v6034
        %v6036 = vpop.xlane.xlu0 %6035
        %v6037 = vsel %vm1646, %v6027, -inf
        %6038 = vmax.xlane.f32.xlu0 %v6037
        %v6039 = vpop.xlane.xlu0 %6038
        %v6040 = vsel %vm1646, %v6028, -inf
        %6041 = vmax.xlane.f32.xlu0 %v6040
        %v6042 = vpop.xlane.xlu0 %6041
        %v6043 = vsel %vm1646, %v6029, -inf
        %6044 = vmax.xlane.f32.xlu0 %v6043
        %v6045 = vpop.xlane.xlu0 %6044
        %v6046 = vsel %vm1646, %v6030, -inf
        %6047 = vmax.xlane.f32.xlu0 %v6046
        %v6048 = vpop.xlane.xlu0 %6047
        %v6049 = vsel %vm1646, %v6031, -inf
        %6050 = vmax.xlane.f32.xlu0 %v6049
        %v6051 = vpop.xlane.xlu0 %6050
        %v6052 = vsel %vm1646, %v6032, -inf
        %6053 = vmax.xlane.f32.xlu0 %v6052
        %v6054 = vpop.xlane.xlu0 %6053
        %v6055 = vsel %vm1646, %v6033, -inf
        %6056 = vmax.xlane.f32.xlu0 %v6055
        %v6057 = vpop.xlane.xlu0 %6056
        %v6058 = vsub.f32 %v6026, %v6036
        %v6059 = vsub.f32 %v6027, %v6039
        %v6060 = vsub.f32 %v6028, %v6042
        %v6061 = vsub.f32 %v6029, %v6045
        %v6062 = vsub.f32 %v6030, %v6048
        %v6063 = vsub.f32 %v6031, %v6051
        %v6064 = vsub.f32 %v6032, %v6054
        %v6065 = vsub.f32 %v6033, %v6057
        %v6066 = vmul.f32 %v6058, 1.442695
        %v6067 = vpow.pop %v6066
        %v6068 = vmul.f32 %v6059, 1.442695
        %v6069 = vpow.pop %v6068
        %v6070 = vmul.f32 %v6060, 1.442695
        %v6071 = vpow.pop %v6070
        %v6072 = vmul.f32 %v6061, 1.442695
        %v6073 = vpow.pop %v6072
        %v6074 = vmul.f32 %v6062, 1.442695
        %v6075 = vpow.pop %v6074
        %v6076 = vmul.f32 %v6063, 1.442695
        %v6077 = vpow.pop %v6076
        %v6078 = vmul.f32 %v6064, 1.442695
        %v6079 = vpow.pop %v6078
        %v6080 = vmul.f32 %v6065, 1.442695
        %v6081 = vpow.pop %v6080
        %v6082 = vsel %vm1646, %v6067, 0.0
        %6083 = vadd.xlane.f32.xlu0 %v6082
        %v6084 = vpop.xlane.xlu0 %6083
        %v6085 = vsel %vm1646, %v6069, 0.0
        %6086 = vadd.xlane.f32.xlu0 %v6085
        %v6087 = vpop.xlane.xlu0 %6086
        %v6088 = vsel %vm1646, %v6071, 0.0
        %6089 = vadd.xlane.f32.xlu0 %v6088
        %v6090 = vpop.xlane.xlu0 %6089
        %v6091 = vsel %vm1646, %v6073, 0.0
        %6092 = vadd.xlane.f32.xlu0 %v6091
        %v6093 = vpop.xlane.xlu0 %6092
        %v6094 = vsel %vm1646, %v6075, 0.0
        %6095 = vadd.xlane.f32.xlu0 %v6094
        %v6096 = vpop.xlane.xlu0 %6095
        %v6097 = vsel %vm1646, %v6077, 0.0
        %6098 = vadd.xlane.f32.xlu0 %v6097
        %v6099 = vpop.xlane.xlu0 %6098
        %v6100 = vsel %vm1646, %v6079, 0.0
        %6101 = vadd.xlane.f32.xlu0 %v6100
        %v6102 = vpop.xlane.xlu0 %6101
        %v6103 = vsel %vm1646, %v6081, 0.0
        %6104 = vadd.xlane.f32.xlu0 %v6103
        %v6105 = vpop.xlane.xlu0 %6104
        %v6106 = vrcp.pop %v6084
        %v6107 = vmul.f32 %v6084, %v6106
        %v6108 = vsub.f32 1.0, %v6107
        %v6109 = vmul.f32 %v6106, %v6108
        %v6110 = vadd.f32 %v6106, %v6109
        %vm6111 = vweird.f32 %v6084
        %vm6112 = vweird.f32 %v6106
        %vm6113 = vmor %vm6111, %vm6112
        %v6114 = vsel %vm6113, %v6106, %v6110
        %v6115 = vand.u32 2147483647, %v6084
        %vm6116 = vcmp.eq.f32.partialorder %v6115, 8.507059e+37
        %v6117 = vand.u32 %v6084, 2147483648
        %v6118 = vor.u32 1.1754944e-38, %v6117
        %v6119 = vsel %vm6116, %v6118, %v6114
        %v6120 = vmul.f32 %v6067, %v6119
        %v6121 = vrcp.pop %v6087
        %v6122 = vmul.f32 %v6087, %v6121
        %v6123 = vsub.f32 1.0, %v6122
        %v6124 = vmul.f32 %v6121, %v6123
        %v6125 = vadd.f32 %v6121, %v6124
        %vm6126 = vweird.f32 %v6087
        %vm6127 = vweird.f32 %v6121
        %vm6128 = vmor %vm6126, %vm6127
        %v6129 = vsel %vm6128, %v6121, %v6125
        %v6130 = vand.u32 2147483647, %v6087
        %vm6131 = vcmp.eq.f32.partialorder %v6130, 8.507059e+37
        %v6132 = vand.u32 %v6087, 2147483648
        %v6133 = vor.u32 1.1754944e-38, %v6132
        %v6134 = vsel %vm6131, %v6133, %v6129
        %v6135 = vmul.f32 %v6069, %v6134
        %v6136 = vrcp.pop %v6090
        %v6137 = vmul.f32 %v6090, %v6136
        %v6138 = vsub.f32 1.0, %v6137
        %v6139 = vmul.f32 %v6136, %v6138
        %v6140 = vadd.f32 %v6136, %v6139
        %vm6141 = vweird.f32 %v6090
        %vm6142 = vweird.f32 %v6136
        %vm6143 = vmor %vm6141, %vm6142
        %v6144 = vsel %vm6143, %v6136, %v6140
        %v6145 = vand.u32 2147483647, %v6090
        %vm6146 = vcmp.eq.f32.partialorder %v6145, 8.507059e+37
        %v6147 = vand.u32 %v6090, 2147483648
        %v6148 = vor.u32 1.1754944e-38, %v6147
        %v6149 = vsel %vm6146, %v6148, %v6144
        %v6150 = vmul.f32 %v6071, %v6149
        %v6151 = vrcp.pop %v6093
        %v6152 = vmul.f32 %v6093, %v6151
        %v6153 = vsub.f32 1.0, %v6152
        %v6154 = vmul.f32 %v6151, %v6153
        %v6155 = vadd.f32 %v6151, %v6154
        %vm6156 = vweird.f32 %v6093
        %vm6157 = vweird.f32 %v6151
        %vm6158 = vmor %vm6156, %vm6157
        %v6159 = vsel %vm6158, %v6151, %v6155
        %v6160 = vand.u32 2147483647, %v6093
        %vm6161 = vcmp.eq.f32.partialorder %v6160, 8.507059e+37
        %v6162 = vand.u32 %v6093, 2147483648
        %v6163 = vor.u32 1.1754944e-38, %v6162
        %v6164 = vsel %vm6161, %v6163, %v6159
        %v6165 = vmul.f32 %v6073, %v6164
        %v6166 = vrcp.pop %v6096
        %v6167 = vmul.f32 %v6096, %v6166
        %v6168 = vsub.f32 1.0, %v6167
        %v6169 = vmul.f32 %v6166, %v6168
        %v6170 = vadd.f32 %v6166, %v6169
        %vm6171 = vweird.f32 %v6096
        %vm6172 = vweird.f32 %v6166
        %vm6173 = vmor %vm6171, %vm6172
        %v6174 = vsel %vm6173, %v6166, %v6170
        %v6175 = vand.u32 2147483647, %v6096
        %vm6176 = vcmp.eq.f32.partialorder %v6175, 8.507059e+37
        %v6177 = vand.u32 %v6096, 2147483648
        %v6178 = vor.u32 1.1754944e-38, %v6177
        %v6179 = vsel %vm6176, %v6178, %v6174
        %v6180 = vmul.f32 %v6075, %v6179
        %v6181 = vrcp.pop %v6099
        %v6182 = vmul.f32 %v6099, %v6181
        %v6183 = vsub.f32 1.0, %v6182
        %v6184 = vmul.f32 %v6181, %v6183
        %v6185 = vadd.f32 %v6181, %v6184
        %vm6186 = vweird.f32 %v6099
        %vm6187 = vweird.f32 %v6181
        %vm6188 = vmor %vm6186, %vm6187
        %v6189 = vsel %vm6188, %v6181, %v6185
        %v6190 = vand.u32 2147483647, %v6099
        %vm6191 = vcmp.eq.f32.partialorder %v6190, 8.507059e+37
        %v6192 = vand.u32 %v6099, 2147483648
        %v6193 = vor.u32 1.1754944e-38, %v6192
        %v6194 = vsel %vm6191, %v6193, %v6189
        %v6195 = vmul.f32 %v6077, %v6194
        %v6196 = vrcp.pop %v6102
        %v6197 = vmul.f32 %v6102, %v6196
        %v6198 = vsub.f32 1.0, %v6197
        %v6199 = vmul.f32 %v6196, %v6198
        %v6200 = vadd.f32 %v6196, %v6199
        %vm6201 = vweird.f32 %v6102
        %vm6202 = vweird.f32 %v6196
        %vm6203 = vmor %vm6201, %vm6202
        %v6204 = vsel %vm6203, %v6196, %v6200
        %v6205 = vand.u32 2147483647, %v6102
        %vm6206 = vcmp.eq.f32.partialorder %v6205, 8.507059e+37
        %v6207 = vand.u32 %v6102, 2147483648
        %v6208 = vor.u32 1.1754944e-38, %v6207
        %v6209 = vsel %vm6206, %v6208, %v6204
        %v6210 = vmul.f32 %v6079, %v6209
        %v6211 = vrcp.pop %v6105
        %v6212 = vmul.f32 %v6105, %v6211
        %v6213 = vsub.f32 1.0, %v6212
        %v6214 = vmul.f32 %v6211, %v6213
        %v6215 = vadd.f32 %v6211, %v6214
        %vm6216 = vweird.f32 %v6105
        %vm6217 = vweird.f32 %v6211
        %vm6218 = vmor %vm6216, %vm6217
        %v6219 = vsel %vm6218, %v6211, %v6215
        %v6220 = vand.u32 2147483647, %v6105
        %vm6221 = vcmp.eq.f32.partialorder %v6220, 8.507059e+37
        %v6222 = vand.u32 %v6105, 2147483648
        %v6223 = vor.u32 1.1754944e-38, %v6222
        %v6224 = vsel %vm6221, %v6223, %v6219
        %v6225 = vmul.f32 %v6081, %v6224
        %v6227 = vsel %vm1646, %v6120, 0
        %v6230 = vsel %vm1646, %v6135, 0
        %6232 = vmatpush.msra.mxu0 0.0
        %6233 = vmatpush.msra.mxu0 0.0
        %6234 = vmatpush.msra.mxu0 0.0
        %6235 = vmatpush.msra.mxu0 0.0
        %6236 = vmatpush.msra.mxu0 0.0
        %6237 = vmatpush.msra.mxu0 0.0
        %6238 = vmatpush.msra.mxu0 0.0
        %6239 = vmatpush.msra.mxu0 0.0
        %6240 = vmatpush.msra.mxu0 0.0
        %6241 = vmatpush.msra.mxu0 0.0
        %6242 = vmatpush.msra.mxu0 0.0
        %6243 = vmatpush.msra.mxu0 0.0
        %6244 = vmatpush.msra.mxu0 0.0
        %6245 = vmatpush.msra.mxu0 0.0
        %6246 = vmatpush.msra.mxu0 %v5871
        %6247 = vmatpush.msra.mxu0 %v5817
        %6248 = vmatmul.f32.gmra.mxu0 %v6227
        %v6249 = vpop.f32.mrf.mxu0
        %v6250 = vadd.f32 0.0, %v6249
        %6251 = vmatmul.f32.gmra.mxu0 %v6230
        %v6252 = vpop.f32.mrf.mxu0
        %v6253 = vadd.f32 0.0, %v6252
        %6254 = vdwg.mxu0
        %v6256 = vsel %vm1646, %v6150, 0
        %v6259 = vsel %vm1646, %v6165, 0
        %6261 = vmatpush.msra.mxu0 0.0
        %6262 = vmatpush.msra.mxu0 0.0
        %6263 = vmatpush.msra.mxu0 0.0
        %6264 = vmatpush.msra.mxu0 0.0
        %6265 = vmatpush.msra.mxu0 0.0
        %6266 = vmatpush.msra.mxu0 0.0
        %6267 = vmatpush.msra.mxu0 0.0
        %6268 = vmatpush.msra.mxu0 0.0
        %6269 = vmatpush.msra.mxu0 0.0
        %6270 = vmatpush.msra.mxu0 0.0
        %6271 = vmatpush.msra.mxu0 0.0
        %6272 = vmatpush.msra.mxu0 0.0
        %6273 = vmatpush.msra.mxu0 0.0
        %6274 = vmatpush.msra.mxu0 0.0
        %6275 = vmatpush.msra.mxu0 %v5873
        %6276 = vmatpush.msra.mxu0 %v5819
        %6277 = vmatmul.f32.gmra.mxu0 %v6256
        %v6278 = vpop.f32.mrf.mxu0
        %v6279 = vadd.f32 0.0, %v6278
        %6280 = vmatmul.f32.gmra.mxu0 %v6259
        %v6281 = vpop.f32.mrf.mxu0
        %v6282 = vadd.f32 0.0, %v6281
        %6283 = vdwg.mxu0
        %v6285 = vsel %vm1646, %v6180, 0
        %v6288 = vsel %vm1646, %v6195, 0
        %6290 = vmatpush.msra.mxu0 0.0
        %6291 = vmatpush.msra.mxu0 0.0
        %6292 = vmatpush.msra.mxu0 0.0
        %6293 = vmatpush.msra.mxu0 0.0
        %6294 = vmatpush.msra.mxu0 0.0
        %6295 = vmatpush.msra.mxu0 0.0
        %6296 = vmatpush.msra.mxu0 0.0
        %6297 = vmatpush.msra.mxu0 0.0
        %6298 = vmatpush.msra.mxu0 0.0
        %6299 = vmatpush.msra.mxu0 0.0
        %6300 = vmatpush.msra.mxu0 0.0
        %6301 = vmatpush.msra.mxu0 0.0
        %6302 = vmatpush.msra.mxu0 0.0
        %6303 = vmatpush.msra.mxu0 0.0
        %6304 = vmatpush.msra.mxu0 %v5875
        %6305 = vmatpush.msra.mxu0 %v5821
        %6306 = vmatmul.f32.gmra.mxu0 %v6285
        %v6307 = vpop.f32.mrf.mxu0
        %v6308 = vadd.f32 0.0, %v6307
        %6309 = vmatmul.f32.gmra.mxu0 %v6288
        %v6310 = vpop.f32.mrf.mxu0
        %v6311 = vadd.f32 0.0, %v6310
        %6312 = vdwg.mxu0
        %v6314 = vsel %vm1646, %v6210, 0
        %v6317 = vsel %vm1646, %v6225, 0
        %6319 = vmatpush.msra.mxu0 0.0
        %6320 = vmatpush.msra.mxu0 0.0
        %6321 = vmatpush.msra.mxu0 0.0
        %6322 = vmatpush.msra.mxu0 0.0
        %6323 = vmatpush.msra.mxu0 0.0
        %6324 = vmatpush.msra.mxu0 0.0
        %6325 = vmatpush.msra.mxu0 0.0
        %6326 = vmatpush.msra.mxu0 0.0
        %6327 = vmatpush.msra.mxu0 0.0
        %6328 = vmatpush.msra.mxu0 0.0
        %6329 = vmatpush.msra.mxu0 0.0
        %6330 = vmatpush.msra.mxu0 0.0
        %6331 = vmatpush.msra.mxu0 0.0
        %6332 = vmatpush.msra.mxu0 0.0
        %6333 = vmatpush.msra.mxu0 %v5877
        %6334 = vmatpush.msra.mxu0 %v5823
        %6335 = vmatmul.f32.gmra.mxu0 %v6314
        %v6336 = vpop.f32.mrf.mxu0
        %v6337 = vadd.f32 0.0, %v6336
        %6338 = vmatmul.f32.gmra.mxu0 %v6317
        %v6339 = vpop.f32.mrf.mxu0
        %v6340 = vadd.f32 0.0, %v6339
        %6341 = vdwg.mxu0
        %v6342 = vrot.slane %v6308, 4
        %v6343 = vsel %vm777, %v6342, %v6250
        %v6344 = vrot.slane %v6250, 4
        %v6345 = vsel %vm777, %v6308, %v6344
        %v6347 = vunpack.c.l.s4 1983009808
        %v6348 = vunpack.c.0.s8 %v6347
        %v6349 = vperm.slane %v6343, %v6348
        %v6351 = vunpack.c.l.s4 1983009808
        %v6352 = vunpack.c.0.s8 %v6351
        %v6353 = vperm.slane %v6345, %v6352
        %v6354 = vrot.slane %v6337, 4
        %v6355 = vsel %vm777, %v6354, %v6279
        %v6356 = vrot.slane %v6279, 4
        %v6357 = vsel %vm777, %v6337, %v6356
        %v6359 = vunpack.c.l.s4 1983009808
        %v6360 = vunpack.c.0.s8 %v6359
        %v6361 = vperm.slane %v6355, %v6360
        %v6363 = vunpack.c.l.s4 1983009808
        %v6364 = vunpack.c.0.s8 %v6363
        %v6365 = vperm.slane %v6357, %v6364
        %v6366 = vrot.slane %v6361, 4
        %v6367 = vsel %vm777, %v6366, %v6349
        %v6368 = vrot.slane %v6349, 4
        %v6369 = vsel %vm777, %v6361, %v6368
        %v6371 = vunpack.c.l.s4 1934713408
        %v6372 = vunpack.c.0.s8 %v6371
        %v6373 = vperm.slane %v6367, %v6372
        %v6375 = vunpack.c.l.s4 1934713408
        %v6376 = vunpack.c.0.s8 %v6375
        %v6377 = vperm.slane %v6369, %v6376
        %v6378 = vrot.slane %v6365, 4
        %v6379 = vsel %vm777, %v6378, %v6353
        %v6380 = vrot.slane %v6353, 4
        %v6381 = vsel %vm777, %v6365, %v6380
        %v6383 = vunpack.c.l.s4 1934713408
        %v6384 = vunpack.c.0.s8 %v6383
        %v6385 = vperm.slane %v6379, %v6384
        %v6387 = vunpack.c.l.s4 1934713408
        %v6388 = vunpack.c.0.s8 %v6387
        %v6389 = vperm.slane %v6381, %v6388
        %v6390 = vrot.slane %v6373, 4
        %v6391 = vsel %vm777, 0.0, %v6390
        %v6392 = vrot.slane %v6377, 4
        %v6393 = vsel %vm777, 0.0, %v6392
        %v6394 = vrot.slane %v6385, 4
        %v6395 = vsel %vm777, 0.0, %v6394
        %v6396 = vrot.slane %v6389, 4
        %v6397 = vsel %vm777, 0.0, %v6396
        %v6398 = vrot.slane %v6311, 4
        %v6399 = vsel %vm777, %v6398, %v6253
        %v6400 = vrot.slane %v6253, 4
        %v6401 = vsel %vm777, %v6311, %v6400
        %v6403 = vunpack.c.l.s4 1983009808
        %v6404 = vunpack.c.0.s8 %v6403
        %v6405 = vperm.slane %v6399, %v6404
        %v6407 = vunpack.c.l.s4 1983009808
        %v6408 = vunpack.c.0.s8 %v6407
        %v6409 = vperm.slane %v6401, %v6408
        %v6410 = vrot.slane %v6340, 4
        %v6411 = vsel %vm777, %v6410, %v6282
        %v6412 = vrot.slane %v6282, 4
        %v6413 = vsel %vm777, %v6340, %v6412
        %v6415 = vunpack.c.l.s4 1983009808
        %v6416 = vunpack.c.0.s8 %v6415
        %v6417 = vperm.slane %v6411, %v6416
        %v6419 = vunpack.c.l.s4 1983009808
        %v6420 = vunpack.c.0.s8 %v6419
        %v6421 = vperm.slane %v6413, %v6420
        %v6422 = vrot.slane %v6417, 4
        %v6423 = vsel %vm777, %v6422, %v6405
        %v6424 = vrot.slane %v6405, 4
        %v6425 = vsel %vm777, %v6417, %v6424
        %v6427 = vunpack.c.l.s4 1934713408
        %v6428 = vunpack.c.0.s8 %v6427
        %v6429 = vperm.slane %v6423, %v6428
        %v6431 = vunpack.c.l.s4 1934713408
        %v6432 = vunpack.c.0.s8 %v6431
        %v6433 = vperm.slane %v6425, %v6432
        %v6434 = vrot.slane %v6421, 4
        %v6435 = vsel %vm777, %v6434, %v6409
        %v6436 = vrot.slane %v6409, 4
        %v6437 = vsel %vm777, %v6421, %v6436
        %v6439 = vunpack.c.l.s4 1934713408
        %v6440 = vunpack.c.0.s8 %v6439
        %v6441 = vperm.slane %v6435, %v6440
        %v6443 = vunpack.c.l.s4 1934713408
        %v6444 = vunpack.c.0.s8 %v6443
        %v6445 = vperm.slane %v6437, %v6444
        %v6446 = vrot.slane %v6429, 4
        %v6447 = vsel %vm777, 0.0, %v6446
        %v6448 = vrot.slane %v6433, 4
        %v6449 = vsel %vm777, 0.0, %v6448
        %v6450 = vrot.slane %v6441, 4
        %v6451 = vsel %vm777, 0.0, %v6450
        %v6452 = vrot.slane %v6445, 4
        %v6453 = vsel %vm777, 0.0, %v6452
        %v6454 = vsel %vm777, %v6392, %v6373
        %v6456 = vunpack.c.l.s4 1983009808
        %v6457 = vunpack.c.0.s8 %v6456
        %v6458 = vperm.slane %v6454, %v6457
        %v6459 = vrot.slane %v6393, 4
        %v6460 = vsel %vm777, %v6459, %v6391
        %v6462 = vunpack.c.l.s4 1983009808
        %v6463 = vunpack.c.0.s8 %v6462
        %v6464 = vperm.slane %v6460, %v6463
        %v6465 = vsel %vm777, %v6396, %v6385
        %v6467 = vunpack.c.l.s4 1983009808
        %v6468 = vunpack.c.0.s8 %v6467
        %v6469 = vperm.slane %v6465, %v6468
        %v6470 = vrot.slane %v6397, 4
        %v6471 = vsel %vm777, %v6470, %v6395
        %v6473 = vunpack.c.l.s4 1983009808
        %v6474 = vunpack.c.0.s8 %v6473
        %v6475 = vperm.slane %v6471, %v6474
        %v6476 = vrot.slane %v6464, 4
        %v6477 = vsel %vm777, %v6476, %v6458
        %v6478 = vrot.slane %v6458, 4
        %v6479 = vsel %vm777, %v6464, %v6478
        %v6481 = vunpack.c.l.s4 1934713408
        %v6482 = vunpack.c.0.s8 %v6481
        %v6483 = vperm.slane %v6477, %v6482
        %v6485 = vunpack.c.l.s4 1934713408
        %v6486 = vunpack.c.0.s8 %v6485
        %v6487 = vperm.slane %v6479, %v6486
        %v6488 = vrot.slane %v6475, 4
        %v6489 = vsel %vm777, %v6488, %v6469
        %v6490 = vrot.slane %v6469, 4
        %v6491 = vsel %vm777, %v6475, %v6490
        %v6493 = vunpack.c.l.s4 1934713408
        %v6494 = vunpack.c.0.s8 %v6493
        %v6495 = vperm.slane %v6489, %v6494
        %v6497 = vunpack.c.l.s4 1934713408
        %v6498 = vunpack.c.0.s8 %v6497
        %v6499 = vperm.slane %v6491, %v6498
        %v6500 = vrot.slane %v6495, 4
        %v6501 = vsel %vm777, %v6500, %v6483
        %v6502 = vrot.slane %v6483, 4
        %v6503 = vsel %vm777, %v6495, %v6502
        %v6504 = vrot.slane %v6499, 4
        %v6505 = vsel %vm777, %v6504, %v6487
        %v6506 = vrot.slane %v6487, 4
        %v6507 = vsel %vm777, %v6499, %v6506
        %v6508 = vsel %vm777, %v6448, %v6429
        %v6510 = vunpack.c.l.s4 1983009808
        %v6511 = vunpack.c.0.s8 %v6510
        %v6512 = vperm.slane %v6508, %v6511
        %v6513 = vrot.slane %v6449, 4
        %v6514 = vsel %vm777, %v6513, %v6447
        %v6516 = vunpack.c.l.s4 1983009808
        %v6517 = vunpack.c.0.s8 %v6516
        %v6518 = vperm.slane %v6514, %v6517
        %v6519 = vsel %vm777, %v6452, %v6441
        %v6521 = vunpack.c.l.s4 1983009808
        %v6522 = vunpack.c.0.s8 %v6521
        %v6523 = vperm.slane %v6519, %v6522
        %v6524 = vrot.slane %v6453, 4
        %v6525 = vsel %vm777, %v6524, %v6451
        %v6527 = vunpack.c.l.s4 1983009808
        %v6528 = vunpack.c.0.s8 %v6527
        %v6529 = vperm.slane %v6525, %v6528
        %v6530 = vrot.slane %v6518, 4
        %v6531 = vsel %vm777, %v6530, %v6512
        %v6532 = vrot.slane %v6512, 4
        %v6533 = vsel %vm777, %v6518, %v6532
        %v6535 = vunpack.c.l.s4 1934713408
        %v6536 = vunpack.c.0.s8 %v6535
        %v6537 = vperm.slane %v6531, %v6536
        %v6539 = vunpack.c.l.s4 1934713408
        %v6540 = vunpack.c.0.s8 %v6539
        %v6541 = vperm.slane %v6533, %v6540
        %v6542 = vrot.slane %v6529, 4
        %v6543 = vsel %vm777, %v6542, %v6523
        %v6544 = vrot.slane %v6523, 4
        %v6545 = vsel %vm777, %v6529, %v6544
        %v6547 = vunpack.c.l.s4 1934713408
        %v6548 = vunpack.c.0.s8 %v6547
        %v6549 = vperm.slane %v6543, %v6548
        %v6551 = vunpack.c.l.s4 1934713408
        %v6552 = vunpack.c.0.s8 %v6551
        %v6553 = vperm.slane %v6545, %v6552
        %v6554 = vrot.slane %v6549, 4
        %v6555 = vsel %vm777, %v6554, %v6537
        %v6556 = vrot.slane %v6537, 4
        %v6557 = vsel %vm777, %v6549, %v6556
        %v6558 = vrot.slane %v6553, 4
        %v6559 = vsel %vm777, %v6558, %v6541
        %v6560 = vrot.slane %v6541, 4
        %v6561 = vsel %vm777, %v6553, %v6560
        %6564 = vrot.lane.b32.xlu0 %v6503, 8
        %v6565 = vpop.permute.xlu0 %6564
        %6566 = vrot.lane.b32.xlu0 %v6557, 8
        %v6567 = vpop.permute.xlu0 %6566
        %6572 = vrot.lane.b32.xlu0 %v6505, 16
        %v6573 = vpop.permute.xlu0 %6572
        %6574 = vrot.lane.b32.xlu0 %v6559, 16
        %v6575 = vpop.permute.xlu0 %6574
        %6580 = vrot.lane.b32.xlu0 %v6507, 24
        %v6581 = vpop.permute.xlu0 %6580
        %6582 = vrot.lane.b32.xlu0 %v6561, 24
        %v6583 = vpop.permute.xlu0 %6582
        %v6586 = vsel %vm1485, %v6501, %v6565
        %v6587 = vsel %vm1485, %v6555, %v6567
        %v6588 = vsel %vm1646, %v6586, %v6573
        %v6589 = vsel %vm1646, %v6587, %v6575
        %v6590 = vsel %vm2203, %v6588, %v6581
        %v6591 = vsel %vm2203, %v6589, %v6583
        %s6592 = scalar_lea.vmem %s3, 32
        %v6593 = vld [vmem:[%s6592] sm:$0xff]
        %v6594 = vld [vmem:[%s6592 + $0x8] sm:$0xff]
        %v6595 = vld [vmem:[%s6592 + $0x10] sm:$0xff]
        %v6596 = vld [vmem:[%s6592 + $0x18] sm:$0xff]
        %s6597 = scalar_lea.vmem %s4, 1
        %v6598 = vld [vmem:[%s6597] sm:$0x1]
        %v6600 = vperm.slane %v6598, 0
        %v6603 = vsel %vm726, %v6590, 0
        %v6606 = vsel %vm726, %v6591, 0
        %6608 = vmatpush.msra.mxu0 0.0
        %6609 = vmatpush.msra.mxu0 0.0
        %6610 = vmatpush.msra.mxu0 0.0
        %6611 = vmatpush.msra.mxu0 0.0
        %6612 = vmatpush.msra.mxu0 0.0
        %6613 = vmatpush.msra.mxu0 0.0
        %6614 = vmatpush.msra.mxu0 0.0
        %6615 = vmatpush.msra.mxu0 0.0
        %6616 = vmatpush.msra.mxu0 0.0
        %6617 = vmatpush.msra.mxu0 0.0
        %6618 = vmatpush.msra.mxu0 0.0
        %6619 = vmatpush.msra.mxu0 0.0
        %6620 = vmatpush.msra.mxu0 %v6596
        %6621 = vmatpush.msra.mxu0 %v6595
        %6622 = vmatpush.msra.mxu0 %v6594
        %6623 = vmatpush.msra.mxu0 %v6593
        %6624 = vmatmul.f32.gmra.mxu0 %v6603
        %v6625 = vpop.f32.mrf.mxu0
        %v6626 = vadd.f32 %v6600, %v6625
        %6627 = vmatmul.f32.gmra.mxu0 %v6606
        %v6628 = vpop.f32.mrf.mxu0
        %v6629 = vadd.f32 %v6600, %v6628
        %6630 = vdwg.mxu0
        %v6631 = vadd.f32 %v5109, %v6626
        %v6632 = vadd.f32 %v5110, %v6629
        %s6633 = scalar_lea.vmem %s11, 1
        %v6634 = vld [vmem:[%s6633] sm:$0x1]
        %s6635 = scalar_lea.vmem %s12, 1
        %v6636 = vld [vmem:[%s6635] sm:$0x1]
        %v6637 = vsel %vm726, %v6631, 0.0
        %6638 = vadd.xlane.f32.xlu0 %v6637
        %v6639 = vpop.xlane.xlu0 %6638
        %v6640 = vsel %vm726, %v6632, 0.0
        %6641 = vadd.xlane.f32.xlu0 %v6640
        %v6642 = vpop.xlane.xlu0 %6641
        %v6643 = vmul.f32 %v6639, %v2259
        %v6644 = vmul.f32 %v6642, %v2259
        %v6645 = vsub.f32 %v6631, %v6643
        %v6646 = vsub.f32 %v6632, %v6644
        %v6647 = vmul.f32 %v6645, %v6645
        %v6648 = vmul.f32 %v6646, %v6646
        %v6649 = vsel %vm726, %v6647, 0.0
        %6650 = vadd.xlane.f32.xlu0 %v6649
        %v6651 = vpop.xlane.xlu0 %6650
        %v6652 = vsel %vm726, %v6648, 0.0
        %6653 = vadd.xlane.f32.xlu0 %v6652
        %v6654 = vpop.xlane.xlu0 %6653
        %v6655 = vmul.f32 %v6651, %v2259
        %v6656 = vmul.f32 %v6654, %v2259
        %v6657 = vadd.f32 %v6655, 1e-05
        %v6658 = vadd.f32 %v6656, 1e-05
        %v6659 = vrsqrt.pop %v6657
        %v6660 = vmul.f32 %v6659, %v6657
        %v6661 = vmul.f32 %v6660, %v6659
        %v6662 = vmul.f32 0.5, %v6661
        %v6663 = vsub.f32 1.5, %v6662
        %v6664 = vmul.f32 %v6659, %v6663
        %vm6665 = vweird.f32 %v6657
        %vm6666 = vweird.f32 %v6659
        %vm6667 = vmor %vm6665, %vm6666
        %v6668 = vsel %vm6667, %v6659, %v6664
        %v6669 = vrsqrt.pop %v6658
        %v6670 = vmul.f32 %v6669, %v6658
        %v6671 = vmul.f32 %v6670, %v6669
        %v6672 = vmul.f32 0.5, %v6671
        %v6673 = vsub.f32 1.5, %v6672
        %v6674 = vmul.f32 %v6669, %v6673
        %vm6675 = vweird.f32 %v6658
        %vm6676 = vweird.f32 %v6669
        %vm6677 = vmor %vm6675, %vm6676
        %v6678 = vsel %vm6677, %v6669, %v6674
        %v6679 = vmul.f32 %v6645, %v6668
        %v6680 = vmul.f32 %v6646, %v6678
        %v6682 = vperm.slane %v6634, 0
        %v6684 = vmul.f32 %v6679, %v6682
        %v6685 = vmul.f32 %v6680, %v6682
        %v6687 = vperm.slane %v6636, 0
        %v6689 = vadd.f32 %v6684, %v6687
        %v6690 = vadd.f32 %v6685, %v6687
        %s6691 = scalar_lea.vmem %s5, 32
        %v6692 = vld [vmem:[%s6691] sm:$0xff]
        %v6693 = vld [vmem:[%s6691 + $0x8] sm:$0xff]
        %v6694 = vld [vmem:[%s6691 + $0x10] sm:$0xff]
        %v6695 = vld [vmem:[%s6691 + $0x18] sm:$0xff]
        %s6696 = scalar_lea.vmem %s6, 1
        %v6697 = vld [vmem:[%s6696] sm:$0x1]
        %v6699 = vperm.slane %v6697, 0
        %v6702 = vsel %vm726, %v6689, 0
        %v6705 = vsel %vm726, %v6690, 0
        %6707 = vmatpush.msra.mxu0 0.0
        %6708 = vmatpush.msra.mxu0 0.0
        %6709 = vmatpush.msra.mxu0 0.0
        %6710 = vmatpush.msra.mxu0 0.0
        %6711 = vmatpush.msra.mxu0 0.0
        %6712 = vmatpush.msra.mxu0 0.0
        %6713 = vmatpush.msra.mxu0 0.0
        %6714 = vmatpush.msra.mxu0 0.0
        %6715 = vmatpush.msra.mxu0 0.0
        %6716 = vmatpush.msra.mxu0 0.0
        %6717 = vmatpush.msra.mxu0 0.0
        %6718 = vmatpush.msra.mxu0 0.0
        %6719 = vmatpush.msra.mxu0 %v6695
        %6720 = vmatpush.msra.mxu0 %v6694
        %6721 = vmatpush.msra.mxu0 %v6693
        %6722 = vmatpush.msra.mxu0 %v6692
        %6723 = vmatmul.f32.gmra.mxu0 %v6702
        %v6724 = vpop.f32.mrf.mxu0
        %v6725 = vadd.f32 %v6699, %v6724
        %6726 = vmatmul.f32.gmra.mxu0 %v6705
        %v6727 = vpop.f32.mrf.mxu0
        %v6728 = vadd.f32 %v6699, %v6727
        %6729 = vdwg.mxu0
        %s6730 = scalar_lea.vmem %s7, 32
        %v6731 = vld [vmem:[%s6730] sm:$0xff]
        %v6732 = vld [vmem:[%s6730 + $0x8] sm:$0xff]
        %v6733 = vld [vmem:[%s6730 + $0x10] sm:$0xff]
        %v6734 = vld [vmem:[%s6730 + $0x18] sm:$0xff]
        %s6735 = scalar_lea.vmem %s8, 1
        %v6736 = vld [vmem:[%s6735] sm:$0x1]
        %v6738 = vperm.slane %v6736, 0
        %6740 = vmatpush.msra.mxu0 0.0
        %6741 = vmatpush.msra.mxu0 0.0
        %6742 = vmatpush.msra.mxu0 0.0
        %6743 = vmatpush.msra.mxu0 0.0
        %6744 = vmatpush.msra.mxu0 0.0
        %6745 = vmatpush.msra.mxu0 0.0
        %6746 = vmatpush.msra.mxu0 0.0
        %6747 = vmatpush.msra.mxu0 0.0
        %6748 = vmatpush.msra.mxu0 0.0
        %6749 = vmatpush.msra.mxu0 0.0
        %6750 = vmatpush.msra.mxu0 0.0
        %6751 = vmatpush.msra.mxu0 0.0
        %6752 = vmatpush.msra.mxu0 %v6734
        %6753 = vmatpush.msra.mxu0 %v6733
        %6754 = vmatpush.msra.mxu0 %v6732
        %6755 = vmatpush.msra.mxu0 %v6731
        %6756 = vmatmul.f32.gmra.mxu0 %v728
        %v6757 = vpop.f32.mrf.mxu0
        %v6758 = vadd.f32 %v6738, %v6757
        %6759 = vmatmul.f32.gmra.mxu0 %v731
        %v6760 = vpop.f32.mrf.mxu0
        %v6761 = vadd.f32 %v6738, %v6760
        %6762 = vdwg.mxu0
        %6765 = vrot.lane.b32.xlu0 %v6725, 120
        %v6766 = vpop.permute.xlu0 %6765
        %6767 = vrot.lane.b32.xlu0 %v6728, 120
        %v6768 = vpop.permute.xlu0 %6767
        %6771 = vrot.lane.b32.xlu0 %v6725, 112
        %v6772 = vpop.permute.xlu0 %6771
        %6773 = vrot.lane.b32.xlu0 %v6728, 112
        %v6774 = vpop.permute.xlu0 %6773
        %6777 = vrot.lane.b32.xlu0 %v6725, 104
        %v6778 = vpop.permute.xlu0 %6777
        %6779 = vrot.lane.b32.xlu0 %v6728, 104
        %v6780 = vpop.permute.xlu0 %6779
        %v6783 = vrot.slane %v6772, 4
        %v6784 = vsel %vm777, %v6783, %v6725
        %v6785 = vrot.slane %v6725, 4
        %v6786 = vsel %vm777, %v6772, %v6785
        %v6788 = vunpack.c.l.s4 1983009808
        %v6789 = vunpack.c.0.s8 %v6788
        %v6790 = vperm.slane %v6784, %v6789
        %v6792 = vunpack.c.l.s4 1983009808
        %v6793 = vunpack.c.0.s8 %v6792
        %v6794 = vperm.slane %v6786, %v6793
        %v6795 = vrot.slane %v6778, 4
        %v6796 = vsel %vm777, %v6795, %v6766
        %v6797 = vrot.slane %v6766, 4
        %v6798 = vsel %vm777, %v6778, %v6797
        %v6800 = vunpack.c.l.s4 1983009808
        %v6801 = vunpack.c.0.s8 %v6800
        %v6802 = vperm.slane %v6796, %v6801
        %v6804 = vunpack.c.l.s4 1983009808
        %v6805 = vunpack.c.0.s8 %v6804
        %v6806 = vperm.slane %v6798, %v6805
        %v6807 = vrot.slane %v6802, 4
        %v6808 = vsel %vm777, %v6807, %v6790
        %v6809 = vrot.slane %v6790, 4
        %v6810 = vsel %vm777, %v6802, %v6809
        %v6812 = vunpack.c.l.s4 1934713408
        %v6813 = vunpack.c.0.s8 %v6812
        %v6814 = vperm.slane %v6808, %v6813
        %v6816 = vunpack.c.l.s4 1934713408
        %v6817 = vunpack.c.0.s8 %v6816
        %v6818 = vperm.slane %v6810, %v6817
        %v6819 = vrot.slane %v6806, 4
        %v6820 = vsel %vm777, %v6819, %v6794
        %v6821 = vrot.slane %v6794, 4
        %v6822 = vsel %vm777, %v6806, %v6821
        %v6824 = vunpack.c.l.s4 1934713408
        %v6825 = vunpack.c.0.s8 %v6824
        %v6826 = vperm.slane %v6820, %v6825
        %v6828 = vunpack.c.l.s4 1934713408
        %v6829 = vunpack.c.0.s8 %v6828
        %v6830 = vperm.slane %v6822, %v6829
        %v6831 = vrot.slane %v6814, 4
        %v6832 = vsel %vm777, 0.0, %v6831
        %v6833 = vrot.slane %v6818, 4
        %v6834 = vsel %vm777, 0.0, %v6833
        %v6835 = vrot.slane %v6826, 4
        %v6836 = vsel %vm777, 0.0, %v6835
        %v6837 = vrot.slane %v6830, 4
        %v6838 = vsel %vm777, 0.0, %v6837
        %v6839 = vrot.slane %v6774, 4
        %v6840 = vsel %vm777, %v6839, %v6728
        %v6841 = vrot.slane %v6728, 4
        %v6842 = vsel %vm777, %v6774, %v6841
        %v6844 = vunpack.c.l.s4 1983009808
        %v6845 = vunpack.c.0.s8 %v6844
        %v6846 = vperm.slane %v6840, %v6845
        %v6848 = vunpack.c.l.s4 1983009808
        %v6849 = vunpack.c.0.s8 %v6848
        %v6850 = vperm.slane %v6842, %v6849
        %v6851 = vrot.slane %v6780, 4
        %v6852 = vsel %vm777, %v6851, %v6768
        %v6853 = vrot.slane %v6768, 4
        %v6854 = vsel %vm777, %v6780, %v6853
        %v6856 = vunpack.c.l.s4 1983009808
        %v6857 = vunpack.c.0.s8 %v6856
        %v6858 = vperm.slane %v6852, %v6857
        %v6860 = vunpack.c.l.s4 1983009808
        %v6861 = vunpack.c.0.s8 %v6860
        %v6862 = vperm.slane %v6854, %v6861
        %v6863 = vrot.slane %v6858, 4
        %v6864 = vsel %vm777, %v6863, %v6846
        %v6865 = vrot.slane %v6846, 4
        %v6866 = vsel %vm777, %v6858, %v6865
        %v6868 = vunpack.c.l.s4 1934713408
        %v6869 = vunpack.c.0.s8 %v6868
        %v6870 = vperm.slane %v6864, %v6869
        %v6872 = vunpack.c.l.s4 1934713408
        %v6873 = vunpack.c.0.s8 %v6872
        %v6874 = vperm.slane %v6866, %v6873
        %v6875 = vrot.slane %v6862, 4
        %v6876 = vsel %vm777, %v6875, %v6850
        %v6877 = vrot.slane %v6850, 4
        %v6878 = vsel %vm777, %v6862, %v6877
        %v6880 = vunpack.c.l.s4 1934713408
        %v6881 = vunpack.c.0.s8 %v6880
        %v6882 = vperm.slane %v6876, %v6881
        %v6884 = vunpack.c.l.s4 1934713408
        %v6885 = vunpack.c.0.s8 %v6884
        %v6886 = vperm.slane %v6878, %v6885
        %v6887 = vrot.slane %v6870, 4
        %v6888 = vsel %vm777, 0.0, %v6887
        %v6889 = vrot.slane %v6874, 4
        %v6890 = vsel %vm777, 0.0, %v6889
        %v6891 = vrot.slane %v6882, 4
        %v6892 = vsel %vm777, 0.0, %v6891
        %v6893 = vrot.slane %v6886, 4
        %v6894 = vsel %vm777, 0.0, %v6893
        %v6895 = vsel %vm777, %v6833, %v6814
        %v6897 = vunpack.c.l.s4 1983009808
        %v6898 = vunpack.c.0.s8 %v6897
        %v6899 = vperm.slane %v6895, %v6898
        %v6900 = vrot.slane %v6834, 4
        %v6901 = vsel %vm777, %v6900, %v6832
        %v6903 = vunpack.c.l.s4 1983009808
        %v6904 = vunpack.c.0.s8 %v6903
        %v6905 = vperm.slane %v6901, %v6904
        %v6906 = vsel %vm777, %v6837, %v6826
        %v6908 = vunpack.c.l.s4 1983009808
        %v6909 = vunpack.c.0.s8 %v6908
        %v6910 = vperm.slane %v6906, %v6909
        %v6911 = vrot.slane %v6838, 4
        %v6912 = vsel %vm777, %v6911, %v6836
        %v6914 = vunpack.c.l.s4 1983009808
        %v6915 = vunpack.c.0.s8 %v6914
        %v6916 = vperm.slane %v6912, %v6915
        %v6917 = vrot.slane %v6905, 4
        %v6918 = vsel %vm777, %v6917, %v6899
        %v6919 = vrot.slane %v6899, 4
        %v6920 = vsel %vm777, %v6905, %v6919
        %v6922 = vunpack.c.l.s4 1934713408
        %v6923 = vunpack.c.0.s8 %v6922
        %v6924 = vperm.slane %v6918, %v6923
        %v6926 = vunpack.c.l.s4 1934713408
        %v6927 = vunpack.c.0.s8 %v6926
        %v6928 = vperm.slane %v6920, %v6927
        %v6929 = vrot.slane %v6916, 4
        %v6930 = vsel %vm777, %v6929, %v6910
        %v6931 = vrot.slane %v6910, 4
        %v6932 = vsel %vm777, %v6916, %v6931
        %v6934 = vunpack.c.l.s4 1934713408
        %v6935 = vunpack.c.0.s8 %v6934
        %v6936 = vperm.slane %v6930, %v6935
        %v6938 = vunpack.c.l.s4 1934713408
        %v6939 = vunpack.c.0.s8 %v6938
        %v6940 = vperm.slane %v6932, %v6939
        %v6941 = vrot.slane %v6936, 4
        %v6942 = vsel %vm777, %v6941, %v6924
        %v6943 = vrot.slane %v6924, 4
        %v6944 = vsel %vm777, %v6936, %v6943
        %v6945 = vrot.slane %v6940, 4
        %v6946 = vsel %vm777, %v6945, %v6928
        %v6947 = vrot.slane %v6928, 4
        %v6948 = vsel %vm777, %v6940, %v6947
        %v6949 = vsel %vm777, %v6889, %v6870
        %v6951 = vunpack.c.l.s4 1983009808
        %v6952 = vunpack.c.0.s8 %v6951
        %v6953 = vperm.slane %v6949, %v6952
        %v6954 = vrot.slane %v6890, 4
        %v6955 = vsel %vm777, %v6954, %v6888
        %v6957 = vunpack.c.l.s4 1983009808
        %v6958 = vunpack.c.0.s8 %v6957
        %v6959 = vperm.slane %v6955, %v6958
        %v6960 = vsel %vm777, %v6893, %v6882
        %v6962 = vunpack.c.l.s4 1983009808
        %v6963 = vunpack.c.0.s8 %v6962
        %v6964 = vperm.slane %v6960, %v6963
        %v6965 = vrot.slane %v6894, 4
        %v6966 = vsel %vm777, %v6965, %v6892
        %v6968 = vunpack.c.l.s4 1983009808
        %v6969 = vunpack.c.0.s8 %v6968
        %v6970 = vperm.slane %v6966, %v6969
        %v6971 = vrot.slane %v6959, 4
        %v6972 = vsel %vm777, %v6971, %v6953
        %v6973 = vrot.slane %v6953, 4
        %v6974 = vsel %vm777, %v6959, %v6973
        %v6976 = vunpack.c.l.s4 1934713408
        %v6977 = vunpack.c.0.s8 %v6976
        %v6978 = vperm.slane %v6972, %v6977
        %v6980 = vunpack.c.l.s4 1934713408
        %v6981 = vunpack.c.0.s8 %v6980
        %v6982 = vperm.slane %v6974, %v6981
        %v6983 = vrot.slane %v6970, 4
        %v6984 = vsel %vm777, %v6983, %v6964
        %v6985 = vrot.slane %v6964, 4
        %v6986 = vsel %vm777, %v6970, %v6985
        %v6988 = vunpack.c.l.s4 1934713408
        %v6989 = vunpack.c.0.s8 %v6988
        %v6990 = vperm.slane %v6984, %v6989
        %v6992 = vunpack.c.l.s4 1934713408
        %v6993 = vunpack.c.0.s8 %v6992
        %v6994 = vperm.slane %v6986, %v6993
        %v6995 = vrot.slane %v6990, 4
        %v6996 = vsel %vm777, %v6995, %v6978
        %v6997 = vrot.slane %v6978, 4
        %v6998 = vsel %vm777, %v6990, %v6997
        %v6999 = vrot.slane %v6994, 4
        %v7000 = vsel %vm777, %v6999, %v6982
        %v7001 = vrot.slane %v6982, 4
        %v7002 = vsel %vm777, %v6994, %v7001
        %7005 = vrot.lane.b32.xlu0 %v6758, 120
        %v7006 = vpop.permute.xlu0 %7005
        %7007 = vrot.lane.b32.xlu0 %v6761, 120
        %v7008 = vpop.permute.xlu0 %7007
        %7011 = vrot.lane.b32.xlu0 %v6758, 112
        %v7012 = vpop.permute.xlu0 %7011
        %7013 = vrot.lane.b32.xlu0 %v6761, 112
        %v7014 = vpop.permute.xlu0 %7013
        %7017 = vrot.lane.b32.xlu0 %v6758, 104
        %v7018 = vpop.permute.xlu0 %7017
        %7019 = vrot.lane.b32.xlu0 %v6761, 104
        %v7020 = vpop.permute.xlu0 %7019
        %v7023 = vrot.slane %v7012, 4
        %v7024 = vsel %vm777, %v7023, %v6758
        %v7025 = vrot.slane %v6758, 4
        %v7026 = vsel %vm777, %v7012, %v7025
        %v7028 = vunpack.c.l.s4 1983009808
        %v7029 = vunpack.c.0.s8 %v7028
        %v7030 = vperm.slane %v7024, %v7029
        %v7032 = vunpack.c.l.s4 1983009808
        %v7033 = vunpack.c.0.s8 %v7032
        %v7034 = vperm.slane %v7026, %v7033
        %v7035 = vrot.slane %v7018, 4
        %v7036 = vsel %vm777, %v7035, %v7006
        %v7037 = vrot.slane %v7006, 4
        %v7038 = vsel %vm777, %v7018, %v7037
        %v7040 = vunpack.c.l.s4 1983009808
        %v7041 = vunpack.c.0.s8 %v7040
        %v7042 = vperm.slane %v7036, %v7041
        %v7044 = vunpack.c.l.s4 1983009808
        %v7045 = vunpack.c.0.s8 %v7044
        %v7046 = vperm.slane %v7038, %v7045
        %v7047 = vrot.slane %v7042, 4
        %v7048 = vsel %vm777, %v7047, %v7030
        %v7049 = vrot.slane %v7030, 4
        %v7050 = vsel %vm777, %v7042, %v7049
        %v7052 = vunpack.c.l.s4 1934713408
        %v7053 = vunpack.c.0.s8 %v7052
        %v7054 = vperm.slane %v7048, %v7053
        %v7056 = vunpack.c.l.s4 1934713408
        %v7057 = vunpack.c.0.s8 %v7056
        %v7058 = vperm.slane %v7050, %v7057
        %v7059 = vrot.slane %v7046, 4
        %v7060 = vsel %vm777, %v7059, %v7034
        %v7061 = vrot.slane %v7034, 4
        %v7062 = vsel %vm777, %v7046, %v7061
        %v7064 = vunpack.c.l.s4 1934713408
        %v7065 = vunpack.c.0.s8 %v7064
        %v7066 = vperm.slane %v7060, %v7065
        %v7068 = vunpack.c.l.s4 1934713408
        %v7069 = vunpack.c.0.s8 %v7068
        %v7070 = vperm.slane %v7062, %v7069
        %v7071 = vrot.slane %v7054, 4
        %v7072 = vsel %vm777, 0.0, %v7071
        %v7073 = vrot.slane %v7058, 4
        %v7074 = vsel %vm777, 0.0, %v7073
        %v7075 = vrot.slane %v7066, 4
        %v7076 = vsel %vm777, 0.0, %v7075
        %v7077 = vrot.slane %v7070, 4
        %v7078 = vsel %vm777, 0.0, %v7077
        %v7079 = vrot.slane %v7014, 4
        %v7080 = vsel %vm777, %v7079, %v6761
        %v7081 = vrot.slane %v6761, 4
        %v7082 = vsel %vm777, %v7014, %v7081
        %v7084 = vunpack.c.l.s4 1983009808
        %v7085 = vunpack.c.0.s8 %v7084
        %v7086 = vperm.slane %v7080, %v7085
        %v7088 = vunpack.c.l.s4 1983009808
        %v7089 = vunpack.c.0.s8 %v7088
        %v7090 = vperm.slane %v7082, %v7089
        %v7091 = vrot.slane %v7020, 4
        %v7092 = vsel %vm777, %v7091, %v7008
        %v7093 = vrot.slane %v7008, 4
        %v7094 = vsel %vm777, %v7020, %v7093
        %v7096 = vunpack.c.l.s4 1983009808
        %v7097 = vunpack.c.0.s8 %v7096
        %v7098 = vperm.slane %v7092, %v7097
        %v7100 = vunpack.c.l.s4 1983009808
        %v7101 = vunpack.c.0.s8 %v7100
        %v7102 = vperm.slane %v7094, %v7101
        %v7103 = vrot.slane %v7098, 4
        %v7104 = vsel %vm777, %v7103, %v7086
        %v7105 = vrot.slane %v7086, 4
        %v7106 = vsel %vm777, %v7098, %v7105
        %v7108 = vunpack.c.l.s4 1934713408
        %v7109 = vunpack.c.0.s8 %v7108
        %v7110 = vperm.slane %v7104, %v7109
        %v7112 = vunpack.c.l.s4 1934713408
        %v7113 = vunpack.c.0.s8 %v7112
        %v7114 = vperm.slane %v7106, %v7113
        %v7115 = vrot.slane %v7102, 4
        %v7116 = vsel %vm777, %v7115, %v7090
        %v7117 = vrot.slane %v7090, 4
        %v7118 = vsel %vm777, %v7102, %v7117
        %v7120 = vunpack.c.l.s4 1934713408
        %v7121 = vunpack.c.0.s8 %v7120
        %v7122 = vperm.slane %v7116, %v7121
        %v7124 = vunpack.c.l.s4 1934713408
        %v7125 = vunpack.c.0.s8 %v7124
        %v7126 = vperm.slane %v7118, %v7125
        %v7127 = vrot.slane %v7110, 4
        %v7128 = vsel %vm777, 0.0, %v7127
        %v7129 = vrot.slane %v7114, 4
        %v7130 = vsel %vm777, 0.0, %v7129
        %v7131 = vrot.slane %v7122, 4
        %v7132 = vsel %vm777, 0.0, %v7131
        %v7133 = vrot.slane %v7126, 4
        %v7134 = vsel %vm777, 0.0, %v7133
        %v7135 = vsel %vm777, %v7073, %v7054
        %v7137 = vunpack.c.l.s4 1983009808
        %v7138 = vunpack.c.0.s8 %v7137
        %v7139 = vperm.slane %v7135, %v7138
        %v7140 = vrot.slane %v7074, 4
        %v7141 = vsel %vm777, %v7140, %v7072
        %v7143 = vunpack.c.l.s4 1983009808
        %v7144 = vunpack.c.0.s8 %v7143
        %v7145 = vperm.slane %v7141, %v7144
        %v7146 = vsel %vm777, %v7077, %v7066
        %v7148 = vunpack.c.l.s4 1983009808
        %v7149 = vunpack.c.0.s8 %v7148
        %v7150 = vperm.slane %v7146, %v7149
        %v7151 = vrot.slane %v7078, 4
        %v7152 = vsel %vm777, %v7151, %v7076
        %v7154 = vunpack.c.l.s4 1983009808
        %v7155 = vunpack.c.0.s8 %v7154
        %v7156 = vperm.slane %v7152, %v7155
        %v7157 = vrot.slane %v7145, 4
        %v7158 = vsel %vm777, %v7157, %v7139
        %v7159 = vrot.slane %v7139, 4
        %v7160 = vsel %vm777, %v7145, %v7159
        %v7162 = vunpack.c.l.s4 1934713408
        %v7163 = vunpack.c.0.s8 %v7162
        %v7164 = vperm.slane %v7158, %v7163
        %v7166 = vunpack.c.l.s4 1934713408
        %v7167 = vunpack.c.0.s8 %v7166
        %v7168 = vperm.slane %v7160, %v7167
        %v7169 = vrot.slane %v7156, 4
        %v7170 = vsel %vm777, %v7169, %v7150
        %v7171 = vrot.slane %v7150, 4
        %v7172 = vsel %vm777, %v7156, %v7171
        %v7174 = vunpack.c.l.s4 1934713408
        %v7175 = vunpack.c.0.s8 %v7174
        %v7176 = vperm.slane %v7170, %v7175
        %v7178 = vunpack.c.l.s4 1934713408
        %v7179 = vunpack.c.0.s8 %v7178
        %v7180 = vperm.slane %v7172, %v7179
        %v7181 = vrot.slane %v7176, 4
        %v7182 = vsel %vm777, %v7181, %v7164
        %v7183 = vrot.slane %v7164, 4
        %v7184 = vsel %vm777, %v7176, %v7183
        %v7185 = vrot.slane %v7180, 4
        %v7186 = vsel %vm777, %v7185, %v7168
        %v7187 = vrot.slane %v7168, 4
        %v7188 = vsel %vm777, %v7180, %v7187
        %v7189 = vsel %vm777, %v7129, %v7110
        %v7191 = vunpack.c.l.s4 1983009808
        %v7192 = vunpack.c.0.s8 %v7191
        %v7193 = vperm.slane %v7189, %v7192
        %v7194 = vrot.slane %v7130, 4
        %v7195 = vsel %vm777, %v7194, %v7128
        %v7197 = vunpack.c.l.s4 1983009808
        %v7198 = vunpack.c.0.s8 %v7197
        %v7199 = vperm.slane %v7195, %v7198
        %v7200 = vsel %vm777, %v7133, %v7122
        %v7202 = vunpack.c.l.s4 1983009808
        %v7203 = vunpack.c.0.s8 %v7202
        %v7204 = vperm.slane %v7200, %v7203
        %v7205 = vrot.slane %v7134, 4
        %v7206 = vsel %vm777, %v7205, %v7132
        %v7208 = vunpack.c.l.s4 1983009808
        %v7209 = vunpack.c.0.s8 %v7208
        %v7210 = vperm.slane %v7206, %v7209
        %v7211 = vrot.slane %v7199, 4
        %v7212 = vsel %vm777, %v7211, %v7193
        %v7213 = vrot.slane %v7193, 4
        %v7214 = vsel %vm777, %v7199, %v7213
        %v7216 = vunpack.c.l.s4 1934713408
        %v7217 = vunpack.c.0.s8 %v7216
        %v7218 = vperm.slane %v7212, %v7217
        %v7220 = vunpack.c.l.s4 1934713408
        %v7221 = vunpack.c.0.s8 %v7220
        %v7222 = vperm.slane %v7214, %v7221
        %v7223 = vrot.slane %v7210, 4
        %v7224 = vsel %vm777, %v7223, %v7204
        %v7225 = vrot.slane %v7204, 4
        %v7226 = vsel %vm777, %v7210, %v7225
        %v7228 = vunpack.c.l.s4 1934713408
        %v7229 = vunpack.c.0.s8 %v7228
        %v7230 = vperm.slane %v7224, %v7229
        %v7232 = vunpack.c.l.s4 1934713408
        %v7233 = vunpack.c.0.s8 %v7232
        %v7234 = vperm.slane %v7226, %v7233
        %v7235 = vrot.slane %v7230, 4
        %v7236 = vsel %vm777, %v7235, %v7218
        %v7237 = vrot.slane %v7218, 4
        %v7238 = vsel %vm777, %v7230, %v7237
        %v7239 = vrot.slane %v7234, 4
        %v7240 = vsel %vm777, %v7239, %v7222
        %v7241 = vrot.slane %v7222, 4
        %v7242 = vsel %vm777, %v7234, %v7241
        %7243 = vrot.lane.b32.xlu0 %v6758, 96
        %v7244 = vpop.permute.xlu0 %7243
        %7245 = vrot.lane.b32.xlu0 %v6761, 96
        %v7246 = vpop.permute.xlu0 %7245
        %7247 = vrot.lane.b32.xlu0 %v7006, 96
        %v7248 = vpop.permute.xlu0 %7247
        %7249 = vrot.lane.b32.xlu0 %v7008, 96
        %v7250 = vpop.permute.xlu0 %7249
        %7251 = vrot.lane.b32.xlu0 %v7012, 96
        %v7252 = vpop.permute.xlu0 %7251
        %7253 = vrot.lane.b32.xlu0 %v7014, 96
        %v7254 = vpop.permute.xlu0 %7253
        %7255 = vrot.lane.b32.xlu0 %v7018, 96
        %v7256 = vpop.permute.xlu0 %7255
        %7257 = vrot.lane.b32.xlu0 %v7020, 96
        %v7258 = vpop.permute.xlu0 %7257
        %v7267 = vrot.slane %v7252, 4
        %v7268 = vsel %vm777, %v7267, %v7244
        %v7269 = vrot.slane %v7244, 4
        %v7270 = vsel %vm777, %v7252, %v7269
        %v7272 = vunpack.c.l.s4 1983009808
        %v7273 = vunpack.c.0.s8 %v7272
        %v7274 = vperm.slane %v7268, %v7273
        %v7276 = vunpack.c.l.s4 1983009808
        %v7277 = vunpack.c.0.s8 %v7276
        %v7278 = vperm.slane %v7270, %v7277
        %v7279 = vrot.slane %v7256, 4
        %v7280 = vsel %vm777, %v7279, %v7248
        %v7281 = vrot.slane %v7248, 4
        %v7282 = vsel %vm777, %v7256, %v7281
        %v7284 = vunpack.c.l.s4 1983009808
        %v7285 = vunpack.c.0.s8 %v7284
        %v7286 = vperm.slane %v7280, %v7285
        %v7288 = vunpack.c.l.s4 1983009808
        %v7289 = vunpack.c.0.s8 %v7288
        %v7290 = vperm.slane %v7282, %v7289
        %v7291 = vrot.slane %v7286, 4
        %v7292 = vsel %vm777, %v7291, %v7274
        %v7293 = vrot.slane %v7274, 4
        %v7294 = vsel %vm777, %v7286, %v7293
        %v7296 = vunpack.c.l.s4 1934713408
        %v7297 = vunpack.c.0.s8 %v7296
        %v7298 = vperm.slane %v7292, %v7297
        %v7300 = vunpack.c.l.s4 1934713408
        %v7301 = vunpack.c.0.s8 %v7300
        %v7302 = vperm.slane %v7294, %v7301
        %v7303 = vrot.slane %v7290, 4
        %v7304 = vsel %vm777, %v7303, %v7278
        %v7305 = vrot.slane %v7278, 4
        %v7306 = vsel %vm777, %v7290, %v7305
        %v7308 = vunpack.c.l.s4 1934713408
        %v7309 = vunpack.c.0.s8 %v7308
        %v7310 = vperm.slane %v7304, %v7309
        %v7312 = vunpack.c.l.s4 1934713408
        %v7313 = vunpack.c.0.s8 %v7312
        %v7314 = vperm.slane %v7306, %v7313
        %v7315 = vrot.slane %v7298, 4
        %v7316 = vsel %vm777, 0.0, %v7315
        %v7317 = vrot.slane %v7302, 4
        %v7318 = vsel %vm777, 0.0, %v7317
        %v7319 = vrot.slane %v7310, 4
        %v7320 = vsel %vm777, 0.0, %v7319
        %v7321 = vrot.slane %v7314, 4
        %v7322 = vsel %vm777, 0.0, %v7321
        %v7323 = vrot.slane %v7254, 4
        %v7324 = vsel %vm777, %v7323, %v7246
        %v7325 = vrot.slane %v7246, 4
        %v7326 = vsel %vm777, %v7254, %v7325
        %v7328 = vunpack.c.l.s4 1983009808
        %v7329 = vunpack.c.0.s8 %v7328
        %v7330 = vperm.slane %v7324, %v7329
        %v7332 = vunpack.c.l.s4 1983009808
        %v7333 = vunpack.c.0.s8 %v7332
        %v7334 = vperm.slane %v7326, %v7333
        %v7335 = vrot.slane %v7258, 4
        %v7336 = vsel %vm777, %v7335, %v7250
        %v7337 = vrot.slane %v7250, 4
        %v7338 = vsel %vm777, %v7258, %v7337
        %v7340 = vunpack.c.l.s4 1983009808
        %v7341 = vunpack.c.0.s8 %v7340
        %v7342 = vperm.slane %v7336, %v7341
        %v7344 = vunpack.c.l.s4 1983009808
        %v7345 = vunpack.c.0.s8 %v7344
        %v7346 = vperm.slane %v7338, %v7345
        %v7347 = vrot.slane %v7342, 4
        %v7348 = vsel %vm777, %v7347, %v7330
        %v7349 = vrot.slane %v7330, 4
        %v7350 = vsel %vm777, %v7342, %v7349
        %v7352 = vunpack.c.l.s4 1934713408
        %v7353 = vunpack.c.0.s8 %v7352
        %v7354 = vperm.slane %v7348, %v7353
        %v7356 = vunpack.c.l.s4 1934713408
        %v7357 = vunpack.c.0.s8 %v7356
        %v7358 = vperm.slane %v7350, %v7357
        %v7359 = vrot.slane %v7346, 4
        %v7360 = vsel %vm777, %v7359, %v7334
        %v7361 = vrot.slane %v7334, 4
        %v7362 = vsel %vm777, %v7346, %v7361
        %v7364 = vunpack.c.l.s4 1934713408
        %v7365 = vunpack.c.0.s8 %v7364
        %v7366 = vperm.slane %v7360, %v7365
        %v7368 = vunpack.c.l.s4 1934713408
        %v7369 = vunpack.c.0.s8 %v7368
        %v7370 = vperm.slane %v7362, %v7369
        %v7371 = vrot.slane %v7354, 4
        %v7372 = vsel %vm777, 0.0, %v7371
        %v7373 = vrot.slane %v7358, 4
        %v7374 = vsel %vm777, 0.0, %v7373
        %v7375 = vrot.slane %v7366, 4
        %v7376 = vsel %vm777, 0.0, %v7375
        %v7377 = vrot.slane %v7370, 4
        %v7378 = vsel %vm777, 0.0, %v7377
        %v7379 = vsel %vm777, %v7317, %v7298
        %v7381 = vunpack.c.l.s4 1983009808
        %v7382 = vunpack.c.0.s8 %v7381
        %v7383 = vperm.slane %v7379, %v7382
        %v7384 = vrot.slane %v7318, 4
        %v7385 = vsel %vm777, %v7384, %v7316
        %v7387 = vunpack.c.l.s4 1983009808
        %v7388 = vunpack.c.0.s8 %v7387
        %v7389 = vperm.slane %v7385, %v7388
        %v7390 = vsel %vm777, %v7321, %v7310
        %v7392 = vunpack.c.l.s4 1983009808
        %v7393 = vunpack.c.0.s8 %v7392
        %v7394 = vperm.slane %v7390, %v7393
        %v7395 = vrot.slane %v7322, 4
        %v7396 = vsel %vm777, %v7395, %v7320
        %v7398 = vunpack.c.l.s4 1983009808
        %v7399 = vunpack.c.0.s8 %v7398
        %v7400 = vperm.slane %v7396, %v7399
        %v7401 = vrot.slane %v7389, 4
        %v7402 = vsel %vm777, %v7401, %v7383
        %v7403 = vrot.slane %v7383, 4
        %v7404 = vsel %vm777, %v7389, %v7403
        %v7406 = vunpack.c.l.s4 1934713408
        %v7407 = vunpack.c.0.s8 %v7406
        %v7408 = vperm.slane %v7402, %v7407
        %v7410 = vunpack.c.l.s4 1934713408
        %v7411 = vunpack.c.0.s8 %v7410
        %v7412 = vperm.slane %v7404, %v7411
        %v7413 = vrot.slane %v7400, 4
        %v7414 = vsel %vm777, %v7413, %v7394
        %v7415 = vrot.slane %v7394, 4
        %v7416 = vsel %vm777, %v7400, %v7415
        %v7418 = vunpack.c.l.s4 1934713408
        %v7419 = vunpack.c.0.s8 %v7418
        %v7420 = vperm.slane %v7414, %v7419
        %v7422 = vunpack.c.l.s4 1934713408
        %v7423 = vunpack.c.0.s8 %v7422
        %v7424 = vperm.slane %v7416, %v7423
        %v7425 = vrot.slane %v7420, 4
        %v7426 = vsel %vm777, %v7425, %v7408
        %v7427 = vrot.slane %v7408, 4
        %v7428 = vsel %vm777, %v7420, %v7427
        %v7429 = vrot.slane %v7424, 4
        %v7430 = vsel %vm777, %v7429, %v7412
        %v7431 = vrot.slane %v7412, 4
        %v7432 = vsel %vm777, %v7424, %v7431
        %v7433 = vsel %vm777, %v7373, %v7354
        %v7435 = vunpack.c.l.s4 1983009808
        %v7436 = vunpack.c.0.s8 %v7435
        %v7437 = vperm.slane %v7433, %v7436
        %v7438 = vrot.slane %v7374, 4
        %v7439 = vsel %vm777, %v7438, %v7372
        %v7441 = vunpack.c.l.s4 1983009808
        %v7442 = vunpack.c.0.s8 %v7441
        %v7443 = vperm.slane %v7439, %v7442
        %v7444 = vsel %vm777, %v7377, %v7366
        %v7446 = vunpack.c.l.s4 1983009808
        %v7447 = vunpack.c.0.s8 %v7446
        %v7448 = vperm.slane %v7444, %v7447
        %v7449 = vrot.slane %v7378, 4
        %v7450 = vsel %vm777, %v7449, %v7376
        %v7452 = vunpack.c.l.s4 1983009808
        %v7453 = vunpack.c.0.s8 %v7452
        %v7454 = vperm.slane %v7450, %v7453
        %v7455 = vrot.slane %v7443, 4
        %v7456 = vsel %vm777, %v7455, %v7437
        %v7457 = vrot.slane %v7437, 4
        %v7458 = vsel %vm777, %v7443, %v7457
        %v7460 = vunpack.c.l.s4 1934713408
        %v7461 = vunpack.c.0.s8 %v7460
        %v7462 = vperm.slane %v7456, %v7461
        %v7464 = vunpack.c.l.s4 1934713408
        %v7465 = vunpack.c.0.s8 %v7464
        %v7466 = vperm.slane %v7458, %v7465
        %v7467 = vrot.slane %v7454, 4
        %v7468 = vsel %vm777, %v7467, %v7448
        %v7469 = vrot.slane %v7448, 4
        %v7470 = vsel %vm777, %v7454, %v7469
        %v7472 = vunpack.c.l.s4 1934713408
        %v7473 = vunpack.c.0.s8 %v7472
        %v7474 = vperm.slane %v7468, %v7473
        %v7476 = vunpack.c.l.s4 1934713408
        %v7477 = vunpack.c.0.s8 %v7476
        %v7478 = vperm.slane %v7470, %v7477
        %v7479 = vrot.slane %v7474, 4
        %v7480 = vsel %vm777, %v7479, %v7462
        %v7481 = vrot.slane %v7462, 4
        %v7482 = vsel %vm777, %v7474, %v7481
        %v7483 = vrot.slane %v7478, 4
        %v7484 = vsel %vm777, %v7483, %v7466
        %v7485 = vrot.slane %v7466, 4
        %v7486 = vsel %vm777, %v7478, %v7485
        %v7488 = vsel %vm1485, %v6942, 0
        %v7491 = vsel %vm1485, %v6996, 0
        %v7494 = vsel %vm1485, %v7182, 0
        %v7497 = vsel %vm1485, %v7236, 0
        %7499 = vmatpush.xpose.msra.mxu0 0.0
        %7500 = vmatpush.xpose.msra.mxu0 0.0
        %7501 = vmatpush.xpose.msra.mxu0 0.0
        %7502 = vmatpush.xpose.msra.mxu0 0.0
        %7503 = vmatpush.xpose.msra.mxu0 0.0
        %7504 = vmatpush.xpose.msra.mxu0 0.0
        %7505 = vmatpush.xpose.msra.mxu0 0.0
        %7506 = vmatpush.xpose.msra.mxu0 0.0
        %7507 = vmatpush.xpose.msra.mxu0 0.0
        %7508 = vmatpush.xpose.msra.mxu0 0.0
        %7509 = vmatpush.xpose.msra.mxu0 0.0
        %7510 = vmatpush.xpose.msra.mxu0 0.0
        %7511 = vmatpush.xpose.msra.mxu0 0.0
        %7512 = vmatpush.xpose.msra.mxu0 0.0
        %7513 = vmatpush.xpose.msra.mxu0 %v7497
        %7514 = vmatpush.xpose.msra.mxu0 %v7494
        %7515 = vmatmul.f32.gmra.mxu0 %v7488
        %v7516 = vpop.f32.mrf.mxu0
        %v7517 = vadd.f32 0.0, %v7516
        %7518 = vmatmul.f32.gmra.mxu0 %v7491
        %v7519 = vpop.f32.mrf.mxu0
        %v7520 = vadd.f32 0.0, %v7519
        %7521 = vdwg.mxu0
        %v7523 = vsel %vm1485, %v6944, 0
        %v7526 = vsel %vm1485, %v6998, 0
        %v7529 = vsel %vm1485, %v7184, 0
        %v7532 = vsel %vm1485, %v7238, 0
        %7534 = vmatpush.xpose.msra.mxu0 0.0
        %7535 = vmatpush.xpose.msra.mxu0 0.0
        %7536 = vmatpush.xpose.msra.mxu0 0.0
        %7537 = vmatpush.xpose.msra.mxu0 0.0
        %7538 = vmatpush.xpose.msra.mxu0 0.0
        %7539 = vmatpush.xpose.msra.mxu0 0.0
        %7540 = vmatpush.xpose.msra.mxu0 0.0
        %7541 = vmatpush.xpose.msra.mxu0 0.0
        %7542 = vmatpush.xpose.msra.mxu0 0.0
        %7543 = vmatpush.xpose.msra.mxu0 0.0
        %7544 = vmatpush.xpose.msra.mxu0 0.0
        %7545 = vmatpush.xpose.msra.mxu0 0.0
        %7546 = vmatpush.xpose.msra.mxu0 0.0
        %7547 = vmatpush.xpose.msra.mxu0 0.0
        %7548 = vmatpush.xpose.msra.mxu0 %v7532
        %7549 = vmatpush.xpose.msra.mxu0 %v7529
        %7550 = vmatmul.f32.gmra.mxu0 %v7523
        %v7551 = vpop.f32.mrf.mxu0
        %v7552 = vadd.f32 0.0, %v7551
        %7553 = vmatmul.f32.gmra.mxu0 %v7526
        %v7554 = vpop.f32.mrf.mxu0
        %v7555 = vadd.f32 0.0, %v7554
        %7556 = vdwg.mxu0
        %v7558 = vsel %vm1485, %v6946, 0
        %v7561 = vsel %vm1485, %v7000, 0
        %v7564 = vsel %vm1485, %v7186, 0
        %v7567 = vsel %vm1485, %v7240, 0
        %7569 = vmatpush.xpose.msra.mxu0 0.0
        %7570 = vmatpush.xpose.msra.mxu0 0.0
        %7571 = vmatpush.xpose.msra.mxu0 0.0
        %7572 = vmatpush.xpose.msra.mxu0 0.0
        %7573 = vmatpush.xpose.msra.mxu0 0.0
        %7574 = vmatpush.xpose.msra.mxu0 0.0
        %7575 = vmatpush.xpose.msra.mxu0 0.0
        %7576 = vmatpush.xpose.msra.mxu0 0.0
        %7577 = vmatpush.xpose.msra.mxu0 0.0
        %7578 = vmatpush.xpose.msra.mxu0 0.0
        %7579 = vmatpush.xpose.msra.mxu0 0.0
        %7580 = vmatpush.xpose.msra.mxu0 0.0
        %7581 = vmatpush.xpose.msra.mxu0 0.0
        %7582 = vmatpush.xpose.msra.mxu0 0.0
        %7583 = vmatpush.xpose.msra.mxu0 %v7567
        %7584 = vmatpush.xpose.msra.mxu0 %v7564
        %7585 = vmatmul.f32.gmra.mxu0 %v7558
        %v7586 = vpop.f32.mrf.mxu0
        %v7587 = vadd.f32 0.0, %v7586
        %7588 = vmatmul.f32.gmra.mxu0 %v7561
        %v7589 = vpop.f32.mrf.mxu0
        %v7590 = vadd.f32 0.0, %v7589
        %7591 = vdwg.mxu0
        %v7593 = vsel %vm1485, %v6948, 0
        %v7596 = vsel %vm1485, %v7002, 0
        %v7599 = vsel %vm1485, %v7188, 0
        %v7602 = vsel %vm1485, %v7242, 0
        %7604 = vmatpush.xpose.msra.mxu0 0.0
        %7605 = vmatpush.xpose.msra.mxu0 0.0
        %7606 = vmatpush.xpose.msra.mxu0 0.0
        %7607 = vmatpush.xpose.msra.mxu0 0.0
        %7608 = vmatpush.xpose.msra.mxu0 0.0
        %7609 = vmatpush.xpose.msra.mxu0 0.0
        %7610 = vmatpush.xpose.msra.mxu0 0.0
        %7611 = vmatpush.xpose.msra.mxu0 0.0
        %7612 = vmatpush.xpose.msra.mxu0 0.0
        %7613 = vmatpush.xpose.msra.mxu0 0.0
        %7614 = vmatpush.xpose.msra.mxu0 0.0
        %7615 = vmatpush.xpose.msra.mxu0 0.0
        %7616 = vmatpush.xpose.msra.mxu0 0.0
        %7617 = vmatpush.xpose.msra.mxu0 0.0
        %7618 = vmatpush.xpose.msra.mxu0 %v7602
        %7619 = vmatpush.xpose.msra.mxu0 %v7599
        %7620 = vmatmul.f32.gmra.mxu0 %v7593
        %v7621 = vpop.f32.mrf.mxu0
        %v7622 = vadd.f32 0.0, %v7621
        %7623 = vmatmul.f32.gmra.mxu0 %v7596
        %v7624 = vpop.f32.mrf.mxu0
        %v7625 = vadd.f32 0.0, %v7624
        %7626 = vdwg.mxu0
        %v7627 = vmul.f32 %v7517, 0.35355338
        %v7628 = vmul.f32 %v7520, 0.35355338
        %v7629 = vmul.f32 %v7552, 0.35355338
        %v7630 = vmul.f32 %v7555, 0.35355338
        %v7631 = vmul.f32 %v7587, 0.35355338
        %v7632 = vmul.f32 %v7590, 0.35355338
        %v7633 = vmul.f32 %v7622, 0.35355338
        %v7634 = vmul.f32 %v7625, 0.35355338
        %v7635 = vsel %vm1636, %v7627, -1e+30
        %v7636 = vsel %vm1637, %v7628, -1e+30
        %v7637 = vsel %vm1636, %v7629, -1e+30
        %v7638 = vsel %vm1637, %v7630, -1e+30
        %v7639 = vsel %vm1636, %v7631, -1e+30
        %v7640 = vsel %vm1637, %v7632, -1e+30
        %v7641 = vsel %vm1636, %v7633, -1e+30
        %v7642 = vsel %vm1637, %v7634, -1e+30
        %v7643 = vsel %vm1646, %v7635, -inf
        %7644 = vmax.xlane.f32.xlu0 %v7643
        %v7645 = vpop.xlane.xlu0 %7644
        %v7646 = vsel %vm1646, %v7636, -inf
        %7647 = vmax.xlane.f32.xlu0 %v7646
        %v7648 = vpop.xlane.xlu0 %7647
        %v7649 = vsel %vm1646, %v7637, -inf
        %7650 = vmax.xlane.f32.xlu0 %v7649
        %v7651 = vpop.xlane.xlu0 %7650
        %v7652 = vsel %vm1646, %v7638, -inf
        %7653 = vmax.xlane.f32.xlu0 %v7652
        %v7654 = vpop.xlane.xlu0 %7653
        %v7655 = vsel %vm1646, %v7639, -inf
        %7656 = vmax.xlane.f32.xlu0 %v7655
        %v7657 = vpop.xlane.xlu0 %7656
        %v7658 = vsel %vm1646, %v7640, -inf
        %7659 = vmax.xlane.f32.xlu0 %v7658
        %v7660 = vpop.xlane.xlu0 %7659
        %v7661 = vsel %vm1646, %v7641, -inf
        %7662 = vmax.xlane.f32.xlu0 %v7661
        %v7663 = vpop.xlane.xlu0 %7662
        %v7664 = vsel %vm1646, %v7642, -inf
        %7665 = vmax.xlane.f32.xlu0 %v7664
        %v7666 = vpop.xlane.xlu0 %7665
        %v7667 = vsub.f32 %v7635, %v7645
        %v7668 = vsub.f32 %v7636, %v7648
        %v7669 = vsub.f32 %v7637, %v7651
        %v7670 = vsub.f32 %v7638, %v7654
        %v7671 = vsub.f32 %v7639, %v7657
        %v7672 = vsub.f32 %v7640, %v7660
        %v7673 = vsub.f32 %v7641, %v7663
        %v7674 = vsub.f32 %v7642, %v7666
        %v7675 = vmul.f32 %v7667, 1.442695
        %v7676 = vpow.pop %v7675
        %v7677 = vmul.f32 %v7668, 1.442695
        %v7678 = vpow.pop %v7677
        %v7679 = vmul.f32 %v7669, 1.442695
        %v7680 = vpow.pop %v7679
        %v7681 = vmul.f32 %v7670, 1.442695
        %v7682 = vpow.pop %v7681
        %v7683 = vmul.f32 %v7671, 1.442695
        %v7684 = vpow.pop %v7683
        %v7685 = vmul.f32 %v7672, 1.442695
        %v7686 = vpow.pop %v7685
        %v7687 = vmul.f32 %v7673, 1.442695
        %v7688 = vpow.pop %v7687
        %v7689 = vmul.f32 %v7674, 1.442695
        %v7690 = vpow.pop %v7689
        %v7691 = vsel %vm1646, %v7676, 0.0
        %7692 = vadd.xlane.f32.xlu0 %v7691
        %v7693 = vpop.xlane.xlu0 %7692
        %v7694 = vsel %vm1646, %v7678, 0.0
        %7695 = vadd.xlane.f32.xlu0 %v7694
        %v7696 = vpop.xlane.xlu0 %7695
        %v7697 = vsel %vm1646, %v7680, 0.0
        %7698 = vadd.xlane.f32.xlu0 %v7697
        %v7699 = vpop.xlane.xlu0 %7698
        %v7700 = vsel %vm1646, %v7682, 0.0
        %7701 = vadd.xlane.f32.xlu0 %v7700
        %v7702 = vpop.xlane.xlu0 %7701
        %v7703 = vsel %vm1646, %v7684, 0.0
        %7704 = vadd.xlane.f32.xlu0 %v7703
        %v7705 = vpop.xlane.xlu0 %7704
        %v7706 = vsel %vm1646, %v7686, 0.0
        %7707 = vadd.xlane.f32.xlu0 %v7706
        %v7708 = vpop.xlane.xlu0 %7707
        %v7709 = vsel %vm1646, %v7688, 0.0
        %7710 = vadd.xlane.f32.xlu0 %v7709
        %v7711 = vpop.xlane.xlu0 %7710
        %v7712 = vsel %vm1646, %v7690, 0.0
        %7713 = vadd.xlane.f32.xlu0 %v7712
        %v7714 = vpop.xlane.xlu0 %7713
        %v7715 = vrcp.pop %v7693
        %v7716 = vmul.f32 %v7693, %v7715
        %v7717 = vsub.f32 1.0, %v7716
        %v7718 = vmul.f32 %v7715, %v7717
        %v7719 = vadd.f32 %v7715, %v7718
        %vm7720 = vweird.f32 %v7693
        %vm7721 = vweird.f32 %v7715
        %vm7722 = vmor %vm7720, %vm7721
        %v7723 = vsel %vm7722, %v7715, %v7719
        %v7724 = vand.u32 2147483647, %v7693
        %vm7725 = vcmp.eq.f32.partialorder %v7724, 8.507059e+37
        %v7726 = vand.u32 %v7693, 2147483648
        %v7727 = vor.u32 1.1754944e-38, %v7726
        %v7728 = vsel %vm7725, %v7727, %v7723
        %v7729 = vmul.f32 %v7676, %v7728
        %v7730 = vrcp.pop %v7696
        %v7731 = vmul.f32 %v7696, %v7730
        %v7732 = vsub.f32 1.0, %v7731
        %v7733 = vmul.f32 %v7730, %v7732
        %v7734 = vadd.f32 %v7730, %v7733
        %vm7735 = vweird.f32 %v7696
        %vm7736 = vweird.f32 %v7730
        %vm7737 = vmor %vm7735, %vm7736
        %v7738 = vsel %vm7737, %v7730, %v7734
        %v7739 = vand.u32 2147483647, %v7696
        %vm7740 = vcmp.eq.f32.partialorder %v7739, 8.507059e+37
        %v7741 = vand.u32 %v7696, 2147483648
        %v7742 = vor.u32 1.1754944e-38, %v7741
        %v7743 = vsel %vm7740, %v7742, %v7738
        %v7744 = vmul.f32 %v7678, %v7743
        %v7745 = vrcp.pop %v7699
        %v7746 = vmul.f32 %v7699, %v7745
        %v7747 = vsub.f32 1.0, %v7746
        %v7748 = vmul.f32 %v7745, %v7747
        %v7749 = vadd.f32 %v7745, %v7748
        %vm7750 = vweird.f32 %v7699
        %vm7751 = vweird.f32 %v7745
        %vm7752 = vmor %vm7750, %vm7751
        %v7753 = vsel %vm7752, %v7745, %v7749
        %v7754 = vand.u32 2147483647, %v7699
        %vm7755 = vcmp.eq.f32.partialorder %v7754, 8.507059e+37
        %v7756 = vand.u32 %v7699, 2147483648
        %v7757 = vor.u32 1.1754944e-38, %v7756
        %v7758 = vsel %vm7755, %v7757, %v7753
        %v7759 = vmul.f32 %v7680, %v7758
        %v7760 = vrcp.pop %v7702
        %v7761 = vmul.f32 %v7702, %v7760
        %v7762 = vsub.f32 1.0, %v7761
        %v7763 = vmul.f32 %v7760, %v7762
        %v7764 = vadd.f32 %v7760, %v7763
        %vm7765 = vweird.f32 %v7702
        %vm7766 = vweird.f32 %v7760
        %vm7767 = vmor %vm7765, %vm7766
        %v7768 = vsel %vm7767, %v7760, %v7764
        %v7769 = vand.u32 2147483647, %v7702
        %vm7770 = vcmp.eq.f32.partialorder %v7769, 8.507059e+37
        %v7771 = vand.u32 %v7702, 2147483648
        %v7772 = vor.u32 1.1754944e-38, %v7771
        %v7773 = vsel %vm7770, %v7772, %v7768
        %v7774 = vmul.f32 %v7682, %v7773
        %v7775 = vrcp.pop %v7705
        %v7776 = vmul.f32 %v7705, %v7775
        %v7777 = vsub.f32 1.0, %v7776
        %v7778 = vmul.f32 %v7775, %v7777
        %v7779 = vadd.f32 %v7775, %v7778
        %vm7780 = vweird.f32 %v7705
        %vm7781 = vweird.f32 %v7775
        %vm7782 = vmor %vm7780, %vm7781
        %v7783 = vsel %vm7782, %v7775, %v7779
        %v7784 = vand.u32 2147483647, %v7705
        %vm7785 = vcmp.eq.f32.partialorder %v7784, 8.507059e+37
        %v7786 = vand.u32 %v7705, 2147483648
        %v7787 = vor.u32 1.1754944e-38, %v7786
        %v7788 = vsel %vm7785, %v7787, %v7783
        %v7789 = vmul.f32 %v7684, %v7788
        %v7790 = vrcp.pop %v7708
        %v7791 = vmul.f32 %v7708, %v7790
        %v7792 = vsub.f32 1.0, %v7791
        %v7793 = vmul.f32 %v7790, %v7792
        %v7794 = vadd.f32 %v7790, %v7793
        %vm7795 = vweird.f32 %v7708
        %vm7796 = vweird.f32 %v7790
        %vm7797 = vmor %vm7795, %vm7796
        %v7798 = vsel %vm7797, %v7790, %v7794
        %v7799 = vand.u32 2147483647, %v7708
        %vm7800 = vcmp.eq.f32.partialorder %v7799, 8.507059e+37
        %v7801 = vand.u32 %v7708, 2147483648
        %v7802 = vor.u32 1.1754944e-38, %v7801
        %v7803 = vsel %vm7800, %v7802, %v7798
        %v7804 = vmul.f32 %v7686, %v7803
        %v7805 = vrcp.pop %v7711
        %v7806 = vmul.f32 %v7711, %v7805
        %v7807 = vsub.f32 1.0, %v7806
        %v7808 = vmul.f32 %v7805, %v7807
        %v7809 = vadd.f32 %v7805, %v7808
        %vm7810 = vweird.f32 %v7711
        %vm7811 = vweird.f32 %v7805
        %vm7812 = vmor %vm7810, %vm7811
        %v7813 = vsel %vm7812, %v7805, %v7809
        %v7814 = vand.u32 2147483647, %v7711
        %vm7815 = vcmp.eq.f32.partialorder %v7814, 8.507059e+37
        %v7816 = vand.u32 %v7711, 2147483648
        %v7817 = vor.u32 1.1754944e-38, %v7816
        %v7818 = vsel %vm7815, %v7817, %v7813
        %v7819 = vmul.f32 %v7688, %v7818
        %v7820 = vrcp.pop %v7714
        %v7821 = vmul.f32 %v7714, %v7820
        %v7822 = vsub.f32 1.0, %v7821
        %v7823 = vmul.f32 %v7820, %v7822
        %v7824 = vadd.f32 %v7820, %v7823
        %vm7825 = vweird.f32 %v7714
        %vm7826 = vweird.f32 %v7820
        %vm7827 = vmor %vm7825, %vm7826
        %v7828 = vsel %vm7827, %v7820, %v7824
        %v7829 = vand.u32 2147483647, %v7714
        %vm7830 = vcmp.eq.f32.partialorder %v7829, 8.507059e+37
        %v7831 = vand.u32 %v7714, 2147483648
        %v7832 = vor.u32 1.1754944e-38, %v7831
        %v7833 = vsel %vm7830, %v7832, %v7828
        %v7834 = vmul.f32 %v7690, %v7833
        %v7836 = vsel %vm1646, %v7729, 0
        %v7839 = vsel %vm1646, %v7744, 0
        %7841 = vmatpush.msra.mxu0 0.0
        %7842 = vmatpush.msra.mxu0 0.0
        %7843 = vmatpush.msra.mxu0 0.0
        %7844 = vmatpush.msra.mxu0 0.0
        %7845 = vmatpush.msra.mxu0 0.0
        %7846 = vmatpush.msra.mxu0 0.0
        %7847 = vmatpush.msra.mxu0 0.0
        %7848 = vmatpush.msra.mxu0 0.0
        %7849 = vmatpush.msra.mxu0 0.0
        %7850 = vmatpush.msra.mxu0 0.0
        %7851 = vmatpush.msra.mxu0 0.0
        %7852 = vmatpush.msra.mxu0 0.0
        %7853 = vmatpush.msra.mxu0 0.0
        %7854 = vmatpush.msra.mxu0 0.0
        %7855 = vmatpush.msra.mxu0 %v7480
        %7856 = vmatpush.msra.mxu0 %v7426
        %7857 = vmatmul.f32.gmra.mxu0 %v7836
        %v7858 = vpop.f32.mrf.mxu0
        %v7859 = vadd.f32 0.0, %v7858
        %7860 = vmatmul.f32.gmra.mxu0 %v7839
        %v7861 = vpop.f32.mrf.mxu0
        %v7862 = vadd.f32 0.0, %v7861
        %7863 = vdwg.mxu0
        %v7865 = vsel %vm1646, %v7759, 0
        %v7868 = vsel %vm1646, %v7774, 0
        %7870 = vmatpush.msra.mxu0 0.0
        %7871 = vmatpush.msra.mxu0 0.0
        %7872 = vmatpush.msra.mxu0 0.0
        %7873 = vmatpush.msra.mxu0 0.0
        %7874 = vmatpush.msra.mxu0 0.0
        %7875 = vmatpush.msra.mxu0 0.0
        %7876 = vmatpush.msra.mxu0 0.0
        %7877 = vmatpush.msra.mxu0 0.0
        %7878 = vmatpush.msra.mxu0 0.0
        %7879 = vmatpush.msra.mxu0 0.0
        %7880 = vmatpush.msra.mxu0 0.0
        %7881 = vmatpush.msra.mxu0 0.0
        %7882 = vmatpush.msra.mxu0 0.0
        %7883 = vmatpush.msra.mxu0 0.0
        %7884 = vmatpush.msra.mxu0 %v7482
        %7885 = vmatpush.msra.mxu0 %v7428
        %7886 = vmatmul.f32.gmra.mxu0 %v7865
        %v7887 = vpop.f32.mrf.mxu0
        %v7888 = vadd.f32 0.0, %v7887
        %7889 = vmatmul.f32.gmra.mxu0 %v7868
        %v7890 = vpop.f32.mrf.mxu0
        %v7891 = vadd.f32 0.0, %v7890
        %7892 = vdwg.mxu0
        %v7894 = vsel %vm1646, %v7789, 0
        %v7897 = vsel %vm1646, %v7804, 0
        %7899 = vmatpush.msra.mxu0 0.0
        %7900 = vmatpush.msra.mxu0 0.0
        %7901 = vmatpush.msra.mxu0 0.0
        %7902 = vmatpush.msra.mxu0 0.0
        %7903 = vmatpush.msra.mxu0 0.0
        %7904 = vmatpush.msra.mxu0 0.0
        %7905 = vmatpush.msra.mxu0 0.0
        %7906 = vmatpush.msra.mxu0 0.0
        %7907 = vmatpush.msra.mxu0 0.0
        %7908 = vmatpush.msra.mxu0 0.0
        %7909 = vmatpush.msra.mxu0 0.0
        %7910 = vmatpush.msra.mxu0 0.0
        %7911 = vmatpush.msra.mxu0 0.0
        %7912 = vmatpush.msra.mxu0 0.0
        %7913 = vmatpush.msra.mxu0 %v7484
        %7914 = vmatpush.msra.mxu0 %v7430
        %7915 = vmatmul.f32.gmra.mxu0 %v7894
        %v7916 = vpop.f32.mrf.mxu0
        %v7917 = vadd.f32 0.0, %v7916
        %7918 = vmatmul.f32.gmra.mxu0 %v7897
        %v7919 = vpop.f32.mrf.mxu0
        %v7920 = vadd.f32 0.0, %v7919
        %7921 = vdwg.mxu0
        %v7923 = vsel %vm1646, %v7819, 0
        %v7926 = vsel %vm1646, %v7834, 0
        %7928 = vmatpush.msra.mxu0 0.0
        %7929 = vmatpush.msra.mxu0 0.0
        %7930 = vmatpush.msra.mxu0 0.0
        %7931 = vmatpush.msra.mxu0 0.0
        %7932 = vmatpush.msra.mxu0 0.0
        %7933 = vmatpush.msra.mxu0 0.0
        %7934 = vmatpush.msra.mxu0 0.0
        %7935 = vmatpush.msra.mxu0 0.0
        %7936 = vmatpush.msra.mxu0 0.0
        %7937 = vmatpush.msra.mxu0 0.0
        %7938 = vmatpush.msra.mxu0 0.0
        %7939 = vmatpush.msra.mxu0 0.0
        %7940 = vmatpush.msra.mxu0 0.0
        %7941 = vmatpush.msra.mxu0 0.0
        %7942 = vmatpush.msra.mxu0 %v7486
        %7943 = vmatpush.msra.mxu0 %v7432
        %7944 = vmatmul.f32.gmra.mxu0 %v7923
        %v7945 = vpop.f32.mrf.mxu0
        %v7946 = vadd.f32 0.0, %v7945
        %7947 = vmatmul.f32.gmra.mxu0 %v7926
        %v7948 = vpop.f32.mrf.mxu0
        %v7949 = vadd.f32 0.0, %v7948
        %7950 = vdwg.mxu0
        %v7951 = vrot.slane %v7917, 4
        %v7952 = vsel %vm777, %v7951, %v7859
        %v7953 = vrot.slane %v7859, 4
        %v7954 = vsel %vm777, %v7917, %v7953
        %v7956 = vunpack.c.l.s4 1983009808
        %v7957 = vunpack.c.0.s8 %v7956
        %v7958 = vperm.slane %v7952, %v7957
        %v7960 = vunpack.c.l.s4 1983009808
        %v7961 = vunpack.c.0.s8 %v7960
        %v7962 = vperm.slane %v7954, %v7961
        %v7963 = vrot.slane %v7946, 4
        %v7964 = vsel %vm777, %v7963, %v7888
        %v7965 = vrot.slane %v7888, 4
        %v7966 = vsel %vm777, %v7946, %v7965
        %v7968 = vunpack.c.l.s4 1983009808
        %v7969 = vunpack.c.0.s8 %v7968
        %v7970 = vperm.slane %v7964, %v7969
        %v7972 = vunpack.c.l.s4 1983009808
        %v7973 = vunpack.c.0.s8 %v7972
        %v7974 = vperm.slane %v7966, %v7973
        %v7975 = vrot.slane %v7970, 4
        %v7976 = vsel %vm777, %v7975, %v7958
        %v7977 = vrot.slane %v7958, 4
        %v7978 = vsel %vm777, %v7970, %v7977
        %v7980 = vunpack.c.l.s4 1934713408
        %v7981 = vunpack.c.0.s8 %v7980
        %v7982 = vperm.slane %v7976, %v7981
        %v7984 = vunpack.c.l.s4 1934713408
        %v7985 = vunpack.c.0.s8 %v7984
        %v7986 = vperm.slane %v7978, %v7985
        %v7987 = vrot.slane %v7974, 4
        %v7988 = vsel %vm777, %v7987, %v7962
        %v7989 = vrot.slane %v7962, 4
        %v7990 = vsel %vm777, %v7974, %v7989
        %v7992 = vunpack.c.l.s4 1934713408
        %v7993 = vunpack.c.0.s8 %v7992
        %v7994 = vperm.slane %v7988, %v7993
        %v7996 = vunpack.c.l.s4 1934713408
        %v7997 = vunpack.c.0.s8 %v7996
        %v7998 = vperm.slane %v7990, %v7997
        %v7999 = vrot.slane %v7982, 4
        %v8000 = vsel %vm777, 0.0, %v7999
        %v8001 = vrot.slane %v7986, 4
        %v8002 = vsel %vm777, 0.0, %v8001
        %v8003 = vrot.slane %v7994, 4
        %v8004 = vsel %vm777, 0.0, %v8003
        %v8005 = vrot.slane %v7998, 4
        %v8006 = vsel %vm777, 0.0, %v8005
        %v8007 = vrot.slane %v7920, 4
        %v8008 = vsel %vm777, %v8007, %v7862
        %v8009 = vrot.slane %v7862, 4
        %v8010 = vsel %vm777, %v7920, %v8009
        %v8012 = vunpack.c.l.s4 1983009808
        %v8013 = vunpack.c.0.s8 %v8012
        %v8014 = vperm.slane %v8008, %v8013
        %v8016 = vunpack.c.l.s4 1983009808
        %v8017 = vunpack.c.0.s8 %v8016
        %v8018 = vperm.slane %v8010, %v8017
        %v8019 = vrot.slane %v7949, 4
        %v8020 = vsel %vm777, %v8019, %v7891
        %v8021 = vrot.slane %v7891, 4
        %v8022 = vsel %vm777, %v7949, %v8021
        %v8024 = vunpack.c.l.s4 1983009808
        %v8025 = vunpack.c.0.s8 %v8024
        %v8026 = vperm.slane %v8020, %v8025
        %v8028 = vunpack.c.l.s4 1983009808
        %v8029 = vunpack.c.0.s8 %v8028
        %v8030 = vperm.slane %v8022, %v8029
        %v8031 = vrot.slane %v8026, 4
        %v8032 = vsel %vm777, %v8031, %v8014
        %v8033 = vrot.slane %v8014, 4
        %v8034 = vsel %vm777, %v8026, %v8033
        %v8036 = vunpack.c.l.s4 1934713408
        %v8037 = vunpack.c.0.s8 %v8036
        %v8038 = vperm.slane %v8032, %v8037
        %v8040 = vunpack.c.l.s4 1934713408
        %v8041 = vunpack.c.0.s8 %v8040
        %v8042 = vperm.slane %v8034, %v8041
        %v8043 = vrot.slane %v8030, 4
        %v8044 = vsel %vm777, %v8043, %v8018
        %v8045 = vrot.slane %v8018, 4
        %v8046 = vsel %vm777, %v8030, %v8045
        %v8048 = vunpack.c.l.s4 1934713408
        %v8049 = vunpack.c.0.s8 %v8048
        %v8050 = vperm.slane %v8044, %v8049
        %v8052 = vunpack.c.l.s4 1934713408
        %v8053 = vunpack.c.0.s8 %v8052
        %v8054 = vperm.slane %v8046, %v8053
        %v8055 = vrot.slane %v8038, 4
        %v8056 = vsel %vm777, 0.0, %v8055
        %v8057 = vrot.slane %v8042, 4
        %v8058 = vsel %vm777, 0.0, %v8057
        %v8059 = vrot.slane %v8050, 4
        %v8060 = vsel %vm777, 0.0, %v8059
        %v8061 = vrot.slane %v8054, 4
        %v8062 = vsel %vm777, 0.0, %v8061
        %v8063 = vsel %vm777, %v8001, %v7982
        %v8065 = vunpack.c.l.s4 1983009808
        %v8066 = vunpack.c.0.s8 %v8065
        %v8067 = vperm.slane %v8063, %v8066
        %v8068 = vrot.slane %v8002, 4
        %v8069 = vsel %vm777, %v8068, %v8000
        %v8071 = vunpack.c.l.s4 1983009808
        %v8072 = vunpack.c.0.s8 %v8071
        %v8073 = vperm.slane %v8069, %v8072
        %v8074 = vsel %vm777, %v8005, %v7994
        %v8076 = vunpack.c.l.s4 1983009808
        %v8077 = vunpack.c.0.s8 %v8076
        %v8078 = vperm.slane %v8074, %v8077
        %v8079 = vrot.slane %v8006, 4
        %v8080 = vsel %vm777, %v8079, %v8004
        %v8082 = vunpack.c.l.s4 1983009808
        %v8083 = vunpack.c.0.s8 %v8082
        %v8084 = vperm.slane %v8080, %v8083
        %v8085 = vrot.slane %v8073, 4
        %v8086 = vsel %vm777, %v8085, %v8067
        %v8087 = vrot.slane %v8067, 4
        %v8088 = vsel %vm777, %v8073, %v8087
        %v8090 = vunpack.c.l.s4 1934713408
        %v8091 = vunpack.c.0.s8 %v8090
        %v8092 = vperm.slane %v8086, %v8091
        %v8094 = vunpack.c.l.s4 1934713408
        %v8095 = vunpack.c.0.s8 %v8094
        %v8096 = vperm.slane %v8088, %v8095
        %v8097 = vrot.slane %v8084, 4
        %v8098 = vsel %vm777, %v8097, %v8078
        %v8099 = vrot.slane %v8078, 4
        %v8100 = vsel %vm777, %v8084, %v8099
        %v8102 = vunpack.c.l.s4 1934713408
        %v8103 = vunpack.c.0.s8 %v8102
        %v8104 = vperm.slane %v8098, %v8103
        %v8106 = vunpack.c.l.s4 1934713408
        %v8107 = vunpack.c.0.s8 %v8106
        %v8108 = vperm.slane %v8100, %v8107
        %v8109 = vrot.slane %v8104, 4
        %v8110 = vsel %vm777, %v8109, %v8092
        %v8111 = vrot.slane %v8092, 4
        %v8112 = vsel %vm777, %v8104, %v8111
        %v8113 = vrot.slane %v8108, 4
        %v8114 = vsel %vm777, %v8113, %v8096
        %v8115 = vrot.slane %v8096, 4
        %v8116 = vsel %vm777, %v8108, %v8115
        %v8117 = vsel %vm777, %v8057, %v8038
        %v8119 = vunpack.c.l.s4 1983009808
        %v8120 = vunpack.c.0.s8 %v8119
        %v8121 = vperm.slane %v8117, %v8120
        %v8122 = vrot.slane %v8058, 4
        %v8123 = vsel %vm777, %v8122, %v8056
        %v8125 = vunpack.c.l.s4 1983009808
        %v8126 = vunpack.c.0.s8 %v8125
        %v8127 = vperm.slane %v8123, %v8126
        %v8128 = vsel %vm777, %v8061, %v8050
        %v8130 = vunpack.c.l.s4 1983009808
        %v8131 = vunpack.c.0.s8 %v8130
        %v8132 = vperm.slane %v8128, %v8131
        %v8133 = vrot.slane %v8062, 4
        %v8134 = vsel %vm777, %v8133, %v8060
        %v8136 = vunpack.c.l.s4 1983009808
        %v8137 = vunpack.c.0.s8 %v8136
        %v8138 = vperm.slane %v8134, %v8137
        %v8139 = vrot.slane %v8127, 4
        %v8140 = vsel %vm777, %v8139, %v8121
        %v8141 = vrot.slane %v8121, 4
        %v8142 = vsel %vm777, %v8127, %v8141
        %v8144 = vunpack.c.l.s4 1934713408
        %v8145 = vunpack.c.0.s8 %v8144
        %v8146 = vperm.slane %v8140, %v8145
        %v8148 = vunpack.c.l.s4 1934713408
        %v8149 = vunpack.c.0.s8 %v8148
        %v8150 = vperm.slane %v8142, %v8149
        %v8151 = vrot.slane %v8138, 4
        %v8152 = vsel %vm777, %v8151, %v8132
        %v8153 = vrot.slane %v8132, 4
        %v8154 = vsel %vm777, %v8138, %v8153
        %v8156 = vunpack.c.l.s4 1934713408
        %v8157 = vunpack.c.0.s8 %v8156
        %v8158 = vperm.slane %v8152, %v8157
        %v8160 = vunpack.c.l.s4 1934713408
        %v8161 = vunpack.c.0.s8 %v8160
        %v8162 = vperm.slane %v8154, %v8161
        %v8163 = vrot.slane %v8158, 4
        %v8164 = vsel %vm777, %v8163, %v8146
        %v8165 = vrot.slane %v8146, 4
        %v8166 = vsel %vm777, %v8158, %v8165
        %v8167 = vrot.slane %v8162, 4
        %v8168 = vsel %vm777, %v8167, %v8150
        %v8169 = vrot.slane %v8150, 4
        %v8170 = vsel %vm777, %v8162, %v8169
        %8173 = vrot.lane.b32.xlu0 %v8112, 8
        %v8174 = vpop.permute.xlu0 %8173
        %8175 = vrot.lane.b32.xlu0 %v8166, 8
        %v8176 = vpop.permute.xlu0 %8175
        %8181 = vrot.lane.b32.xlu0 %v8114, 16
        %v8182 = vpop.permute.xlu0 %8181
        %8183 = vrot.lane.b32.xlu0 %v8168, 16
        %v8184 = vpop.permute.xlu0 %8183
        %8189 = vrot.lane.b32.xlu0 %v8116, 24
        %v8190 = vpop.permute.xlu0 %8189
        %8191 = vrot.lane.b32.xlu0 %v8170, 24
        %v8192 = vpop.permute.xlu0 %8191
        %v8195 = vsel %vm1485, %v8110, %v8174
        %v8196 = vsel %vm1485, %v8164, %v8176
        %v8197 = vsel %vm1646, %v8195, %v8182
        %v8198 = vsel %vm1646, %v8196, %v8184
        %v8199 = vsel %vm2203, %v8197, %v8190
        %v8200 = vsel %vm2203, %v8198, %v8192
        %s8201 = scalar_lea.vmem %s9, 32
        %v8202 = vld [vmem:[%s8201] sm:$0xff]
        %v8203 = vld [vmem:[%s8201 + $0x8] sm:$0xff]
        %v8204 = vld [vmem:[%s8201 + $0x10] sm:$0xff]
        %v8205 = vld [vmem:[%s8201 + $0x18] sm:$0xff]
        %s8206 = scalar_lea.vmem %s10, 1
        %v8207 = vld [vmem:[%s8206] sm:$0x1]
        %v8209 = vperm.slane %v8207, 0
        %v8212 = vsel %vm726, %v8199, 0
        %v8215 = vsel %vm726, %v8200, 0
        %8217 = vmatpush.msra.mxu0 0.0
        %8218 = vmatpush.msra.mxu0 0.0
        %8219 = vmatpush.msra.mxu0 0.0
        %8220 = vmatpush.msra.mxu0 0.0
        %8221 = vmatpush.msra.mxu0 0.0
        %8222 = vmatpush.msra.mxu0 0.0
        %8223 = vmatpush.msra.mxu0 0.0
        %8224 = vmatpush.msra.mxu0 0.0
        %8225 = vmatpush.msra.mxu0 0.0
        %8226 = vmatpush.msra.mxu0 0.0
        %8227 = vmatpush.msra.mxu0 0.0
        %8228 = vmatpush.msra.mxu0 0.0
        %8229 = vmatpush.msra.mxu0 %v8205
        %8230 = vmatpush.msra.mxu0 %v8204
        %8231 = vmatpush.msra.mxu0 %v8203
        %8232 = vmatpush.msra.mxu0 %v8202
        %8233 = vmatmul.f32.gmra.mxu0 %v8212
        %v8234 = vpop.f32.mrf.mxu0
        %v8235 = vadd.f32 %v8209, %v8234
        %8236 = vmatmul.f32.gmra.mxu0 %v8215
        %v8237 = vpop.f32.mrf.mxu0
        %v8238 = vadd.f32 %v8209, %v8237
        %8239 = vdwg.mxu0
        %v8240 = vadd.f32 %v6689, %v8235
        %v8241 = vadd.f32 %v6690, %v8238
        %s8242 = scalar_lea.vmem %s13, 1
        %v8243 = vld [vmem:[%s8242] sm:$0x1]
        %s8244 = scalar_lea.vmem %s14, 1
        %v8245 = vld [vmem:[%s8244] sm:$0x1]
        %v8246 = vsel %vm726, %v8240, 0.0
        %8247 = vadd.xlane.f32.xlu0 %v8246
        %v8248 = vpop.xlane.xlu0 %8247
        %v8249 = vsel %vm726, %v8241, 0.0
        %8250 = vadd.xlane.f32.xlu0 %v8249
        %v8251 = vpop.xlane.xlu0 %8250
        %v8252 = vmul.f32 %v8248, %v2259
        %v8253 = vmul.f32 %v8251, %v2259
        %v8254 = vsub.f32 %v8240, %v8252
        %v8255 = vsub.f32 %v8241, %v8253
        %v8256 = vmul.f32 %v8254, %v8254
        %v8257 = vmul.f32 %v8255, %v8255
        %v8258 = vsel %vm726, %v8256, 0.0
        %8259 = vadd.xlane.f32.xlu0 %v8258
        %v8260 = vpop.xlane.xlu0 %8259
        %v8261 = vsel %vm726, %v8257, 0.0
        %8262 = vadd.xlane.f32.xlu0 %v8261
        %v8263 = vpop.xlane.xlu0 %8262
        %v8264 = vmul.f32 %v8260, %v2259
        %v8265 = vmul.f32 %v8263, %v2259
        %v8266 = vadd.f32 %v8264, 1e-05
        %v8267 = vadd.f32 %v8265, 1e-05
        %v8268 = vrsqrt.pop %v8266
        %v8269 = vmul.f32 %v8268, %v8266
        %v8270 = vmul.f32 %v8269, %v8268
        %v8271 = vmul.f32 0.5, %v8270
        %v8272 = vsub.f32 1.5, %v8271
        %v8273 = vmul.f32 %v8268, %v8272
        %vm8274 = vweird.f32 %v8266
        %vm8275 = vweird.f32 %v8268
        %vm8276 = vmor %vm8274, %vm8275
        %v8277 = vsel %vm8276, %v8268, %v8273
        %v8278 = vrsqrt.pop %v8267
        %v8279 = vmul.f32 %v8278, %v8267
        %v8280 = vmul.f32 %v8279, %v8278
        %v8281 = vmul.f32 0.5, %v8280
        %v8282 = vsub.f32 1.5, %v8281
        %v8283 = vmul.f32 %v8278, %v8282
        %vm8284 = vweird.f32 %v8267
        %vm8285 = vweird.f32 %v8278
        %vm8286 = vmor %vm8284, %vm8285
        %v8287 = vsel %vm8286, %v8278, %v8283
        %v8288 = vmul.f32 %v8254, %v8277
        %v8289 = vmul.f32 %v8255, %v8287
        %v8291 = vperm.slane %v8243, 0
        %v8293 = vmul.f32 %v8288, %v8291
        %v8294 = vmul.f32 %v8289, %v8291
        %v8296 = vperm.slane %v8245, 0
        %v8298 = vadd.f32 %v8293, %v8296
        %v8299 = vadd.f32 %v8294, %v8296
        %s8300 = scalar_lea.vmem %s17, 512
        %v8301 = vld [vmem:[%s8300] sm:$0xff]
        %v8302 = vld [vmem:[%s8300 + $0x8] sm:$0xff]
        %v8303 = vld [vmem:[%s8300 + $0x10] sm:$0xff]
        %v8304 = vld [vmem:[%s8300 + $0x18] sm:$0xff]
        %v8305 = vld [vmem:[%s8300 + $0x80] sm:$0xff]
        %v8306 = vld [vmem:[%s8300 + $0x88] sm:$0xff]
        %v8307 = vld [vmem:[%s8300 + $0x90] sm:$0xff]
        %v8308 = vld [vmem:[%s8300 + $0x98] sm:$0xff]
        %v8309 = vld [vmem:[%s8300 + $0x100] sm:$0xff]
        %v8310 = vld [vmem:[%s8300 + $0x108] sm:$0xff]
        %v8311 = vld [vmem:[%s8300 + $0x110] sm:$0xff]
        %v8312 = vld [vmem:[%s8300 + $0x118] sm:$0xff]
        %v8313 = vld [vmem:[%s8300 + $0x180] sm:$0xff]
        %v8314 = vld [vmem:[%s8300 + $0x188] sm:$0xff]
        %v8315 = vld [vmem:[%s8300 + $0x190] sm:$0xff]
        %v8316 = vld [vmem:[%s8300 + $0x198] sm:$0xff]
        %s8317 = scalar_lea.vmem %s18, 16
        %v8318 = vld [vmem:[%s8317] sm:$0xf]
        %v8320 = vperm.slane %v8318, 0
        %v8321 = vperm.slane %v8318, 1
        %v8322 = vperm.slane %v8318, 2
        %v8323 = vperm.slane %v8318, 3
        %v8329 = vsel %vm726, %v8298, 0
        %v8332 = vsel %vm726, %v8299, 0
        %8334 = vmatpush.msra.mxu0 0.0
        %8335 = vmatpush.msra.mxu0 0.0
        %8336 = vmatpush.msra.mxu0 0.0
        %8337 = vmatpush.msra.mxu0 0.0
        %8338 = vmatpush.msra.mxu0 0.0
        %8339 = vmatpush.msra.mxu0 0.0
        %8340 = vmatpush.msra.mxu0 0.0
        %8341 = vmatpush.msra.mxu0 0.0
        %8342 = vmatpush.msra.mxu0 0.0
        %8343 = vmatpush.msra.mxu0 0.0
        %8344 = vmatpush.msra.mxu0 0.0
        %8345 = vmatpush.msra.mxu0 0.0
        %8346 = vmatpush.msra.mxu0 %v8313
        %8347 = vmatpush.msra.mxu0 %v8309
        %8348 = vmatpush.msra.mxu0 %v8305
        %8349 = vmatpush.msra.mxu0 %v8301
        %8350 = vmatmul.f32.gmra.mxu0 %v8329
        %v8351 = vpop.f32.mrf.mxu0
        %v8352 = vadd.f32 %v8320, %v8351
        %8353 = vmatmul.f32.gmra.mxu0 %v8332
        %v8354 = vpop.f32.mrf.mxu0
        %v8355 = vadd.f32 %v8320, %v8354
        %8356 = vdwg.mxu0
        %8357 = vmatpush.msra.mxu0 0.0
        %8358 = vmatpush.msra.mxu0 0.0
        %8359 = vmatpush.msra.mxu0 0.0
        %8360 = vmatpush.msra.mxu0 0.0
        %8361 = vmatpush.msra.mxu0 0.0
        %8362 = vmatpush.msra.mxu0 0.0
        %8363 = vmatpush.msra.mxu0 0.0
        %8364 = vmatpush.msra.mxu0 0.0
        %8365 = vmatpush.msra.mxu0 0.0
        %8366 = vmatpush.msra.mxu0 0.0
        %8367 = vmatpush.msra.mxu0 0.0
        %8368 = vmatpush.msra.mxu0 0.0
        %8369 = vmatpush.msra.mxu0 %v8314
        %8370 = vmatpush.msra.mxu0 %v8310
        %8371 = vmatpush.msra.mxu0 %v8306
        %8372 = vmatpush.msra.mxu0 %v8302
        %8373 = vmatmul.f32.gmra.mxu0 %v8329
        %v8374 = vpop.f32.mrf.mxu0
        %v8375 = vadd.f32 %v8321, %v8374
        %8376 = vmatmul.f32.gmra.mxu0 %v8332
        %v8377 = vpop.f32.mrf.mxu0
        %v8378 = vadd.f32 %v8321, %v8377
        %8379 = vdwg.mxu0
        %8380 = vmatpush.msra.mxu0 0.0
        %8381 = vmatpush.msra.mxu0 0.0
        %8382 = vmatpush.msra.mxu0 0.0
        %8383 = vmatpush.msra.mxu0 0.0
        %8384 = vmatpush.msra.mxu0 0.0
        %8385 = vmatpush.msra.mxu0 0.0
        %8386 = vmatpush.msra.mxu0 0.0
        %8387 = vmatpush.msra.mxu0 0.0
        %8388 = vmatpush.msra.mxu0 0.0
        %8389 = vmatpush.msra.mxu0 0.0
        %8390 = vmatpush.msra.mxu0 0.0
        %8391 = vmatpush.msra.mxu0 0.0
        %8392 = vmatpush.msra.mxu0 %v8315
        %8393 = vmatpush.msra.mxu0 %v8311
        %8394 = vmatpush.msra.mxu0 %v8307
        %8395 = vmatpush.msra.mxu0 %v8303
        %8396 = vmatmul.f32.gmra.mxu0 %v8329
        %v8397 = vpop.f32.mrf.mxu0
        %v8398 = vadd.f32 %v8322, %v8397
        %8399 = vmatmul.f32.gmra.mxu0 %v8332
        %v8400 = vpop.f32.mrf.mxu0
        %v8401 = vadd.f32 %v8322, %v8400
        %8402 = vdwg.mxu0
        %8403 = vmatpush.msra.mxu0 0.0
        %8404 = vmatpush.msra.mxu0 0.0
        %8405 = vmatpush.msra.mxu0 0.0
        %8406 = vmatpush.msra.mxu0 0.0
        %8407 = vmatpush.msra.mxu0 0.0
        %8408 = vmatpush.msra.mxu0 0.0
        %8409 = vmatpush.msra.mxu0 0.0
        %8410 = vmatpush.msra.mxu0 0.0
        %8411 = vmatpush.msra.mxu0 0.0
        %8412 = vmatpush.msra.mxu0 0.0
        %8413 = vmatpush.msra.mxu0 0.0
        %8414 = vmatpush.msra.mxu0 0.0
        %8415 = vmatpush.msra.mxu0 %v8316
        %8416 = vmatpush.msra.mxu0 %v8312
        %8417 = vmatpush.msra.mxu0 %v8308
        %8418 = vmatpush.msra.mxu0 %v8304
        %8419 = vmatmul.f32.gmra.mxu0 %v8329
        %v8420 = vpop.f32.mrf.mxu0
        %v8421 = vadd.f32 %v8323, %v8420
        %8422 = vmatmul.f32.gmra.mxu0 %v8332
        %v8423 = vpop.f32.mrf.mxu0
        %v8424 = vadd.f32 %v8323, %v8423
        %8425 = vdwg.mxu0
        %v8426 = vmax.f32 %v8352, 0.0
        %v8427 = vmax.f32 %v8375, 0.0
        %v8428 = vmax.f32 %v8398, 0.0
        %v8429 = vmax.f32 %v8421, 0.0
        %v8430 = vmax.f32 %v8355, 0.0
        %v8431 = vmax.f32 %v8378, 0.0
        %v8432 = vmax.f32 %v8401, 0.0
        %v8433 = vmax.f32 %v8424, 0.0
        %s8434 = scalar_lea.vmem %s19, 2048
        %v8435 = vld [vmem:[%s8434] sm:$0xff]
        %v8436 = vld [vmem:[%s8434 + $0x8] sm:$0xff]
        %v8437 = vld [vmem:[%s8434 + $0x10] sm:$0xff]
        %v8438 = vld [vmem:[%s8434 + $0x18] sm:$0xff]
        %v8439 = vld [vmem:[%s8434 + $0x20] sm:$0xff]
        %v8440 = vld [vmem:[%s8434 + $0x28] sm:$0xff]
        %v8441 = vld [vmem:[%s8434 + $0x30] sm:$0xff]
        %v8442 = vld [vmem:[%s8434 + $0x38] sm:$0xff]
        %v8443 = vld [vmem:[%s8434 + $0x40] sm:$0xff]
        %v8444 = vld [vmem:[%s8434 + $0x48] sm:$0xff]
        %v8445 = vld [vmem:[%s8434 + $0x50] sm:$0xff]
        %v8446 = vld [vmem:[%s8434 + $0x58] sm:$0xff]
        %v8447 = vld [vmem:[%s8434 + $0x60] sm:$0xff]
        %v8448 = vld [vmem:[%s8434 + $0x68] sm:$0xff]
        %v8449 = vld [vmem:[%s8434 + $0x70] sm:$0xff]
        %v8450 = vld [vmem:[%s8434 + $0x78] sm:$0xff]
        %v8451 = vld [vmem:[%s8434 + $0x80] sm:$0xff]
        %v8452 = vld [vmem:[%s8434 + $0x88] sm:$0xff]
        %v8453 = vld [vmem:[%s8434 + $0x90] sm:$0xff]
        %v8454 = vld [vmem:[%s8434 + $0x98] sm:$0xff]
        %v8455 = vld [vmem:[%s8434 + $0xa0] sm:$0xff]
        %v8456 = vld [vmem:[%s8434 + $0xa8] sm:$0xff]
        %v8457 = vld [vmem:[%s8434 + $0xb0] sm:$0xff]
        %v8458 = vld [vmem:[%s8434 + $0xb8] sm:$0xff]
        %v8459 = vld [vmem:[%s8434 + $0xc0] sm:$0xff]
        %v8460 = vld [vmem:[%s8434 + $0xc8] sm:$0xff]
        %v8461 = vld [vmem:[%s8434 + $0xd0] sm:$0xff]
        %v8462 = vld [vmem:[%s8434 + $0xd8] sm:$0xff]
        %v8463 = vld [vmem:[%s8434 + $0xe0] sm:$0xff]
        %v8464 = vld [vmem:[%s8434 + $0xe8] sm:$0xff]
        %v8465 = vld [vmem:[%s8434 + $0xf0] sm:$0xff]
        %v8466 = vld [vmem:[%s8434 + $0xf8] sm:$0xff]
        %v8467 = vld [vmem:[%s8434 + $0x100] sm:$0xff]
        %v8468 = vld [vmem:[%s8434 + $0x108] sm:$0xff]
        %v8469 = vld [vmem:[%s8434 + $0x110] sm:$0xff]
        %v8470 = vld [vmem:[%s8434 + $0x118] sm:$0xff]
        %v8471 = vld [vmem:[%s8434 + $0x120] sm:$0xff]
        %v8472 = vld [vmem:[%s8434 + $0x128] sm:$0xff]
        %v8473 = vld [vmem:[%s8434 + $0x130] sm:$0xff]
        %v8474 = vld [vmem:[%s8434 + $0x138] sm:$0xff]
        %v8475 = vld [vmem:[%s8434 + $0x140] sm:$0xff]
        %v8476 = vld [vmem:[%s8434 + $0x148] sm:$0xff]
        %v8477 = vld [vmem:[%s8434 + $0x150] sm:$0xff]
        %v8478 = vld [vmem:[%s8434 + $0x158] sm:$0xff]
        %v8479 = vld [vmem:[%s8434 + $0x160] sm:$0xff]
        %v8480 = vld [vmem:[%s8434 + $0x168] sm:$0xff]
        %v8481 = vld [vmem:[%s8434 + $0x170] sm:$0xff]
        %v8482 = vld [vmem:[%s8434 + $0x178] sm:$0xff]
        %v8483 = vld [vmem:[%s8434 + $0x180] sm:$0xff]
        %v8484 = vld [vmem:[%s8434 + $0x188] sm:$0xff]
        %v8485 = vld [vmem:[%s8434 + $0x190] sm:$0xff]
        %v8486 = vld [vmem:[%s8434 + $0x198] sm:$0xff]
        %v8487 = vld [vmem:[%s8434 + $0x1a0] sm:$0xff]
        %v8488 = vld [vmem:[%s8434 + $0x1a8] sm:$0xff]
        %v8489 = vld [vmem:[%s8434 + $0x1b0] sm:$0xff]
        %v8490 = vld [vmem:[%s8434 + $0x1b8] sm:$0xff]
        %v8491 = vld [vmem:[%s8434 + $0x1c0] sm:$0xff]
        %v8492 = vld [vmem:[%s8434 + $0x1c8] sm:$0xff]
        %v8493 = vld [vmem:[%s8434 + $0x1d0] sm:$0xff]
        %v8494 = vld [vmem:[%s8434 + $0x1d8] sm:$0xff]
        %v8495 = vld [vmem:[%s8434 + $0x1e0] sm:$0xff]
        %v8496 = vld [vmem:[%s8434 + $0x1e8] sm:$0xff]
        %v8497 = vld [vmem:[%s8434 + $0x1f0] sm:$0xff]
        %v8498 = vld [vmem:[%s8434 + $0x1f8] sm:$0xff]
        %v8499 = vld [vmem:[%s8300 + $0x20] sm:$0xff]
        %v8500 = vld [vmem:[%s8300 + $0x28] sm:$0xff]
        %v8501 = vld [vmem:[%s8300 + $0x30] sm:$0xff]
        %v8502 = vld [vmem:[%s8300 + $0x38] sm:$0xff]
        %v8503 = vld [vmem:[%s8300 + $0xa0] sm:$0xff]
        %v8504 = vld [vmem:[%s8300 + $0xa8] sm:$0xff]
        %v8505 = vld [vmem:[%s8300 + $0xb0] sm:$0xff]
        %v8506 = vld [vmem:[%s8300 + $0xb8] sm:$0xff]
        %v8507 = vld [vmem:[%s8300 + $0x120] sm:$0xff]
        %v8508 = vld [vmem:[%s8300 + $0x128] sm:$0xff]
        %v8509 = vld [vmem:[%s8300 + $0x130] sm:$0xff]
        %v8510 = vld [vmem:[%s8300 + $0x138] sm:$0xff]
        %v8511 = vld [vmem:[%s8300 + $0x1a0] sm:$0xff]
        %v8512 = vld [vmem:[%s8300 + $0x1a8] sm:$0xff]
        %v8513 = vld [vmem:[%s8300 + $0x1b0] sm:$0xff]
        %v8514 = vld [vmem:[%s8300 + $0x1b8] sm:$0xff]
        %v8515 = vld [vmem:[%s8317 + $0x4] sm:$0xf]
        %v8517 = vperm.slane %v8515, 0
        %v8518 = vperm.slane %v8515, 1
        %v8519 = vperm.slane %v8515, 2
        %v8520 = vperm.slane %v8515, 3
        %8525 = vmatpush.msra.mxu0 0.0
        %8526 = vmatpush.msra.mxu0 0.0
        %8527 = vmatpush.msra.mxu0 0.0
        %8528 = vmatpush.msra.mxu0 0.0
        %8529 = vmatpush.msra.mxu0 0.0
        %8530 = vmatpush.msra.mxu0 0.0
        %8531 = vmatpush.msra.mxu0 0.0
        %8532 = vmatpush.msra.mxu0 0.0
        %8533 = vmatpush.msra.mxu0 0.0
        %8534 = vmatpush.msra.mxu0 0.0
        %8535 = vmatpush.msra.mxu0 0.0
        %8536 = vmatpush.msra.mxu0 0.0
        %8537 = vmatpush.msra.mxu0 %v8511
        %8538 = vmatpush.msra.mxu0 %v8507
        %8539 = vmatpush.msra.mxu0 %v8503
        %8540 = vmatpush.msra.mxu0 %v8499
        %8541 = vmatmul.f32.gmra.mxu0 %v8329
        %v8542 = vpop.f32.mrf.mxu0
        %v8543 = vadd.f32 %v8517, %v8542
        %8544 = vmatmul.f32.gmra.mxu0 %v8332
        %v8545 = vpop.f32.mrf.mxu0
        %v8546 = vadd.f32 %v8517, %v8545
        %8547 = vdwg.mxu0
        %8548 = vmatpush.msra.mxu0 0.0
        %8549 = vmatpush.msra.mxu0 0.0
        %8550 = vmatpush.msra.mxu0 0.0
        %8551 = vmatpush.msra.mxu0 0.0
        %8552 = vmatpush.msra.mxu0 0.0
        %8553 = vmatpush.msra.mxu0 0.0
        %8554 = vmatpush.msra.mxu0 0.0
        %8555 = vmatpush.msra.mxu0 0.0
        %8556 = vmatpush.msra.mxu0 0.0
        %8557 = vmatpush.msra.mxu0 0.0
        %8558 = vmatpush.msra.mxu0 0.0
        %8559 = vmatpush.msra.mxu0 0.0
        %8560 = vmatpush.msra.mxu0 %v8512
        %8561 = vmatpush.msra.mxu0 %v8508
        %8562 = vmatpush.msra.mxu0 %v8504
        %8563 = vmatpush.msra.mxu0 %v8500
        %8564 = vmatmul.f32.gmra.mxu0 %v8329
        %v8565 = vpop.f32.mrf.mxu0
        %v8566 = vadd.f32 %v8518, %v8565
        %8567 = vmatmul.f32.gmra.mxu0 %v8332
        %v8568 = vpop.f32.mrf.mxu0
        %v8569 = vadd.f32 %v8518, %v8568
        %8570 = vdwg.mxu0
        %8571 = vmatpush.msra.mxu0 0.0
        %8572 = vmatpush.msra.mxu0 0.0
        %8573 = vmatpush.msra.mxu0 0.0
        %8574 = vmatpush.msra.mxu0 0.0
        %8575 = vmatpush.msra.mxu0 0.0
        %8576 = vmatpush.msra.mxu0 0.0
        %8577 = vmatpush.msra.mxu0 0.0
        %8578 = vmatpush.msra.mxu0 0.0
        %8579 = vmatpush.msra.mxu0 0.0
        %8580 = vmatpush.msra.mxu0 0.0
        %8581 = vmatpush.msra.mxu0 0.0
        %8582 = vmatpush.msra.mxu0 0.0
        %8583 = vmatpush.msra.mxu0 %v8513
        %8584 = vmatpush.msra.mxu0 %v8509
        %8585 = vmatpush.msra.mxu0 %v8505
        %8586 = vmatpush.msra.mxu0 %v8501
        %8587 = vmatmul.f32.gmra.mxu0 %v8329
        %v8588 = vpop.f32.mrf.mxu0
        %v8589 = vadd.f32 %v8519, %v8588
        %8590 = vmatmul.f32.gmra.mxu0 %v8332
        %v8591 = vpop.f32.mrf.mxu0
        %v8592 = vadd.f32 %v8519, %v8591
        %8593 = vdwg.mxu0
        %8594 = vmatpush.msra.mxu0 0.0
        %8595 = vmatpush.msra.mxu0 0.0
        %8596 = vmatpush.msra.mxu0 0.0
        %8597 = vmatpush.msra.mxu0 0.0
        %8598 = vmatpush.msra.mxu0 0.0
        %8599 = vmatpush.msra.mxu0 0.0
        %8600 = vmatpush.msra.mxu0 0.0
        %8601 = vmatpush.msra.mxu0 0.0
        %8602 = vmatpush.msra.mxu0 0.0
        %8603 = vmatpush.msra.mxu0 0.0
        %8604 = vmatpush.msra.mxu0 0.0
        %8605 = vmatpush.msra.mxu0 0.0
        %8606 = vmatpush.msra.mxu0 %v8514
        %8607 = vmatpush.msra.mxu0 %v8510
        %8608 = vmatpush.msra.mxu0 %v8506
        %8609 = vmatpush.msra.mxu0 %v8502
        %8610 = vmatmul.f32.gmra.mxu0 %v8329
        %v8611 = vpop.f32.mrf.mxu0
        %v8612 = vadd.f32 %v8520, %v8611
        %8613 = vmatmul.f32.gmra.mxu0 %v8332
        %v8614 = vpop.f32.mrf.mxu0
        %v8615 = vadd.f32 %v8520, %v8614
        %8616 = vdwg.mxu0
        %v8617 = vmax.f32 %v8543, 0.0
        %v8618 = vmax.f32 %v8566, 0.0
        %v8619 = vmax.f32 %v8589, 0.0
        %v8620 = vmax.f32 %v8612, 0.0
        %v8621 = vmax.f32 %v8546, 0.0
        %v8622 = vmax.f32 %v8569, 0.0
        %v8623 = vmax.f32 %v8592, 0.0
        %v8624 = vmax.f32 %v8615, 0.0
        %v8625 = vld [vmem:[%s8434 + $0x200] sm:$0xff]
        %v8626 = vld [vmem:[%s8434 + $0x208] sm:$0xff]
        %v8627 = vld [vmem:[%s8434 + $0x210] sm:$0xff]
        %v8628 = vld [vmem:[%s8434 + $0x218] sm:$0xff]
        %v8629 = vld [vmem:[%s8434 + $0x220] sm:$0xff]
        %v8630 = vld [vmem:[%s8434 + $0x228] sm:$0xff]
        %v8631 = vld [vmem:[%s8434 + $0x230] sm:$0xff]
        %v8632 = vld [vmem:[%s8434 + $0x238] sm:$0xff]
        %v8633 = vld [vmem:[%s8434 + $0x240] sm:$0xff]
        %v8634 = vld [vmem:[%s8434 + $0x248] sm:$0xff]
        %v8635 = vld [vmem:[%s8434 + $0x250] sm:$0xff]
        %v8636 = vld [vmem:[%s8434 + $0x258] sm:$0xff]
        %v8637 = vld [vmem:[%s8434 + $0x260] sm:$0xff]
        %v8638 = vld [vmem:[%s8434 + $0x268] sm:$0xff]
        %v8639 = vld [vmem:[%s8434 + $0x270] sm:$0xff]
        %v8640 = vld [vmem:[%s8434 + $0x278] sm:$0xff]
        %v8641 = vld [vmem:[%s8434 + $0x280] sm:$0xff]
        %v8642 = vld [vmem:[%s8434 + $0x288] sm:$0xff]
        %v8643 = vld [vmem:[%s8434 + $0x290] sm:$0xff]
        %v8644 = vld [vmem:[%s8434 + $0x298] sm:$0xff]
        %v8645 = vld [vmem:[%s8434 + $0x2a0] sm:$0xff]
        %v8646 = vld [vmem:[%s8434 + $0x2a8] sm:$0xff]
        %v8647 = vld [vmem:[%s8434 + $0x2b0] sm:$0xff]
        %v8648 = vld [vmem:[%s8434 + $0x2b8] sm:$0xff]
        %v8649 = vld [vmem:[%s8434 + $0x2c0] sm:$0xff]
        %v8650 = vld [vmem:[%s8434 + $0x2c8] sm:$0xff]
        %v8651 = vld [vmem:[%s8434 + $0x2d0] sm:$0xff]
        %v8652 = vld [vmem:[%s8434 + $0x2d8] sm:$0xff]
        %v8653 = vld [vmem:[%s8434 + $0x2e0] sm:$0xff]
        %v8654 = vld [vmem:[%s8434 + $0x2e8] sm:$0xff]
        %v8655 = vld [vmem:[%s8434 + $0x2f0] sm:$0xff]
        %v8656 = vld [vmem:[%s8434 + $0x2f8] sm:$0xff]
        %v8657 = vld [vmem:[%s8434 + $0x300] sm:$0xff]
        %v8658 = vld [vmem:[%s8434 + $0x308] sm:$0xff]
        %v8659 = vld [vmem:[%s8434 + $0x310] sm:$0xff]
        %v8660 = vld [vmem:[%s8434 + $0x318] sm:$0xff]
        %v8661 = vld [vmem:[%s8434 + $0x320] sm:$0xff]
        %v8662 = vld [vmem:[%s8434 + $0x328] sm:$0xff]
        %v8663 = vld [vmem:[%s8434 + $0x330] sm:$0xff]
        %v8664 = vld [vmem:[%s8434 + $0x338] sm:$0xff]
        %v8665 = vld [vmem:[%s8434 + $0x340] sm:$0xff]
        %v8666 = vld [vmem:[%s8434 + $0x348] sm:$0xff]
        %v8667 = vld [vmem:[%s8434 + $0x350] sm:$0xff]
        %v8668 = vld [vmem:[%s8434 + $0x358] sm:$0xff]
        %v8669 = vld [vmem:[%s8434 + $0x360] sm:$0xff]
        %v8670 = vld [vmem:[%s8434 + $0x368] sm:$0xff]
        %v8671 = vld [vmem:[%s8434 + $0x370] sm:$0xff]
        %v8672 = vld [vmem:[%s8434 + $0x378] sm:$0xff]
        %v8673 = vld [vmem:[%s8434 + $0x380] sm:$0xff]
        %v8674 = vld [vmem:[%s8434 + $0x388] sm:$0xff]
        %v8675 = vld [vmem:[%s8434 + $0x390] sm:$0xff]
        %v8676 = vld [vmem:[%s8434 + $0x398] sm:$0xff]
        %v8677 = vld [vmem:[%s8434 + $0x3a0] sm:$0xff]
        %v8678 = vld [vmem:[%s8434 + $0x3a8] sm:$0xff]
        %v8679 = vld [vmem:[%s8434 + $0x3b0] sm:$0xff]
        %v8680 = vld [vmem:[%s8434 + $0x3b8] sm:$0xff]
        %v8681 = vld [vmem:[%s8434 + $0x3c0] sm:$0xff]
        %v8682 = vld [vmem:[%s8434 + $0x3c8] sm:$0xff]
        %v8683 = vld [vmem:[%s8434 + $0x3d0] sm:$0xff]
        %v8684 = vld [vmem:[%s8434 + $0x3d8] sm:$0xff]
        %v8685 = vld [vmem:[%s8434 + $0x3e0] sm:$0xff]
        %v8686 = vld [vmem:[%s8434 + $0x3e8] sm:$0xff]
        %v8687 = vld [vmem:[%s8434 + $0x3f0] sm:$0xff]
        %v8688 = vld [vmem:[%s8434 + $0x3f8] sm:$0xff]
        %8689 = vmatpush.msra.mxu0 %v8640
        %8690 = vmatpush.msra.mxu0 %v8639
        %8691 = vmatpush.msra.mxu0 %v8638
        %8692 = vmatpush.msra.mxu0 %v8637
        %8693 = vmatpush.msra.mxu0 %v8636
        %8694 = vmatpush.msra.mxu0 %v8635
        %8695 = vmatpush.msra.mxu0 %v8634
        %8696 = vmatpush.msra.mxu0 %v8633
        %8697 = vmatpush.msra.mxu0 %v8632
        %8698 = vmatpush.msra.mxu0 %v8631
        %8699 = vmatpush.msra.mxu0 %v8630
        %8700 = vmatpush.msra.mxu0 %v8629
        %8701 = vmatpush.msra.mxu0 %v8628
        %8702 = vmatpush.msra.mxu0 %v8627
        %8703 = vmatpush.msra.mxu0 %v8626
        %8704 = vmatpush.msra.mxu0 %v8625
        %8705 = vmatmul.f32.gmra.mxu0 %v8617
        %v8706 = vpop.f32.mrf.mxu0
        %v8707 = vadd.f32 0.0, %v8706
        %8708 = vmatmul.f32.gmra.mxu0 %v8621
        %v8709 = vpop.f32.mrf.mxu0
        %v8710 = vadd.f32 0.0, %v8709
        %8711 = vdwg.mxu0
        %8712 = vmatpush.msra.mxu0 %v8656
        %8713 = vmatpush.msra.mxu0 %v8655
        %8714 = vmatpush.msra.mxu0 %v8654
        %8715 = vmatpush.msra.mxu0 %v8653
        %8716 = vmatpush.msra.mxu0 %v8652
        %8717 = vmatpush.msra.mxu0 %v8651
        %8718 = vmatpush.msra.mxu0 %v8650
        %8719 = vmatpush.msra.mxu0 %v8649
        %8720 = vmatpush.msra.mxu0 %v8648
        %8721 = vmatpush.msra.mxu0 %v8647
        %8722 = vmatpush.msra.mxu0 %v8646
        %8723 = vmatpush.msra.mxu0 %v8645
        %8724 = vmatpush.msra.mxu0 %v8644
        %8725 = vmatpush.msra.mxu0 %v8643
        %8726 = vmatpush.msra.mxu0 %v8642
        %8727 = vmatpush.msra.mxu0 %v8641
        %8728 = vmatmul.f32.gmra.mxu0 %v8618
        %v8729 = vpop.f32.mrf.mxu0
        %v8730 = vadd.f32 %v8707, %v8729
        %8731 = vmatmul.f32.gmra.mxu0 %v8622
        %v8732 = vpop.f32.mrf.mxu0
        %v8733 = vadd.f32 %v8710, %v8732
        %8734 = vdwg.mxu0
        %8735 = vmatpush.msra.mxu0 %v8672
        %8736 = vmatpush.msra.mxu0 %v8671
        %8737 = vmatpush.msra.mxu0 %v8670
        %8738 = vmatpush.msra.mxu0 %v8669
        %8739 = vmatpush.msra.mxu0 %v8668
        %8740 = vmatpush.msra.mxu0 %v8667
        %8741 = vmatpush.msra.mxu0 %v8666
        %8742 = vmatpush.msra.mxu0 %v8665
        %8743 = vmatpush.msra.mxu0 %v8664
        %8744 = vmatpush.msra.mxu0 %v8663
        %8745 = vmatpush.msra.mxu0 %v8662
        %8746 = vmatpush.msra.mxu0 %v8661
        %8747 = vmatpush.msra.mxu0 %v8660
        %8748 = vmatpush.msra.mxu0 %v8659
        %8749 = vmatpush.msra.mxu0 %v8658
        %8750 = vmatpush.msra.mxu0 %v8657
        %8751 = vmatmul.f32.gmra.mxu0 %v8619
        %v8752 = vpop.f32.mrf.mxu0
        %v8753 = vadd.f32 %v8730, %v8752
        %8754 = vmatmul.f32.gmra.mxu0 %v8623
        %v8755 = vpop.f32.mrf.mxu0
        %v8756 = vadd.f32 %v8733, %v8755
        %8757 = vdwg.mxu0
        %8758 = vmatpush.msra.mxu0 %v8688
        %8759 = vmatpush.msra.mxu0 %v8687
        %8760 = vmatpush.msra.mxu0 %v8686
        %8761 = vmatpush.msra.mxu0 %v8685
        %8762 = vmatpush.msra.mxu0 %v8684
        %8763 = vmatpush.msra.mxu0 %v8683
        %8764 = vmatpush.msra.mxu0 %v8682
        %8765 = vmatpush.msra.mxu0 %v8681
        %8766 = vmatpush.msra.mxu0 %v8680
        %8767 = vmatpush.msra.mxu0 %v8679
        %8768 = vmatpush.msra.mxu0 %v8678
        %8769 = vmatpush.msra.mxu0 %v8677
        %8770 = vmatpush.msra.mxu0 %v8676
        %8771 = vmatpush.msra.mxu0 %v8675
        %8772 = vmatpush.msra.mxu0 %v8674
        %8773 = vmatpush.msra.mxu0 %v8673
        %8774 = vmatmul.f32.gmra.mxu0 %v8620
        %v8775 = vpop.f32.mrf.mxu0
        %v8776 = vadd.f32 %v8753, %v8775
        %8777 = vmatmul.f32.gmra.mxu0 %v8624
        %v8778 = vpop.f32.mrf.mxu0
        %v8779 = vadd.f32 %v8756, %v8778
        %8780 = vdwg.mxu0
        %8781 = vmatpush.msra.mxu0 %v8450
        %8782 = vmatpush.msra.mxu0 %v8449
        %8783 = vmatpush.msra.mxu0 %v8448
        %8784 = vmatpush.msra.mxu0 %v8447
        %8785 = vmatpush.msra.mxu0 %v8446
        %8786 = vmatpush.msra.mxu0 %v8445
        %8787 = vmatpush.msra.mxu0 %v8444
        %8788 = vmatpush.msra.mxu0 %v8443
        %8789 = vmatpush.msra.mxu0 %v8442
        %8790 = vmatpush.msra.mxu0 %v8441
        %8791 = vmatpush.msra.mxu0 %v8440
        %8792 = vmatpush.msra.mxu0 %v8439
        %8793 = vmatpush.msra.mxu0 %v8438
        %8794 = vmatpush.msra.mxu0 %v8437
        %8795 = vmatpush.msra.mxu0 %v8436
        %8796 = vmatpush.msra.mxu0 %v8435
        %8797 = vmatmul.f32.gmra.mxu0 %v8426
        %v8798 = vpop.f32.mrf.mxu0
        %v8799 = vadd.f32 %v8776, %v8798
        %8800 = vmatmul.f32.gmra.mxu0 %v8430
        %v8801 = vpop.f32.mrf.mxu0
        %v8802 = vadd.f32 %v8779, %v8801
        %8803 = vdwg.mxu0
        %8804 = vmatpush.msra.mxu0 %v8466
        %8805 = vmatpush.msra.mxu0 %v8465
        %8806 = vmatpush.msra.mxu0 %v8464
        %8807 = vmatpush.msra.mxu0 %v8463
        %8808 = vmatpush.msra.mxu0 %v8462
        %8809 = vmatpush.msra.mxu0 %v8461
        %8810 = vmatpush.msra.mxu0 %v8460
        %8811 = vmatpush.msra.mxu0 %v8459
        %8812 = vmatpush.msra.mxu0 %v8458
        %8813 = vmatpush.msra.mxu0 %v8457
        %8814 = vmatpush.msra.mxu0 %v8456
        %8815 = vmatpush.msra.mxu0 %v8455
        %8816 = vmatpush.msra.mxu0 %v8454
        %8817 = vmatpush.msra.mxu0 %v8453
        %8818 = vmatpush.msra.mxu0 %v8452
        %8819 = vmatpush.msra.mxu0 %v8451
        %8820 = vmatmul.f32.gmra.mxu0 %v8427
        %v8821 = vpop.f32.mrf.mxu0
        %v8822 = vadd.f32 %v8799, %v8821
        %8823 = vmatmul.f32.gmra.mxu0 %v8431
        %v8824 = vpop.f32.mrf.mxu0
        %v8825 = vadd.f32 %v8802, %v8824
        %8826 = vdwg.mxu0
        %8827 = vmatpush.msra.mxu0 %v8482
        %8828 = vmatpush.msra.mxu0 %v8481
        %8829 = vmatpush.msra.mxu0 %v8480
        %8830 = vmatpush.msra.mxu0 %v8479
        %8831 = vmatpush.msra.mxu0 %v8478
        %8832 = vmatpush.msra.mxu0 %v8477
        %8833 = vmatpush.msra.mxu0 %v8476
        %8834 = vmatpush.msra.mxu0 %v8475
        %8835 = vmatpush.msra.mxu0 %v8474
        %8836 = vmatpush.msra.mxu0 %v8473
        %8837 = vmatpush.msra.mxu0 %v8472
        %8838 = vmatpush.msra.mxu0 %v8471
        %8839 = vmatpush.msra.mxu0 %v8470
        %8840 = vmatpush.msra.mxu0 %v8469
        %8841 = vmatpush.msra.mxu0 %v8468
        %8842 = vmatpush.msra.mxu0 %v8467
        %8843 = vmatmul.f32.gmra.mxu0 %v8428
        %v8844 = vpop.f32.mrf.mxu0
        %v8845 = vadd.f32 %v8822, %v8844
        %8846 = vmatmul.f32.gmra.mxu0 %v8432
        %v8847 = vpop.f32.mrf.mxu0
        %v8848 = vadd.f32 %v8825, %v8847
        %8849 = vdwg.mxu0
        %8850 = vmatpush.msra.mxu0 %v8498
        %8851 = vmatpush.msra.mxu0 %v8497
        %8852 = vmatpush.msra.mxu0 %v8496
        %8853 = vmatpush.msra.mxu0 %v8495
        %8854 = vmatpush.msra.mxu0 %v8494
        %8855 = vmatpush.msra.mxu0 %v8493
        %8856 = vmatpush.msra.mxu0 %v8492
        %8857 = vmatpush.msra.mxu0 %v8491
        %8858 = vmatpush.msra.mxu0 %v8490
        %8859 = vmatpush.msra.mxu0 %v8489
        %8860 = vmatpush.msra.mxu0 %v8488
        %8861 = vmatpush.msra.mxu0 %v8487
        %8862 = vmatpush.msra.mxu0 %v8486
        %8863 = vmatpush.msra.mxu0 %v8485
        %8864 = vmatpush.msra.mxu0 %v8484
        %8865 = vmatpush.msra.mxu0 %v8483
        %8866 = vmatmul.f32.gmra.mxu0 %v8429
        %v8867 = vpop.f32.mrf.mxu0
        %v8868 = vadd.f32 %v8845, %v8867
        %8869 = vmatmul.f32.gmra.mxu0 %v8433
        %v8870 = vpop.f32.mrf.mxu0
        %v8871 = vadd.f32 %v8848, %v8870
        %8872 = vdwg.mxu0
        %v8873 = vld [vmem:[%s8300 + $0x40] sm:$0xff]
        %v8874 = vld [vmem:[%s8300 + $0x48] sm:$0xff]
        %v8875 = vld [vmem:[%s8300 + $0x50] sm:$0xff]
        %v8876 = vld [vmem:[%s8300 + $0x58] sm:$0xff]
        %v8877 = vld [vmem:[%s8300 + $0xc0] sm:$0xff]
        %v8878 = vld [vmem:[%s8300 + $0xc8] sm:$0xff]
        %v8879 = vld [vmem:[%s8300 + $0xd0] sm:$0xff]
        %v8880 = vld [vmem:[%s8300 + $0xd8] sm:$0xff]
        %v8881 = vld [vmem:[%s8300 + $0x140] sm:$0xff]
        %v8882 = vld [vmem:[%s8300 + $0x148] sm:$0xff]
        %v8883 = vld [vmem:[%s8300 + $0x150] sm:$0xff]
        %v8884 = vld [vmem:[%s8300 + $0x158] sm:$0xff]
        %v8885 = vld [vmem:[%s8300 + $0x1c0] sm:$0xff]
        %v8886 = vld [vmem:[%s8300 + $0x1c8] sm:$0xff]
        %v8887 = vld [vmem:[%s8300 + $0x1d0] sm:$0xff]
        %v8888 = vld [vmem:[%s8300 + $0x1d8] sm:$0xff]
        %v8889 = vld [vmem:[%s8317 + $0x8] sm:$0xf]
        %v8891 = vperm.slane %v8889, 0
        %v8892 = vperm.slane %v8889, 1
        %v8893 = vperm.slane %v8889, 2
        %v8894 = vperm.slane %v8889, 3
        %8899 = vmatpush.msra.mxu0 0.0
        %8900 = vmatpush.msra.mxu0 0.0
        %8901 = vmatpush.msra.mxu0 0.0
        %8902 = vmatpush.msra.mxu0 0.0
        %8903 = vmatpush.msra.mxu0 0.0
        %8904 = vmatpush.msra.mxu0 0.0
        %8905 = vmatpush.msra.mxu0 0.0
        %8906 = vmatpush.msra.mxu0 0.0
        %8907 = vmatpush.msra.mxu0 0.0
        %8908 = vmatpush.msra.mxu0 0.0
        %8909 = vmatpush.msra.mxu0 0.0
        %8910 = vmatpush.msra.mxu0 0.0
        %8911 = vmatpush.msra.mxu0 %v8885
        %8912 = vmatpush.msra.mxu0 %v8881
        %8913 = vmatpush.msra.mxu0 %v8877
        %8914 = vmatpush.msra.mxu0 %v8873
        %8915 = vmatmul.f32.gmra.mxu0 %v8329
        %v8916 = vpop.f32.mrf.mxu0
        %v8917 = vadd.f32 %v8891, %v8916
        %8918 = vmatmul.f32.gmra.mxu0 %v8332
        %v8919 = vpop.f32.mrf.mxu0
        %v8920 = vadd.f32 %v8891, %v8919
        %8921 = vdwg.mxu0
        %8922 = vmatpush.msra.mxu0 0.0
        %8923 = vmatpush.msra.mxu0 0.0
        %8924 = vmatpush.msra.mxu0 0.0
        %8925 = vmatpush.msra.mxu0 0.0
        %8926 = vmatpush.msra.mxu0 0.0
        %8927 = vmatpush.msra.mxu0 0.0
        %8928 = vmatpush.msra.mxu0 0.0
        %8929 = vmatpush.msra.mxu0 0.0
        %8930 = vmatpush.msra.mxu0 0.0
        %8931 = vmatpush.msra.mxu0 0.0
        %8932 = vmatpush.msra.mxu0 0.0
        %8933 = vmatpush.msra.mxu0 0.0
        %8934 = vmatpush.msra.mxu0 %v8886
        %8935 = vmatpush.msra.mxu0 %v8882
        %8936 = vmatpush.msra.mxu0 %v8878
        %8937 = vmatpush.msra.mxu0 %v8874
        %8938 = vmatmul.f32.gmra.mxu0 %v8329
        %v8939 = vpop.f32.mrf.mxu0
        %v8940 = vadd.f32 %v8892, %v8939
        %8941 = vmatmul.f32.gmra.mxu0 %v8332
        %v8942 = vpop.f32.mrf.mxu0
        %v8943 = vadd.f32 %v8892, %v8942
        %8944 = vdwg.mxu0
        %8945 = vmatpush.msra.mxu0 0.0
        %8946 = vmatpush.msra.mxu0 0.0
        %8947 = vmatpush.msra.mxu0 0.0
        %8948 = vmatpush.msra.mxu0 0.0
        %8949 = vmatpush.msra.mxu0 0.0
        %8950 = vmatpush.msra.mxu0 0.0
        %8951 = vmatpush.msra.mxu0 0.0
        %8952 = vmatpush.msra.mxu0 0.0
        %8953 = vmatpush.msra.mxu0 0.0
        %8954 = vmatpush.msra.mxu0 0.0
        %8955 = vmatpush.msra.mxu0 0.0
        %8956 = vmatpush.msra.mxu0 0.0
        %8957 = vmatpush.msra.mxu0 %v8887
        %8958 = vmatpush.msra.mxu0 %v8883
        %8959 = vmatpush.msra.mxu0 %v8879
        %8960 = vmatpush.msra.mxu0 %v8875
        %8961 = vmatmul.f32.gmra.mxu0 %v8329
        %v8962 = vpop.f32.mrf.mxu0
        %v8963 = vadd.f32 %v8893, %v8962
        %8964 = vmatmul.f32.gmra.mxu0 %v8332
        %v8965 = vpop.f32.mrf.mxu0
        %v8966 = vadd.f32 %v8893, %v8965
        %8967 = vdwg.mxu0
        %8968 = vmatpush.msra.mxu0 0.0
        %8969 = vmatpush.msra.mxu0 0.0
        %8970 = vmatpush.msra.mxu0 0.0
        %8971 = vmatpush.msra.mxu0 0.0
        %8972 = vmatpush.msra.mxu0 0.0
        %8973 = vmatpush.msra.mxu0 0.0
        %8974 = vmatpush.msra.mxu0 0.0
        %8975 = vmatpush.msra.mxu0 0.0
        %8976 = vmatpush.msra.mxu0 0.0
        %8977 = vmatpush.msra.mxu0 0.0
        %8978 = vmatpush.msra.mxu0 0.0
        %8979 = vmatpush.msra.mxu0 0.0
        %8980 = vmatpush.msra.mxu0 %v8888
        %8981 = vmatpush.msra.mxu0 %v8884
        %8982 = vmatpush.msra.mxu0 %v8880
        %8983 = vmatpush.msra.mxu0 %v8876
        %8984 = vmatmul.f32.gmra.mxu0 %v8329
        %v8985 = vpop.f32.mrf.mxu0
        %v8986 = vadd.f32 %v8894, %v8985
        %8987 = vmatmul.f32.gmra.mxu0 %v8332
        %v8988 = vpop.f32.mrf.mxu0
        %v8989 = vadd.f32 %v8894, %v8988
        %8990 = vdwg.mxu0
        %v8991 = vmax.f32 %v8917, 0.0
        %v8992 = vmax.f32 %v8940, 0.0
        %v8993 = vmax.f32 %v8963, 0.0
        %v8994 = vmax.f32 %v8986, 0.0
        %v8995 = vmax.f32 %v8920, 0.0
        %v8996 = vmax.f32 %v8943, 0.0
        %v8997 = vmax.f32 %v8966, 0.0
        %v8998 = vmax.f32 %v8989, 0.0
        %v8999 = vld [vmem:[%s8434 + $0x400] sm:$0xff]
        %v9000 = vld [vmem:[%s8434 + $0x408] sm:$0xff]
        %v9001 = vld [vmem:[%s8434 + $0x410] sm:$0xff]
        %v9002 = vld [vmem:[%s8434 + $0x418] sm:$0xff]
        %v9003 = vld [vmem:[%s8434 + $0x420] sm:$0xff]
        %v9004 = vld [vmem:[%s8434 + $0x428] sm:$0xff]
        %v9005 = vld [vmem:[%s8434 + $0x430] sm:$0xff]
        %v9006 = vld [vmem:[%s8434 + $0x438] sm:$0xff]
        %v9007 = vld [vmem:[%s8434 + $0x440] sm:$0xff]
        %v9008 = vld [vmem:[%s8434 + $0x448] sm:$0xff]
        %v9009 = vld [vmem:[%s8434 + $0x450] sm:$0xff]
        %v9010 = vld [vmem:[%s8434 + $0x458] sm:$0xff]
        %v9011 = vld [vmem:[%s8434 + $0x460] sm:$0xff]
        %v9012 = vld [vmem:[%s8434 + $0x468] sm:$0xff]
        %v9013 = vld [vmem:[%s8434 + $0x470] sm:$0xff]
        %v9014 = vld [vmem:[%s8434 + $0x478] sm:$0xff]
        %v9015 = vld [vmem:[%s8434 + $0x480] sm:$0xff]
        %v9016 = vld [vmem:[%s8434 + $0x488] sm:$0xff]
        %v9017 = vld [vmem:[%s8434 + $0x490] sm:$0xff]
        %v9018 = vld [vmem:[%s8434 + $0x498] sm:$0xff]
        %v9019 = vld [vmem:[%s8434 + $0x4a0] sm:$0xff]
        %v9020 = vld [vmem:[%s8434 + $0x4a8] sm:$0xff]
        %v9021 = vld [vmem:[%s8434 + $0x4b0] sm:$0xff]
        %v9022 = vld [vmem:[%s8434 + $0x4b8] sm:$0xff]
        %v9023 = vld [vmem:[%s8434 + $0x4c0] sm:$0xff]
        %v9024 = vld [vmem:[%s8434 + $0x4c8] sm:$0xff]
        %v9025 = vld [vmem:[%s8434 + $0x4d0] sm:$0xff]
        %v9026 = vld [vmem:[%s8434 + $0x4d8] sm:$0xff]
        %v9027 = vld [vmem:[%s8434 + $0x4e0] sm:$0xff]
        %v9028 = vld [vmem:[%s8434 + $0x4e8] sm:$0xff]
        %v9029 = vld [vmem:[%s8434 + $0x4f0] sm:$0xff]
        %v9030 = vld [vmem:[%s8434 + $0x4f8] sm:$0xff]
        %v9031 = vld [vmem:[%s8434 + $0x500] sm:$0xff]
        %v9032 = vld [vmem:[%s8434 + $0x508] sm:$0xff]
        %v9033 = vld [vmem:[%s8434 + $0x510] sm:$0xff]
        %v9034 = vld [vmem:[%s8434 + $0x518] sm:$0xff]
        %v9035 = vld [vmem:[%s8434 + $0x520] sm:$0xff]
        %v9036 = vld [vmem:[%s8434 + $0x528] sm:$0xff]
        %v9037 = vld [vmem:[%s8434 + $0x530] sm:$0xff]
        %v9038 = vld [vmem:[%s8434 + $0x538] sm:$0xff]
        %v9039 = vld [vmem:[%s8434 + $0x540] sm:$0xff]
        %v9040 = vld [vmem:[%s8434 + $0x548] sm:$0xff]
        %v9041 = vld [vmem:[%s8434 + $0x550] sm:$0xff]
        %v9042 = vld [vmem:[%s8434 + $0x558] sm:$0xff]
        %v9043 = vld [vmem:[%s8434 + $0x560] sm:$0xff]
        %v9044 = vld [vmem:[%s8434 + $0x568] sm:$0xff]
        %v9045 = vld [vmem:[%s8434 + $0x570] sm:$0xff]
        %v9046 = vld [vmem:[%s8434 + $0x578] sm:$0xff]
        %v9047 = vld [vmem:[%s8434 + $0x580] sm:$0xff]
        %v9048 = vld [vmem:[%s8434 + $0x588] sm:$0xff]
        %v9049 = vld [vmem:[%s8434 + $0x590] sm:$0xff]
        %v9050 = vld [vmem:[%s8434 + $0x598] sm:$0xff]
        %v9051 = vld [vmem:[%s8434 + $0x5a0] sm:$0xff]
        %v9052 = vld [vmem:[%s8434 + $0x5a8] sm:$0xff]
        %v9053 = vld [vmem:[%s8434 + $0x5b0] sm:$0xff]
        %v9054 = vld [vmem:[%s8434 + $0x5b8] sm:$0xff]
        %v9055 = vld [vmem:[%s8434 + $0x5c0] sm:$0xff]
        %v9056 = vld [vmem:[%s8434 + $0x5c8] sm:$0xff]
        %v9057 = vld [vmem:[%s8434 + $0x5d0] sm:$0xff]
        %v9058 = vld [vmem:[%s8434 + $0x5d8] sm:$0xff]
        %v9059 = vld [vmem:[%s8434 + $0x5e0] sm:$0xff]
        %v9060 = vld [vmem:[%s8434 + $0x5e8] sm:$0xff]
        %v9061 = vld [vmem:[%s8434 + $0x5f0] sm:$0xff]
        %v9062 = vld [vmem:[%s8434 + $0x5f8] sm:$0xff]
        %9063 = vmatpush.msra.mxu0 %v9014
        %9064 = vmatpush.msra.mxu0 %v9013
        %9065 = vmatpush.msra.mxu0 %v9012
        %9066 = vmatpush.msra.mxu0 %v9011
        %9067 = vmatpush.msra.mxu0 %v9010
        %9068 = vmatpush.msra.mxu0 %v9009
        %9069 = vmatpush.msra.mxu0 %v9008
        %9070 = vmatpush.msra.mxu0 %v9007
        %9071 = vmatpush.msra.mxu0 %v9006
        %9072 = vmatpush.msra.mxu0 %v9005
        %9073 = vmatpush.msra.mxu0 %v9004
        %9074 = vmatpush.msra.mxu0 %v9003
        %9075 = vmatpush.msra.mxu0 %v9002
        %9076 = vmatpush.msra.mxu0 %v9001
        %9077 = vmatpush.msra.mxu0 %v9000
        %9078 = vmatpush.msra.mxu0 %v8999
        %9079 = vmatmul.f32.gmra.mxu0 %v8991
        %v9080 = vpop.f32.mrf.mxu0
        %v9081 = vadd.f32 0.0, %v9080
        %9082 = vmatmul.f32.gmra.mxu0 %v8995
        %v9083 = vpop.f32.mrf.mxu0
        %v9084 = vadd.f32 0.0, %v9083
        %9085 = vdwg.mxu0
        %9086 = vmatpush.msra.mxu0 %v9030
        %9087 = vmatpush.msra.mxu0 %v9029
        %9088 = vmatpush.msra.mxu0 %v9028
        %9089 = vmatpush.msra.mxu0 %v9027
        %9090 = vmatpush.msra.mxu0 %v9026
        %9091 = vmatpush.msra.mxu0 %v9025
        %9092 = vmatpush.msra.mxu0 %v9024
        %9093 = vmatpush.msra.mxu0 %v9023
        %9094 = vmatpush.msra.mxu0 %v9022
        %9095 = vmatpush.msra.mxu0 %v9021
        %9096 = vmatpush.msra.mxu0 %v9020
        %9097 = vmatpush.msra.mxu0 %v9019
        %9098 = vmatpush.msra.mxu0 %v9018
        %9099 = vmatpush.msra.mxu0 %v9017
        %9100 = vmatpush.msra.mxu0 %v9016
        %9101 = vmatpush.msra.mxu0 %v9015
        %9102 = vmatmul.f32.gmra.mxu0 %v8992
        %v9103 = vpop.f32.mrf.mxu0
        %v9104 = vadd.f32 %v9081, %v9103
        %9105 = vmatmul.f32.gmra.mxu0 %v8996
        %v9106 = vpop.f32.mrf.mxu0
        %v9107 = vadd.f32 %v9084, %v9106
        %9108 = vdwg.mxu0
        %9109 = vmatpush.msra.mxu0 %v9046
        %9110 = vmatpush.msra.mxu0 %v9045
        %9111 = vmatpush.msra.mxu0 %v9044
        %9112 = vmatpush.msra.mxu0 %v9043
        %9113 = vmatpush.msra.mxu0 %v9042
        %9114 = vmatpush.msra.mxu0 %v9041
        %9115 = vmatpush.msra.mxu0 %v9040
        %9116 = vmatpush.msra.mxu0 %v9039
        %9117 = vmatpush.msra.mxu0 %v9038
        %9118 = vmatpush.msra.mxu0 %v9037
        %9119 = vmatpush.msra.mxu0 %v9036
        %9120 = vmatpush.msra.mxu0 %v9035
        %9121 = vmatpush.msra.mxu0 %v9034
        %9122 = vmatpush.msra.mxu0 %v9033
        %9123 = vmatpush.msra.mxu0 %v9032
        %9124 = vmatpush.msra.mxu0 %v9031
        %9125 = vmatmul.f32.gmra.mxu0 %v8993
        %v9126 = vpop.f32.mrf.mxu0
        %v9127 = vadd.f32 %v9104, %v9126
        %9128 = vmatmul.f32.gmra.mxu0 %v8997
        %v9129 = vpop.f32.mrf.mxu0
        %v9130 = vadd.f32 %v9107, %v9129
        %9131 = vdwg.mxu0
        %9132 = vmatpush.msra.mxu0 %v9062
        %9133 = vmatpush.msra.mxu0 %v9061
        %9134 = vmatpush.msra.mxu0 %v9060
        %9135 = vmatpush.msra.mxu0 %v9059
        %9136 = vmatpush.msra.mxu0 %v9058
        %9137 = vmatpush.msra.mxu0 %v9057
        %9138 = vmatpush.msra.mxu0 %v9056
        %9139 = vmatpush.msra.mxu0 %v9055
        %9140 = vmatpush.msra.mxu0 %v9054
        %9141 = vmatpush.msra.mxu0 %v9053
        %9142 = vmatpush.msra.mxu0 %v9052
        %9143 = vmatpush.msra.mxu0 %v9051
        %9144 = vmatpush.msra.mxu0 %v9050
        %9145 = vmatpush.msra.mxu0 %v9049
        %9146 = vmatpush.msra.mxu0 %v9048
        %9147 = vmatpush.msra.mxu0 %v9047
        %9148 = vmatmul.f32.gmra.mxu0 %v8994
        %v9149 = vpop.f32.mrf.mxu0
        %v9150 = vadd.f32 %v9127, %v9149
        %9151 = vmatmul.f32.gmra.mxu0 %v8998
        %v9152 = vpop.f32.mrf.mxu0
        %v9153 = vadd.f32 %v9130, %v9152
        %9154 = vdwg.mxu0
        %v9155 = vadd.f32 %v8868, %v9150
        %v9156 = vadd.f32 %v8871, %v9153
        %v9157 = vld [vmem:[%s8300 + $0x60] sm:$0xff]
        %v9158 = vld [vmem:[%s8300 + $0x68] sm:$0xff]
        %v9159 = vld [vmem:[%s8300 + $0x70] sm:$0xff]
        %v9160 = vld [vmem:[%s8300 + $0x78] sm:$0xff]
        %v9161 = vld [vmem:[%s8300 + $0xe0] sm:$0xff]
        %v9162 = vld [vmem:[%s8300 + $0xe8] sm:$0xff]
        %v9163 = vld [vmem:[%s8300 + $0xf0] sm:$0xff]
        %v9164 = vld [vmem:[%s8300 + $0xf8] sm:$0xff]
        %v9165 = vld [vmem:[%s8300 + $0x160] sm:$0xff]
        %v9166 = vld [vmem:[%s8300 + $0x168] sm:$0xff]
        %v9167 = vld [vmem:[%s8300 + $0x170] sm:$0xff]
        %v9168 = vld [vmem:[%s8300 + $0x178] sm:$0xff]
        %v9169 = vld [vmem:[%s8300 + $0x1e0] sm:$0xff]
        %v9170 = vld [vmem:[%s8300 + $0x1e8] sm:$0xff]
        %v9171 = vld [vmem:[%s8300 + $0x1f0] sm:$0xff]
        %v9172 = vld [vmem:[%s8300 + $0x1f8] sm:$0xff]
        %v9173 = vld [vmem:[%s8317 + $0xc] sm:$0xf]
        %v9175 = vperm.slane %v9173, 0
        %v9176 = vperm.slane %v9173, 1
        %v9177 = vperm.slane %v9173, 2
        %v9178 = vperm.slane %v9173, 3
        %9183 = vmatpush.msra.mxu0 0.0
        %9184 = vmatpush.msra.mxu0 0.0
        %9185 = vmatpush.msra.mxu0 0.0
        %9186 = vmatpush.msra.mxu0 0.0
        %9187 = vmatpush.msra.mxu0 0.0
        %9188 = vmatpush.msra.mxu0 0.0
        %9189 = vmatpush.msra.mxu0 0.0
        %9190 = vmatpush.msra.mxu0 0.0
        %9191 = vmatpush.msra.mxu0 0.0
        %9192 = vmatpush.msra.mxu0 0.0
        %9193 = vmatpush.msra.mxu0 0.0
        %9194 = vmatpush.msra.mxu0 0.0
        %9195 = vmatpush.msra.mxu0 %v9169
        %9196 = vmatpush.msra.mxu0 %v9165
        %9197 = vmatpush.msra.mxu0 %v9161
        %9198 = vmatpush.msra.mxu0 %v9157
        %9199 = vmatmul.f32.gmra.mxu0 %v8329
        %v9200 = vpop.f32.mrf.mxu0
        %v9201 = vadd.f32 %v9175, %v9200
        %9202 = vmatmul.f32.gmra.mxu0 %v8332
        %v9203 = vpop.f32.mrf.mxu0
        %v9204 = vadd.f32 %v9175, %v9203
        %9205 = vdwg.mxu0
        %9206 = vmatpush.msra.mxu0 0.0
        %9207 = vmatpush.msra.mxu0 0.0
        %9208 = vmatpush.msra.mxu0 0.0
        %9209 = vmatpush.msra.mxu0 0.0
        %9210 = vmatpush.msra.mxu0 0.0
        %9211 = vmatpush.msra.mxu0 0.0
        %9212 = vmatpush.msra.mxu0 0.0
        %9213 = vmatpush.msra.mxu0 0.0
        %9214 = vmatpush.msra.mxu0 0.0
        %9215 = vmatpush.msra.mxu0 0.0
        %9216 = vmatpush.msra.mxu0 0.0
        %9217 = vmatpush.msra.mxu0 0.0
        %9218 = vmatpush.msra.mxu0 %v9170
        %9219 = vmatpush.msra.mxu0 %v9166
        %9220 = vmatpush.msra.mxu0 %v9162
        %9221 = vmatpush.msra.mxu0 %v9158
        %9222 = vmatmul.f32.gmra.mxu0 %v8329
        %v9223 = vpop.f32.mrf.mxu0
        %v9224 = vadd.f32 %v9176, %v9223
        %9225 = vmatmul.f32.gmra.mxu0 %v8332
        %v9226 = vpop.f32.mrf.mxu0
        %v9227 = vadd.f32 %v9176, %v9226
        %9228 = vdwg.mxu0
        %9229 = vmatpush.msra.mxu0 0.0
        %9230 = vmatpush.msra.mxu0 0.0
        %9231 = vmatpush.msra.mxu0 0.0
        %9232 = vmatpush.msra.mxu0 0.0
        %9233 = vmatpush.msra.mxu0 0.0
        %9234 = vmatpush.msra.mxu0 0.0
        %9235 = vmatpush.msra.mxu0 0.0
        %9236 = vmatpush.msra.mxu0 0.0
        %9237 = vmatpush.msra.mxu0 0.0
        %9238 = vmatpush.msra.mxu0 0.0
        %9239 = vmatpush.msra.mxu0 0.0
        %9240 = vmatpush.msra.mxu0 0.0
        %9241 = vmatpush.msra.mxu0 %v9171
        %9242 = vmatpush.msra.mxu0 %v9167
        %9243 = vmatpush.msra.mxu0 %v9163
        %9244 = vmatpush.msra.mxu0 %v9159
        %9245 = vmatmul.f32.gmra.mxu0 %v8329
        %v9246 = vpop.f32.mrf.mxu0
        %v9247 = vadd.f32 %v9177, %v9246
        %9248 = vmatmul.f32.gmra.mxu0 %v8332
        %v9249 = vpop.f32.mrf.mxu0
        %v9250 = vadd.f32 %v9177, %v9249
        %9251 = vdwg.mxu0
        %9252 = vmatpush.msra.mxu0 0.0
        %9253 = vmatpush.msra.mxu0 0.0
        %9254 = vmatpush.msra.mxu0 0.0
        %9255 = vmatpush.msra.mxu0 0.0
        %9256 = vmatpush.msra.mxu0 0.0
        %9257 = vmatpush.msra.mxu0 0.0
        %9258 = vmatpush.msra.mxu0 0.0
        %9259 = vmatpush.msra.mxu0 0.0
        %9260 = vmatpush.msra.mxu0 0.0
        %9261 = vmatpush.msra.mxu0 0.0
        %9262 = vmatpush.msra.mxu0 0.0
        %9263 = vmatpush.msra.mxu0 0.0
        %9264 = vmatpush.msra.mxu0 %v9172
        %9265 = vmatpush.msra.mxu0 %v9168
        %9266 = vmatpush.msra.mxu0 %v9164
        %9267 = vmatpush.msra.mxu0 %v9160
        %9268 = vmatmul.f32.gmra.mxu0 %v8329
        %v9269 = vpop.f32.mrf.mxu0
        %v9270 = vadd.f32 %v9178, %v9269
        %9271 = vmatmul.f32.gmra.mxu0 %v8332
        %v9272 = vpop.f32.mrf.mxu0
        %v9273 = vadd.f32 %v9178, %v9272
        %9274 = vdwg.mxu0
        %v9275 = vmax.f32 %v9201, 0.0
        %v9276 = vmax.f32 %v9224, 0.0
        %v9277 = vmax.f32 %v9247, 0.0
        %v9278 = vmax.f32 %v9270, 0.0
        %v9279 = vmax.f32 %v9204, 0.0
        %v9280 = vmax.f32 %v9227, 0.0
        %v9281 = vmax.f32 %v9250, 0.0
        %v9282 = vmax.f32 %v9273, 0.0
        %v9283 = vld [vmem:[%s8434 + $0x600] sm:$0xff]
        %v9284 = vld [vmem:[%s8434 + $0x608] sm:$0xff]
        %v9285 = vld [vmem:[%s8434 + $0x610] sm:$0xff]
        %v9286 = vld [vmem:[%s8434 + $0x618] sm:$0xff]
        %v9287 = vld [vmem:[%s8434 + $0x620] sm:$0xff]
        %v9288 = vld [vmem:[%s8434 + $0x628] sm:$0xff]
        %v9289 = vld [vmem:[%s8434 + $0x630] sm:$0xff]
        %v9290 = vld [vmem:[%s8434 + $0x638] sm:$0xff]
        %v9291 = vld [vmem:[%s8434 + $0x640] sm:$0xff]
        %v9292 = vld [vmem:[%s8434 + $0x648] sm:$0xff]
        %v9293 = vld [vmem:[%s8434 + $0x650] sm:$0xff]
        %v9294 = vld [vmem:[%s8434 + $0x658] sm:$0xff]
        %v9295 = vld [vmem:[%s8434 + $0x660] sm:$0xff]
        %v9296 = vld [vmem:[%s8434 + $0x668] sm:$0xff]
        %v9297 = vld [vmem:[%s8434 + $0x670] sm:$0xff]
        %v9298 = vld [vmem:[%s8434 + $0x678] sm:$0xff]
        %v9299 = vld [vmem:[%s8434 + $0x680] sm:$0xff]
        %v9300 = vld [vmem:[%s8434 + $0x688] sm:$0xff]
        %v9301 = vld [vmem:[%s8434 + $0x690] sm:$0xff]
        %v9302 = vld [vmem:[%s8434 + $0x698] sm:$0xff]
        %v9303 = vld [vmem:[%s8434 + $0x6a0] sm:$0xff]
        %v9304 = vld [vmem:[%s8434 + $0x6a8] sm:$0xff]
        %v9305 = vld [vmem:[%s8434 + $0x6b0] sm:$0xff]
        %v9306 = vld [vmem:[%s8434 + $0x6b8] sm:$0xff]
        %v9307 = vld [vmem:[%s8434 + $0x6c0] sm:$0xff]
        %v9308 = vld [vmem:[%s8434 + $0x6c8] sm:$0xff]
        %v9309 = vld [vmem:[%s8434 + $0x6d0] sm:$0xff]
        %v9310 = vld [vmem:[%s8434 + $0x6d8] sm:$0xff]
        %v9311 = vld [vmem:[%s8434 + $0x6e0] sm:$0xff]
        %v9312 = vld [vmem:[%s8434 + $0x6e8] sm:$0xff]
        %v9313 = vld [vmem:[%s8434 + $0x6f0] sm:$0xff]
        %v9314 = vld [vmem:[%s8434 + $0x6f8] sm:$0xff]
        %v9315 = vld [vmem:[%s8434 + $0x700] sm:$0xff]
        %v9316 = vld [vmem:[%s8434 + $0x708] sm:$0xff]
        %v9317 = vld [vmem:[%s8434 + $0x710] sm:$0xff]
        %v9318 = vld [vmem:[%s8434 + $0x718] sm:$0xff]
        %v9319 = vld [vmem:[%s8434 + $0x720] sm:$0xff]
        %v9320 = vld [vmem:[%s8434 + $0x728] sm:$0xff]
        %v9321 = vld [vmem:[%s8434 + $0x730] sm:$0xff]
        %v9322 = vld [vmem:[%s8434 + $0x738] sm:$0xff]
        %v9323 = vld [vmem:[%s8434 + $0x740] sm:$0xff]
        %v9324 = vld [vmem:[%s8434 + $0x748] sm:$0xff]
        %v9325 = vld [vmem:[%s8434 + $0x750] sm:$0xff]
        %v9326 = vld [vmem:[%s8434 + $0x758] sm:$0xff]
        %v9327 = vld [vmem:[%s8434 + $0x760] sm:$0xff]
        %v9328 = vld [vmem:[%s8434 + $0x768] sm:$0xff]
        %v9329 = vld [vmem:[%s8434 + $0x770] sm:$0xff]
        %v9330 = vld [vmem:[%s8434 + $0x778] sm:$0xff]
        %v9331 = vld [vmem:[%s8434 + $0x780] sm:$0xff]
        %v9332 = vld [vmem:[%s8434 + $0x788] sm:$0xff]
        %v9333 = vld [vmem:[%s8434 + $0x790] sm:$0xff]
        %v9334 = vld [vmem:[%s8434 + $0x798] sm:$0xff]
        %v9335 = vld [vmem:[%s8434 + $0x7a0] sm:$0xff]
        %v9336 = vld [vmem:[%s8434 + $0x7a8] sm:$0xff]
        %v9337 = vld [vmem:[%s8434 + $0x7b0] sm:$0xff]
        %v9338 = vld [vmem:[%s8434 + $0x7b8] sm:$0xff]
        %v9339 = vld [vmem:[%s8434 + $0x7c0] sm:$0xff]
        %v9340 = vld [vmem:[%s8434 + $0x7c8] sm:$0xff]
        %v9341 = vld [vmem:[%s8434 + $0x7d0] sm:$0xff]
        %v9342 = vld [vmem:[%s8434 + $0x7d8] sm:$0xff]
        %v9343 = vld [vmem:[%s8434 + $0x7e0] sm:$0xff]
        %v9344 = vld [vmem:[%s8434 + $0x7e8] sm:$0xff]
        %v9345 = vld [vmem:[%s8434 + $0x7f0] sm:$0xff]
        %v9346 = vld [vmem:[%s8434 + $0x7f8] sm:$0xff]
        %9347 = vmatpush.msra.mxu0 %v9298
        %9348 = vmatpush.msra.mxu0 %v9297
        %9349 = vmatpush.msra.mxu0 %v9296
        %9350 = vmatpush.msra.mxu0 %v9295
        %9351 = vmatpush.msra.mxu0 %v9294
        %9352 = vmatpush.msra.mxu0 %v9293
        %9353 = vmatpush.msra.mxu0 %v9292
        %9354 = vmatpush.msra.mxu0 %v9291
        %9355 = vmatpush.msra.mxu0 %v9290
        %9356 = vmatpush.msra.mxu0 %v9289
        %9357 = vmatpush.msra.mxu0 %v9288
        %9358 = vmatpush.msra.mxu0 %v9287
        %9359 = vmatpush.msra.mxu0 %v9286
        %9360 = vmatpush.msra.mxu0 %v9285
        %9361 = vmatpush.msra.mxu0 %v9284
        %9362 = vmatpush.msra.mxu0 %v9283
        %9363 = vmatmul.f32.gmra.mxu0 %v9275
        %v9364 = vpop.f32.mrf.mxu0
        %v9365 = vadd.f32 0.0, %v9364
        %9366 = vmatmul.f32.gmra.mxu0 %v9279
        %v9367 = vpop.f32.mrf.mxu0
        %v9368 = vadd.f32 0.0, %v9367
        %9369 = vdwg.mxu0
        %9370 = vmatpush.msra.mxu0 %v9314
        %9371 = vmatpush.msra.mxu0 %v9313
        %9372 = vmatpush.msra.mxu0 %v9312
        %9373 = vmatpush.msra.mxu0 %v9311
        %9374 = vmatpush.msra.mxu0 %v9310
        %9375 = vmatpush.msra.mxu0 %v9309
        %9376 = vmatpush.msra.mxu0 %v9308
        %9377 = vmatpush.msra.mxu0 %v9307
        %9378 = vmatpush.msra.mxu0 %v9306
        %9379 = vmatpush.msra.mxu0 %v9305
        %9380 = vmatpush.msra.mxu0 %v9304
        %9381 = vmatpush.msra.mxu0 %v9303
        %9382 = vmatpush.msra.mxu0 %v9302
        %9383 = vmatpush.msra.mxu0 %v9301
        %9384 = vmatpush.msra.mxu0 %v9300
        %9385 = vmatpush.msra.mxu0 %v9299
        %9386 = vmatmul.f32.gmra.mxu0 %v9276
        %v9387 = vpop.f32.mrf.mxu0
        %v9388 = vadd.f32 %v9365, %v9387
        %9389 = vmatmul.f32.gmra.mxu0 %v9280
        %v9390 = vpop.f32.mrf.mxu0
        %v9391 = vadd.f32 %v9368, %v9390
        %9392 = vdwg.mxu0
        %9393 = vmatpush.msra.mxu0 %v9330
        %9394 = vmatpush.msra.mxu0 %v9329
        %9395 = vmatpush.msra.mxu0 %v9328
        %9396 = vmatpush.msra.mxu0 %v9327
        %9397 = vmatpush.msra.mxu0 %v9326
        %9398 = vmatpush.msra.mxu0 %v9325
        %9399 = vmatpush.msra.mxu0 %v9324
        %9400 = vmatpush.msra.mxu0 %v9323
        %9401 = vmatpush.msra.mxu0 %v9322
        %9402 = vmatpush.msra.mxu0 %v9321
        %9403 = vmatpush.msra.mxu0 %v9320
        %9404 = vmatpush.msra.mxu0 %v9319
        %9405 = vmatpush.msra.mxu0 %v9318
        %9406 = vmatpush.msra.mxu0 %v9317
        %9407 = vmatpush.msra.mxu0 %v9316
        %9408 = vmatpush.msra.mxu0 %v9315
        %9409 = vmatmul.f32.gmra.mxu0 %v9277
        %v9410 = vpop.f32.mrf.mxu0
        %v9411 = vadd.f32 %v9388, %v9410
        %9412 = vmatmul.f32.gmra.mxu0 %v9281
        %v9413 = vpop.f32.mrf.mxu0
        %v9414 = vadd.f32 %v9391, %v9413
        %9415 = vdwg.mxu0
        %9416 = vmatpush.msra.mxu0 %v9346
        %9417 = vmatpush.msra.mxu0 %v9345
        %9418 = vmatpush.msra.mxu0 %v9344
        %9419 = vmatpush.msra.mxu0 %v9343
        %9420 = vmatpush.msra.mxu0 %v9342
        %9421 = vmatpush.msra.mxu0 %v9341
        %9422 = vmatpush.msra.mxu0 %v9340
        %9423 = vmatpush.msra.mxu0 %v9339
        %9424 = vmatpush.msra.mxu0 %v9338
        %9425 = vmatpush.msra.mxu0 %v9337
        %9426 = vmatpush.msra.mxu0 %v9336
        %9427 = vmatpush.msra.mxu0 %v9335
        %9428 = vmatpush.msra.mxu0 %v9334
        %9429 = vmatpush.msra.mxu0 %v9333
        %9430 = vmatpush.msra.mxu0 %v9332
        %9431 = vmatpush.msra.mxu0 %v9331
        %9432 = vmatmul.f32.gmra.mxu0 %v9278
        %v9433 = vpop.f32.mrf.mxu0
        %v9434 = vadd.f32 %v9411, %v9433
        %9435 = vmatmul.f32.gmra.mxu0 %v9282
        %v9436 = vpop.f32.mrf.mxu0
        %v9437 = vadd.f32 %v9414, %v9436
        %9438 = vdwg.mxu0
        %v9439 = vadd.f32 %v9155, %v9434
        %v9440 = vadd.f32 %v9156, %v9437
        %s9441 = scalar_lea.vmem %s20, 1
        %v9442 = vld [vmem:[%s9441] sm:$0x1]
        %v9444 = vperm.slane %v9442, 0
        %v9446 = vadd.f32 %v9439, %v9444
        %v9447 = vadd.f32 %v9440, %v9444
        %v9448 = vadd.f32 %v8298, %v9446
        %v9449 = vadd.f32 %v8299, %v9447
        %s9450 = scalar_lea.vmem %s15, 1
        %v9451 = vld [vmem:[%s9450] sm:$0x1]
        %s9452 = scalar_lea.vmem %s16, 1
        %v9453 = vld [vmem:[%s9452] sm:$0x1]
        %v9454 = vsel %vm726, %v9448, 0.0
        %9455 = vadd.xlane.f32.xlu0 %v9454
        %v9456 = vpop.xlane.xlu0 %9455
        %v9457 = vsel %vm726, %v9449, 0.0
        %9458 = vadd.xlane.f32.xlu0 %v9457
        %v9459 = vpop.xlane.xlu0 %9458
        %v9460 = vmul.f32 %v9456, %v2259
        %v9461 = vmul.f32 %v9459, %v2259
        %v9462 = vsub.f32 %v9448, %v9460
        %v9463 = vsub.f32 %v9449, %v9461
        %v9464 = vmul.f32 %v9462, %v9462
        %v9465 = vmul.f32 %v9463, %v9463
        %v9466 = vsel %vm726, %v9464, 0.0
        %9467 = vadd.xlane.f32.xlu0 %v9466
        %v9468 = vpop.xlane.xlu0 %9467
        %v9469 = vsel %vm726, %v9465, 0.0
        %9470 = vadd.xlane.f32.xlu0 %v9469
        %v9471 = vpop.xlane.xlu0 %9470
        %v9472 = vmul.f32 %v9468, %v2259
        %v9473 = vmul.f32 %v9471, %v2259
        %v9474 = vadd.f32 %v9472, 1e-05
        %v9475 = vadd.f32 %v9473, 1e-05
        %v9476 = vrsqrt.pop %v9474
        %v9477 = vmul.f32 %v9476, %v9474
        %v9478 = vmul.f32 %v9477, %v9476
        %v9479 = vmul.f32 0.5, %v9478
        %v9480 = vsub.f32 1.5, %v9479
        %v9481 = vmul.f32 %v9476, %v9480
        %vm9482 = vweird.f32 %v9474
        %vm9483 = vweird.f32 %v9476
        %vm9484 = vmor %vm9482, %vm9483
        %v9485 = vsel %vm9484, %v9476, %v9481
        %v9486 = vrsqrt.pop %v9475
        %v9487 = vmul.f32 %v9486, %v9475
        %v9488 = vmul.f32 %v9487, %v9486
        %v9489 = vmul.f32 0.5, %v9488
        %v9490 = vsub.f32 1.5, %v9489
        %v9491 = vmul.f32 %v9486, %v9490
        %vm9492 = vweird.f32 %v9475
        %vm9493 = vweird.f32 %v9486
        %vm9494 = vmor %vm9492, %vm9493
        %v9495 = vsel %vm9494, %v9486, %v9491
        %v9496 = vmul.f32 %v9462, %v9485
        %v9497 = vmul.f32 %v9463, %v9495
        %v9499 = vperm.slane %v9451, 0
        %v9501 = vmul.f32 %v9496, %v9499
        %v9502 = vmul.f32 %v9497, %v9499
        %v9504 = vperm.slane %v9453, 0
        %v9506 = vadd.f32 %v9501, %v9504
        %v9507 = vadd.f32 %v9502, %v9504
        %v9508 = vld [vmem:[%s21] sm:$0xff]
        %v9509 = vld [vmem:[%s21 + $0x8] sm:$0xff]
        %v9510 = vld [vmem:[%s21 + $0x10] sm:$0xff]
        %v9511 = vld [vmem:[%s21 + $0x18] sm:$0xff]
        %v9512 = vld [vmem:[%s22] sm:$0x1]
        %v9514 = vperm.slane %v9512, 0
        %v9517 = vsel %vm726, %v9506, 0
        %v9520 = vsel %vm726, %v9507, 0
        %9522 = vmatpush.msra.mxu0 0.0
        %9523 = vmatpush.msra.mxu0 0.0
        %9524 = vmatpush.msra.mxu0 0.0
        %9525 = vmatpush.msra.mxu0 0.0
        %9526 = vmatpush.msra.mxu0 0.0
        %9527 = vmatpush.msra.mxu0 0.0
        %9528 = vmatpush.msra.mxu0 0.0
        %9529 = vmatpush.msra.mxu0 0.0
        %9530 = vmatpush.msra.mxu0 0.0
        %9531 = vmatpush.msra.mxu0 0.0
        %9532 = vmatpush.msra.mxu0 0.0
        %9533 = vmatpush.msra.mxu0 0.0
        %9534 = vmatpush.msra.mxu0 %v9511
        %9535 = vmatpush.msra.mxu0 %v9510
        %9536 = vmatpush.msra.mxu0 %v9509
        %9537 = vmatpush.msra.mxu0 %v9508
        %9538 = vmatmul.f32.gmra.mxu0 %v9517
        %v9539 = vpop.f32.mrf.mxu0
        %v9540 = vadd.f32 %v9514, %v9539
        %9541 = vmatmul.f32.gmra.mxu0 %v9520
        %v9542 = vpop.f32.mrf.mxu0
        %v9543 = vadd.f32 %v9514, %v9542
        %9544 = vdwg.mxu0
        %9545 = vst [vmem:[%s703] sm:$0xff] %v9540
        %9546 = vst [vmem:[%s703 + $0x8] sm:$0xff] %v9543
        %s9547 = sand.u32 %s533, 1
        %s9548 = scalar_lea.sflag [#allocation3], %s9547
        %s9549 = sand.u32 %s533, 1
        %s9550 = smul.addr %s9549, 16
        %s9551 = scalar_lea.vmem [#allocation2], %s9550
        // Predicated region
        $region113: #{textgen_forward.1} parent=111 // pred_check
          %p9552 = pneg %p543
        $region114: #{textgen_forward.1} parent=111 // pred_check_branch
          %9554 = sbr.rel (%p9552) target = $region116
        $region115: #{textgen_forward.1} parent=111 // pred_region
          %9556 = vsyncadd %s9548, 0
          %s9557 = smul.addr %s37, 2
          %s9558 = smul.addr %s9557, 8
          %s9559 = scalar_lea.hbm %s23, %s9558
          %s9560 = sshll.u32 %s9551, 4
          %s9561 = int_to_ptr.vmem [resolvable:$true] %s9560
          %s9562 = sshll.u32 %s9559, 4
          %s9563 = int_to_ptr.hbm [resolvable:$true] %s9562
          %9568 = dma.vmem_to_hbm [thread:$0]  %s9561, 256, %s9563, %s9548, 128, 128, 8
        $region116: #{textgen_forward.1} parent=111 // pred_fallthru
          _
      $region112: #{textgen_forward.1} parent=5 // pred_fallthru
        _
      %p9569 = scmp.le.s32.totalorder 2, %s32
      // Predicated region
      $region117: #{textgen_forward.1} parent=5 // pred_check
        %p9570 = pneg %p9569
      $region118: #{textgen_forward.1} parent=5 // pred_check_branch
        %9572 = sbr.rel (%p9570) target = $region120
      $region119: #{textgen_forward.1} parent=5 // pred_region
        %s9573 = ssub.s32 %s32, 2
        // Predicated region
        $region121: #{textgen_forward.1} parent=119 // pred_check
          %p9574 = pneg %p549
        $region122: #{textgen_forward.1} parent=119 // pred_check_branch
          %9576 = sbr.rel (%p9574) target = $region124
        $region123: #{textgen_forward.1} parent=119 // pred_region
          %s9577 = sand.u32 %s534, 1
          %s9578 = scalar_lea.sflag [#allocation3], %s9577
          %s9579 = sand.u32 %s534, 1
          %s9580 = smul.addr %s9579, 16
          %s9581 = scalar_lea.vmem [#allocation2], %s9580
          %9583 = dma.done %s9578, 256
        $region124: #{textgen_forward.1} parent=119 // pred_fallthru
          _
      $region120: #{textgen_forward.1} parent=5 // pred_fallthru
        _
    $region6: #{textgen_forward.1} parent=1 // loop_footer
      %s36 = sadd.s32 1, %s32
    $region7: #{textgen_forward.1} parent=1 // loop_footer_branch
      %31 = sbr.rel target = $region3
    $region8: #{textgen_forward.1} parent=1 // loop_exit
      _
    %9584 = vsyncpa [#allocation3], 1
    %s9585 = scalar_lea.sflag [#allocation3], 1
    %9586 = vsyncpa %s9585, 1

</llo_original>
